<compile_context>
chip_gen: v7x
topology: tpu7x:2x2x1
jax: 0.10.0
libtpu: 0.0.40
codegen_flags: <defaults>
</compile_context>

<pallas_src>
import jax
import jax.numpy as jnp
from jax.experimental import pallas as pl
from jax.experimental.pallas import tpu as pltpu


def _make_fused_kernel(C, H, W, eps):
    HW = H * W
    inv_hw = 1.0 / float(HW)

    def inorm(y):
        # Single-pass InstanceNorm2d(affine=False) over the lane (H*W) axis.
        s = jnp.sum(y, axis=1, keepdims=True)
        ss = jnp.sum(y * y, axis=1, keepdims=True)
        mean = s * inv_hw
        var = jnp.maximum(ss * inv_hw - mean * mean, 0.0)
        return (y - mean) * jax.lax.rsqrt(var + eps)

    def kernel(pos_ref, x_ref, w1_ref, w2_ref, o_ref):
        col = pos_ref[0:1, :]              # (1, HW) int32: w index of each lane
        row = pos_ref[1:2, :]              # (1, HW) int32: h index of each lane
        col_first = col == 0
        col_last = col == (W - 1)
        row_first = row == 0
        row_last = row == (H - 1)

        def conv3x3(a, w_ref):
            # a: (C, HW). Reflect-padded 3x3 conv; channel contraction on the MXU.
            # In flattened space roll(t, s)[l] == t[l - s] (circular); lanes that
            # wrapped across a row/image boundary are replaced by the reflected value.
            up = pltpu.roll(a, W, axis=1)          # a at (h-1, w)
            down = pltpu.roll(a, HW - W, axis=1)   # a at (h+1, w)
            row_shifted = (
                jnp.where(row_first, down, up),    # dh = -1 (reflect at h == 0)
                a,                                 # dh =  0
                jnp.where(row_last, up, down),     # dh = +1 (reflect at h == H-1)
            )

            acc = None
            for kh in range(3):
                t = row_shifted[kh]
                left = pltpu.roll(t, 1, axis=1)        # t at (h, w-1)
                right = pltpu.roll(t, HW - 1, axis=1)  # t at (h, w+1)
                col_shifted = (
                    jnp.where(col_first, right, left),  # dw = -1 (reflect at w == 0)
                    t,                                  # dw =  0
                    jnp.where(col_last, left, right),   # dw = +1 (reflect at w == W-1)
                )
                for kw in range(3):
                    part = jnp.dot(
                        w_ref[kh * 3 + kw], col_shifted[kw],
                        preferred_element_type=jnp.float32,
                        precision=jax.lax.Precision.HIGHEST,
                    )
                    acc = part if acc is None else acc + part
            return acc

        x = x_ref[...]                                       # (C, HW)
        h = jnp.maximum(inorm(conv3x3(x, w1_ref)), 0.0)      # conv1 -> IN -> ReLU
        y = inorm(conv3x3(h, w2_ref))                        # conv2 -> IN
        o_ref[...] = (x + y).astype(o_ref.dtype)             # residual add

    return kernel


def residual_block_forward(x, w1, b1, w2, b2, eps=1e-5):
    """Pallas implementation of ResidualBlock.forward (NCHW, float32).

    b1/b2 are accepted for interface parity but skipped inside the kernel: a
    per-channel constant bias is cancelled exactly by InstanceNorm2d(affine=False).
    """
    del b1, b2
    N, C, H, W = x.shape
    assert H >= 2 and W >= 2, "reflect padding needs H, W >= 2"
    HW = H * W
    Cp = ((C + 7) // 8) * 8            # pad channels to a sublane multiple

    x_flat = x.reshape(N, C, HW).astype(jnp.float32)
    if Cp != C:
        x_flat = jnp.pad(x_flat, ((0, 0), (0, Cp - C), (0, 0)))

    def prep_w(w):
        # (O, I, 3, 3) -> (9, Cp, Cp): taps leading, wt[kh*3+kw, o, i] = w[o, i, kh, kw]
        wt = jnp.transpose(w.astype(jnp.float32), (2, 3, 0, 1)).reshape(9, C, C)
        if Cp != C:
            wt = jnp.pad(wt, ((0, 0), (0, Cp - C), (0, Cp - C)))
        return wt

    w1t = prep_w(w1)
    w2t = prep_w(w2)

    lane = jnp.arange(HW, dtype=jnp.int32)
    pos = jnp.stack([lane % W, lane // W], axis=0)   # (2, HW): [col, row] per lane

    out_flat = pl.pallas_call(
        _make_fused_kernel(Cp, H, W, eps),
        out_shape=jax.ShapeDtypeStruct((N, Cp, HW), jnp.float32),
        grid=(N,),
        in_specs=[
            pl.BlockSpec((2, HW), lambda n: (0, 0)),            # lane -> (col, row)
            pl.BlockSpec((None, Cp, HW), lambda n: (n, 0, 0)),  # one image per step
            pl.BlockSpec((9, Cp, Cp), lambda n: (0, 0, 0)),     # conv1 taps (VMEM)
            pl.BlockSpec((9, Cp, Cp), lambda n: (0, 0, 0)),     # conv2 taps (VMEM)
        ],
        out_specs=pl.BlockSpec((None, Cp, HW), lambda n: (n, 0, 0)),
        compiler_params=pltpu.CompilerParams(
            dimension_semantics=("parallel",),   # batch axis across TCs (v7x megacore)
        ),
    )(pos, x_flat, w1t, w2t)

    return out_flat[:, :C, :].reshape(N, C, H, W)


def residual_block_reference(x, w1, b1, w2, b2, eps=1e-5):
    """Pure-JAX reference matching the PyTorch module semantics."""

    def conv(a, w, b):
        ap = jnp.pad(a, ((0, 0), (0, 0), (1, 1), (1, 1)), mode="reflect")
        y = jax.lax.conv_general_dilated(
            ap, w, (1, 1), "VALID",
            dimension_numbers=("NCHW", "OIHW", "NCHW"),
            precision=jax.lax.Precision.HIGHEST,
        )
        return y + b[None, :, None, None]

    def inorm(a):
        m = jnp.mean(a, axis=(2, 3), keepdims=True)
        v = jnp.mean((a - m) ** 2, axis=(2, 3), keepdims=True)
        return (a - m) * jax.lax.rsqrt(v + eps)

    h = jax.nn.relu(inorm(conv(x, w1, b1)))
    return x + inorm(conv(h, w2, b2))


if __name__ == "__main__":
    N, C, H, W = 2, 4, 16, 16

    key = jax.random.PRNGKey(0)
    kx, kw1, kb1, kw2, kb2 = jax.random.split(key, 5)

    # Deterministic parameter init, PyTorch Conv2d default-style uniform bounds.
    fan_in = C * 3 * 3
    bound = 1.0 / (fan_in ** 0.5)
    w1 = jax.random.uniform(kw1, (C, C, 3, 3), jnp.float32, -bound, bound)
    b1 = jax.random.uniform(kb1, (C,), jnp.float32, -bound, bound)
    w2 = jax.random.uniform(kw2, (C, C, 3, 3), jnp.float32, -bound, bound)
    b2 = jax.random.uniform(kb2, (C,), jnp.float32, -bound, bound)

    x = jax.random.normal(kx, (N, C, H, W), jnp.float32)

    out = jax.jit(residual_block_forward)(x, w1, b1, w2, b2)
    out = jax.block_until_ready(out)

    ref = residual_block_reference(x, w1, b1, w2, b2)
    assert out.shape == (N, C, H, W)
    err = float(jnp.max(jnp.abs(out - ref)))
    assert jnp.allclose(out, ref, atol=1e-3, rtol=1e-3), err

    print("KERNEL_OK")
</pallas_src>

<mosaic_0001>
module attributes {stable_mosaic.version = 11 : i64} {
  func.func @kernel(%arg0: i32, %arg1: memref<2x256xi32, #tpu.memory_space<vmem>>, %arg2: memref<1x8x256xf32, #tpu.memory_space<vmem>>, %arg3: memref<9x8x8xf32, #tpu.memory_space<vmem>>, %arg4: memref<9x8x8xf32, #tpu.memory_space<vmem>>, %arg5: memref<1x8x256xf32, #tpu.memory_space<vmem>>) attributes {dimension_semantics = [#tpu.dimension_semantics<parallel>], iteration_bounds = array<i64: 2>, scalar_prefetch = 0 : i64, scratch_operands = 0 : i64, tpu.core_type = #tpu.core_type<tc>, window_params = [{pipeline_mode = #tpu.pipeline_mode<synchronous>, transform_indices = @transform_0, window_bounds = array<i64: 2, 256>}, {transform_indices = @transform_1, window_bounds = array<i64: 1, 8, 256>}, {pipeline_mode = #tpu.pipeline_mode<synchronous>, transform_indices = @transform_2, window_bounds = array<i64: 9, 8, 8>}, {pipeline_mode = #tpu.pipeline_mode<synchronous>, transform_indices = @transform_3, window_bounds = array<i64: 9, 8, 8>}, {transform_indices = @transform_4, window_bounds = array<i64: 1, 8, 256>}]} {
    %c0 = arith.constant 0 : index
    %c0_0 = arith.constant 0 : index
    %0 = vector.load %arg1[%c0, %c0_0] : memref<2x256xi32, #tpu.memory_space<vmem>>, vector<1x256xi32>
    %c1 = arith.constant 1 : index
    %c0_1 = arith.constant 0 : index
    %1 = vector.load %arg1[%c1, %c0_1] : memref<2x256xi32, #tpu.memory_space<vmem>>, vector<1x256xi32>
    %c0_i32 = arith.constant 0 : i32
    %2 = vector.broadcast %c0_i32 : i32 to vector<1x256xi32>
    %3 = arith.cmpi eq, %0, %2 : vector<1x256xi32>
    %c15_i32 = arith.constant 15 : i32
    %4 = vector.broadcast %c15_i32 : i32 to vector<1x256xi32>
    %5 = arith.cmpi eq, %0, %4 : vector<1x256xi32>
    %c0_i32_2 = arith.constant 0 : i32
    %6 = vector.broadcast %c0_i32_2 : i32 to vector<1x256xi32>
    %7 = arith.cmpi eq, %1, %6 : vector<1x256xi32>
    %c15_i32_3 = arith.constant 15 : i32
    %8 = vector.broadcast %c15_i32_3 : i32 to vector<1x256xi32>
    %9 = arith.cmpi eq, %1, %8 : vector<1x256xi32>
    %c0_4 = arith.constant 0 : index
    %c0_5 = arith.constant 0 : index
    %c0_6 = arith.constant 0 : index
    %10 = vector.load %arg2[%c0_4, %c0_5, %c0_6] : memref<1x8x256xf32, #tpu.memory_space<vmem>>, vector<1x8x256xf32>
    %11 = vector.shape_cast %10 : vector<1x8x256xf32> to vector<8x256xf32>
    %c16_i32 = arith.constant 16 : i32
    %12 = tpu.dynamic_rotate %11 by %c16_i32 dim 1 : vector<8x256xf32>, i32 -> vector<8x256xf32>
    %c240_i32 = arith.constant 240 : i32
    %13 = tpu.dynamic_rotate %11 by %c240_i32 dim 1 : vector<8x256xf32>, i32 -> vector<8x256xf32>
    %14 = vector.shape_cast %7 : vector<1x256xi1> to vector<1x256xi1>
    %15 = vector.broadcast %14 : vector<1x256xi1> to vector<8x256xi1>
    %16 = arith.select %15, %13, %12 : vector<8x256xi1>, vector<8x256xf32>
    %17 = vector.shape_cast %9 : vector<1x256xi1> to vector<1x256xi1>
    %18 = vector.broadcast %17 : vector<1x256xi1> to vector<8x256xi1>
    %19 = arith.select %18, %12, %13 : vector<8x256xi1>, vector<8x256xf32>
    %c1_i32 = arith.constant 1 : i32
    %20 = tpu.dynamic_rotate %16 by %c1_i32 dim 1 : vector<8x256xf32>, i32 -> vector<8x256xf32>
    %c255_i32 = arith.constant 255 : i32
    %21 = tpu.dynamic_rotate %16 by %c255_i32 dim 1 : vector<8x256xf32>, i32 -> vector<8x256xf32>
    %22 = vector.shape_cast %3 : vector<1x256xi1> to vector<1x256xi1>
    %23 = vector.broadcast %22 : vector<1x256xi1> to vector<8x256xi1>
    %24 = arith.select %23, %21, %20 : vector<8x256xi1>, vector<8x256xf32>
    %25 = vector.shape_cast %5 : vector<1x256xi1> to vector<1x256xi1>
    %26 = vector.broadcast %25 : vector<1x256xi1> to vector<8x256xi1>
    %27 = arith.select %26, %20, %21 : vector<8x256xi1>, vector<8x256xf32>
    %c0_7 = arith.constant 0 : index
    %c0_8 = arith.constant 0 : index
    %c0_9 = arith.constant 0 : index
    %28 = vector.load %arg3[%c0_7, %c0_8, %c0_9] : memref<9x8x8xf32, #tpu.memory_space<vmem>>, vector<1x8x8xf32>
    %29 = vector.shape_cast %28 : vector<1x8x8xf32> to vector<8x8xf32>
    %cst = arith.constant dense<0.000000e+00> : vector<8x256xf32>
    %30 = tpu.matmul %29, %24, %cst {dimension_numbers = #tpu.dot_dimension_numbers<[1], [0], [0], [1], [0, 0, 1, 1], [], []>, precision = #tpu.contract_precision<fp32>} : vector<8x8xf32>, vector<8x256xf32>, vector<8x256xf32> -> vector<8x256xf32>
    %c1_10 = arith.constant 1 : index
    %c0_11 = arith.constant 0 : index
    %c0_12 = arith.constant 0 : index
    %31 = vector.load %arg3[%c1_10, %c0_11, %c0_12] : memref<9x8x8xf32, #tpu.memory_space<vmem>>, vector<1x8x8xf32>
    %32 = vector.shape_cast %31 : vector<1x8x8xf32> to vector<8x8xf32>
    %cst_13 = arith.constant dense<0.000000e+00> : vector<8x256xf32>
    %33 = tpu.matmul %32, %16, %cst_13 {dimension_numbers = #tpu.dot_dimension_numbers<[1], [0], [0], [1], [0, 0, 1, 1], [], []>, precision = #tpu.contract_precision<fp32>} : vector<8x8xf32>, vector<8x256xf32>, vector<8x256xf32> -> vector<8x256xf32>
    %34 = arith.addf %30, %33 : vector<8x256xf32>
    %c2 = arith.constant 2 : index
    %c0_14 = arith.constant 0 : index
    %c0_15 = arith.constant 0 : index
    %35 = vector.load %arg3[%c2, %c0_14, %c0_15] : memref<9x8x8xf32, #tpu.memory_space<vmem>>, vector<1x8x8xf32>
    %36 = vector.shape_cast %35 : vector<1x8x8xf32> to vector<8x8xf32>
    %cst_16 = arith.constant dense<0.000000e+00> : vector<8x256xf32>
    %37 = tpu.matmul %36, %27, %cst_16 {dimension_numbers = #tpu.dot_dimension_numbers<[1], [0], [0], [1], [0, 0, 1, 1], [], []>, precision = #tpu.contract_precision<fp32>} : vector<8x8xf32>, vector<8x256xf32>, vector<8x256xf32> -> vector<8x256xf32>
    %38 = arith.addf %34, %37 : vector<8x256xf32>
    %c1_i32_17 = arith.constant 1 : i32
    %39 = tpu.dynamic_rotate %11 by %c1_i32_17 dim 1 : vector<8x256xf32>, i32 -> vector<8x256xf32>
    %c255_i32_18 = arith.constant 255 : i32
    %40 = tpu.dynamic_rotate %11 by %c255_i32_18 dim 1 : vector<8x256xf32>, i32 -> vector<8x256xf32>
    %41 = vector.shape_cast %3 : vector<1x256xi1> to vector<1x256xi1>
    %42 = vector.broadcast %41 : vector<1x256xi1> to vector<8x256xi1>
    %43 = arith.select %42, %40, %39 : vector<8x256xi1>, vector<8x256xf32>
    %44 = vector.shape_cast %5 : vector<1x256xi1> to vector<1x256xi1>
    %45 = vector.broadcast %44 : vector<1x256xi1> to vector<8x256xi1>
    %46 = arith.select %45, %39, %40 : vector<8x256xi1>, vector<8x256xf32>
    %c3 = arith.constant 3 : index
    %c0_19 = arith.constant 0 : index
    %c0_20 = arith.constant 0 : index
    %47 = vector.load %arg3[%c3, %c0_19, %c0_20] : memref<9x8x8xf32, #tpu.memory_space<vmem>>, vector<1x8x8xf32>
    %48 = vector.shape_cast %47 : vector<1x8x8xf32> to vector<8x8xf32>
    %cst_21 = arith.constant dense<0.000000e+00> : vector<8x256xf32>
    %49 = tpu.matmul %48, %43, %cst_21 {dimension_numbers = #tpu.dot_dimension_numbers<[1], [0], [0], [1], [0, 0, 1, 1], [], []>, precision = #tpu.contract_precision<fp32>} : vector<8x8xf32>, vector<8x256xf32>, vector<8x256xf32> -> vector<8x256xf32>
    %50 = arith.addf %38, %49 : vector<8x256xf32>
    %c4 = arith.constant 4 : index
    %c0_22 = arith.constant 0 : index
    %c0_23 = arith.constant 0 : index
    %51 = vector.load %arg3[%c4, %c0_22, %c0_23] : memref<9x8x8xf32, #tpu.memory_space<vmem>>, vector<1x8x8xf32>
    %52 = vector.shape_cast %51 : vector<1x8x8xf32> to vector<8x8xf32>
    %cst_24 = arith.constant dense<0.000000e+00> : vector<8x256xf32>
    %53 = tpu.matmul %52, %11, %cst_24 {dimension_numbers = #tpu.dot_dimension_numbers<[1], [0], [0], [1], [0, 0, 1, 1], [], []>, precision = #tpu.contract_precision<fp32>} : vector<8x8xf32>, vector<8x256xf32>, vector<8x256xf32> -> vector<8x256xf32>
    %54 = arith.addf %50, %53 : vector<8x256xf32>
    %c5 = arith.constant 5 : index
    %c0_25 = arith.constant 0 : index
    %c0_26 = arith.constant 0 : index
    %55 = vector.load %arg3[%c5, %c0_25, %c0_26] : memref<9x8x8xf32, #tpu.memory_space<vmem>>, vector<1x8x8xf32>
    %56 = vector.shape_cast %55 : vector<1x8x8xf32> to vector<8x8xf32>
    %cst_27 = arith.constant dense<0.000000e+00> : vector<8x256xf32>
    %57 = tpu.matmul %56, %46, %cst_27 {dimension_numbers = #tpu.dot_dimension_numbers<[1], [0], [0], [1], [0, 0, 1, 1], [], []>, precision = #tpu.contract_precision<fp32>} : vector<8x8xf32>, vector<8x256xf32>, vector<8x256xf32> -> vector<8x256xf32>
    %58 = arith.addf %54, %57 : vector<8x256xf32>
    %c1_i32_28 = arith.constant 1 : i32
    %59 = tpu.dynamic_rotate %19 by %c1_i32_28 dim 1 : vector<8x256xf32>, i32 -> vector<8x256xf32>
    %c255_i32_29 = arith.constant 255 : i32
    %60 = tpu.dynamic_rotate %19 by %c255_i32_29 dim 1 : vector<8x256xf32>, i32 -> vector<8x256xf32>
    %61 = vector.shape_cast %3 : vector<1x256xi1> to vector<1x256xi1>
    %62 = vector.broadcast %61 : vector<1x256xi1> to vector<8x256xi1>
    %63 = arith.select %62, %60, %59 : vector<8x256xi1>, vector<8x256xf32>
    %64 = vector.shape_cast %5 : vector<1x256xi1> to vector<1x256xi1>
    %65 = vector.broadcast %64 : vector<1x256xi1> to vector<8x256xi1>
    %66 = arith.select %65, %59, %60 : vector<8x256xi1>, vector<8x256xf32>
    %c6 = arith.constant 6 : index
    %c0_30 = arith.constant 0 : index
    %c0_31 = arith.constant 0 : index
    %67 = vector.load %arg3[%c6, %c0_30, %c0_31] : memref<9x8x8xf32, #tpu.memory_space<vmem>>, vector<1x8x8xf32>
    %68 = vector.shape_cast %67 : vector<1x8x8xf32> to vector<8x8xf32>
    %cst_32 = arith.constant dense<0.000000e+00> : vector<8x256xf32>
    %69 = tpu.matmul %68, %63, %cst_32 {dimension_numbers = #tpu.dot_dimension_numbers<[1], [0], [0], [1], [0, 0, 1, 1], [], []>, precision = #tpu.contract_precision<fp32>} : vector<8x8xf32>, vector<8x256xf32>, vector<8x256xf32> -> vector<8x256xf32>
    %70 = arith.addf %58, %69 : vector<8x256xf32>
    %c7 = arith.constant 7 : index
    %c0_33 = arith.constant 0 : index
    %c0_34 = arith.constant 0 : index
    %71 = vector.load %arg3[%c7, %c0_33, %c0_34] : memref<9x8x8xf32, #tpu.memory_space<vmem>>, vector<1x8x8xf32>
    %72 = vector.shape_cast %71 : vector<1x8x8xf32> to vector<8x8xf32>
    %cst_35 = arith.constant dense<0.000000e+00> : vector<8x256xf32>
    %73 = tpu.matmul %72, %19, %cst_35 {dimension_numbers = #tpu.dot_dimension_numbers<[1], [0], [0], [1], [0, 0, 1, 1], [], []>, precision = #tpu.contract_precision<fp32>} : vector<8x8xf32>, vector<8x256xf32>, vector<8x256xf32> -> vector<8x256xf32>
    %74 = arith.addf %70, %73 : vector<8x256xf32>
    %c8 = arith.constant 8 : index
    %c0_36 = arith.constant 0 : index
    %c0_37 = arith.constant 0 : index
    %75 = vector.load %arg3[%c8, %c0_36, %c0_37] : memref<9x8x8xf32, #tpu.memory_space<vmem>>, vector<1x8x8xf32>
    %76 = vector.shape_cast %75 : vector<1x8x8xf32> to vector<8x8xf32>
    %cst_38 = arith.constant dense<0.000000e+00> : vector<8x256xf32>
    %77 = tpu.matmul %76, %66, %cst_38 {dimension_numbers = #tpu.dot_dimension_numbers<[1], [0], [0], [1], [0, 0, 1, 1], [], []>, precision = #tpu.contract_precision<fp32>} : vector<8x8xf32>, vector<8x256xf32>, vector<8x256xf32> -> vector<8x256xf32>
    %78 = arith.addf %74, %77 : vector<8x256xf32>
    %cst_39 = arith.constant dense<0.000000e+00> : vector<8xf32>
    %79 = vector.multi_reduction <add>, %78, %cst_39 [1] : vector<8x256xf32> to vector<8xf32>
    %80 = vector.shape_cast %79 : vector<8xf32> to vector<8x1xf32>
    %81 = arith.mulf %78, %78 : vector<8x256xf32>
    %cst_40 = arith.constant dense<0.000000e+00> : vector<8xf32>
    %82 = vector.multi_reduction <add>, %81, %cst_40 [1] : vector<8x256xf32> to vector<8xf32>
    %83 = vector.shape_cast %82 : vector<8xf32> to vector<8x1xf32>
    %cst_41 = arith.constant 3.906250e-03 : f32
    %84 = vector.broadcast %cst_41 : f32 to vector<8x1xf32>
    %85 = arith.mulf %80, %84 : vector<8x1xf32>
    %cst_42 = arith.constant 3.906250e-03 : f32
    %86 = vector.broadcast %cst_42 : f32 to vector<8x1xf32>
    %87 = arith.mulf %83, %86 : vector<8x1xf32>
    %88 = arith.mulf %85, %85 : vector<8x1xf32>
    %89 = arith.subf %87, %88 : vector<8x1xf32>
    %cst_43 = arith.constant 0.000000e+00 : f32
    %90 = vector.broadcast %cst_43 : f32 to vector<8x1xf32>
    %91 = arith.maximumf %89, %90 : vector<8x1xf32>
    %92 = vector.broadcast %85 : vector<8x1xf32> to vector<8x256xf32>
    %93 = arith.subf %78, %92 : vector<8x256xf32>
    %cst_44 = arith.constant 9.99999974E-6 : f32
    %94 = vector.broadcast %cst_44 : f32 to vector<8x1xf32>
    %95 = arith.addf %91, %94 : vector<8x1xf32>
    %96 = math.rsqrt %95 : vector<8x1xf32>
    %97 = vector.broadcast %96 : vector<8x1xf32> to vector<8x256xf32>
    %98 = arith.mulf %93, %97 : vector<8x256xf32>
    %cst_45 = arith.constant 0.000000e+00 : f32
    %99 = vector.broadcast %cst_45 : f32 to vector<8x256xf32>
    %100 = arith.maximumf %98, %99 : vector<8x256xf32>
    %c16_i32_46 = arith.constant 16 : i32
    %101 = tpu.dynamic_rotate %100 by %c16_i32_46 dim 1 : vector<8x256xf32>, i32 -> vector<8x256xf32>
    %c240_i32_47 = arith.constant 240 : i32
    %102 = tpu.dynamic_rotate %100 by %c240_i32_47 dim 1 : vector<8x256xf32>, i32 -> vector<8x256xf32>
    %103 = vector.shape_cast %7 : vector<1x256xi1> to vector<1x256xi1>
    %104 = vector.broadcast %103 : vector<1x256xi1> to vector<8x256xi1>
    %105 = arith.select %104, %102, %101 : vector<8x256xi1>, vector<8x256xf32>
    %106 = vector.shape_cast %9 : vector<1x256xi1> to vector<1x256xi1>
    %107 = vector.broadcast %106 : vector<1x256xi1> to vector<8x256xi1>
    %108 = arith.select %107, %101, %102 : vector<8x256xi1>, vector<8x256xf32>
    %c1_i32_48 = arith.constant 1 : i32
    %109 = tpu.dynamic_rotate %105 by %c1_i32_48 dim 1 : vector<8x256xf32>, i32 -> vector<8x256xf32>
    %c255_i32_49 = arith.constant 255 : i32
    %110 = tpu.dynamic_rotate %105 by %c255_i32_49 dim 1 : vector<8x256xf32>, i32 -> vector<8x256xf32>
    %111 = vector.shape_cast %3 : vector<1x256xi1> to vector<1x256xi1>
    %112 = vector.broadcast %111 : vector<1x256xi1> to vector<8x256xi1>
    %113 = arith.select %112, %110, %109 : vector<8x256xi1>, vector<8x256xf32>
    %114 = vector.shape_cast %5 : vector<1x256xi1> to vector<1x256xi1>
    %115 = vector.broadcast %114 : vector<1x256xi1> to vector<8x256xi1>
    %116 = arith.select %115, %109, %110 : vector<8x256xi1>, vector<8x256xf32>
    %c0_50 = arith.constant 0 : index
    %c0_51 = arith.constant 0 : index
    %c0_52 = arith.constant 0 : index
    %117 = vector.load %arg4[%c0_50, %c0_51, %c0_52] : memref<9x8x8xf32, #tpu.memory_space<vmem>>, vector<1x8x8xf32>
    %118 = vector.shape_cast %117 : vector<1x8x8xf32> to vector<8x8xf32>
    %cst_53 = arith.constant dense<0.000000e+00> : vector<8x256xf32>
    %119 = tpu.matmul %118, %113, %cst_53 {dimension_numbers = #tpu.dot_dimension_numbers<[1], [0], [0], [1], [0, 0, 1, 1], [], []>, precision = #tpu.contract_precision<fp32>} : vector<8x8xf32>, vector<8x256xf32>, vector<8x256xf32> -> vector<8x256xf32>
    %c1_54 = arith.constant 1 : index
    %c0_55 = arith.constant 0 : index
    %c0_56 = arith.constant 0 : index
    %120 = vector.load %arg4[%c1_54, %c0_55, %c0_56] : memref<9x8x8xf32, #tpu.memory_space<vmem>>, vector<1x8x8xf32>
    %121 = vector.shape_cast %120 : vector<1x8x8xf32> to vector<8x8xf32>
    %cst_57 = arith.constant dense<0.000000e+00> : vector<8x256xf32>
    %122 = tpu.matmul %121, %105, %cst_57 {dimension_numbers = #tpu.dot_dimension_numbers<[1], [0], [0], [1], [0, 0, 1, 1], [], []>, precision = #tpu.contract_precision<fp32>} : vector<8x8xf32>, vector<8x256xf32>, vector<8x256xf32> -> vector<8x256xf32>
    %123 = arith.addf %119, %122 : vector<8x256xf32>
    %c2_58 = arith.constant 2 : index
    %c0_59 = arith.constant 0 : index
    %c0_60 = arith.constant 0 : index
    %124 = vector.load %arg4[%c2_58, %c0_59, %c0_60] : memref<9x8x8xf32, #tpu.memory_space<vmem>>, vector<1x8x8xf32>
    %125 = vector.shape_cast %124 : vector<1x8x8xf32> to vector<8x8xf32>
    %cst_61 = arith.constant dense<0.000000e+00> : vector<8x256xf32>
    %126 = tpu.matmul %125, %116, %cst_61 {dimension_numbers = #tpu.dot_dimension_numbers<[1], [0], [0], [1], [0, 0, 1, 1], [], []>, precision = #tpu.contract_precision<fp32>} : vector<8x8xf32>, vector<8x256xf32>, vector<8x256xf32> -> vector<8x256xf32>
    %127 = arith.addf %123, %126 : vector<8x256xf32>
    %c1_i32_62 = arith.constant 1 : i32
    %128 = tpu.dynamic_rotate %100 by %c1_i32_62 dim 1 : vector<8x256xf32>, i32 -> vector<8x256xf32>
    %c255_i32_63 = arith.constant 255 : i32
    %129 = tpu.dynamic_rotate %100 by %c255_i32_63 dim 1 : vector<8x256xf32>, i32 -> vector<8x256xf32>
    %130 = vector.shape_cast %3 : vector<1x256xi1> to vector<1x256xi1>
    %131 = vector.broadcast %130 : vector<1x256xi1> to vector<8x256xi1>
    %132 = arith.select %131, %129, %128 : vector<8x256xi1>, vector<8x256xf32>
    %133 = vector.shape_cast %5 : vector<1x256xi1> to vector<1x256xi1>
    %134 = vector.broadcast %133 : vector<1x256xi1> to vector<8x256xi1>
    %135 = arith.select %134, %128, %129 : vector<8x256xi1>, vector<8x256xf32>
    %c3_64 = arith.constant 3 : index
    %c0_65 = arith.constant 0 : index
    %c0_66 = arith.constant 0 : index
    %136 = vector.load %arg4[%c3_64, %c0_65, %c0_66] : memref<9x8x8xf32, #tpu.memory_space<vmem>>, vector<1x8x8xf32>
    %137 = vector.shape_cast %136 : vector<1x8x8xf32> to vector<8x8xf32>
    %cst_67 = arith.constant dense<0.000000e+00> : vector<8x256xf32>
    %138 = tpu.matmul %137, %132, %cst_67 {dimension_numbers = #tpu.dot_dimension_numbers<[1], [0], [0], [1], [0, 0, 1, 1], [], []>, precision = #tpu.contract_precision<fp32>} : vector<8x8xf32>, vector<8x256xf32>, vector<8x256xf32> -> vector<8x256xf32>
    %139 = arith.addf %127, %138 : vector<8x256xf32>
    %c4_68 = arith.constant 4 : index
    %c0_69 = arith.constant 0 : index
    %c0_70 = arith.constant 0 : index
    %140 = vector.load %arg4[%c4_68, %c0_69, %c0_70] : memref<9x8x8xf32, #tpu.memory_space<vmem>>, vector<1x8x8xf32>
    %141 = vector.shape_cast %140 : vector<1x8x8xf32> to vector<8x8xf32>
    %cst_71 = arith.constant dense<0.000000e+00> : vector<8x256xf32>
    %142 = tpu.matmul %141, %100, %cst_71 {dimension_numbers = #tpu.dot_dimension_numbers<[1], [0], [0], [1], [0, 0, 1, 1], [], []>, precision = #tpu.contract_precision<fp32>} : vector<8x8xf32>, vector<8x256xf32>, vector<8x256xf32> -> vector<8x256xf32>
    %143 = arith.addf %139, %142 : vector<8x256xf32>
    %c5_72 = arith.constant 5 : index
    %c0_73 = arith.constant 0 : index
    %c0_74 = arith.constant 0 : index
    %144 = vector.load %arg4[%c5_72, %c0_73, %c0_74] : memref<9x8x8xf32, #tpu.memory_space<vmem>>, vector<1x8x8xf32>
    %145 = vector.shape_cast %144 : vector<1x8x8xf32> to vector<8x8xf32>
    %cst_75 = arith.constant dense<0.000000e+00> : vector<8x256xf32>
    %146 = tpu.matmul %145, %135, %cst_75 {dimension_numbers = #tpu.dot_dimension_numbers<[1], [0], [0], [1], [0, 0, 1, 1], [], []>, precision = #tpu.contract_precision<fp32>} : vector<8x8xf32>, vector<8x256xf32>, vector<8x256xf32> -> vector<8x256xf32>
    %147 = arith.addf %143, %146 : vector<8x256xf32>
    %c1_i32_76 = arith.constant 1 : i32
    %148 = tpu.dynamic_rotate %108 by %c1_i32_76 dim 1 : vector<8x256xf32>, i32 -> vector<8x256xf32>
    %c255_i32_77 = arith.constant 255 : i32
    %149 = tpu.dynamic_rotate %108 by %c255_i32_77 dim 1 : vector<8x256xf32>, i32 -> vector<8x256xf32>
    %150 = vector.shape_cast %3 : vector<1x256xi1> to vector<1x256xi1>
    %151 = vector.broadcast %150 : vector<1x256xi1> to vector<8x256xi1>
    %152 = arith.select %151, %149, %148 : vector<8x256xi1>, vector<8x256xf32>
    %153 = vector.shape_cast %5 : vector<1x256xi1> to vector<1x256xi1>
    %154 = vector.broadcast %153 : vector<1x256xi1> to vector<8x256xi1>
    %155 = arith.select %154, %148, %149 : vector<8x256xi1>, vector<8x256xf32>
    %c6_78 = arith.constant 6 : index
    %c0_79 = arith.constant 0 : index
    %c0_80 = arith.constant 0 : index
    %156 = vector.load %arg4[%c6_78, %c0_79, %c0_80] : memref<9x8x8xf32, #tpu.memory_space<vmem>>, vector<1x8x8xf32>
    %157 = vector.shape_cast %156 : vector<1x8x8xf32> to vector<8x8xf32>
    %cst_81 = arith.constant dense<0.000000e+00> : vector<8x256xf32>
    %158 = tpu.matmul %157, %152, %cst_81 {dimension_numbers = #tpu.dot_dimension_numbers<[1], [0], [0], [1], [0, 0, 1, 1], [], []>, precision = #tpu.contract_precision<fp32>} : vector<8x8xf32>, vector<8x256xf32>, vector<8x256xf32> -> vector<8x256xf32>
    %159 = arith.addf %147, %158 : vector<8x256xf32>
    %c7_82 = arith.constant 7 : index
    %c0_83 = arith.constant 0 : index
    %c0_84 = arith.constant 0 : index
    %160 = vector.load %arg4[%c7_82, %c0_83, %c0_84] : memref<9x8x8xf32, #tpu.memory_space<vmem>>, vector<1x8x8xf32>
    %161 = vector.shape_cast %160 : vector<1x8x8xf32> to vector<8x8xf32>
    %cst_85 = arith.constant dense<0.000000e+00> : vector<8x256xf32>
    %162 = tpu.matmul %161, %108, %cst_85 {dimension_numbers = #tpu.dot_dimension_numbers<[1], [0], [0], [1], [0, 0, 1, 1], [], []>, precision = #tpu.contract_precision<fp32>} : vector<8x8xf32>, vector<8x256xf32>, vector<8x256xf32> -> vector<8x256xf32>
    %163 = arith.addf %159, %162 : vector<8x256xf32>
    %c8_86 = arith.constant 8 : index
    %c0_87 = arith.constant 0 : index
    %c0_88 = arith.constant 0 : index
    %164 = vector.load %arg4[%c8_86, %c0_87, %c0_88] : memref<9x8x8xf32, #tpu.memory_space<vmem>>, vector<1x8x8xf32>
    %165 = vector.shape_cast %164 : vector<1x8x8xf32> to vector<8x8xf32>
    %cst_89 = arith.constant dense<0.000000e+00> : vector<8x256xf32>
    %166 = tpu.matmul %165, %155, %cst_89 {dimension_numbers = #tpu.dot_dimension_numbers<[1], [0], [0], [1], [0, 0, 1, 1], [], []>, precision = #tpu.contract_precision<fp32>} : vector<8x8xf32>, vector<8x256xf32>, vector<8x256xf32> -> vector<8x256xf32>
    %167 = arith.addf %163, %166 : vector<8x256xf32>
    %cst_90 = arith.constant dense<0.000000e+00> : vector<8xf32>
    %168 = vector.multi_reduction <add>, %167, %cst_90 [1] : vector<8x256xf32> to vector<8xf32>
    %169 = vector.shape_cast %168 : vector<8xf32> to vector<8x1xf32>
    %170 = arith.mulf %167, %167 : vector<8x256xf32>
    %cst_91 = arith.constant dense<0.000000e+00> : vector<8xf32>
    %171 = vector.multi_reduction <add>, %170, %cst_91 [1] : vector<8x256xf32> to vector<8xf32>
    %172 = vector.shape_cast %171 : vector<8xf32> to vector<8x1xf32>
    %cst_92 = arith.constant 3.906250e-03 : f32
    %173 = vector.broadcast %cst_92 : f32 to vector<8x1xf32>
    %174 = arith.mulf %169, %173 : vector<8x1xf32>
    %cst_93 = arith.constant 3.906250e-03 : f32
    %175 = vector.broadcast %cst_93 : f32 to vector<8x1xf32>
    %176 = arith.mulf %172, %175 : vector<8x1xf32>
    %177 = arith.mulf %174, %174 : vector<8x1xf32>
    %178 = arith.subf %176, %177 : vector<8x1xf32>
    %cst_94 = arith.constant 0.000000e+00 : f32
    %179 = vector.broadcast %cst_94 : f32 to vector<8x1xf32>
    %180 = arith.maximumf %178, %179 : vector<8x1xf32>
    %181 = vector.broadcast %174 : vector<8x1xf32> to vector<8x256xf32>
    %182 = arith.subf %167, %181 : vector<8x256xf32>
    %cst_95 = arith.constant 9.99999974E-6 : f32
    %183 = vector.broadcast %cst_95 : f32 to vector<8x1xf32>
    %184 = arith.addf %180, %183 : vector<8x1xf32>
    %185 = math.rsqrt %184 : vector<8x1xf32>
    %186 = vector.broadcast %185 : vector<8x1xf32> to vector<8x256xf32>
    %187 = arith.mulf %182, %186 : vector<8x256xf32>
    %188 = arith.addf %11, %187 : vector<8x256xf32>
    %c0_96 = arith.constant 0 : index
    %c0_97 = arith.constant 0 : index
    %c0_98 = arith.constant 0 : index
    %189 = vector.load %arg5[%c0_96, %c0_97, %c0_98] : memref<1x8x256xf32, #tpu.memory_space<vmem>>, vector<1x8x256xf32>
    %190 = vector.shape_cast %189 : vector<1x8x256xf32> to vector<8x256xf32>
    %191 = vector.shape_cast %188 : vector<8x256xf32> to vector<1x8x256xf32>
    tpu.vector_store %arg5[%c0_96, %c0_97, %c0_98], %191 {strides = array<i32>} : memref<1x8x256xf32, #tpu.memory_space<vmem>>, vector<1x8x256xf32>,
    return
  }
  func.func @transform_0(%arg0: i32) -> (i32, i32) {
    %c0_i32 = arith.constant 0 : i32
    %c0_i32_0 = arith.constant 0 : i32
    %c0_i32_1 = arith.constant 0 : i32
    return %c0_i32, %c0_i32_0 : i32, i32
  }
  func.func @transform_1(%arg0: i32) -> (i32, i32, i32) {
    %c0_i32 = arith.constant 0 : i32
    %c0_i32_0 = arith.constant 0 : i32
    %c0_i32_1 = arith.constant 0 : i32
    return %arg0, %c0_i32, %c0_i32_0 : i32, i32, i32
  }
  func.func @transform_2(%arg0: i32) -> (i32, i32, i32) {
    %c0_i32 = arith.constant 0 : i32
    %c0_i32_0 = arith.constant 0 : i32
    %c0_i32_1 = arith.constant 0 : i32
    %c0_i32_2 = arith.constant 0 : i32
    return %c0_i32, %c0_i32_0, %c0_i32_1 : i32, i32, i32
  }
  func.func @transform_3(%arg0: i32) -> (i32, i32, i32) {
    %c0_i32 = arith.constant 0 : i32
    %c0_i32_0 = arith.constant 0 : i32
    %c0_i32_1 = arith.constant 0 : i32
    %c0_i32_2 = arith.constant 0 : i32
    return %c0_i32, %c0_i32_0, %c0_i32_1 : i32, i32, i32
  }
  func.func @transform_4(%arg0: i32) -> (i32, i32, i32) {
    %c0_i32 = arith.constant 0 : i32
    %c0_i32_0 = arith.constant 0 : i32
    %c0_i32_1 = arith.constant 0 : i32
    return %arg0, %c0_i32, %c0_i32_0 : i32, i32, i32
  }
}

</mosaic_0001>

<llo_original>
// kernel: residual_block_forward.1
$region0: #{residual_block_forward.1}
  #allocation0 [shape = 'u32[]', space=smem, size = 0x4, offset = 0x4, fixed_abs, tag = 'smem constant byte address 0x4 - core index']
  #allocation1 [shape = 'u32[144,128]{1,0:T(1,128)}', space=vmem, size = 0x12000, scoped, tag = 'internal scratch']
  %s0 = inlined_call_operand.vmem [shape: s32[2,256], index: 0, kind: input, shape index: {}]
  %s1 = inlined_call_operand.vmem [shape: f32[2,8,256], index: 1, kind: input, shape index: {}]
  %s2 = inlined_call_operand.vmem [shape: f32[9,8,8], index: 2, kind: input, shape index: {}]
  %s3 = inlined_call_operand.vmem [shape: f32[9,8,8], index: 3, kind: input, shape index: {}]
  %s4 = inlined_call_operand.vmem [shape: f32[2,8,256], index: 4, kind: output, shape index: {}]
  %s5 = sld [smem:[#allocation0]]
  $region49: #{residual_block_forward.1} parent=0
    _
  %s7 = ssub.s32 1, %s5
  %s8 = scalar_select 0, %s7, %s5
  loop: start=0, step=1, limit=4
  $region2: #{residual_block_forward.1} parent=0 // loop_pre_header
    _
  $region3: #{residual_block_forward.1} parent=0 // loop_header
    %s10 = sphi 0, %s14
    %p11 = scmp.ge.s32.totalorder %s10, 4
    %s18 = sphi 0, %s18
    %s20 = sphi 0, %s18
    %s21 = sphi 0, %s20
    %s35 = sphi 0, %s21
    %s41 = sphi 0, %s43
    %s44 = sphi 0, %s41
    %s45 = sphi 0, %s44
    %s61 = sphi 0, %s45
    %s65 = sphi 0, %s65
    %s67 = sphi 0, %s65
    %s68 = sphi 0, %s67
    %s82 = sphi 0, %s68
    %s86 = sphi 0, %s86
    %s88 = sphi 0, %s86
    %s89 = sphi 0, %s88
    %s103 = sphi 0, %s89
    %s109 = sphi 0, %s111
    %s112 = sphi 0, %s109
    %s113 = sphi 0, %s112
    %s129 = sphi 0, %s113
  $region4: #{residual_block_forward.1} parent=0 // loop_header_branch
    %13 = sbr.rel (%p11) target = $region8
  $region5: #{residual_block_forward.1} parent=0 // loop_body
    %s15 = ssub.s32 %s10, 1
    %s16 = ssub.s32 %s10, 2
    %s17 = sadd.s32 %s10, 1
    %s19 = sadd.s32 %s18, 1
    %p22 = scmp.eq.s32.totalorder %s10, 1
    %p23 = scmp.ne.s32.totalorder %s18, %s20
    %p24 = scmp.eq.s32.totalorder %s10, 0
    %p25 = por %p23, %p24
    %p26 = scmp.ne.s32.totalorder %s18, %s20
    %p27 = scmp.eq.s32.totalorder %s15, 1
    %p28 = por %p26, %p27
    %p29 = scmp.ne.s32.totalorder %s20, %s21
    %p30 = scmp.eq.s32.totalorder %s15, 0
    %p31 = por %p29, %p30
    %p32 = scmp.ne.s32.totalorder %s20, %s21
    %p33 = scmp.eq.s32.totalorder %s16, 1
    %p34 = por %p32, %p33
    %p36 = scmp.ne.s32.totalorder %s21, %s35
    %p37 = scmp.eq.s32.totalorder %s16, 0
    %p38 = por %p36, %p37
    %s39 = ssub.s32 %s10, %s17
    %p40 = scmp.eq.s32.totalorder %s39, 0
    %s42 = sadd.s32 %s41, 1
    %s43 = scalar_select %p40, %s41, %s42
    %p46 = pneg %p40
    %p47 = scmp.eq.s32.totalorder %s10, 1
    %p48 = por %p46, %p47
    %p49 = scmp.ne.s32.totalorder %s41, %s44
    %p50 = scmp.eq.s32.totalorder %s10, 0
    %p51 = por %p49, %p50
    %p52 = scmp.ne.s32.totalorder %s41, %s44
    %p53 = scmp.eq.s32.totalorder %s15, 1
    %p54 = por %p52, %p53
    %p55 = scmp.ne.s32.totalorder %s44, %s45
    %p56 = scmp.eq.s32.totalorder %s15, 0
    %p57 = por %p55, %p56
    %p58 = scmp.ne.s32.totalorder %s44, %s45
    %p59 = scmp.eq.s32.totalorder %s16, 1
    %p60 = por %p58, %p59
    %p62 = scmp.ne.s32.totalorder %s45, %s61
    %p63 = scmp.eq.s32.totalorder %s16, 0
    %p64 = por %p62, %p63
    %s66 = sadd.s32 %s65, 1
    %p69 = scmp.eq.s32.totalorder %s10, 1
    %p70 = scmp.ne.s32.totalorder %s65, %s67
    %p71 = scmp.eq.s32.totalorder %s10, 0
    %p72 = por %p70, %p71
    %p73 = scmp.ne.s32.totalorder %s65, %s67
    %p74 = scmp.eq.s32.totalorder %s15, 1
    %p75 = por %p73, %p74
    %p76 = scmp.ne.s32.totalorder %s67, %s68
    %p77 = scmp.eq.s32.totalorder %s15, 0
    %p78 = por %p76, %p77
    %p79 = scmp.ne.s32.totalorder %s67, %s68
    %p80 = scmp.eq.s32.totalorder %s16, 1
    %p81 = por %p79, %p80
    %p83 = scmp.ne.s32.totalorder %s68, %s82
    %p84 = scmp.eq.s32.totalorder %s16, 0
    %p85 = por %p83, %p84
    %s87 = sadd.s32 %s86, 1
    %p90 = scmp.eq.s32.totalorder %s10, 1
    %p91 = scmp.ne.s32.totalorder %s86, %s88
    %p92 = scmp.eq.s32.totalorder %s10, 0
    %p93 = por %p91, %p92
    %p94 = scmp.ne.s32.totalorder %s86, %s88
    %p95 = scmp.eq.s32.totalorder %s15, 1
    %p96 = por %p94, %p95
    %p97 = scmp.ne.s32.totalorder %s88, %s89
    %p98 = scmp.eq.s32.totalorder %s15, 0
    %p99 = por %p97, %p98
    %p100 = scmp.ne.s32.totalorder %s88, %s89
    %p101 = scmp.eq.s32.totalorder %s16, 1
    %p102 = por %p100, %p101
    %p104 = scmp.ne.s32.totalorder %s89, %s103
    %p105 = scmp.eq.s32.totalorder %s16, 0
    %p106 = por %p104, %p105
    %s107 = ssub.s32 %s10, %s17
    %p108 = scmp.eq.s32.totalorder %s107, 0
    %s110 = sadd.s32 %s109, 1
    %s111 = scalar_select %p108, %s109, %s110
    %p114 = pneg %p108
    %p115 = scmp.eq.s32.totalorder %s10, 1
    %p116 = por %p114, %p115
    %p117 = scmp.ne.s32.totalorder %s109, %s112
    %p118 = scmp.eq.s32.totalorder %s10, 0
    %p119 = por %p117, %p118
    %p120 = scmp.ne.s32.totalorder %s109, %s112
    %p121 = scmp.eq.s32.totalorder %s15, 1
    %p122 = por %p120, %p121
    %p123 = scmp.ne.s32.totalorder %s112, %s113
    %p124 = scmp.eq.s32.totalorder %s15, 0
    %p125 = por %p123, %p124
    %p126 = scmp.ne.s32.totalorder %s112, %s113
    %p127 = scmp.eq.s32.totalorder %s16, 1
    %p128 = por %p126, %p127
    %p130 = scmp.ne.s32.totalorder %s113, %s129
    %p131 = scmp.eq.s32.totalorder %s16, 0
    %p132 = por %p130, %p131
    %p133 = scmp.le.s32.totalorder 1, %s10
    %p134 = scmp.lt.s32.totalorder %s10, 3
    %p135 = pnand %p133, %p134
    %p136 = pneg %p135
    // Predicated region
    $region9: #{residual_block_forward.1} parent=5 // pred_check
      _
    $region10: #{residual_block_forward.1} parent=5 // pred_check_branch
      %138 = sbr.rel (%p135) target = $region12
    $region11: #{residual_block_forward.1} parent=5 // pred_region
      %s139 = ssub.s32 %s10, 1
      // Predicated region
      $region13: #{residual_block_forward.1} parent=11 // pred_check
        %p140 = pneg %p31
      $region14: #{residual_block_forward.1} parent=11 // pred_check_branch
        %142 = sbr.rel (%p140) target = $region16
      $region15: #{residual_block_forward.1} parent=11 // pred_region
        _
      $region16: #{residual_block_forward.1} parent=11 // pred_fallthru
        _
      // Predicated region
      $region17: #{residual_block_forward.1} parent=11 // pred_check
        %p143 = pneg %p78
      $region18: #{residual_block_forward.1} parent=11 // pred_check_branch
        %145 = sbr.rel (%p143) target = $region20
      $region19: #{residual_block_forward.1} parent=11 // pred_region
        _
      $region20: #{residual_block_forward.1} parent=11 // pred_fallthru
        _
      // Predicated region
      $region21: #{residual_block_forward.1} parent=11 // pred_check
        %p146 = pneg %p99
      $region22: #{residual_block_forward.1} parent=11 // pred_check_branch
        %148 = sbr.rel (%p146) target = $region24
      $region23: #{residual_block_forward.1} parent=11 // pred_region
        _
      $region24: #{residual_block_forward.1} parent=11 // pred_fallthru
        _
    $region12: #{residual_block_forward.1} parent=5 // pred_fallthru
      _
    %p149 = scmp.lt.s32.totalorder %s10, 2
    // Predicated region
    $region25: #{residual_block_forward.1} parent=5 // pred_check
      %p150 = pneg %p149
    $region26: #{residual_block_forward.1} parent=5 // pred_check_branch
      %152 = sbr.rel (%p150) target = $region28
    $region27: #{residual_block_forward.1} parent=5 // pred_region
      // Predicated region
      $region29: #{residual_block_forward.1} parent=27 // pred_check
        %p153 = pneg %p51
      $region30: #{residual_block_forward.1} parent=27 // pred_check_branch
        %155 = sbr.rel (%p153) target = $region32
      $region31: #{residual_block_forward.1} parent=27 // pred_region
        %p156 = scmp.lt.s32.totalorder %s10, 1
        %s157 = scalar_select %p156, %s10, 1
        %s158 = smul.addr %s157, 2
        %s159 = smul.addr %s158, 8
        %s160 = scalar_lea.vmem %s1, %s159
      $region32: #{residual_block_forward.1} parent=27 // pred_fallthru
        _
    $region28: #{residual_block_forward.1} parent=5 // pred_fallthru
      _
    %p161 = scmp.le.s32.totalorder 1, %s10
    %p162 = scmp.lt.s32.totalorder %s10, 3
    %p163 = pnand %p161, %p162
    %p164 = pneg %p163
    // Predicated region
    $region33: #{residual_block_forward.1} parent=5 // pred_check
      _
    $region34: #{residual_block_forward.1} parent=5 // pred_check_branch
      %166 = sbr.rel (%p163) target = $region36
    $region35: #{residual_block_forward.1} parent=5 // pred_region
      %s167 = ssub.s32 %s10, 1
      %p168 = pneg %p31
      %p169 = pneg %p28
      %p170 = scmp.lt.s32.totalorder %s15, 1
      %s171 = scalar_select %p170, %s15, 1
      %s172 = smul.addr %s171, 2
      %s173 = smul.addr %s172, 8
      %s174 = scalar_lea.vmem %s1, %s173
      %p175 = pneg %p57
      %p176 = pneg %p54
      %p177 = pneg %p78
      %p178 = pneg %p75
      %p179 = pneg %p99
      %p180 = pneg %p96
      %p181 = pneg %p125
      %p182 = pneg %p122
      %p183 = scmp.lt.s32.totalorder %s15, 1
      %s184 = scalar_select %p183, %s15, 1
      %s185 = smul.addr %s184, 2
      %s186 = smul.addr %s185, 8
      %s187 = scalar_lea.vmem %s4, %s186
      %p188 = scmp.lt.s32.totalorder %s15, 1
      %s189 = scalar_select %p188, %s15, 1
      %s190 = smul.addr %s189, 2
      %s191 = smul.addr %s190, 8
      %s192 = scalar_lea.vmem %s1, %s191
      %p193 = scmp.lt.s32.totalorder %s15, 1
      %s194 = scalar_select %p193, %s15, 1
      %s195 = smul.addr %s194, 2
      %s196 = smul.addr %s195, 8
      %s197 = scalar_lea.vmem %s4, %s196
      %v198 = vld [vmem:[%s0] ss:$2 sm:$0x3]
      %s199 = scalar_lea.vmem %s0, 1
      %v200 = vld [vmem:[%s199] ss:$2 sm:$0x3]
      %vm201 = vcmp.eq.s32.totalorder %v198, 0
      %vm202 = vcmp.eq.s32.totalorder %v198, 15
      %vm203 = vcmp.eq.s32.totalorder %v200, 0
      %vm204 = vcmp.eq.s32.totalorder %v200, 15
      %v205 = vld [vmem:[%s192] sm:$0xff]
      %v206 = vld [vmem:[%s192 + $0x8] sm:$0xff]
      %207 = vrot.lane.b32.xlu0 %v205, 16
      %v208 = vpop.permute.xlu0 %207
      %209 = vrot.lane.b32.xlu0 %v206, 16
      %v210 = vpop.permute.xlu0 %209
      %v211 = vlaneseq
      %v212 = vand.u32 %v211, 127
      %vm213 = vcmp.lt.s32.totalorder %v212, 16
      %v214 = vsel %vm213, %v208, %v210
      %v215 = vsel %vm213, %v210, %v208
      %216 = vrot.lane.b32.xlu0 %v205, 112
      %v217 = vpop.permute.xlu0 %216
      %218 = vrot.lane.b32.xlu0 %v206, 112
      %v219 = vpop.permute.xlu0 %218
      %vm220 = vcmp.lt.s32.totalorder %v212, 112
      %v221 = vsel %vm220, %v217, %v219
      %v222 = vsel %vm220, %v219, %v217
      %v223 = vsel %vm203, 1, 0
      %v224 = vlaneseq
      %v225 = vshrl.u32 %v224, 7
      %v226 = vsub.s32 0, %v225
      %v227 = vrot.slane %v223, %v226
      %v228 = vlaneseq
      %v229 = vshrl.u32 %v228, 7
      %v230 = vsub.s32 1, %v229
      %v231 = vrot.slane %v223, %v230
      %vm232 = vcmp.eq.s32.totalorder %v227, 1
      %vm233 = vcmp.eq.s32.totalorder %v231, 1
      %v234 = vsel %vm232, %v221, %v215
      %v235 = vsel %vm233, %v222, %v214
      %v236 = vsel %vm204, 1, 0
      %v237 = vlaneseq
      %v238 = vshrl.u32 %v237, 7
      %v239 = vsub.s32 0, %v238
      %v240 = vrot.slane %v236, %v239
      %v241 = vlaneseq
      %v242 = vshrl.u32 %v241, 7
      %v243 = vsub.s32 1, %v242
      %v244 = vrot.slane %v236, %v243
      %vm245 = vcmp.eq.s32.totalorder %v240, 1
      %vm246 = vcmp.eq.s32.totalorder %v244, 1
      %v247 = vsel %vm245, %v215, %v221
      %v248 = vsel %vm246, %v214, %v222
      %249 = vrot.lane.b32.xlu0 %v234, 1
      %v250 = vpop.permute.xlu0 %249
      %251 = vrot.lane.b32.xlu0 %v235, 1
      %v252 = vpop.permute.xlu0 %251
      %vm253 = vcmp.lt.s32.totalorder %v212, 1
      %v254 = vsel %vm253, %v250, %v252
      %v255 = vsel %vm253, %v252, %v250
      %256 = vrot.lane.b32.xlu0 %v234, 127
      %v257 = vpop.permute.xlu0 %256
      %258 = vrot.lane.b32.xlu0 %v235, 127
      %v259 = vpop.permute.xlu0 %258
      %vm260 = vcmp.lt.s32.totalorder %v212, 127
      %v261 = vsel %vm260, %v257, %v259
      %v262 = vsel %vm260, %v259, %v257
      %v263 = vsel %vm201, 1, 0
      %v264 = vlaneseq
      %v265 = vshrl.u32 %v264, 7
      %v266 = vsub.s32 0, %v265
      %v267 = vrot.slane %v263, %v266
      %v268 = vlaneseq
      %v269 = vshrl.u32 %v268, 7
      %v270 = vsub.s32 1, %v269
      %v271 = vrot.slane %v263, %v270
      %vm272 = vcmp.eq.s32.totalorder %v267, 1
      %vm273 = vcmp.eq.s32.totalorder %v271, 1
      %v274 = vsel %vm272, %v261, %v255
      %v275 = vsel %vm273, %v262, %v254
      %v276 = vsel %vm202, 1, 0
      %v277 = vlaneseq
      %v278 = vshrl.u32 %v277, 7
      %v279 = vsub.s32 0, %v278
      %v280 = vrot.slane %v276, %v279
      %v281 = vlaneseq
      %v282 = vshrl.u32 %v281, 7
      %v283 = vsub.s32 1, %v282
      %v284 = vrot.slane %v276, %v283
      %vm285 = vcmp.eq.s32.totalorder %v280, 1
      %vm286 = vcmp.eq.s32.totalorder %v284, 1
      %v287 = vsel %vm285, %v255, %v261
      %v288 = vsel %vm286, %v254, %v262
      %v289 = vld [vmem:[%s2] sm:$0xff]
      %s290 = scalar_lea.vmem %s2, 8
      %v291 = vld [vmem:[%s290] sm:$0xff]
      %vm292 = vcmask 64512
      %v294 = vsel %vm292, %v291, 0
      %v296 = vand.u32 %v235, 4294901760
      %297 = vmatprep.subr.mxu0 %v296
      %v298 = vand.u32 %v234, 4294901760
      %299 = vmatpush1.msra.mxu0 %v298
      %300 = vmatprep.subr.mxu0 0.0
      %301 = vmatpush1.msra.mxu0 0.0
      %302 = vmatprep.subr.mxu0 0.0
      %303 = vmatpush1.msra.mxu0 0.0
      %304 = vmatprep.subr.mxu0 0.0
      %305 = vmatpush1.msra.mxu0 0.0
      %306 = vmatprep.subr.mxu0 0.0
      %307 = vmatpush1.msra.mxu0 0.0
      %308 = vmatprep.subr.mxu0 0.0
      %309 = vmatpush1.msra.mxu0 0.0
      %310 = vmatprep.subr.mxu0 0.0
      %311 = vmatpush1.msra.mxu0 0.0
      %312 = vmatprep.subr.mxu0 0.0
      %313 = vmatpush1.msra.mxu0 0.0
      %314 = vmatprep.subr.mxu0 0.0
      %315 = vmatpush1.msra.mxu0 0.0
      %316 = vmatprep.subr.mxu0 0.0
      %317 = vmatpush1.msra.mxu0 0.0
      %318 = vmatprep.subr.mxu0 0.0
      %319 = vmatpush1.msra.mxu0 0.0
      %320 = vmatprep.subr.mxu0 0.0
      %321 = vmatpush1.msra.mxu0 0.0
      %322 = vmatprep.subr.mxu0 0.0
      %323 = vmatpush1.msra.mxu0 0.0
      %324 = vmatprep.subr.mxu0 0.0
      %325 = vmatpush1.msra.mxu0 0.0
      %326 = vmatprep.subr.mxu0 0.0
      %327 = vmatpush1.msra.mxu0 0.0
      %328 = vmatprep.subr.mxu0 0.0
      %329 = vmatpush1.msra.mxu0 0.0
      %330 = vmatprep.subr.mxu0 0.0
      %331 = vmatpush1.msra.mxu0 0.0
      %332 = vmatprep.subr.mxu0 0.0
      %333 = vmatpush1.msra.mxu0 0.0
      %334 = vmatprep.subr.mxu0 0.0
      %335 = vmatpush1.msra.mxu0 0.0
      %336 = vmatprep.subr.mxu0 0.0
      %337 = vmatpush1.msra.mxu0 0.0
      %338 = vmatprep.subr.mxu0 0.0
      %339 = vmatpush1.msra.mxu0 0.0
      %340 = vmatprep.subr.mxu0 0.0
      %341 = vmatpush1.msra.mxu0 0.0
      %342 = vmatprep.subr.mxu0 0.0
      %343 = vmatpush1.msra.mxu0 0.0
      %344 = vmatprep.subr.mxu0 0.0
      %345 = vmatpush1.msra.mxu0 0.0
      %346 = vmatprep.subr.mxu0 0.0
      %347 = vmatpush1.msra.mxu0 0.0
      %348 = vmatprep.subr.mxu0 0.0
      %349 = vmatpush1.msra.mxu0 0.0
      %350 = vmatprep.subr.mxu0 0.0
      %351 = vmatpush1.msra.mxu0 0.0
      %352 = vmatprep.subr.mxu0 0.0
      %353 = vmatpush1.msra.mxu0 0.0
      %354 = vmatprep.subr.mxu0 0.0
      %355 = vmatpush1.msra.mxu0 0.0
      %356 = vmatprep.subr.mxu0 0.0
      %357 = vmatpush1.msra.mxu0 0.0
      %358 = vmatprep.subr.mxu0 0.0
      %359 = vmatpush1.msra.mxu0 0.0
      %360 = vmatprep.subr.mxu0 0.0
      %361 = vmatpush1.msra.mxu0 0.0
      %362 = vmatprep.mubr.f32.mxu0 0.0
      %v363 = vand.u32 %v294, 4294901760
      %v364 = vsub.f32 %v294, %v363
      %v365 = vand.u32 %v364, 4294901760
      %v366 = vsub.f32 %v364, %v365
      %v367 = vand.u32 %v366, 4294901760
      %368 = vmatmul.mubr.f32.gmra.mrb[0].mxu0 %v367
      %v369 = vpop.f32.mrb[0].mxu0
      %v370 = vadd.f32 0.0, %v369
      %v371 = vpop.f32.mrb[0].mxu0
      %v372 = vadd.f32 0.0, %v371
      %373 = vdwg.mxu0
      %v374 = vand.u32 %v235, 4294901760
      %v375 = vsub.f32 %v235, %v374
      %v376 = vand.u32 %v375, 4294901760
      %v377 = vsub.f32 %v375, %v376
      %v378 = vand.u32 %v377, 4294901760
      %379 = vmatprep.subr.mxu0 %v378
      %v380 = vand.u32 %v234, 4294901760
      %v381 = vsub.f32 %v234, %v380
      %v382 = vand.u32 %v381, 4294901760
      %v383 = vsub.f32 %v381, %v382
      %v384 = vand.u32 %v383, 4294901760
      %385 = vmatpush1.msra.mxu0 %v384
      %386 = vmatprep.subr.mxu0 0.0
      %387 = vmatpush1.msra.mxu0 0.0
      %388 = vmatprep.subr.mxu0 0.0
      %389 = vmatpush1.msra.mxu0 0.0
      %390 = vmatprep.subr.mxu0 0.0
      %391 = vmatpush1.msra.mxu0 0.0
      %392 = vmatprep.subr.mxu0 0.0
      %393 = vmatpush1.msra.mxu0 0.0
      %394 = vmatprep.subr.mxu0 0.0
      %395 = vmatpush1.msra.mxu0 0.0
      %396 = vmatprep.subr.mxu0 0.0
      %397 = vmatpush1.msra.mxu0 0.0
      %398 = vmatprep.subr.mxu0 0.0
      %399 = vmatpush1.msra.mxu0 0.0
      %400 = vmatprep.subr.mxu0 0.0
      %401 = vmatpush1.msra.mxu0 0.0
      %402 = vmatprep.subr.mxu0 0.0
      %403 = vmatpush1.msra.mxu0 0.0
      %404 = vmatprep.subr.mxu0 0.0
      %405 = vmatpush1.msra.mxu0 0.0
      %406 = vmatprep.subr.mxu0 0.0
      %407 = vmatpush1.msra.mxu0 0.0
      %408 = vmatprep.subr.mxu0 0.0
      %409 = vmatpush1.msra.mxu0 0.0
      %410 = vmatprep.subr.mxu0 0.0
      %411 = vmatpush1.msra.mxu0 0.0
      %412 = vmatprep.subr.mxu0 0.0
      %413 = vmatpush1.msra.mxu0 0.0
      %414 = vmatprep.subr.mxu0 0.0
      %415 = vmatpush1.msra.mxu0 0.0
      %416 = vmatprep.subr.mxu0 0.0
      %417 = vmatpush1.msra.mxu0 0.0
      %418 = vmatprep.subr.mxu0 0.0
      %419 = vmatpush1.msra.mxu0 0.0
      %420 = vmatprep.subr.mxu0 0.0
      %421 = vmatpush1.msra.mxu0 0.0
      %422 = vmatprep.subr.mxu0 0.0
      %423 = vmatpush1.msra.mxu0 0.0
      %424 = vmatprep.subr.mxu0 0.0
      %425 = vmatpush1.msra.mxu0 0.0
      %426 = vmatprep.subr.mxu0 0.0
      %427 = vmatpush1.msra.mxu0 0.0
      %428 = vmatprep.subr.mxu0 0.0
      %429 = vmatpush1.msra.mxu0 0.0
      %430 = vmatprep.subr.mxu0 0.0
      %431 = vmatpush1.msra.mxu0 0.0
      %432 = vmatprep.subr.mxu0 0.0
      %433 = vmatpush1.msra.mxu0 0.0
      %434 = vmatprep.subr.mxu0 0.0
      %435 = vmatpush1.msra.mxu0 0.0
      %436 = vmatprep.subr.mxu0 0.0
      %437 = vmatpush1.msra.mxu0 0.0
      %438 = vmatprep.subr.mxu0 0.0
      %439 = vmatpush1.msra.mxu0 0.0
      %440 = vmatprep.subr.mxu0 0.0
      %441 = vmatpush1.msra.mxu0 0.0
      %442 = vmatprep.subr.mxu0 0.0
      %443 = vmatpush1.msra.mxu0 0.0
      %444 = vmatprep.subr.mxu0 0.0
      %445 = vmatpush1.msra.mxu0 0.0
      %446 = vmatprep.subr.mxu0 0.0
      %447 = vmatpush1.msra.mxu0 0.0
      %448 = vmatprep.mubr.f32.mxu0 0.0
      %v449 = vand.u32 %v294, 4294901760
      %450 = vmatmul.mubr.f32.gmra.mrb[0].mxu0 %v449
      %v451 = vpop.f32.mrb[0].mxu0
      %v452 = vadd.f32 %v370, %v451
      %v453 = vpop.f32.mrb[0].mxu0
      %v454 = vadd.f32 %v372, %v453
      %455 = vdwg.mxu0
      %v456 = vand.u32 %v235, 4294901760
      %v457 = vsub.f32 %v235, %v456
      %458 = vmatprep.subr.mxu0 %v457
      %v459 = vand.u32 %v234, 4294901760
      %v460 = vsub.f32 %v234, %v459
      %461 = vmatpush1.msra.mxu0 %v460
      %462 = vmatprep.subr.mxu0 0.0
      %463 = vmatpush1.msra.mxu0 0.0
      %464 = vmatprep.subr.mxu0 0.0
      %465 = vmatpush1.msra.mxu0 0.0
      %466 = vmatprep.subr.mxu0 0.0
      %467 = vmatpush1.msra.mxu0 0.0
      %468 = vmatprep.subr.mxu0 0.0
      %469 = vmatpush1.msra.mxu0 0.0
      %470 = vmatprep.subr.mxu0 0.0
      %471 = vmatpush1.msra.mxu0 0.0
      %472 = vmatprep.subr.mxu0 0.0
      %473 = vmatpush1.msra.mxu0 0.0
      %474 = vmatprep.subr.mxu0 0.0
      %475 = vmatpush1.msra.mxu0 0.0
      %476 = vmatprep.subr.mxu0 0.0
      %477 = vmatpush1.msra.mxu0 0.0
      %478 = vmatprep.subr.mxu0 0.0
      %479 = vmatpush1.msra.mxu0 0.0
      %480 = vmatprep.subr.mxu0 0.0
      %481 = vmatpush1.msra.mxu0 0.0
      %482 = vmatprep.subr.mxu0 0.0
      %483 = vmatpush1.msra.mxu0 0.0
      %484 = vmatprep.subr.mxu0 0.0
      %485 = vmatpush1.msra.mxu0 0.0
      %486 = vmatprep.subr.mxu0 0.0
      %487 = vmatpush1.msra.mxu0 0.0
      %488 = vmatprep.subr.mxu0 0.0
      %489 = vmatpush1.msra.mxu0 0.0
      %490 = vmatprep.subr.mxu0 0.0
      %491 = vmatpush1.msra.mxu0 0.0
      %492 = vmatprep.subr.mxu0 0.0
      %493 = vmatpush1.msra.mxu0 0.0
      %494 = vmatprep.subr.mxu0 0.0
      %495 = vmatpush1.msra.mxu0 0.0
      %496 = vmatprep.subr.mxu0 0.0
      %497 = vmatpush1.msra.mxu0 0.0
      %498 = vmatprep.subr.mxu0 0.0
      %499 = vmatpush1.msra.mxu0 0.0
      %500 = vmatprep.subr.mxu0 0.0
      %501 = vmatpush1.msra.mxu0 0.0
      %502 = vmatprep.subr.mxu0 0.0
      %503 = vmatpush1.msra.mxu0 0.0
      %504 = vmatprep.subr.mxu0 0.0
      %505 = vmatpush1.msra.mxu0 0.0
      %506 = vmatprep.subr.mxu0 0.0
      %507 = vmatpush1.msra.mxu0 0.0
      %508 = vmatprep.subr.mxu0 0.0
      %509 = vmatpush1.msra.mxu0 0.0
      %510 = vmatprep.subr.mxu0 0.0
      %511 = vmatpush1.msra.mxu0 0.0
      %512 = vmatprep.subr.mxu0 0.0
      %513 = vmatpush1.msra.mxu0 0.0
      %514 = vmatprep.subr.mxu0 0.0
      %515 = vmatpush1.msra.mxu0 0.0
      %516 = vmatprep.subr.mxu0 0.0
      %517 = vmatpush1.msra.mxu0 0.0
      %518 = vmatprep.subr.mxu0 0.0
      %519 = vmatpush1.msra.mxu0 0.0
      %520 = vmatprep.subr.mxu0 0.0
      %521 = vmatpush1.msra.mxu0 0.0
      %522 = vmatprep.subr.mxu0 0.0
      %523 = vmatpush1.msra.mxu0 0.0
      %524 = vmatprep.mubr.f32.mxu0 0.0
      %v525 = vand.u32 %v294, 4294901760
      %v526 = vsub.f32 %v294, %v525
      %527 = vmatmul.mubr.f32.gmra.mrb[0].mxu0 %v526
      %v528 = vpop.f32.mrb[0].mxu0
      %v529 = vadd.f32 %v452, %v528
      %v530 = vpop.f32.mrb[0].mxu0
      %v531 = vadd.f32 %v454, %v530
      %532 = vdwg.mxu0
      %v533 = vand.u32 %v235, 4294901760
      %534 = vmatprep.subr.mxu0 %v533
      %v535 = vand.u32 %v234, 4294901760
      %536 = vmatpush1.msra.mxu0 %v535
      %537 = vmatprep.subr.mxu0 0.0
      %538 = vmatpush1.msra.mxu0 0.0
      %539 = vmatprep.subr.mxu0 0.0
      %540 = vmatpush1.msra.mxu0 0.0
      %541 = vmatprep.subr.mxu0 0.0
      %542 = vmatpush1.msra.mxu0 0.0
      %543 = vmatprep.subr.mxu0 0.0
      %544 = vmatpush1.msra.mxu0 0.0
      %545 = vmatprep.subr.mxu0 0.0
      %546 = vmatpush1.msra.mxu0 0.0
      %547 = vmatprep.subr.mxu0 0.0
      %548 = vmatpush1.msra.mxu0 0.0
      %549 = vmatprep.subr.mxu0 0.0
      %550 = vmatpush1.msra.mxu0 0.0
      %551 = vmatprep.subr.mxu0 0.0
      %552 = vmatpush1.msra.mxu0 0.0
      %553 = vmatprep.subr.mxu0 0.0
      %554 = vmatpush1.msra.mxu0 0.0
      %555 = vmatprep.subr.mxu0 0.0
      %556 = vmatpush1.msra.mxu0 0.0
      %557 = vmatprep.subr.mxu0 0.0
      %558 = vmatpush1.msra.mxu0 0.0
      %559 = vmatprep.subr.mxu0 0.0
      %560 = vmatpush1.msra.mxu0 0.0
      %561 = vmatprep.subr.mxu0 0.0
      %562 = vmatpush1.msra.mxu0 0.0
      %563 = vmatprep.subr.mxu0 0.0
      %564 = vmatpush1.msra.mxu0 0.0
      %565 = vmatprep.subr.mxu0 0.0
      %566 = vmatpush1.msra.mxu0 0.0
      %567 = vmatprep.subr.mxu0 0.0
      %568 = vmatpush1.msra.mxu0 0.0
      %569 = vmatprep.subr.mxu0 0.0
      %570 = vmatpush1.msra.mxu0 0.0
      %571 = vmatprep.subr.mxu0 0.0
      %572 = vmatpush1.msra.mxu0 0.0
      %573 = vmatprep.subr.mxu0 0.0
      %574 = vmatpush1.msra.mxu0 0.0
      %575 = vmatprep.subr.mxu0 0.0
      %576 = vmatpush1.msra.mxu0 0.0
      %577 = vmatprep.subr.mxu0 0.0
      %578 = vmatpush1.msra.mxu0 0.0
      %579 = vmatprep.subr.mxu0 0.0
      %580 = vmatpush1.msra.mxu0 0.0
      %581 = vmatprep.subr.mxu0 0.0
      %582 = vmatpush1.msra.mxu0 0.0
      %583 = vmatprep.subr.mxu0 0.0
      %584 = vmatpush1.msra.mxu0 0.0
      %585 = vmatprep.subr.mxu0 0.0
      %586 = vmatpush1.msra.mxu0 0.0
      %587 = vmatprep.subr.mxu0 0.0
      %588 = vmatpush1.msra.mxu0 0.0
      %589 = vmatprep.subr.mxu0 0.0
      %590 = vmatpush1.msra.mxu0 0.0
      %591 = vmatprep.subr.mxu0 0.0
      %592 = vmatpush1.msra.mxu0 0.0
      %593 = vmatprep.subr.mxu0 0.0
      %594 = vmatpush1.msra.mxu0 0.0
      %595 = vmatprep.subr.mxu0 0.0
      %596 = vmatpush1.msra.mxu0 0.0
      %597 = vmatprep.subr.mxu0 0.0
      %598 = vmatpush1.msra.mxu0 0.0
      %599 = vmatprep.mubr.f32.mxu0 0.0
      %v600 = vand.u32 %v294, 4294901760
      %v601 = vsub.f32 %v294, %v600
      %v602 = vand.u32 %v601, 4294901760
      %603 = vmatmul.mubr.f32.gmra.mrb[0].mxu0 %v602
      %v604 = vpop.f32.mrb[0].mxu0
      %v605 = vadd.f32 %v529, %v604
      %v606 = vpop.f32.mrb[0].mxu0
      %v607 = vadd.f32 %v531, %v606
      %608 = vdwg.mxu0
      %v609 = vand.u32 %v235, 4294901760
      %v610 = vsub.f32 %v235, %v609
      %v611 = vand.u32 %v610, 4294901760
      %612 = vmatprep.subr.mxu0 %v611
      %v613 = vand.u32 %v234, 4294901760
      %v614 = vsub.f32 %v234, %v613
      %v615 = vand.u32 %v614, 4294901760
      %616 = vmatpush1.msra.mxu0 %v615
      %617 = vmatprep.subr.mxu0 0.0
      %618 = vmatpush1.msra.mxu0 0.0
      %619 = vmatprep.subr.mxu0 0.0
      %620 = vmatpush1.msra.mxu0 0.0
      %621 = vmatprep.subr.mxu0 0.0
      %622 = vmatpush1.msra.mxu0 0.0
      %623 = vmatprep.subr.mxu0 0.0
      %624 = vmatpush1.msra.mxu0 0.0
      %625 = vmatprep.subr.mxu0 0.0
      %626 = vmatpush1.msra.mxu0 0.0
      %627 = vmatprep.subr.mxu0 0.0
      %628 = vmatpush1.msra.mxu0 0.0
      %629 = vmatprep.subr.mxu0 0.0
      %630 = vmatpush1.msra.mxu0 0.0
      %631 = vmatprep.subr.mxu0 0.0
      %632 = vmatpush1.msra.mxu0 0.0
      %633 = vmatprep.subr.mxu0 0.0
      %634 = vmatpush1.msra.mxu0 0.0
      %635 = vmatprep.subr.mxu0 0.0
      %636 = vmatpush1.msra.mxu0 0.0
      %637 = vmatprep.subr.mxu0 0.0
      %638 = vmatpush1.msra.mxu0 0.0
      %639 = vmatprep.subr.mxu0 0.0
      %640 = vmatpush1.msra.mxu0 0.0
      %641 = vmatprep.subr.mxu0 0.0
      %642 = vmatpush1.msra.mxu0 0.0
      %643 = vmatprep.subr.mxu0 0.0
      %644 = vmatpush1.msra.mxu0 0.0
      %645 = vmatprep.subr.mxu0 0.0
      %646 = vmatpush1.msra.mxu0 0.0
      %647 = vmatprep.subr.mxu0 0.0
      %648 = vmatpush1.msra.mxu0 0.0
      %649 = vmatprep.subr.mxu0 0.0
      %650 = vmatpush1.msra.mxu0 0.0
      %651 = vmatprep.subr.mxu0 0.0
      %652 = vmatpush1.msra.mxu0 0.0
      %653 = vmatprep.subr.mxu0 0.0
      %654 = vmatpush1.msra.mxu0 0.0
      %655 = vmatprep.subr.mxu0 0.0
      %656 = vmatpush1.msra.mxu0 0.0
      %657 = vmatprep.subr.mxu0 0.0
      %658 = vmatpush1.msra.mxu0 0.0
      %659 = vmatprep.subr.mxu0 0.0
      %660 = vmatpush1.msra.mxu0 0.0
      %661 = vmatprep.subr.mxu0 0.0
      %662 = vmatpush1.msra.mxu0 0.0
      %663 = vmatprep.subr.mxu0 0.0
      %664 = vmatpush1.msra.mxu0 0.0
      %665 = vmatprep.subr.mxu0 0.0
      %666 = vmatpush1.msra.mxu0 0.0
      %667 = vmatprep.subr.mxu0 0.0
      %668 = vmatpush1.msra.mxu0 0.0
      %669 = vmatprep.subr.mxu0 0.0
      %670 = vmatpush1.msra.mxu0 0.0
      %671 = vmatprep.subr.mxu0 0.0
      %672 = vmatpush1.msra.mxu0 0.0
      %673 = vmatprep.subr.mxu0 0.0
      %674 = vmatpush1.msra.mxu0 0.0
      %675 = vmatprep.subr.mxu0 0.0
      %676 = vmatpush1.msra.mxu0 0.0
      %677 = vmatprep.subr.mxu0 0.0
      %678 = vmatpush1.msra.mxu0 0.0
      %679 = vmatprep.mubr.f32.mxu0 0.0
      %v680 = vand.u32 %v294, 4294901760
      %681 = vmatmul.mubr.f32.gmra.mrb[0].mxu0 %v680
      %v682 = vpop.f32.mrb[0].mxu0
      %v683 = vadd.f32 %v605, %v682
      %v684 = vpop.f32.mrb[0].mxu0
      %v685 = vadd.f32 %v607, %v684
      %686 = vdwg.mxu0
      %v687 = vand.u32 %v235, 4294901760
      %688 = vmatprep.subr.mxu0 %v687
      %v689 = vand.u32 %v234, 4294901760
      %690 = vmatpush1.msra.mxu0 %v689
      %691 = vmatprep.subr.mxu0 0.0
      %692 = vmatpush1.msra.mxu0 0.0
      %693 = vmatprep.subr.mxu0 0.0
      %694 = vmatpush1.msra.mxu0 0.0
      %695 = vmatprep.subr.mxu0 0.0
      %696 = vmatpush1.msra.mxu0 0.0
      %697 = vmatprep.subr.mxu0 0.0
      %698 = vmatpush1.msra.mxu0 0.0
      %699 = vmatprep.subr.mxu0 0.0
      %700 = vmatpush1.msra.mxu0 0.0
      %701 = vmatprep.subr.mxu0 0.0
      %702 = vmatpush1.msra.mxu0 0.0
      %703 = vmatprep.subr.mxu0 0.0
      %704 = vmatpush1.msra.mxu0 0.0
      %705 = vmatprep.subr.mxu0 0.0
      %706 = vmatpush1.msra.mxu0 0.0
      %707 = vmatprep.subr.mxu0 0.0
      %708 = vmatpush1.msra.mxu0 0.0
      %709 = vmatprep.subr.mxu0 0.0
      %710 = vmatpush1.msra.mxu0 0.0
      %711 = vmatprep.subr.mxu0 0.0
      %712 = vmatpush1.msra.mxu0 0.0
      %713 = vmatprep.subr.mxu0 0.0
      %714 = vmatpush1.msra.mxu0 0.0
      %715 = vmatprep.subr.mxu0 0.0
      %716 = vmatpush1.msra.mxu0 0.0
      %717 = vmatprep.subr.mxu0 0.0
      %718 = vmatpush1.msra.mxu0 0.0
      %719 = vmatprep.subr.mxu0 0.0
      %720 = vmatpush1.msra.mxu0 0.0
      %721 = vmatprep.subr.mxu0 0.0
      %722 = vmatpush1.msra.mxu0 0.0
      %723 = vmatprep.subr.mxu0 0.0
      %724 = vmatpush1.msra.mxu0 0.0
      %725 = vmatprep.subr.mxu0 0.0
      %726 = vmatpush1.msra.mxu0 0.0
      %727 = vmatprep.subr.mxu0 0.0
      %728 = vmatpush1.msra.mxu0 0.0
      %729 = vmatprep.subr.mxu0 0.0
      %730 = vmatpush1.msra.mxu0 0.0
      %731 = vmatprep.subr.mxu0 0.0
      %732 = vmatpush1.msra.mxu0 0.0
      %733 = vmatprep.subr.mxu0 0.0
      %734 = vmatpush1.msra.mxu0 0.0
      %735 = vmatprep.subr.mxu0 0.0
      %736 = vmatpush1.msra.mxu0 0.0
      %737 = vmatprep.subr.mxu0 0.0
      %738 = vmatpush1.msra.mxu0 0.0
      %739 = vmatprep.subr.mxu0 0.0
      %740 = vmatpush1.msra.mxu0 0.0
      %741 = vmatprep.subr.mxu0 0.0
      %742 = vmatpush1.msra.mxu0 0.0
      %743 = vmatprep.subr.mxu0 0.0
      %744 = vmatpush1.msra.mxu0 0.0
      %745 = vmatprep.subr.mxu0 0.0
      %746 = vmatpush1.msra.mxu0 0.0
      %747 = vmatprep.subr.mxu0 0.0
      %748 = vmatpush1.msra.mxu0 0.0
      %749 = vmatprep.subr.mxu0 0.0
      %750 = vmatpush1.msra.mxu0 0.0
      %751 = vmatprep.subr.mxu0 0.0
      %752 = vmatpush1.msra.mxu0 0.0
      %753 = vmatprep.mubr.f32.mxu0 0.0
      %v754 = vand.u32 %v294, 4294901760
      %755 = vmatmul.mubr.f32.gmra.mrb[0].mxu0 %v754
      %v756 = vpop.f32.mrb[0].mxu0
      %v757 = vadd.f32 %v683, %v756
      %v758 = vpop.f32.mrb[0].mxu0
      %v759 = vadd.f32 %v685, %v758
      %760 = vdwg.mxu0
      %v762 = vsel %vm292, %v289, 0
      %v764 = vand.u32 %v275, 4294901760
      %765 = vmatprep.subr.mxu0 %v764
      %v766 = vand.u32 %v274, 4294901760
      %767 = vmatpush1.msra.mxu0 %v766
      %768 = vmatprep.subr.mxu0 0.0
      %769 = vmatpush1.msra.mxu0 0.0
      %770 = vmatprep.subr.mxu0 0.0
      %771 = vmatpush1.msra.mxu0 0.0
      %772 = vmatprep.subr.mxu0 0.0
      %773 = vmatpush1.msra.mxu0 0.0
      %774 = vmatprep.subr.mxu0 0.0
      %775 = vmatpush1.msra.mxu0 0.0
      %776 = vmatprep.subr.mxu0 0.0
      %777 = vmatpush1.msra.mxu0 0.0
      %778 = vmatprep.subr.mxu0 0.0
      %779 = vmatpush1.msra.mxu0 0.0
      %780 = vmatprep.subr.mxu0 0.0
      %781 = vmatpush1.msra.mxu0 0.0
      %782 = vmatprep.subr.mxu0 0.0
      %783 = vmatpush1.msra.mxu0 0.0
      %784 = vmatprep.subr.mxu0 0.0
      %785 = vmatpush1.msra.mxu0 0.0
      %786 = vmatprep.subr.mxu0 0.0
      %787 = vmatpush1.msra.mxu0 0.0
      %788 = vmatprep.subr.mxu0 0.0
      %789 = vmatpush1.msra.mxu0 0.0
      %790 = vmatprep.subr.mxu0 0.0
      %791 = vmatpush1.msra.mxu0 0.0
      %792 = vmatprep.subr.mxu0 0.0
      %793 = vmatpush1.msra.mxu0 0.0
      %794 = vmatprep.subr.mxu0 0.0
      %795 = vmatpush1.msra.mxu0 0.0
      %796 = vmatprep.subr.mxu0 0.0
      %797 = vmatpush1.msra.mxu0 0.0
      %798 = vmatprep.subr.mxu0 0.0
      %799 = vmatpush1.msra.mxu0 0.0
      %800 = vmatprep.subr.mxu0 0.0
      %801 = vmatpush1.msra.mxu0 0.0
      %802 = vmatprep.subr.mxu0 0.0
      %803 = vmatpush1.msra.mxu0 0.0
      %804 = vmatprep.subr.mxu0 0.0
      %805 = vmatpush1.msra.mxu0 0.0
      %806 = vmatprep.subr.mxu0 0.0
      %807 = vmatpush1.msra.mxu0 0.0
      %808 = vmatprep.subr.mxu0 0.0
      %809 = vmatpush1.msra.mxu0 0.0
      %810 = vmatprep.subr.mxu0 0.0
      %811 = vmatpush1.msra.mxu0 0.0
      %812 = vmatprep.subr.mxu0 0.0
      %813 = vmatpush1.msra.mxu0 0.0
      %814 = vmatprep.subr.mxu0 0.0
      %815 = vmatpush1.msra.mxu0 0.0
      %816 = vmatprep.subr.mxu0 0.0
      %817 = vmatpush1.msra.mxu0 0.0
      %818 = vmatprep.subr.mxu0 0.0
      %819 = vmatpush1.msra.mxu0 0.0
      %820 = vmatprep.subr.mxu0 0.0
      %821 = vmatpush1.msra.mxu0 0.0
      %822 = vmatprep.subr.mxu0 0.0
      %823 = vmatpush1.msra.mxu0 0.0
      %824 = vmatprep.subr.mxu0 0.0
      %825 = vmatpush1.msra.mxu0 0.0
      %826 = vmatprep.subr.mxu0 0.0
      %827 = vmatpush1.msra.mxu0 0.0
      %828 = vmatprep.subr.mxu0 0.0
      %829 = vmatpush1.msra.mxu0 0.0
      %830 = vmatprep.mubr.f32.mxu0 0.0
      %v831 = vand.u32 %v762, 4294901760
      %v832 = vsub.f32 %v762, %v831
      %v833 = vand.u32 %v832, 4294901760
      %v834 = vsub.f32 %v832, %v833
      %v835 = vand.u32 %v834, 4294901760
      %836 = vmatmul.mubr.f32.gmra.mrb[0].mxu0 %v835
      %v837 = vpop.f32.mrb[0].mxu0
      %v838 = vadd.f32 %v757, %v837
      %v839 = vpop.f32.mrb[0].mxu0
      %v840 = vadd.f32 %v759, %v839
      %841 = vdwg.mxu0
      %v842 = vand.u32 %v275, 4294901760
      %v843 = vsub.f32 %v275, %v842
      %v844 = vand.u32 %v843, 4294901760
      %v845 = vsub.f32 %v843, %v844
      %v846 = vand.u32 %v845, 4294901760
      %847 = vmatprep.subr.mxu0 %v846
      %v848 = vand.u32 %v274, 4294901760
      %v849 = vsub.f32 %v274, %v848
      %v850 = vand.u32 %v849, 4294901760
      %v851 = vsub.f32 %v849, %v850
      %v852 = vand.u32 %v851, 4294901760
      %853 = vmatpush1.msra.mxu0 %v852
      %854 = vmatprep.subr.mxu0 0.0
      %855 = vmatpush1.msra.mxu0 0.0
      %856 = vmatprep.subr.mxu0 0.0
      %857 = vmatpush1.msra.mxu0 0.0
      %858 = vmatprep.subr.mxu0 0.0
      %859 = vmatpush1.msra.mxu0 0.0
      %860 = vmatprep.subr.mxu0 0.0
      %861 = vmatpush1.msra.mxu0 0.0
      %862 = vmatprep.subr.mxu0 0.0
      %863 = vmatpush1.msra.mxu0 0.0
      %864 = vmatprep.subr.mxu0 0.0
      %865 = vmatpush1.msra.mxu0 0.0
      %866 = vmatprep.subr.mxu0 0.0
      %867 = vmatpush1.msra.mxu0 0.0
      %868 = vmatprep.subr.mxu0 0.0
      %869 = vmatpush1.msra.mxu0 0.0
      %870 = vmatprep.subr.mxu0 0.0
      %871 = vmatpush1.msra.mxu0 0.0
      %872 = vmatprep.subr.mxu0 0.0
      %873 = vmatpush1.msra.mxu0 0.0
      %874 = vmatprep.subr.mxu0 0.0
      %875 = vmatpush1.msra.mxu0 0.0
      %876 = vmatprep.subr.mxu0 0.0
      %877 = vmatpush1.msra.mxu0 0.0
      %878 = vmatprep.subr.mxu0 0.0
      %879 = vmatpush1.msra.mxu0 0.0
      %880 = vmatprep.subr.mxu0 0.0
      %881 = vmatpush1.msra.mxu0 0.0
      %882 = vmatprep.subr.mxu0 0.0
      %883 = vmatpush1.msra.mxu0 0.0
      %884 = vmatprep.subr.mxu0 0.0
      %885 = vmatpush1.msra.mxu0 0.0
      %886 = vmatprep.subr.mxu0 0.0
      %887 = vmatpush1.msra.mxu0 0.0
      %888 = vmatprep.subr.mxu0 0.0
      %889 = vmatpush1.msra.mxu0 0.0
      %890 = vmatprep.subr.mxu0 0.0
      %891 = vmatpush1.msra.mxu0 0.0
      %892 = vmatprep.subr.mxu0 0.0
      %893 = vmatpush1.msra.mxu0 0.0
      %894 = vmatprep.subr.mxu0 0.0
      %895 = vmatpush1.msra.mxu0 0.0
      %896 = vmatprep.subr.mxu0 0.0
      %897 = vmatpush1.msra.mxu0 0.0
      %898 = vmatprep.subr.mxu0 0.0
      %899 = vmatpush1.msra.mxu0 0.0
      %900 = vmatprep.subr.mxu0 0.0
      %901 = vmatpush1.msra.mxu0 0.0
      %902 = vmatprep.subr.mxu0 0.0
      %903 = vmatpush1.msra.mxu0 0.0
      %904 = vmatprep.subr.mxu0 0.0
      %905 = vmatpush1.msra.mxu0 0.0
      %906 = vmatprep.subr.mxu0 0.0
      %907 = vmatpush1.msra.mxu0 0.0
      %908 = vmatprep.subr.mxu0 0.0
      %909 = vmatpush1.msra.mxu0 0.0
      %910 = vmatprep.subr.mxu0 0.0
      %911 = vmatpush1.msra.mxu0 0.0
      %912 = vmatprep.subr.mxu0 0.0
      %913 = vmatpush1.msra.mxu0 0.0
      %914 = vmatprep.subr.mxu0 0.0
      %915 = vmatpush1.msra.mxu0 0.0
      %916 = vmatprep.mubr.f32.mxu0 0.0
      %v917 = vand.u32 %v762, 4294901760
      %918 = vmatmul.mubr.f32.gmra.mrb[0].mxu0 %v917
      %v919 = vpop.f32.mrb[0].mxu0
      %v920 = vadd.f32 %v838, %v919
      %v921 = vpop.f32.mrb[0].mxu0
      %v922 = vadd.f32 %v840, %v921
      %923 = vdwg.mxu0
      %v924 = vand.u32 %v275, 4294901760
      %v925 = vsub.f32 %v275, %v924
      %926 = vmatprep.subr.mxu0 %v925
      %v927 = vand.u32 %v274, 4294901760
      %v928 = vsub.f32 %v274, %v927
      %929 = vmatpush1.msra.mxu0 %v928
      %930 = vmatprep.subr.mxu0 0.0
      %931 = vmatpush1.msra.mxu0 0.0
      %932 = vmatprep.subr.mxu0 0.0
      %933 = vmatpush1.msra.mxu0 0.0
      %934 = vmatprep.subr.mxu0 0.0
      %935 = vmatpush1.msra.mxu0 0.0
      %936 = vmatprep.subr.mxu0 0.0
      %937 = vmatpush1.msra.mxu0 0.0
      %938 = vmatprep.subr.mxu0 0.0
      %939 = vmatpush1.msra.mxu0 0.0
      %940 = vmatprep.subr.mxu0 0.0
      %941 = vmatpush1.msra.mxu0 0.0
      %942 = vmatprep.subr.mxu0 0.0
      %943 = vmatpush1.msra.mxu0 0.0
      %944 = vmatprep.subr.mxu0 0.0
      %945 = vmatpush1.msra.mxu0 0.0
      %946 = vmatprep.subr.mxu0 0.0
      %947 = vmatpush1.msra.mxu0 0.0
      %948 = vmatprep.subr.mxu0 0.0
      %949 = vmatpush1.msra.mxu0 0.0
      %950 = vmatprep.subr.mxu0 0.0
      %951 = vmatpush1.msra.mxu0 0.0
      %952 = vmatprep.subr.mxu0 0.0
      %953 = vmatpush1.msra.mxu0 0.0
      %954 = vmatprep.subr.mxu0 0.0
      %955 = vmatpush1.msra.mxu0 0.0
      %956 = vmatprep.subr.mxu0 0.0
      %957 = vmatpush1.msra.mxu0 0.0
      %958 = vmatprep.subr.mxu0 0.0
      %959 = vmatpush1.msra.mxu0 0.0
      %960 = vmatprep.subr.mxu0 0.0
      %961 = vmatpush1.msra.mxu0 0.0
      %962 = vmatprep.subr.mxu0 0.0
      %963 = vmatpush1.msra.mxu0 0.0
      %964 = vmatprep.subr.mxu0 0.0
      %965 = vmatpush1.msra.mxu0 0.0
      %966 = vmatprep.subr.mxu0 0.0
      %967 = vmatpush1.msra.mxu0 0.0
      %968 = vmatprep.subr.mxu0 0.0
      %969 = vmatpush1.msra.mxu0 0.0
      %970 = vmatprep.subr.mxu0 0.0
      %971 = vmatpush1.msra.mxu0 0.0
      %972 = vmatprep.subr.mxu0 0.0
      %973 = vmatpush1.msra.mxu0 0.0
      %974 = vmatprep.subr.mxu0 0.0
      %975 = vmatpush1.msra.mxu0 0.0
      %976 = vmatprep.subr.mxu0 0.0
      %977 = vmatpush1.msra.mxu0 0.0
      %978 = vmatprep.subr.mxu0 0.0
      %979 = vmatpush1.msra.mxu0 0.0
      %980 = vmatprep.subr.mxu0 0.0
      %981 = vmatpush1.msra.mxu0 0.0
      %982 = vmatprep.subr.mxu0 0.0
      %983 = vmatpush1.msra.mxu0 0.0
      %984 = vmatprep.subr.mxu0 0.0
      %985 = vmatpush1.msra.mxu0 0.0
      %986 = vmatprep.subr.mxu0 0.0
      %987 = vmatpush1.msra.mxu0 0.0
      %988 = vmatprep.subr.mxu0 0.0
      %989 = vmatpush1.msra.mxu0 0.0
      %990 = vmatprep.subr.mxu0 0.0
      %991 = vmatpush1.msra.mxu0 0.0
      %992 = vmatprep.mubr.f32.mxu0 0.0
      %v993 = vand.u32 %v762, 4294901760
      %v994 = vsub.f32 %v762, %v993
      %995 = vmatmul.mubr.f32.gmra.mrb[0].mxu0 %v994
      %v996 = vpop.f32.mrb[0].mxu0
      %v997 = vadd.f32 %v920, %v996
      %v998 = vpop.f32.mrb[0].mxu0
      %v999 = vadd.f32 %v922, %v998
      %1000 = vdwg.mxu0
      %v1001 = vand.u32 %v275, 4294901760
      %1002 = vmatprep.subr.mxu0 %v1001
      %v1003 = vand.u32 %v274, 4294901760
      %1004 = vmatpush1.msra.mxu0 %v1003
      %1005 = vmatprep.subr.mxu0 0.0
      %1006 = vmatpush1.msra.mxu0 0.0
      %1007 = vmatprep.subr.mxu0 0.0
      %1008 = vmatpush1.msra.mxu0 0.0
      %1009 = vmatprep.subr.mxu0 0.0
      %1010 = vmatpush1.msra.mxu0 0.0
      %1011 = vmatprep.subr.mxu0 0.0
      %1012 = vmatpush1.msra.mxu0 0.0
      %1013 = vmatprep.subr.mxu0 0.0
      %1014 = vmatpush1.msra.mxu0 0.0
      %1015 = vmatprep.subr.mxu0 0.0
      %1016 = vmatpush1.msra.mxu0 0.0
      %1017 = vmatprep.subr.mxu0 0.0
      %1018 = vmatpush1.msra.mxu0 0.0
      %1019 = vmatprep.subr.mxu0 0.0
      %1020 = vmatpush1.msra.mxu0 0.0
      %1021 = vmatprep.subr.mxu0 0.0
      %1022 = vmatpush1.msra.mxu0 0.0
      %1023 = vmatprep.subr.mxu0 0.0
      %1024 = vmatpush1.msra.mxu0 0.0
      %1025 = vmatprep.subr.mxu0 0.0
      %1026 = vmatpush1.msra.mxu0 0.0
      %1027 = vmatprep.subr.mxu0 0.0
      %1028 = vmatpush1.msra.mxu0 0.0
      %1029 = vmatprep.subr.mxu0 0.0
      %1030 = vmatpush1.msra.mxu0 0.0
      %1031 = vmatprep.subr.mxu0 0.0
      %1032 = vmatpush1.msra.mxu0 0.0
      %1033 = vmatprep.subr.mxu0 0.0
      %1034 = vmatpush1.msra.mxu0 0.0
      %1035 = vmatprep.subr.mxu0 0.0
      %1036 = vmatpush1.msra.mxu0 0.0
      %1037 = vmatprep.subr.mxu0 0.0
      %1038 = vmatpush1.msra.mxu0 0.0
      %1039 = vmatprep.subr.mxu0 0.0
      %1040 = vmatpush1.msra.mxu0 0.0
      %1041 = vmatprep.subr.mxu0 0.0
      %1042 = vmatpush1.msra.mxu0 0.0
      %1043 = vmatprep.subr.mxu0 0.0
      %1044 = vmatpush1.msra.mxu0 0.0
      %1045 = vmatprep.subr.mxu0 0.0
      %1046 = vmatpush1.msra.mxu0 0.0
      %1047 = vmatprep.subr.mxu0 0.0
      %1048 = vmatpush1.msra.mxu0 0.0
      %1049 = vmatprep.subr.mxu0 0.0
      %1050 = vmatpush1.msra.mxu0 0.0
      %1051 = vmatprep.subr.mxu0 0.0
      %1052 = vmatpush1.msra.mxu0 0.0
      %1053 = vmatprep.subr.mxu0 0.0
      %1054 = vmatpush1.msra.mxu0 0.0
      %1055 = vmatprep.subr.mxu0 0.0
      %1056 = vmatpush1.msra.mxu0 0.0
      %1057 = vmatprep.subr.mxu0 0.0
      %1058 = vmatpush1.msra.mxu0 0.0
      %1059 = vmatprep.subr.mxu0 0.0
      %1060 = vmatpush1.msra.mxu0 0.0
      %1061 = vmatprep.subr.mxu0 0.0
      %1062 = vmatpush1.msra.mxu0 0.0
      %1063 = vmatprep.subr.mxu0 0.0
      %1064 = vmatpush1.msra.mxu0 0.0
      %1065 = vmatprep.subr.mxu0 0.0
      %1066 = vmatpush1.msra.mxu0 0.0
      %1067 = vmatprep.mubr.f32.mxu0 0.0
      %v1068 = vand.u32 %v762, 4294901760
      %v1069 = vsub.f32 %v762, %v1068
      %v1070 = vand.u32 %v1069, 4294901760
      %1071 = vmatmul.mubr.f32.gmra.mrb[0].mxu0 %v1070
      %v1072 = vpop.f32.mrb[0].mxu0
      %v1073 = vadd.f32 %v997, %v1072
      %v1074 = vpop.f32.mrb[0].mxu0
      %v1075 = vadd.f32 %v999, %v1074
      %1076 = vdwg.mxu0
      %v1077 = vand.u32 %v275, 4294901760
      %v1078 = vsub.f32 %v275, %v1077
      %v1079 = vand.u32 %v1078, 4294901760
      %1080 = vmatprep.subr.mxu0 %v1079
      %v1081 = vand.u32 %v274, 4294901760
      %v1082 = vsub.f32 %v274, %v1081
      %v1083 = vand.u32 %v1082, 4294901760
      %1084 = vmatpush1.msra.mxu0 %v1083
      %1085 = vmatprep.subr.mxu0 0.0
      %1086 = vmatpush1.msra.mxu0 0.0
      %1087 = vmatprep.subr.mxu0 0.0
      %1088 = vmatpush1.msra.mxu0 0.0
      %1089 = vmatprep.subr.mxu0 0.0
      %1090 = vmatpush1.msra.mxu0 0.0
      %1091 = vmatprep.subr.mxu0 0.0
      %1092 = vmatpush1.msra.mxu0 0.0
      %1093 = vmatprep.subr.mxu0 0.0
      %1094 = vmatpush1.msra.mxu0 0.0
      %1095 = vmatprep.subr.mxu0 0.0
      %1096 = vmatpush1.msra.mxu0 0.0
      %1097 = vmatprep.subr.mxu0 0.0
      %1098 = vmatpush1.msra.mxu0 0.0
      %1099 = vmatprep.subr.mxu0 0.0
      %1100 = vmatpush1.msra.mxu0 0.0
      %1101 = vmatprep.subr.mxu0 0.0
      %1102 = vmatpush1.msra.mxu0 0.0
      %1103 = vmatprep.subr.mxu0 0.0
      %1104 = vmatpush1.msra.mxu0 0.0
      %1105 = vmatprep.subr.mxu0 0.0
      %1106 = vmatpush1.msra.mxu0 0.0
      %1107 = vmatprep.subr.mxu0 0.0
      %1108 = vmatpush1.msra.mxu0 0.0
      %1109 = vmatprep.subr.mxu0 0.0
      %1110 = vmatpush1.msra.mxu0 0.0
      %1111 = vmatprep.subr.mxu0 0.0
      %1112 = vmatpush1.msra.mxu0 0.0
      %1113 = vmatprep.subr.mxu0 0.0
      %1114 = vmatpush1.msra.mxu0 0.0
      %1115 = vmatprep.subr.mxu0 0.0
      %1116 = vmatpush1.msra.mxu0 0.0
      %1117 = vmatprep.subr.mxu0 0.0
      %1118 = vmatpush1.msra.mxu0 0.0
      %1119 = vmatprep.subr.mxu0 0.0
      %1120 = vmatpush1.msra.mxu0 0.0
      %1121 = vmatprep.subr.mxu0 0.0
      %1122 = vmatpush1.msra.mxu0 0.0
      %1123 = vmatprep.subr.mxu0 0.0
      %1124 = vmatpush1.msra.mxu0 0.0
      %1125 = vmatprep.subr.mxu0 0.0
      %1126 = vmatpush1.msra.mxu0 0.0
      %1127 = vmatprep.subr.mxu0 0.0
      %1128 = vmatpush1.msra.mxu0 0.0
      %1129 = vmatprep.subr.mxu0 0.0
      %1130 = vmatpush1.msra.mxu0 0.0
      %1131 = vmatprep.subr.mxu0 0.0
      %1132 = vmatpush1.msra.mxu0 0.0
      %1133 = vmatprep.subr.mxu0 0.0
      %1134 = vmatpush1.msra.mxu0 0.0
      %1135 = vmatprep.subr.mxu0 0.0
      %1136 = vmatpush1.msra.mxu0 0.0
      %1137 = vmatprep.subr.mxu0 0.0
      %1138 = vmatpush1.msra.mxu0 0.0
      %1139 = vmatprep.subr.mxu0 0.0
      %1140 = vmatpush1.msra.mxu0 0.0
      %1141 = vmatprep.subr.mxu0 0.0
      %1142 = vmatpush1.msra.mxu0 0.0
      %1143 = vmatprep.subr.mxu0 0.0
      %1144 = vmatpush1.msra.mxu0 0.0
      %1145 = vmatprep.subr.mxu0 0.0
      %1146 = vmatpush1.msra.mxu0 0.0
      %1147 = vmatprep.mubr.f32.mxu0 0.0
      %v1148 = vand.u32 %v762, 4294901760
      %1149 = vmatmul.mubr.f32.gmra.mrb[0].mxu0 %v1148
      %v1150 = vpop.f32.mrb[0].mxu0
      %v1151 = vadd.f32 %v1073, %v1150
      %v1152 = vpop.f32.mrb[0].mxu0
      %v1153 = vadd.f32 %v1075, %v1152
      %1154 = vdwg.mxu0
      %v1155 = vand.u32 %v275, 4294901760
      %1156 = vmatprep.subr.mxu0 %v1155
      %v1157 = vand.u32 %v274, 4294901760
      %1158 = vmatpush1.msra.mxu0 %v1157
      %1159 = vmatprep.subr.mxu0 0.0
      %1160 = vmatpush1.msra.mxu0 0.0
      %1161 = vmatprep.subr.mxu0 0.0
      %1162 = vmatpush1.msra.mxu0 0.0
      %1163 = vmatprep.subr.mxu0 0.0
      %1164 = vmatpush1.msra.mxu0 0.0
      %1165 = vmatprep.subr.mxu0 0.0
      %1166 = vmatpush1.msra.mxu0 0.0
      %1167 = vmatprep.subr.mxu0 0.0
      %1168 = vmatpush1.msra.mxu0 0.0
      %1169 = vmatprep.subr.mxu0 0.0
      %1170 = vmatpush1.msra.mxu0 0.0
      %1171 = vmatprep.subr.mxu0 0.0
      %1172 = vmatpush1.msra.mxu0 0.0
      %1173 = vmatprep.subr.mxu0 0.0
      %1174 = vmatpush1.msra.mxu0 0.0
      %1175 = vmatprep.subr.mxu0 0.0
      %1176 = vmatpush1.msra.mxu0 0.0
      %1177 = vmatprep.subr.mxu0 0.0
      %1178 = vmatpush1.msra.mxu0 0.0
      %1179 = vmatprep.subr.mxu0 0.0
      %1180 = vmatpush1.msra.mxu0 0.0
      %1181 = vmatprep.subr.mxu0 0.0
      %1182 = vmatpush1.msra.mxu0 0.0
      %1183 = vmatprep.subr.mxu0 0.0
      %1184 = vmatpush1.msra.mxu0 0.0
      %1185 = vmatprep.subr.mxu0 0.0
      %1186 = vmatpush1.msra.mxu0 0.0
      %1187 = vmatprep.subr.mxu0 0.0
      %1188 = vmatpush1.msra.mxu0 0.0
      %1189 = vmatprep.subr.mxu0 0.0
      %1190 = vmatpush1.msra.mxu0 0.0
      %1191 = vmatprep.subr.mxu0 0.0
      %1192 = vmatpush1.msra.mxu0 0.0
      %1193 = vmatprep.subr.mxu0 0.0
      %1194 = vmatpush1.msra.mxu0 0.0
      %1195 = vmatprep.subr.mxu0 0.0
      %1196 = vmatpush1.msra.mxu0 0.0
      %1197 = vmatprep.subr.mxu0 0.0
      %1198 = vmatpush1.msra.mxu0 0.0
      %1199 = vmatprep.subr.mxu0 0.0
      %1200 = vmatpush1.msra.mxu0 0.0
      %1201 = vmatprep.subr.mxu0 0.0
      %1202 = vmatpush1.msra.mxu0 0.0
      %1203 = vmatprep.subr.mxu0 0.0
      %1204 = vmatpush1.msra.mxu0 0.0
      %1205 = vmatprep.subr.mxu0 0.0
      %1206 = vmatpush1.msra.mxu0 0.0
      %1207 = vmatprep.subr.mxu0 0.0
      %1208 = vmatpush1.msra.mxu0 0.0
      %1209 = vmatprep.subr.mxu0 0.0
      %1210 = vmatpush1.msra.mxu0 0.0
      %1211 = vmatprep.subr.mxu0 0.0
      %1212 = vmatpush1.msra.mxu0 0.0
      %1213 = vmatprep.subr.mxu0 0.0
      %1214 = vmatpush1.msra.mxu0 0.0
      %1215 = vmatprep.subr.mxu0 0.0
      %1216 = vmatpush1.msra.mxu0 0.0
      %1217 = vmatprep.subr.mxu0 0.0
      %1218 = vmatpush1.msra.mxu0 0.0
      %1219 = vmatprep.subr.mxu0 0.0
      %1220 = vmatpush1.msra.mxu0 0.0
      %1221 = vmatprep.mubr.f32.mxu0 0.0
      %v1222 = vand.u32 %v762, 4294901760
      %1223 = vmatmul.mubr.f32.gmra.mrb[0].mxu0 %v1222
      %v1224 = vpop.f32.mrb[0].mxu0
      %v1225 = vadd.f32 %v1151, %v1224
      %v1226 = vpop.f32.mrb[0].mxu0
      %v1227 = vadd.f32 %v1153, %v1226
      %1228 = vdwg.mxu0
      %s1229 = scalar_lea.vmem %s2, 16
      %v1230 = vld [vmem:[%s1229] sm:$0xff]
      %v1232 = vsel %vm292, %v1230, 0
      %v1234 = vand.u32 %v288, 4294901760
      %1235 = vmatprep.subr.mxu0 %v1234
      %v1236 = vand.u32 %v287, 4294901760
      %1237 = vmatpush1.msra.mxu0 %v1236
      %1238 = vmatprep.subr.mxu0 0.0
      %1239 = vmatpush1.msra.mxu0 0.0
      %1240 = vmatprep.subr.mxu0 0.0
      %1241 = vmatpush1.msra.mxu0 0.0
      %1242 = vmatprep.subr.mxu0 0.0
      %1243 = vmatpush1.msra.mxu0 0.0
      %1244 = vmatprep.subr.mxu0 0.0
      %1245 = vmatpush1.msra.mxu0 0.0
      %1246 = vmatprep.subr.mxu0 0.0
      %1247 = vmatpush1.msra.mxu0 0.0
      %1248 = vmatprep.subr.mxu0 0.0
      %1249 = vmatpush1.msra.mxu0 0.0
      %1250 = vmatprep.subr.mxu0 0.0
      %1251 = vmatpush1.msra.mxu0 0.0
      %1252 = vmatprep.subr.mxu0 0.0
      %1253 = vmatpush1.msra.mxu0 0.0
      %1254 = vmatprep.subr.mxu0 0.0
      %1255 = vmatpush1.msra.mxu0 0.0
      %1256 = vmatprep.subr.mxu0 0.0
      %1257 = vmatpush1.msra.mxu0 0.0
      %1258 = vmatprep.subr.mxu0 0.0
      %1259 = vmatpush1.msra.mxu0 0.0
      %1260 = vmatprep.subr.mxu0 0.0
      %1261 = vmatpush1.msra.mxu0 0.0
      %1262 = vmatprep.subr.mxu0 0.0
      %1263 = vmatpush1.msra.mxu0 0.0
      %1264 = vmatprep.subr.mxu0 0.0
      %1265 = vmatpush1.msra.mxu0 0.0
      %1266 = vmatprep.subr.mxu0 0.0
      %1267 = vmatpush1.msra.mxu0 0.0
      %1268 = vmatprep.subr.mxu0 0.0
      %1269 = vmatpush1.msra.mxu0 0.0
      %1270 = vmatprep.subr.mxu0 0.0
      %1271 = vmatpush1.msra.mxu0 0.0
      %1272 = vmatprep.subr.mxu0 0.0
      %1273 = vmatpush1.msra.mxu0 0.0
      %1274 = vmatprep.subr.mxu0 0.0
      %1275 = vmatpush1.msra.mxu0 0.0
      %1276 = vmatprep.subr.mxu0 0.0
      %1277 = vmatpush1.msra.mxu0 0.0
      %1278 = vmatprep.subr.mxu0 0.0
      %1279 = vmatpush1.msra.mxu0 0.0
      %1280 = vmatprep.subr.mxu0 0.0
      %1281 = vmatpush1.msra.mxu0 0.0
      %1282 = vmatprep.subr.mxu0 0.0
      %1283 = vmatpush1.msra.mxu0 0.0
      %1284 = vmatprep.subr.mxu0 0.0
      %1285 = vmatpush1.msra.mxu0 0.0
      %1286 = vmatprep.subr.mxu0 0.0
      %1287 = vmatpush1.msra.mxu0 0.0
      %1288 = vmatprep.subr.mxu0 0.0
      %1289 = vmatpush1.msra.mxu0 0.0
      %1290 = vmatprep.subr.mxu0 0.0
      %1291 = vmatpush1.msra.mxu0 0.0
      %1292 = vmatprep.subr.mxu0 0.0
      %1293 = vmatpush1.msra.mxu0 0.0
      %1294 = vmatprep.subr.mxu0 0.0
      %1295 = vmatpush1.msra.mxu0 0.0
      %1296 = vmatprep.subr.mxu0 0.0
      %1297 = vmatpush1.msra.mxu0 0.0
      %1298 = vmatprep.subr.mxu0 0.0
      %1299 = vmatpush1.msra.mxu0 0.0
      %1300 = vmatprep.mubr.f32.mxu0 0.0
      %v1301 = vand.u32 %v1232, 4294901760
      %v1302 = vsub.f32 %v1232, %v1301
      %v1303 = vand.u32 %v1302, 4294901760
      %v1304 = vsub.f32 %v1302, %v1303
      %v1305 = vand.u32 %v1304, 4294901760
      %1306 = vmatmul.mubr.f32.gmra.mrb[0].mxu0 %v1305
      %v1307 = vpop.f32.mrb[0].mxu0
      %v1308 = vadd.f32 0.0, %v1307
      %v1309 = vpop.f32.mrb[0].mxu0
      %v1310 = vadd.f32 0.0, %v1309
      %1311 = vdwg.mxu0
      %v1312 = vand.u32 %v288, 4294901760
      %v1313 = vsub.f32 %v288, %v1312
      %v1314 = vand.u32 %v1313, 4294901760
      %v1315 = vsub.f32 %v1313, %v1314
      %v1316 = vand.u32 %v1315, 4294901760
      %1317 = vmatprep.subr.mxu0 %v1316
      %v1318 = vand.u32 %v287, 4294901760
      %v1319 = vsub.f32 %v287, %v1318
      %v1320 = vand.u32 %v1319, 4294901760
      %v1321 = vsub.f32 %v1319, %v1320
      %v1322 = vand.u32 %v1321, 4294901760
      %1323 = vmatpush1.msra.mxu0 %v1322
      %1324 = vmatprep.subr.mxu0 0.0
      %1325 = vmatpush1.msra.mxu0 0.0
      %1326 = vmatprep.subr.mxu0 0.0
      %1327 = vmatpush1.msra.mxu0 0.0
      %1328 = vmatprep.subr.mxu0 0.0
      %1329 = vmatpush1.msra.mxu0 0.0
      %1330 = vmatprep.subr.mxu0 0.0
      %1331 = vmatpush1.msra.mxu0 0.0
      %1332 = vmatprep.subr.mxu0 0.0
      %1333 = vmatpush1.msra.mxu0 0.0
      %1334 = vmatprep.subr.mxu0 0.0
      %1335 = vmatpush1.msra.mxu0 0.0
      %1336 = vmatprep.subr.mxu0 0.0
      %1337 = vmatpush1.msra.mxu0 0.0
      %1338 = vmatprep.subr.mxu0 0.0
      %1339 = vmatpush1.msra.mxu0 0.0
      %1340 = vmatprep.subr.mxu0 0.0
      %1341 = vmatpush1.msra.mxu0 0.0
      %1342 = vmatprep.subr.mxu0 0.0
      %1343 = vmatpush1.msra.mxu0 0.0
      %1344 = vmatprep.subr.mxu0 0.0
      %1345 = vmatpush1.msra.mxu0 0.0
      %1346 = vmatprep.subr.mxu0 0.0
      %1347 = vmatpush1.msra.mxu0 0.0
      %1348 = vmatprep.subr.mxu0 0.0
      %1349 = vmatpush1.msra.mxu0 0.0
      %1350 = vmatprep.subr.mxu0 0.0
      %1351 = vmatpush1.msra.mxu0 0.0
      %1352 = vmatprep.subr.mxu0 0.0
      %1353 = vmatpush1.msra.mxu0 0.0
      %1354 = vmatprep.subr.mxu0 0.0
      %1355 = vmatpush1.msra.mxu0 0.0
      %1356 = vmatprep.subr.mxu0 0.0
      %1357 = vmatpush1.msra.mxu0 0.0
      %1358 = vmatprep.subr.mxu0 0.0
      %1359 = vmatpush1.msra.mxu0 0.0
      %1360 = vmatprep.subr.mxu0 0.0
      %1361 = vmatpush1.msra.mxu0 0.0
      %1362 = vmatprep.subr.mxu0 0.0
      %1363 = vmatpush1.msra.mxu0 0.0
      %1364 = vmatprep.subr.mxu0 0.0
      %1365 = vmatpush1.msra.mxu0 0.0
      %1366 = vmatprep.subr.mxu0 0.0
      %1367 = vmatpush1.msra.mxu0 0.0
      %1368 = vmatprep.subr.mxu0 0.0
      %1369 = vmatpush1.msra.mxu0 0.0
      %1370 = vmatprep.subr.mxu0 0.0
      %1371 = vmatpush1.msra.mxu0 0.0
      %1372 = vmatprep.subr.mxu0 0.0
      %1373 = vmatpush1.msra.mxu0 0.0
      %1374 = vmatprep.subr.mxu0 0.0
      %1375 = vmatpush1.msra.mxu0 0.0
      %1376 = vmatprep.subr.mxu0 0.0
      %1377 = vmatpush1.msra.mxu0 0.0
      %1378 = vmatprep.subr.mxu0 0.0
      %1379 = vmatpush1.msra.mxu0 0.0
      %1380 = vmatprep.subr.mxu0 0.0
      %1381 = vmatpush1.msra.mxu0 0.0
      %1382 = vmatprep.subr.mxu0 0.0
      %1383 = vmatpush1.msra.mxu0 0.0
      %1384 = vmatprep.subr.mxu0 0.0
      %1385 = vmatpush1.msra.mxu0 0.0
      %1386 = vmatprep.mubr.f32.mxu0 0.0
      %v1387 = vand.u32 %v1232, 4294901760
      %1388 = vmatmul.mubr.f32.gmra.mrb[0].mxu0 %v1387
      %v1389 = vpop.f32.mrb[0].mxu0
      %v1390 = vadd.f32 %v1308, %v1389
      %v1391 = vpop.f32.mrb[0].mxu0
      %v1392 = vadd.f32 %v1310, %v1391
      %1393 = vdwg.mxu0
      %v1394 = vand.u32 %v288, 4294901760
      %v1395 = vsub.f32 %v288, %v1394
      %1396 = vmatprep.subr.mxu0 %v1395
      %v1397 = vand.u32 %v287, 4294901760
      %v1398 = vsub.f32 %v287, %v1397
      %1399 = vmatpush1.msra.mxu0 %v1398
      %1400 = vmatprep.subr.mxu0 0.0
      %1401 = vmatpush1.msra.mxu0 0.0
      %1402 = vmatprep.subr.mxu0 0.0
      %1403 = vmatpush1.msra.mxu0 0.0
      %1404 = vmatprep.subr.mxu0 0.0
      %1405 = vmatpush1.msra.mxu0 0.0
      %1406 = vmatprep.subr.mxu0 0.0
      %1407 = vmatpush1.msra.mxu0 0.0
      %1408 = vmatprep.subr.mxu0 0.0
      %1409 = vmatpush1.msra.mxu0 0.0
      %1410 = vmatprep.subr.mxu0 0.0
      %1411 = vmatpush1.msra.mxu0 0.0
      %1412 = vmatprep.subr.mxu0 0.0
      %1413 = vmatpush1.msra.mxu0 0.0
      %1414 = vmatprep.subr.mxu0 0.0
      %1415 = vmatpush1.msra.mxu0 0.0
      %1416 = vmatprep.subr.mxu0 0.0
      %1417 = vmatpush1.msra.mxu0 0.0
      %1418 = vmatprep.subr.mxu0 0.0
      %1419 = vmatpush1.msra.mxu0 0.0
      %1420 = vmatprep.subr.mxu0 0.0
      %1421 = vmatpush1.msra.mxu0 0.0
      %1422 = vmatprep.subr.mxu0 0.0
      %1423 = vmatpush1.msra.mxu0 0.0
      %1424 = vmatprep.subr.mxu0 0.0
      %1425 = vmatpush1.msra.mxu0 0.0
      %1426 = vmatprep.subr.mxu0 0.0
      %1427 = vmatpush1.msra.mxu0 0.0
      %1428 = vmatprep.subr.mxu0 0.0
      %1429 = vmatpush1.msra.mxu0 0.0
      %1430 = vmatprep.subr.mxu0 0.0
      %1431 = vmatpush1.msra.mxu0 0.0
      %1432 = vmatprep.subr.mxu0 0.0
      %1433 = vmatpush1.msra.mxu0 0.0
      %1434 = vmatprep.subr.mxu0 0.0
      %1435 = vmatpush1.msra.mxu0 0.0
      %1436 = vmatprep.subr.mxu0 0.0
      %1437 = vmatpush1.msra.mxu0 0.0
      %1438 = vmatprep.subr.mxu0 0.0
      %1439 = vmatpush1.msra.mxu0 0.0
      %1440 = vmatprep.subr.mxu0 0.0
      %1441 = vmatpush1.msra.mxu0 0.0
      %1442 = vmatprep.subr.mxu0 0.0
      %1443 = vmatpush1.msra.mxu0 0.0
      %1444 = vmatprep.subr.mxu0 0.0
      %1445 = vmatpush1.msra.mxu0 0.0
      %1446 = vmatprep.subr.mxu0 0.0
      %1447 = vmatpush1.msra.mxu0 0.0
      %1448 = vmatprep.subr.mxu0 0.0
      %1449 = vmatpush1.msra.mxu0 0.0
      %1450 = vmatprep.subr.mxu0 0.0
      %1451 = vmatpush1.msra.mxu0 0.0
      %1452 = vmatprep.subr.mxu0 0.0
      %1453 = vmatpush1.msra.mxu0 0.0
      %1454 = vmatprep.subr.mxu0 0.0
      %1455 = vmatpush1.msra.mxu0 0.0
      %1456 = vmatprep.subr.mxu0 0.0
      %1457 = vmatpush1.msra.mxu0 0.0
      %1458 = vmatprep.subr.mxu0 0.0
      %1459 = vmatpush1.msra.mxu0 0.0
      %1460 = vmatprep.subr.mxu0 0.0
      %1461 = vmatpush1.msra.mxu0 0.0
      %1462 = vmatprep.mubr.f32.mxu0 0.0
      %v1463 = vand.u32 %v1232, 4294901760
      %v1464 = vsub.f32 %v1232, %v1463
      %1465 = vmatmul.mubr.f32.gmra.mrb[0].mxu0 %v1464
      %v1466 = vpop.f32.mrb[0].mxu0
      %v1467 = vadd.f32 %v1390, %v1466
      %v1468 = vpop.f32.mrb[0].mxu0
      %v1469 = vadd.f32 %v1392, %v1468
      %1470 = vdwg.mxu0
      %v1471 = vand.u32 %v288, 4294901760
      %1472 = vmatprep.subr.mxu0 %v1471
      %v1473 = vand.u32 %v287, 4294901760
      %1474 = vmatpush1.msra.mxu0 %v1473
      %1475 = vmatprep.subr.mxu0 0.0
      %1476 = vmatpush1.msra.mxu0 0.0
      %1477 = vmatprep.subr.mxu0 0.0
      %1478 = vmatpush1.msra.mxu0 0.0
      %1479 = vmatprep.subr.mxu0 0.0
      %1480 = vmatpush1.msra.mxu0 0.0
      %1481 = vmatprep.subr.mxu0 0.0
      %1482 = vmatpush1.msra.mxu0 0.0
      %1483 = vmatprep.subr.mxu0 0.0
      %1484 = vmatpush1.msra.mxu0 0.0
      %1485 = vmatprep.subr.mxu0 0.0
      %1486 = vmatpush1.msra.mxu0 0.0
      %1487 = vmatprep.subr.mxu0 0.0
      %1488 = vmatpush1.msra.mxu0 0.0
      %1489 = vmatprep.subr.mxu0 0.0
      %1490 = vmatpush1.msra.mxu0 0.0
      %1491 = vmatprep.subr.mxu0 0.0
      %1492 = vmatpush1.msra.mxu0 0.0
      %1493 = vmatprep.subr.mxu0 0.0
      %1494 = vmatpush1.msra.mxu0 0.0
      %1495 = vmatprep.subr.mxu0 0.0
      %1496 = vmatpush1.msra.mxu0 0.0
      %1497 = vmatprep.subr.mxu0 0.0
      %1498 = vmatpush1.msra.mxu0 0.0
      %1499 = vmatprep.subr.mxu0 0.0
      %1500 = vmatpush1.msra.mxu0 0.0
      %1501 = vmatprep.subr.mxu0 0.0
      %1502 = vmatpush1.msra.mxu0 0.0
      %1503 = vmatprep.subr.mxu0 0.0
      %1504 = vmatpush1.msra.mxu0 0.0
      %1505 = vmatprep.subr.mxu0 0.0
      %1506 = vmatpush1.msra.mxu0 0.0
      %1507 = vmatprep.subr.mxu0 0.0
      %1508 = vmatpush1.msra.mxu0 0.0
      %1509 = vmatprep.subr.mxu0 0.0
      %1510 = vmatpush1.msra.mxu0 0.0
      %1511 = vmatprep.subr.mxu0 0.0
      %1512 = vmatpush1.msra.mxu0 0.0
      %1513 = vmatprep.subr.mxu0 0.0
      %1514 = vmatpush1.msra.mxu0 0.0
      %1515 = vmatprep.subr.mxu0 0.0
      %1516 = vmatpush1.msra.mxu0 0.0
      %1517 = vmatprep.subr.mxu0 0.0
      %1518 = vmatpush1.msra.mxu0 0.0
      %1519 = vmatprep.subr.mxu0 0.0
      %1520 = vmatpush1.msra.mxu0 0.0
      %1521 = vmatprep.subr.mxu0 0.0
      %1522 = vmatpush1.msra.mxu0 0.0
      %1523 = vmatprep.subr.mxu0 0.0
      %1524 = vmatpush1.msra.mxu0 0.0
      %1525 = vmatprep.subr.mxu0 0.0
      %1526 = vmatpush1.msra.mxu0 0.0
      %1527 = vmatprep.subr.mxu0 0.0
      %1528 = vmatpush1.msra.mxu0 0.0
      %1529 = vmatprep.subr.mxu0 0.0
      %1530 = vmatpush1.msra.mxu0 0.0
      %1531 = vmatprep.subr.mxu0 0.0
      %1532 = vmatpush1.msra.mxu0 0.0
      %1533 = vmatprep.subr.mxu0 0.0
      %1534 = vmatpush1.msra.mxu0 0.0
      %1535 = vmatprep.subr.mxu0 0.0
      %1536 = vmatpush1.msra.mxu0 0.0
      %1537 = vmatprep.mubr.f32.mxu0 0.0
      %v1538 = vand.u32 %v1232, 4294901760
      %v1539 = vsub.f32 %v1232, %v1538
      %v1540 = vand.u32 %v1539, 4294901760
      %1541 = vmatmul.mubr.f32.gmra.mrb[0].mxu0 %v1540
      %v1542 = vpop.f32.mrb[0].mxu0
      %v1543 = vadd.f32 %v1467, %v1542
      %v1544 = vpop.f32.mrb[0].mxu0
      %v1545 = vadd.f32 %v1469, %v1544
      %1546 = vdwg.mxu0
      %v1547 = vand.u32 %v288, 4294901760
      %v1548 = vsub.f32 %v288, %v1547
      %v1549 = vand.u32 %v1548, 4294901760
      %1550 = vmatprep.subr.mxu0 %v1549
      %v1551 = vand.u32 %v287, 4294901760
      %v1552 = vsub.f32 %v287, %v1551
      %v1553 = vand.u32 %v1552, 4294901760
      %1554 = vmatpush1.msra.mxu0 %v1553
      %1555 = vmatprep.subr.mxu0 0.0
      %1556 = vmatpush1.msra.mxu0 0.0
      %1557 = vmatprep.subr.mxu0 0.0
      %1558 = vmatpush1.msra.mxu0 0.0
      %1559 = vmatprep.subr.mxu0 0.0
      %1560 = vmatpush1.msra.mxu0 0.0
      %1561 = vmatprep.subr.mxu0 0.0
      %1562 = vmatpush1.msra.mxu0 0.0
      %1563 = vmatprep.subr.mxu0 0.0
      %1564 = vmatpush1.msra.mxu0 0.0
      %1565 = vmatprep.subr.mxu0 0.0
      %1566 = vmatpush1.msra.mxu0 0.0
      %1567 = vmatprep.subr.mxu0 0.0
      %1568 = vmatpush1.msra.mxu0 0.0
      %1569 = vmatprep.subr.mxu0 0.0
      %1570 = vmatpush1.msra.mxu0 0.0
      %1571 = vmatprep.subr.mxu0 0.0
      %1572 = vmatpush1.msra.mxu0 0.0
      %1573 = vmatprep.subr.mxu0 0.0
      %1574 = vmatpush1.msra.mxu0 0.0
      %1575 = vmatprep.subr.mxu0 0.0
      %1576 = vmatpush1.msra.mxu0 0.0
      %1577 = vmatprep.subr.mxu0 0.0
      %1578 = vmatpush1.msra.mxu0 0.0
      %1579 = vmatprep.subr.mxu0 0.0
      %1580 = vmatpush1.msra.mxu0 0.0
      %1581 = vmatprep.subr.mxu0 0.0
      %1582 = vmatpush1.msra.mxu0 0.0
      %1583 = vmatprep.subr.mxu0 0.0
      %1584 = vmatpush1.msra.mxu0 0.0
      %1585 = vmatprep.subr.mxu0 0.0
      %1586 = vmatpush1.msra.mxu0 0.0
      %1587 = vmatprep.subr.mxu0 0.0
      %1588 = vmatpush1.msra.mxu0 0.0
      %1589 = vmatprep.subr.mxu0 0.0
      %1590 = vmatpush1.msra.mxu0 0.0
      %1591 = vmatprep.subr.mxu0 0.0
      %1592 = vmatpush1.msra.mxu0 0.0
      %1593 = vmatprep.subr.mxu0 0.0
      %1594 = vmatpush1.msra.mxu0 0.0
      %1595 = vmatprep.subr.mxu0 0.0
      %1596 = vmatpush1.msra.mxu0 0.0
      %1597 = vmatprep.subr.mxu0 0.0
      %1598 = vmatpush1.msra.mxu0 0.0
      %1599 = vmatprep.subr.mxu0 0.0
      %1600 = vmatpush1.msra.mxu0 0.0
      %1601 = vmatprep.subr.mxu0 0.0
      %1602 = vmatpush1.msra.mxu0 0.0
      %1603 = vmatprep.subr.mxu0 0.0
      %1604 = vmatpush1.msra.mxu0 0.0
      %1605 = vmatprep.subr.mxu0 0.0
      %1606 = vmatpush1.msra.mxu0 0.0
      %1607 = vmatprep.subr.mxu0 0.0
      %1608 = vmatpush1.msra.mxu0 0.0
      %1609 = vmatprep.subr.mxu0 0.0
      %1610 = vmatpush1.msra.mxu0 0.0
      %1611 = vmatprep.subr.mxu0 0.0
      %1612 = vmatpush1.msra.mxu0 0.0
      %1613 = vmatprep.subr.mxu0 0.0
      %1614 = vmatpush1.msra.mxu0 0.0
      %1615 = vmatprep.subr.mxu0 0.0
      %1616 = vmatpush1.msra.mxu0 0.0
      %1617 = vmatprep.mubr.f32.mxu0 0.0
      %v1618 = vand.u32 %v1232, 4294901760
      %1619 = vmatmul.mubr.f32.gmra.mrb[0].mxu0 %v1618
      %v1620 = vpop.f32.mrb[0].mxu0
      %v1621 = vadd.f32 %v1543, %v1620
      %v1622 = vpop.f32.mrb[0].mxu0
      %v1623 = vadd.f32 %v1545, %v1622
      %1624 = vdwg.mxu0
      %v1625 = vand.u32 %v288, 4294901760
      %1626 = vmatprep.subr.mxu0 %v1625
      %v1627 = vand.u32 %v287, 4294901760
      %1628 = vmatpush1.msra.mxu0 %v1627
      %1629 = vmatprep.subr.mxu0 0.0
      %1630 = vmatpush1.msra.mxu0 0.0
      %1631 = vmatprep.subr.mxu0 0.0
      %1632 = vmatpush1.msra.mxu0 0.0
      %1633 = vmatprep.subr.mxu0 0.0
      %1634 = vmatpush1.msra.mxu0 0.0
      %1635 = vmatprep.subr.mxu0 0.0
      %1636 = vmatpush1.msra.mxu0 0.0
      %1637 = vmatprep.subr.mxu0 0.0
      %1638 = vmatpush1.msra.mxu0 0.0
      %1639 = vmatprep.subr.mxu0 0.0
      %1640 = vmatpush1.msra.mxu0 0.0
      %1641 = vmatprep.subr.mxu0 0.0
      %1642 = vmatpush1.msra.mxu0 0.0
      %1643 = vmatprep.subr.mxu0 0.0
      %1644 = vmatpush1.msra.mxu0 0.0
      %1645 = vmatprep.subr.mxu0 0.0
      %1646 = vmatpush1.msra.mxu0 0.0
      %1647 = vmatprep.subr.mxu0 0.0
      %1648 = vmatpush1.msra.mxu0 0.0
      %1649 = vmatprep.subr.mxu0 0.0
      %1650 = vmatpush1.msra.mxu0 0.0
      %1651 = vmatprep.subr.mxu0 0.0
      %1652 = vmatpush1.msra.mxu0 0.0
      %1653 = vmatprep.subr.mxu0 0.0
      %1654 = vmatpush1.msra.mxu0 0.0
      %1655 = vmatprep.subr.mxu0 0.0
      %1656 = vmatpush1.msra.mxu0 0.0
      %1657 = vmatprep.subr.mxu0 0.0
      %1658 = vmatpush1.msra.mxu0 0.0
      %1659 = vmatprep.subr.mxu0 0.0
      %1660 = vmatpush1.msra.mxu0 0.0
      %1661 = vmatprep.subr.mxu0 0.0
      %1662 = vmatpush1.msra.mxu0 0.0
      %1663 = vmatprep.subr.mxu0 0.0
      %1664 = vmatpush1.msra.mxu0 0.0
      %1665 = vmatprep.subr.mxu0 0.0
      %1666 = vmatpush1.msra.mxu0 0.0
      %1667 = vmatprep.subr.mxu0 0.0
      %1668 = vmatpush1.msra.mxu0 0.0
      %1669 = vmatprep.subr.mxu0 0.0
      %1670 = vmatpush1.msra.mxu0 0.0
      %1671 = vmatprep.subr.mxu0 0.0
      %1672 = vmatpush1.msra.mxu0 0.0
      %1673 = vmatprep.subr.mxu0 0.0
      %1674 = vmatpush1.msra.mxu0 0.0
      %1675 = vmatprep.subr.mxu0 0.0
      %1676 = vmatpush1.msra.mxu0 0.0
      %1677 = vmatprep.subr.mxu0 0.0
      %1678 = vmatpush1.msra.mxu0 0.0
      %1679 = vmatprep.subr.mxu0 0.0
      %1680 = vmatpush1.msra.mxu0 0.0
      %1681 = vmatprep.subr.mxu0 0.0
      %1682 = vmatpush1.msra.mxu0 0.0
      %1683 = vmatprep.subr.mxu0 0.0
      %1684 = vmatpush1.msra.mxu0 0.0
      %1685 = vmatprep.subr.mxu0 0.0
      %1686 = vmatpush1.msra.mxu0 0.0
      %1687 = vmatprep.subr.mxu0 0.0
      %1688 = vmatpush1.msra.mxu0 0.0
      %1689 = vmatprep.subr.mxu0 0.0
      %1690 = vmatpush1.msra.mxu0 0.0
      %1691 = vmatprep.mubr.f32.mxu0 0.0
      %v1692 = vand.u32 %v1232, 4294901760
      %1693 = vmatmul.mubr.f32.gmra.mrb[0].mxu0 %v1692
      %v1694 = vpop.f32.mrb[0].mxu0
      %v1695 = vadd.f32 %v1621, %v1694
      %v1696 = vpop.f32.mrb[0].mxu0
      %v1697 = vadd.f32 %v1623, %v1696
      %1698 = vdwg.mxu0
      %v1699 = vadd.f32 %v1225, %v1695
      %v1700 = vadd.f32 %v1227, %v1697
      %1701 = vrot.lane.b32.xlu0 %v205, 1
      %v1702 = vpop.permute.xlu0 %1701
      %1703 = vrot.lane.b32.xlu0 %v206, 1
      %v1704 = vpop.permute.xlu0 %1703
      %v1705 = vsel %vm253, %v1702, %v1704
      %v1706 = vsel %vm253, %v1704, %v1702
      %1707 = vrot.lane.b32.xlu0 %v205, 127
      %v1708 = vpop.permute.xlu0 %1707
      %1709 = vrot.lane.b32.xlu0 %v206, 127
      %v1710 = vpop.permute.xlu0 %1709
      %v1711 = vsel %vm260, %v1708, %v1710
      %v1712 = vsel %vm260, %v1710, %v1708
      %v1713 = vsel %vm272, %v1711, %v1706
      %v1714 = vsel %vm273, %v1712, %v1705
      %v1715 = vsel %vm285, %v1706, %v1711
      %v1716 = vsel %vm286, %v1705, %v1712
      %s1717 = scalar_lea.vmem %s2, 24
      %v1718 = vld [vmem:[%s1717] sm:$0xff]
      %v1720 = vsel %vm292, %v1718, 0
      %v1722 = vand.u32 %v1714, 4294901760
      %1723 = vmatprep.subr.mxu0 %v1722
      %v1724 = vand.u32 %v1713, 4294901760
      %1725 = vmatpush1.msra.mxu0 %v1724
      %1726 = vmatprep.subr.mxu0 0.0
      %1727 = vmatpush1.msra.mxu0 0.0
      %1728 = vmatprep.subr.mxu0 0.0
      %1729 = vmatpush1.msra.mxu0 0.0
      %1730 = vmatprep.subr.mxu0 0.0
      %1731 = vmatpush1.msra.mxu0 0.0
      %1732 = vmatprep.subr.mxu0 0.0
      %1733 = vmatpush1.msra.mxu0 0.0
      %1734 = vmatprep.subr.mxu0 0.0
      %1735 = vmatpush1.msra.mxu0 0.0
      %1736 = vmatprep.subr.mxu0 0.0
      %1737 = vmatpush1.msra.mxu0 0.0
      %1738 = vmatprep.subr.mxu0 0.0
      %1739 = vmatpush1.msra.mxu0 0.0
      %1740 = vmatprep.subr.mxu0 0.0
      %1741 = vmatpush1.msra.mxu0 0.0
      %1742 = vmatprep.subr.mxu0 0.0
      %1743 = vmatpush1.msra.mxu0 0.0
      %1744 = vmatprep.subr.mxu0 0.0
      %1745 = vmatpush1.msra.mxu0 0.0
      %1746 = vmatprep.subr.mxu0 0.0
      %1747 = vmatpush1.msra.mxu0 0.0
      %1748 = vmatprep.subr.mxu0 0.0
      %1749 = vmatpush1.msra.mxu0 0.0
      %1750 = vmatprep.subr.mxu0 0.0
      %1751 = vmatpush1.msra.mxu0 0.0
      %1752 = vmatprep.subr.mxu0 0.0
      %1753 = vmatpush1.msra.mxu0 0.0
      %1754 = vmatprep.subr.mxu0 0.0
      %1755 = vmatpush1.msra.mxu0 0.0
      %1756 = vmatprep.subr.mxu0 0.0
      %1757 = vmatpush1.msra.mxu0 0.0
      %1758 = vmatprep.subr.mxu0 0.0
      %1759 = vmatpush1.msra.mxu0 0.0
      %1760 = vmatprep.subr.mxu0 0.0
      %1761 = vmatpush1.msra.mxu0 0.0
      %1762 = vmatprep.subr.mxu0 0.0
      %1763 = vmatpush1.msra.mxu0 0.0
      %1764 = vmatprep.subr.mxu0 0.0
      %1765 = vmatpush1.msra.mxu0 0.0
      %1766 = vmatprep.subr.mxu0 0.0
      %1767 = vmatpush1.msra.mxu0 0.0
      %1768 = vmatprep.subr.mxu0 0.0
      %1769 = vmatpush1.msra.mxu0 0.0
      %1770 = vmatprep.subr.mxu0 0.0
      %1771 = vmatpush1.msra.mxu0 0.0
      %1772 = vmatprep.subr.mxu0 0.0
      %1773 = vmatpush1.msra.mxu0 0.0
      %1774 = vmatprep.subr.mxu0 0.0
      %1775 = vmatpush1.msra.mxu0 0.0
      %1776 = vmatprep.subr.mxu0 0.0
      %1777 = vmatpush1.msra.mxu0 0.0
      %1778 = vmatprep.subr.mxu0 0.0
      %1779 = vmatpush1.msra.mxu0 0.0
      %1780 = vmatprep.subr.mxu0 0.0
      %1781 = vmatpush1.msra.mxu0 0.0
      %1782 = vmatprep.subr.mxu0 0.0
      %1783 = vmatpush1.msra.mxu0 0.0
      %1784 = vmatprep.subr.mxu0 0.0
      %1785 = vmatpush1.msra.mxu0 0.0
      %1786 = vmatprep.subr.mxu0 0.0
      %1787 = vmatpush1.msra.mxu0 0.0
      %1788 = vmatprep.mubr.f32.mxu0 0.0
      %v1789 = vand.u32 %v1720, 4294901760
      %v1790 = vsub.f32 %v1720, %v1789
      %v1791 = vand.u32 %v1790, 4294901760
      %v1792 = vsub.f32 %v1790, %v1791
      %v1793 = vand.u32 %v1792, 4294901760
      %1794 = vmatmul.mubr.f32.gmra.mrb[0].mxu0 %v1793
      %v1795 = vpop.f32.mrb[0].mxu0
      %v1796 = vadd.f32 0.0, %v1795
      %v1797 = vpop.f32.mrb[0].mxu0
      %v1798 = vadd.f32 0.0, %v1797
      %1799 = vdwg.mxu0
      %v1800 = vand.u32 %v1714, 4294901760
      %v1801 = vsub.f32 %v1714, %v1800
      %v1802 = vand.u32 %v1801, 4294901760
      %v1803 = vsub.f32 %v1801, %v1802
      %v1804 = vand.u32 %v1803, 4294901760
      %1805 = vmatprep.subr.mxu0 %v1804
      %v1806 = vand.u32 %v1713, 4294901760
      %v1807 = vsub.f32 %v1713, %v1806
      %v1808 = vand.u32 %v1807, 4294901760
      %v1809 = vsub.f32 %v1807, %v1808
      %v1810 = vand.u32 %v1809, 4294901760
      %1811 = vmatpush1.msra.mxu0 %v1810
      %1812 = vmatprep.subr.mxu0 0.0
      %1813 = vmatpush1.msra.mxu0 0.0
      %1814 = vmatprep.subr.mxu0 0.0
      %1815 = vmatpush1.msra.mxu0 0.0
      %1816 = vmatprep.subr.mxu0 0.0
      %1817 = vmatpush1.msra.mxu0 0.0
      %1818 = vmatprep.subr.mxu0 0.0
      %1819 = vmatpush1.msra.mxu0 0.0
      %1820 = vmatprep.subr.mxu0 0.0
      %1821 = vmatpush1.msra.mxu0 0.0
      %1822 = vmatprep.subr.mxu0 0.0
      %1823 = vmatpush1.msra.mxu0 0.0
      %1824 = vmatprep.subr.mxu0 0.0
      %1825 = vmatpush1.msra.mxu0 0.0
      %1826 = vmatprep.subr.mxu0 0.0
      %1827 = vmatpush1.msra.mxu0 0.0
      %1828 = vmatprep.subr.mxu0 0.0
      %1829 = vmatpush1.msra.mxu0 0.0
      %1830 = vmatprep.subr.mxu0 0.0
      %1831 = vmatpush1.msra.mxu0 0.0
      %1832 = vmatprep.subr.mxu0 0.0
      %1833 = vmatpush1.msra.mxu0 0.0
      %1834 = vmatprep.subr.mxu0 0.0
      %1835 = vmatpush1.msra.mxu0 0.0
      %1836 = vmatprep.subr.mxu0 0.0
      %1837 = vmatpush1.msra.mxu0 0.0
      %1838 = vmatprep.subr.mxu0 0.0
      %1839 = vmatpush1.msra.mxu0 0.0
      %1840 = vmatprep.subr.mxu0 0.0
      %1841 = vmatpush1.msra.mxu0 0.0
      %1842 = vmatprep.subr.mxu0 0.0
      %1843 = vmatpush1.msra.mxu0 0.0
      %1844 = vmatprep.subr.mxu0 0.0
      %1845 = vmatpush1.msra.mxu0 0.0
      %1846 = vmatprep.subr.mxu0 0.0
      %1847 = vmatpush1.msra.mxu0 0.0
      %1848 = vmatprep.subr.mxu0 0.0
      %1849 = vmatpush1.msra.mxu0 0.0
      %1850 = vmatprep.subr.mxu0 0.0
      %1851 = vmatpush1.msra.mxu0 0.0
      %1852 = vmatprep.subr.mxu0 0.0
      %1853 = vmatpush1.msra.mxu0 0.0
      %1854 = vmatprep.subr.mxu0 0.0
      %1855 = vmatpush1.msra.mxu0 0.0
      %1856 = vmatprep.subr.mxu0 0.0
      %1857 = vmatpush1.msra.mxu0 0.0
      %1858 = vmatprep.subr.mxu0 0.0
      %1859 = vmatpush1.msra.mxu0 0.0
      %1860 = vmatprep.subr.mxu0 0.0
      %1861 = vmatpush1.msra.mxu0 0.0
      %1862 = vmatprep.subr.mxu0 0.0
      %1863 = vmatpush1.msra.mxu0 0.0
      %1864 = vmatprep.subr.mxu0 0.0
      %1865 = vmatpush1.msra.mxu0 0.0
      %1866 = vmatprep.subr.mxu0 0.0
      %1867 = vmatpush1.msra.mxu0 0.0
      %1868 = vmatprep.subr.mxu0 0.0
      %1869 = vmatpush1.msra.mxu0 0.0
      %1870 = vmatprep.subr.mxu0 0.0
      %1871 = vmatpush1.msra.mxu0 0.0
      %1872 = vmatprep.subr.mxu0 0.0
      %1873 = vmatpush1.msra.mxu0 0.0
      %1874 = vmatprep.mubr.f32.mxu0 0.0
      %v1875 = vand.u32 %v1720, 4294901760
      %1876 = vmatmul.mubr.f32.gmra.mrb[0].mxu0 %v1875
      %v1877 = vpop.f32.mrb[0].mxu0
      %v1878 = vadd.f32 %v1796, %v1877
      %v1879 = vpop.f32.mrb[0].mxu0
      %v1880 = vadd.f32 %v1798, %v1879
      %1881 = vdwg.mxu0
      %v1882 = vand.u32 %v1714, 4294901760
      %v1883 = vsub.f32 %v1714, %v1882
      %1884 = vmatprep.subr.mxu0 %v1883
      %v1885 = vand.u32 %v1713, 4294901760
      %v1886 = vsub.f32 %v1713, %v1885
      %1887 = vmatpush1.msra.mxu0 %v1886
      %1888 = vmatprep.subr.mxu0 0.0
      %1889 = vmatpush1.msra.mxu0 0.0
      %1890 = vmatprep.subr.mxu0 0.0
      %1891 = vmatpush1.msra.mxu0 0.0
      %1892 = vmatprep.subr.mxu0 0.0
      %1893 = vmatpush1.msra.mxu0 0.0
      %1894 = vmatprep.subr.mxu0 0.0
      %1895 = vmatpush1.msra.mxu0 0.0
      %1896 = vmatprep.subr.mxu0 0.0
      %1897 = vmatpush1.msra.mxu0 0.0
      %1898 = vmatprep.subr.mxu0 0.0
      %1899 = vmatpush1.msra.mxu0 0.0
      %1900 = vmatprep.subr.mxu0 0.0
      %1901 = vmatpush1.msra.mxu0 0.0
      %1902 = vmatprep.subr.mxu0 0.0
      %1903 = vmatpush1.msra.mxu0 0.0
      %1904 = vmatprep.subr.mxu0 0.0
      %1905 = vmatpush1.msra.mxu0 0.0
      %1906 = vmatprep.subr.mxu0 0.0
      %1907 = vmatpush1.msra.mxu0 0.0
      %1908 = vmatprep.subr.mxu0 0.0
      %1909 = vmatpush1.msra.mxu0 0.0
      %1910 = vmatprep.subr.mxu0 0.0
      %1911 = vmatpush1.msra.mxu0 0.0
      %1912 = vmatprep.subr.mxu0 0.0
      %1913 = vmatpush1.msra.mxu0 0.0
      %1914 = vmatprep.subr.mxu0 0.0
      %1915 = vmatpush1.msra.mxu0 0.0
      %1916 = vmatprep.subr.mxu0 0.0
      %1917 = vmatpush1.msra.mxu0 0.0
      %1918 = vmatprep.subr.mxu0 0.0
      %1919 = vmatpush1.msra.mxu0 0.0
      %1920 = vmatprep.subr.mxu0 0.0
      %1921 = vmatpush1.msra.mxu0 0.0
      %1922 = vmatprep.subr.mxu0 0.0
      %1923 = vmatpush1.msra.mxu0 0.0
      %1924 = vmatprep.subr.mxu0 0.0
      %1925 = vmatpush1.msra.mxu0 0.0
      %1926 = vmatprep.subr.mxu0 0.0
      %1927 = vmatpush1.msra.mxu0 0.0
      %1928 = vmatprep.subr.mxu0 0.0
      %1929 = vmatpush1.msra.mxu0 0.0
      %1930 = vmatprep.subr.mxu0 0.0
      %1931 = vmatpush1.msra.mxu0 0.0
      %1932 = vmatprep.subr.mxu0 0.0
      %1933 = vmatpush1.msra.mxu0 0.0
      %1934 = vmatprep.subr.mxu0 0.0
      %1935 = vmatpush1.msra.mxu0 0.0
      %1936 = vmatprep.subr.mxu0 0.0
      %1937 = vmatpush1.msra.mxu0 0.0
      %1938 = vmatprep.subr.mxu0 0.0
      %1939 = vmatpush1.msra.mxu0 0.0
      %1940 = vmatprep.subr.mxu0 0.0
      %1941 = vmatpush1.msra.mxu0 0.0
      %1942 = vmatprep.subr.mxu0 0.0
      %1943 = vmatpush1.msra.mxu0 0.0
      %1944 = vmatprep.subr.mxu0 0.0
      %1945 = vmatpush1.msra.mxu0 0.0
      %1946 = vmatprep.subr.mxu0 0.0
      %1947 = vmatpush1.msra.mxu0 0.0
      %1948 = vmatprep.subr.mxu0 0.0
      %1949 = vmatpush1.msra.mxu0 0.0
      %1950 = vmatprep.mubr.f32.mxu0 0.0
      %v1951 = vand.u32 %v1720, 4294901760
      %v1952 = vsub.f32 %v1720, %v1951
      %1953 = vmatmul.mubr.f32.gmra.mrb[0].mxu0 %v1952
      %v1954 = vpop.f32.mrb[0].mxu0
      %v1955 = vadd.f32 %v1878, %v1954
      %v1956 = vpop.f32.mrb[0].mxu0
      %v1957 = vadd.f32 %v1880, %v1956
      %1958 = vdwg.mxu0
      %v1959 = vand.u32 %v1714, 4294901760
      %1960 = vmatprep.subr.mxu0 %v1959
      %v1961 = vand.u32 %v1713, 4294901760
      %1962 = vmatpush1.msra.mxu0 %v1961
      %1963 = vmatprep.subr.mxu0 0.0
      %1964 = vmatpush1.msra.mxu0 0.0
      %1965 = vmatprep.subr.mxu0 0.0
      %1966 = vmatpush1.msra.mxu0 0.0
      %1967 = vmatprep.subr.mxu0 0.0
      %1968 = vmatpush1.msra.mxu0 0.0
      %1969 = vmatprep.subr.mxu0 0.0
      %1970 = vmatpush1.msra.mxu0 0.0
      %1971 = vmatprep.subr.mxu0 0.0
      %1972 = vmatpush1.msra.mxu0 0.0
      %1973 = vmatprep.subr.mxu0 0.0
      %1974 = vmatpush1.msra.mxu0 0.0
      %1975 = vmatprep.subr.mxu0 0.0
      %1976 = vmatpush1.msra.mxu0 0.0
      %1977 = vmatprep.subr.mxu0 0.0
      %1978 = vmatpush1.msra.mxu0 0.0
      %1979 = vmatprep.subr.mxu0 0.0
      %1980 = vmatpush1.msra.mxu0 0.0
      %1981 = vmatprep.subr.mxu0 0.0
      %1982 = vmatpush1.msra.mxu0 0.0
      %1983 = vmatprep.subr.mxu0 0.0
      %1984 = vmatpush1.msra.mxu0 0.0
      %1985 = vmatprep.subr.mxu0 0.0
      %1986 = vmatpush1.msra.mxu0 0.0
      %1987 = vmatprep.subr.mxu0 0.0
      %1988 = vmatpush1.msra.mxu0 0.0
      %1989 = vmatprep.subr.mxu0 0.0
      %1990 = vmatpush1.msra.mxu0 0.0
      %1991 = vmatprep.subr.mxu0 0.0
      %1992 = vmatpush1.msra.mxu0 0.0
      %1993 = vmatprep.subr.mxu0 0.0
      %1994 = vmatpush1.msra.mxu0 0.0
      %1995 = vmatprep.subr.mxu0 0.0
      %1996 = vmatpush1.msra.mxu0 0.0
      %1997 = vmatprep.subr.mxu0 0.0
      %1998 = vmatpush1.msra.mxu0 0.0
      %1999 = vmatprep.subr.mxu0 0.0
      %2000 = vmatpush1.msra.mxu0 0.0
      %2001 = vmatprep.subr.mxu0 0.0
      %2002 = vmatpush1.msra.mxu0 0.0
      %2003 = vmatprep.subr.mxu0 0.0
      %2004 = vmatpush1.msra.mxu0 0.0
      %2005 = vmatprep.subr.mxu0 0.0
      %2006 = vmatpush1.msra.mxu0 0.0
      %2007 = vmatprep.subr.mxu0 0.0
      %2008 = vmatpush1.msra.mxu0 0.0
      %2009 = vmatprep.subr.mxu0 0.0
      %2010 = vmatpush1.msra.mxu0 0.0
      %2011 = vmatprep.subr.mxu0 0.0
      %2012 = vmatpush1.msra.mxu0 0.0
      %2013 = vmatprep.subr.mxu0 0.0
      %2014 = vmatpush1.msra.mxu0 0.0
      %2015 = vmatprep.subr.mxu0 0.0
      %2016 = vmatpush1.msra.mxu0 0.0
      %2017 = vmatprep.subr.mxu0 0.0
      %2018 = vmatpush1.msra.mxu0 0.0
      %2019 = vmatprep.subr.mxu0 0.0
      %2020 = vmatpush1.msra.mxu0 0.0
      %2021 = vmatprep.subr.mxu0 0.0
      %2022 = vmatpush1.msra.mxu0 0.0
      %2023 = vmatprep.subr.mxu0 0.0
      %2024 = vmatpush1.msra.mxu0 0.0
      %2025 = vmatprep.mubr.f32.mxu0 0.0
      %v2026 = vand.u32 %v1720, 4294901760
      %v2027 = vsub.f32 %v1720, %v2026
      %v2028 = vand.u32 %v2027, 4294901760
      %2029 = vmatmul.mubr.f32.gmra.mrb[0].mxu0 %v2028
      %v2030 = vpop.f32.mrb[0].mxu0
      %v2031 = vadd.f32 %v1955, %v2030
      %v2032 = vpop.f32.mrb[0].mxu0
      %v2033 = vadd.f32 %v1957, %v2032
      %2034 = vdwg.mxu0
      %v2035 = vand.u32 %v1714, 4294901760
      %v2036 = vsub.f32 %v1714, %v2035
      %v2037 = vand.u32 %v2036, 4294901760
      %2038 = vmatprep.subr.mxu0 %v2037
      %v2039 = vand.u32 %v1713, 4294901760
      %v2040 = vsub.f32 %v1713, %v2039
      %v2041 = vand.u32 %v2040, 4294901760
      %2042 = vmatpush1.msra.mxu0 %v2041
      %2043 = vmatprep.subr.mxu0 0.0
      %2044 = vmatpush1.msra.mxu0 0.0
      %2045 = vmatprep.subr.mxu0 0.0
      %2046 = vmatpush1.msra.mxu0 0.0
      %2047 = vmatprep.subr.mxu0 0.0
      %2048 = vmatpush1.msra.mxu0 0.0
      %2049 = vmatprep.subr.mxu0 0.0
      %2050 = vmatpush1.msra.mxu0 0.0
      %2051 = vmatprep.subr.mxu0 0.0
      %2052 = vmatpush1.msra.mxu0 0.0
      %2053 = vmatprep.subr.mxu0 0.0
      %2054 = vmatpush1.msra.mxu0 0.0
      %2055 = vmatprep.subr.mxu0 0.0
      %2056 = vmatpush1.msra.mxu0 0.0
      %2057 = vmatprep.subr.mxu0 0.0
      %2058 = vmatpush1.msra.mxu0 0.0
      %2059 = vmatprep.subr.mxu0 0.0
      %2060 = vmatpush1.msra.mxu0 0.0
      %2061 = vmatprep.subr.mxu0 0.0
      %2062 = vmatpush1.msra.mxu0 0.0
      %2063 = vmatprep.subr.mxu0 0.0
      %2064 = vmatpush1.msra.mxu0 0.0
      %2065 = vmatprep.subr.mxu0 0.0
      %2066 = vmatpush1.msra.mxu0 0.0
      %2067 = vmatprep.subr.mxu0 0.0
      %2068 = vmatpush1.msra.mxu0 0.0
      %2069 = vmatprep.subr.mxu0 0.0
      %2070 = vmatpush1.msra.mxu0 0.0
      %2071 = vmatprep.subr.mxu0 0.0
      %2072 = vmatpush1.msra.mxu0 0.0
      %2073 = vmatprep.subr.mxu0 0.0
      %2074 = vmatpush1.msra.mxu0 0.0
      %2075 = vmatprep.subr.mxu0 0.0
      %2076 = vmatpush1.msra.mxu0 0.0
      %2077 = vmatprep.subr.mxu0 0.0
      %2078 = vmatpush1.msra.mxu0 0.0
      %2079 = vmatprep.subr.mxu0 0.0
      %2080 = vmatpush1.msra.mxu0 0.0
      %2081 = vmatprep.subr.mxu0 0.0
      %2082 = vmatpush1.msra.mxu0 0.0
      %2083 = vmatprep.subr.mxu0 0.0
      %2084 = vmatpush1.msra.mxu0 0.0
      %2085 = vmatprep.subr.mxu0 0.0
      %2086 = vmatpush1.msra.mxu0 0.0
      %2087 = vmatprep.subr.mxu0 0.0
      %2088 = vmatpush1.msra.mxu0 0.0
      %2089 = vmatprep.subr.mxu0 0.0
      %2090 = vmatpush1.msra.mxu0 0.0
      %2091 = vmatprep.subr.mxu0 0.0
      %2092 = vmatpush1.msra.mxu0 0.0
      %2093 = vmatprep.subr.mxu0 0.0
      %2094 = vmatpush1.msra.mxu0 0.0
      %2095 = vmatprep.subr.mxu0 0.0
      %2096 = vmatpush1.msra.mxu0 0.0
      %2097 = vmatprep.subr.mxu0 0.0
      %2098 = vmatpush1.msra.mxu0 0.0
      %2099 = vmatprep.subr.mxu0 0.0
      %2100 = vmatpush1.msra.mxu0 0.0
      %2101 = vmatprep.subr.mxu0 0.0
      %2102 = vmatpush1.msra.mxu0 0.0
      %2103 = vmatprep.subr.mxu0 0.0
      %2104 = vmatpush1.msra.mxu0 0.0
      %2105 = vmatprep.mubr.f32.mxu0 0.0
      %v2106 = vand.u32 %v1720, 4294901760
      %2107 = vmatmul.mubr.f32.gmra.mrb[0].mxu0 %v2106
      %v2108 = vpop.f32.mrb[0].mxu0
      %v2109 = vadd.f32 %v2031, %v2108
      %v2110 = vpop.f32.mrb[0].mxu0
      %v2111 = vadd.f32 %v2033, %v2110
      %2112 = vdwg.mxu0
      %v2113 = vand.u32 %v1714, 4294901760
      %2114 = vmatprep.subr.mxu0 %v2113
      %v2115 = vand.u32 %v1713, 4294901760
      %2116 = vmatpush1.msra.mxu0 %v2115
      %2117 = vmatprep.subr.mxu0 0.0
      %2118 = vmatpush1.msra.mxu0 0.0
      %2119 = vmatprep.subr.mxu0 0.0
      %2120 = vmatpush1.msra.mxu0 0.0
      %2121 = vmatprep.subr.mxu0 0.0
      %2122 = vmatpush1.msra.mxu0 0.0
      %2123 = vmatprep.subr.mxu0 0.0
      %2124 = vmatpush1.msra.mxu0 0.0
      %2125 = vmatprep.subr.mxu0 0.0
      %2126 = vmatpush1.msra.mxu0 0.0
      %2127 = vmatprep.subr.mxu0 0.0
      %2128 = vmatpush1.msra.mxu0 0.0
      %2129 = vmatprep.subr.mxu0 0.0
      %2130 = vmatpush1.msra.mxu0 0.0
      %2131 = vmatprep.subr.mxu0 0.0
      %2132 = vmatpush1.msra.mxu0 0.0
      %2133 = vmatprep.subr.mxu0 0.0
      %2134 = vmatpush1.msra.mxu0 0.0
      %2135 = vmatprep.subr.mxu0 0.0
      %2136 = vmatpush1.msra.mxu0 0.0
      %2137 = vmatprep.subr.mxu0 0.0
      %2138 = vmatpush1.msra.mxu0 0.0
      %2139 = vmatprep.subr.mxu0 0.0
      %2140 = vmatpush1.msra.mxu0 0.0
      %2141 = vmatprep.subr.mxu0 0.0
      %2142 = vmatpush1.msra.mxu0 0.0
      %2143 = vmatprep.subr.mxu0 0.0
      %2144 = vmatpush1.msra.mxu0 0.0
      %2145 = vmatprep.subr.mxu0 0.0
      %2146 = vmatpush1.msra.mxu0 0.0
      %2147 = vmatprep.subr.mxu0 0.0
      %2148 = vmatpush1.msra.mxu0 0.0
      %2149 = vmatprep.subr.mxu0 0.0
      %2150 = vmatpush1.msra.mxu0 0.0
      %2151 = vmatprep.subr.mxu0 0.0
      %2152 = vmatpush1.msra.mxu0 0.0
      %2153 = vmatprep.subr.mxu0 0.0
      %2154 = vmatpush1.msra.mxu0 0.0
      %2155 = vmatprep.subr.mxu0 0.0
      %2156 = vmatpush1.msra.mxu0 0.0
      %2157 = vmatprep.subr.mxu0 0.0
      %2158 = vmatpush1.msra.mxu0 0.0
      %2159 = vmatprep.subr.mxu0 0.0
      %2160 = vmatpush1.msra.mxu0 0.0
      %2161 = vmatprep.subr.mxu0 0.0
      %2162 = vmatpush1.msra.mxu0 0.0
      %2163 = vmatprep.subr.mxu0 0.0
      %2164 = vmatpush1.msra.mxu0 0.0
      %2165 = vmatprep.subr.mxu0 0.0
      %2166 = vmatpush1.msra.mxu0 0.0
      %2167 = vmatprep.subr.mxu0 0.0
      %2168 = vmatpush1.msra.mxu0 0.0
      %2169 = vmatprep.subr.mxu0 0.0
      %2170 = vmatpush1.msra.mxu0 0.0
      %2171 = vmatprep.subr.mxu0 0.0
      %2172 = vmatpush1.msra.mxu0 0.0
      %2173 = vmatprep.subr.mxu0 0.0
      %2174 = vmatpush1.msra.mxu0 0.0
      %2175 = vmatprep.subr.mxu0 0.0
      %2176 = vmatpush1.msra.mxu0 0.0
      %2177 = vmatprep.subr.mxu0 0.0
      %2178 = vmatpush1.msra.mxu0 0.0
      %2179 = vmatprep.mubr.f32.mxu0 0.0
      %v2180 = vand.u32 %v1720, 4294901760
      %2181 = vmatmul.mubr.f32.gmra.mrb[0].mxu0 %v2180
      %v2182 = vpop.f32.mrb[0].mxu0
      %v2183 = vadd.f32 %v2109, %v2182
      %v2184 = vpop.f32.mrb[0].mxu0
      %v2185 = vadd.f32 %v2111, %v2184
      %2186 = vdwg.mxu0
      %v2187 = vadd.f32 %v1699, %v2183
      %v2188 = vadd.f32 %v1700, %v2185
      %s2189 = scalar_lea.vmem %s2, 32
      %v2190 = vld [vmem:[%s2189] sm:$0xff]
      %v2192 = vsel %vm292, %v2190, 0
      %v2194 = vand.u32 %v206, 4294901760
      %2195 = vmatprep.subr.mxu0 %v2194
      %v2196 = vand.u32 %v205, 4294901760
      %2197 = vmatpush1.msra.mxu0 %v2196
      %2198 = vmatprep.subr.mxu0 0.0
      %2199 = vmatpush1.msra.mxu0 0.0
      %2200 = vmatprep.subr.mxu0 0.0
      %2201 = vmatpush1.msra.mxu0 0.0
      %2202 = vmatprep.subr.mxu0 0.0
      %2203 = vmatpush1.msra.mxu0 0.0
      %2204 = vmatprep.subr.mxu0 0.0
      %2205 = vmatpush1.msra.mxu0 0.0
      %2206 = vmatprep.subr.mxu0 0.0
      %2207 = vmatpush1.msra.mxu0 0.0
      %2208 = vmatprep.subr.mxu0 0.0
      %2209 = vmatpush1.msra.mxu0 0.0
      %2210 = vmatprep.subr.mxu0 0.0
      %2211 = vmatpush1.msra.mxu0 0.0
      %2212 = vmatprep.subr.mxu0 0.0
      %2213 = vmatpush1.msra.mxu0 0.0
      %2214 = vmatprep.subr.mxu0 0.0
      %2215 = vmatpush1.msra.mxu0 0.0
      %2216 = vmatprep.subr.mxu0 0.0
      %2217 = vmatpush1.msra.mxu0 0.0
      %2218 = vmatprep.subr.mxu0 0.0
      %2219 = vmatpush1.msra.mxu0 0.0
      %2220 = vmatprep.subr.mxu0 0.0
      %2221 = vmatpush1.msra.mxu0 0.0
      %2222 = vmatprep.subr.mxu0 0.0
      %2223 = vmatpush1.msra.mxu0 0.0
      %2224 = vmatprep.subr.mxu0 0.0
      %2225 = vmatpush1.msra.mxu0 0.0
      %2226 = vmatprep.subr.mxu0 0.0
      %2227 = vmatpush1.msra.mxu0 0.0
      %2228 = vmatprep.subr.mxu0 0.0
      %2229 = vmatpush1.msra.mxu0 0.0
      %2230 = vmatprep.subr.mxu0 0.0
      %2231 = vmatpush1.msra.mxu0 0.0
      %2232 = vmatprep.subr.mxu0 0.0
      %2233 = vmatpush1.msra.mxu0 0.0
      %2234 = vmatprep.subr.mxu0 0.0
      %2235 = vmatpush1.msra.mxu0 0.0
      %2236 = vmatprep.subr.mxu0 0.0
      %2237 = vmatpush1.msra.mxu0 0.0
      %2238 = vmatprep.subr.mxu0 0.0
      %2239 = vmatpush1.msra.mxu0 0.0
      %2240 = vmatprep.subr.mxu0 0.0
      %2241 = vmatpush1.msra.mxu0 0.0
      %2242 = vmatprep.subr.mxu0 0.0
      %2243 = vmatpush1.msra.mxu0 0.0
      %2244 = vmatprep.subr.mxu0 0.0
      %2245 = vmatpush1.msra.mxu0 0.0
      %2246 = vmatprep.subr.mxu0 0.0
      %2247 = vmatpush1.msra.mxu0 0.0
      %2248 = vmatprep.subr.mxu0 0.0
      %2249 = vmatpush1.msra.mxu0 0.0
      %2250 = vmatprep.subr.mxu0 0.0
      %2251 = vmatpush1.msra.mxu0 0.0
      %2252 = vmatprep.subr.mxu0 0.0
      %2253 = vmatpush1.msra.mxu0 0.0
      %2254 = vmatprep.subr.mxu0 0.0
      %2255 = vmatpush1.msra.mxu0 0.0
      %2256 = vmatprep.subr.mxu0 0.0
      %2257 = vmatpush1.msra.mxu0 0.0
      %2258 = vmatprep.subr.mxu0 0.0
      %2259 = vmatpush1.msra.mxu0 0.0
      %2260 = vmatprep.mubr.f32.mxu0 0.0
      %v2261 = vand.u32 %v2192, 4294901760
      %v2262 = vsub.f32 %v2192, %v2261
      %v2263 = vand.u32 %v2262, 4294901760
      %v2264 = vsub.f32 %v2262, %v2263
      %v2265 = vand.u32 %v2264, 4294901760
      %2266 = vmatmul.mubr.f32.gmra.mrb[0].mxu0 %v2265
      %v2267 = vpop.f32.mrb[0].mxu0
      %v2268 = vadd.f32 0.0, %v2267
      %v2269 = vpop.f32.mrb[0].mxu0
      %v2270 = vadd.f32 0.0, %v2269
      %2271 = vdwg.mxu0
      %v2272 = vand.u32 %v206, 4294901760
      %v2273 = vsub.f32 %v206, %v2272
      %v2274 = vand.u32 %v2273, 4294901760
      %v2275 = vsub.f32 %v2273, %v2274
      %v2276 = vand.u32 %v2275, 4294901760
      %2277 = vmatprep.subr.mxu0 %v2276
      %v2278 = vand.u32 %v205, 4294901760
      %v2279 = vsub.f32 %v205, %v2278
      %v2280 = vand.u32 %v2279, 4294901760
      %v2281 = vsub.f32 %v2279, %v2280
      %v2282 = vand.u32 %v2281, 4294901760
      %2283 = vmatpush1.msra.mxu0 %v2282
      %2284 = vmatprep.subr.mxu0 0.0
      %2285 = vmatpush1.msra.mxu0 0.0
      %2286 = vmatprep.subr.mxu0 0.0
      %2287 = vmatpush1.msra.mxu0 0.0
      %2288 = vmatprep.subr.mxu0 0.0
      %2289 = vmatpush1.msra.mxu0 0.0
      %2290 = vmatprep.subr.mxu0 0.0
      %2291 = vmatpush1.msra.mxu0 0.0
      %2292 = vmatprep.subr.mxu0 0.0
      %2293 = vmatpush1.msra.mxu0 0.0
      %2294 = vmatprep.subr.mxu0 0.0
      %2295 = vmatpush1.msra.mxu0 0.0
      %2296 = vmatprep.subr.mxu0 0.0
      %2297 = vmatpush1.msra.mxu0 0.0
      %2298 = vmatprep.subr.mxu0 0.0
      %2299 = vmatpush1.msra.mxu0 0.0
      %2300 = vmatprep.subr.mxu0 0.0
      %2301 = vmatpush1.msra.mxu0 0.0
      %2302 = vmatprep.subr.mxu0 0.0
      %2303 = vmatpush1.msra.mxu0 0.0
      %2304 = vmatprep.subr.mxu0 0.0
      %2305 = vmatpush1.msra.mxu0 0.0
      %2306 = vmatprep.subr.mxu0 0.0
      %2307 = vmatpush1.msra.mxu0 0.0
      %2308 = vmatprep.subr.mxu0 0.0
      %2309 = vmatpush1.msra.mxu0 0.0
      %2310 = vmatprep.subr.mxu0 0.0
      %2311 = vmatpush1.msra.mxu0 0.0
      %2312 = vmatprep.subr.mxu0 0.0
      %2313 = vmatpush1.msra.mxu0 0.0
      %2314 = vmatprep.subr.mxu0 0.0
      %2315 = vmatpush1.msra.mxu0 0.0
      %2316 = vmatprep.subr.mxu0 0.0
      %2317 = vmatpush1.msra.mxu0 0.0
      %2318 = vmatprep.subr.mxu0 0.0
      %2319 = vmatpush1.msra.mxu0 0.0
      %2320 = vmatprep.subr.mxu0 0.0
      %2321 = vmatpush1.msra.mxu0 0.0
      %2322 = vmatprep.subr.mxu0 0.0
      %2323 = vmatpush1.msra.mxu0 0.0
      %2324 = vmatprep.subr.mxu0 0.0
      %2325 = vmatpush1.msra.mxu0 0.0
      %2326 = vmatprep.subr.mxu0 0.0
      %2327 = vmatpush1.msra.mxu0 0.0
      %2328 = vmatprep.subr.mxu0 0.0
      %2329 = vmatpush1.msra.mxu0 0.0
      %2330 = vmatprep.subr.mxu0 0.0
      %2331 = vmatpush1.msra.mxu0 0.0
      %2332 = vmatprep.subr.mxu0 0.0
      %2333 = vmatpush1.msra.mxu0 0.0
      %2334 = vmatprep.subr.mxu0 0.0
      %2335 = vmatpush1.msra.mxu0 0.0
      %2336 = vmatprep.subr.mxu0 0.0
      %2337 = vmatpush1.msra.mxu0 0.0
      %2338 = vmatprep.subr.mxu0 0.0
      %2339 = vmatpush1.msra.mxu0 0.0
      %2340 = vmatprep.subr.mxu0 0.0
      %2341 = vmatpush1.msra.mxu0 0.0
      %2342 = vmatprep.subr.mxu0 0.0
      %2343 = vmatpush1.msra.mxu0 0.0
      %2344 = vmatprep.subr.mxu0 0.0
      %2345 = vmatpush1.msra.mxu0 0.0
      %2346 = vmatprep.mubr.f32.mxu0 0.0
      %v2347 = vand.u32 %v2192, 4294901760
      %2348 = vmatmul.mubr.f32.gmra.mrb[0].mxu0 %v2347
      %v2349 = vpop.f32.mrb[0].mxu0
      %v2350 = vadd.f32 %v2268, %v2349
      %v2351 = vpop.f32.mrb[0].mxu0
      %v2352 = vadd.f32 %v2270, %v2351
      %2353 = vdwg.mxu0
      %v2354 = vand.u32 %v206, 4294901760
      %v2355 = vsub.f32 %v206, %v2354
      %2356 = vmatprep.subr.mxu0 %v2355
      %v2357 = vand.u32 %v205, 4294901760
      %v2358 = vsub.f32 %v205, %v2357
      %2359 = vmatpush1.msra.mxu0 %v2358
      %2360 = vmatprep.subr.mxu0 0.0
      %2361 = vmatpush1.msra.mxu0 0.0
      %2362 = vmatprep.subr.mxu0 0.0
      %2363 = vmatpush1.msra.mxu0 0.0
      %2364 = vmatprep.subr.mxu0 0.0
      %2365 = vmatpush1.msra.mxu0 0.0
      %2366 = vmatprep.subr.mxu0 0.0
      %2367 = vmatpush1.msra.mxu0 0.0
      %2368 = vmatprep.subr.mxu0 0.0
      %2369 = vmatpush1.msra.mxu0 0.0
      %2370 = vmatprep.subr.mxu0 0.0
      %2371 = vmatpush1.msra.mxu0 0.0
      %2372 = vmatprep.subr.mxu0 0.0
      %2373 = vmatpush1.msra.mxu0 0.0
      %2374 = vmatprep.subr.mxu0 0.0
      %2375 = vmatpush1.msra.mxu0 0.0
      %2376 = vmatprep.subr.mxu0 0.0
      %2377 = vmatpush1.msra.mxu0 0.0
      %2378 = vmatprep.subr.mxu0 0.0
      %2379 = vmatpush1.msra.mxu0 0.0
      %2380 = vmatprep.subr.mxu0 0.0
      %2381 = vmatpush1.msra.mxu0 0.0
      %2382 = vmatprep.subr.mxu0 0.0
      %2383 = vmatpush1.msra.mxu0 0.0
      %2384 = vmatprep.subr.mxu0 0.0
      %2385 = vmatpush1.msra.mxu0 0.0
      %2386 = vmatprep.subr.mxu0 0.0
      %2387 = vmatpush1.msra.mxu0 0.0
      %2388 = vmatprep.subr.mxu0 0.0
      %2389 = vmatpush1.msra.mxu0 0.0
      %2390 = vmatprep.subr.mxu0 0.0
      %2391 = vmatpush1.msra.mxu0 0.0
      %2392 = vmatprep.subr.mxu0 0.0
      %2393 = vmatpush1.msra.mxu0 0.0
      %2394 = vmatprep.subr.mxu0 0.0
      %2395 = vmatpush1.msra.mxu0 0.0
      %2396 = vmatprep.subr.mxu0 0.0
      %2397 = vmatpush1.msra.mxu0 0.0
      %2398 = vmatprep.subr.mxu0 0.0
      %2399 = vmatpush1.msra.mxu0 0.0
      %2400 = vmatprep.subr.mxu0 0.0
      %2401 = vmatpush1.msra.mxu0 0.0
      %2402 = vmatprep.subr.mxu0 0.0
      %2403 = vmatpush1.msra.mxu0 0.0
      %2404 = vmatprep.subr.mxu0 0.0
      %2405 = vmatpush1.msra.mxu0 0.0
      %2406 = vmatprep.subr.mxu0 0.0
      %2407 = vmatpush1.msra.mxu0 0.0
      %2408 = vmatprep.subr.mxu0 0.0
      %2409 = vmatpush1.msra.mxu0 0.0
      %2410 = vmatprep.subr.mxu0 0.0
      %2411 = vmatpush1.msra.mxu0 0.0
      %2412 = vmatprep.subr.mxu0 0.0
      %2413 = vmatpush1.msra.mxu0 0.0
      %2414 = vmatprep.subr.mxu0 0.0
      %2415 = vmatpush1.msra.mxu0 0.0
      %2416 = vmatprep.subr.mxu0 0.0
      %2417 = vmatpush1.msra.mxu0 0.0
      %2418 = vmatprep.subr.mxu0 0.0
      %2419 = vmatpush1.msra.mxu0 0.0
      %2420 = vmatprep.subr.mxu0 0.0
      %2421 = vmatpush1.msra.mxu0 0.0
      %2422 = vmatprep.mubr.f32.mxu0 0.0
      %v2423 = vand.u32 %v2192, 4294901760
      %v2424 = vsub.f32 %v2192, %v2423
      %2425 = vmatmul.mubr.f32.gmra.mrb[0].mxu0 %v2424
      %v2426 = vpop.f32.mrb[0].mxu0
      %v2427 = vadd.f32 %v2350, %v2426
      %v2428 = vpop.f32.mrb[0].mxu0
      %v2429 = vadd.f32 %v2352, %v2428
      %2430 = vdwg.mxu0
      %v2431 = vand.u32 %v206, 4294901760
      %2432 = vmatprep.subr.mxu0 %v2431
      %v2433 = vand.u32 %v205, 4294901760
      %2434 = vmatpush1.msra.mxu0 %v2433
      %2435 = vmatprep.subr.mxu0 0.0
      %2436 = vmatpush1.msra.mxu0 0.0
      %2437 = vmatprep.subr.mxu0 0.0
      %2438 = vmatpush1.msra.mxu0 0.0
      %2439 = vmatprep.subr.mxu0 0.0
      %2440 = vmatpush1.msra.mxu0 0.0
      %2441 = vmatprep.subr.mxu0 0.0
      %2442 = vmatpush1.msra.mxu0 0.0
      %2443 = vmatprep.subr.mxu0 0.0
      %2444 = vmatpush1.msra.mxu0 0.0
      %2445 = vmatprep.subr.mxu0 0.0
      %2446 = vmatpush1.msra.mxu0 0.0
      %2447 = vmatprep.subr.mxu0 0.0
      %2448 = vmatpush1.msra.mxu0 0.0
      %2449 = vmatprep.subr.mxu0 0.0
      %2450 = vmatpush1.msra.mxu0 0.0
      %2451 = vmatprep.subr.mxu0 0.0
      %2452 = vmatpush1.msra.mxu0 0.0
      %2453 = vmatprep.subr.mxu0 0.0
      %2454 = vmatpush1.msra.mxu0 0.0
      %2455 = vmatprep.subr.mxu0 0.0
      %2456 = vmatpush1.msra.mxu0 0.0
      %2457 = vmatprep.subr.mxu0 0.0
      %2458 = vmatpush1.msra.mxu0 0.0
      %2459 = vmatprep.subr.mxu0 0.0
      %2460 = vmatpush1.msra.mxu0 0.0
      %2461 = vmatprep.subr.mxu0 0.0
      %2462 = vmatpush1.msra.mxu0 0.0
      %2463 = vmatprep.subr.mxu0 0.0
      %2464 = vmatpush1.msra.mxu0 0.0
      %2465 = vmatprep.subr.mxu0 0.0
      %2466 = vmatpush1.msra.mxu0 0.0
      %2467 = vmatprep.subr.mxu0 0.0
      %2468 = vmatpush1.msra.mxu0 0.0
      %2469 = vmatprep.subr.mxu0 0.0
      %2470 = vmatpush1.msra.mxu0 0.0
      %2471 = vmatprep.subr.mxu0 0.0
      %2472 = vmatpush1.msra.mxu0 0.0
      %2473 = vmatprep.subr.mxu0 0.0
      %2474 = vmatpush1.msra.mxu0 0.0
      %2475 = vmatprep.subr.mxu0 0.0
      %2476 = vmatpush1.msra.mxu0 0.0
      %2477 = vmatprep.subr.mxu0 0.0
      %2478 = vmatpush1.msra.mxu0 0.0
      %2479 = vmatprep.subr.mxu0 0.0
      %2480 = vmatpush1.msra.mxu0 0.0
      %2481 = vmatprep.subr.mxu0 0.0
      %2482 = vmatpush1.msra.mxu0 0.0
      %2483 = vmatprep.subr.mxu0 0.0
      %2484 = vmatpush1.msra.mxu0 0.0
      %2485 = vmatprep.subr.mxu0 0.0
      %2486 = vmatpush1.msra.mxu0 0.0
      %2487 = vmatprep.subr.mxu0 0.0
      %2488 = vmatpush1.msra.mxu0 0.0
      %2489 = vmatprep.subr.mxu0 0.0
      %2490 = vmatpush1.msra.mxu0 0.0
      %2491 = vmatprep.subr.mxu0 0.0
      %2492 = vmatpush1.msra.mxu0 0.0
      %2493 = vmatprep.subr.mxu0 0.0
      %2494 = vmatpush1.msra.mxu0 0.0
      %2495 = vmatprep.subr.mxu0 0.0
      %2496 = vmatpush1.msra.mxu0 0.0
      %2497 = vmatprep.mubr.f32.mxu0 0.0
      %v2498 = vand.u32 %v2192, 4294901760
      %v2499 = vsub.f32 %v2192, %v2498
      %v2500 = vand.u32 %v2499, 4294901760
      %2501 = vmatmul.mubr.f32.gmra.mrb[0].mxu0 %v2500
      %v2502 = vpop.f32.mrb[0].mxu0
      %v2503 = vadd.f32 %v2427, %v2502
      %v2504 = vpop.f32.mrb[0].mxu0
      %v2505 = vadd.f32 %v2429, %v2504
      %2506 = vdwg.mxu0
      %v2507 = vand.u32 %v206, 4294901760
      %v2508 = vsub.f32 %v206, %v2507
      %v2509 = vand.u32 %v2508, 4294901760
      %2510 = vmatprep.subr.mxu0 %v2509
      %v2511 = vand.u32 %v205, 4294901760
      %v2512 = vsub.f32 %v205, %v2511
      %v2513 = vand.u32 %v2512, 4294901760
      %2514 = vmatpush1.msra.mxu0 %v2513
      %2515 = vmatprep.subr.mxu0 0.0
      %2516 = vmatpush1.msra.mxu0 0.0
      %2517 = vmatprep.subr.mxu0 0.0
      %2518 = vmatpush1.msra.mxu0 0.0
      %2519 = vmatprep.subr.mxu0 0.0
      %2520 = vmatpush1.msra.mxu0 0.0
      %2521 = vmatprep.subr.mxu0 0.0
      %2522 = vmatpush1.msra.mxu0 0.0
      %2523 = vmatprep.subr.mxu0 0.0
      %2524 = vmatpush1.msra.mxu0 0.0
      %2525 = vmatprep.subr.mxu0 0.0
      %2526 = vmatpush1.msra.mxu0 0.0
      %2527 = vmatprep.subr.mxu0 0.0
      %2528 = vmatpush1.msra.mxu0 0.0
      %2529 = vmatprep.subr.mxu0 0.0
      %2530 = vmatpush1.msra.mxu0 0.0
      %2531 = vmatprep.subr.mxu0 0.0
      %2532 = vmatpush1.msra.mxu0 0.0
      %2533 = vmatprep.subr.mxu0 0.0
      %2534 = vmatpush1.msra.mxu0 0.0
      %2535 = vmatprep.subr.mxu0 0.0
      %2536 = vmatpush1.msra.mxu0 0.0
      %2537 = vmatprep.subr.mxu0 0.0
      %2538 = vmatpush1.msra.mxu0 0.0
      %2539 = vmatprep.subr.mxu0 0.0
      %2540 = vmatpush1.msra.mxu0 0.0
      %2541 = vmatprep.subr.mxu0 0.0
      %2542 = vmatpush1.msra.mxu0 0.0
      %2543 = vmatprep.subr.mxu0 0.0
      %2544 = vmatpush1.msra.mxu0 0.0
      %2545 = vmatprep.subr.mxu0 0.0
      %2546 = vmatpush1.msra.mxu0 0.0
      %2547 = vmatprep.subr.mxu0 0.0
      %2548 = vmatpush1.msra.mxu0 0.0
      %2549 = vmatprep.subr.mxu0 0.0
      %2550 = vmatpush1.msra.mxu0 0.0
      %2551 = vmatprep.subr.mxu0 0.0
      %2552 = vmatpush1.msra.mxu0 0.0
      %2553 = vmatprep.subr.mxu0 0.0
      %2554 = vmatpush1.msra.mxu0 0.0
      %2555 = vmatprep.subr.mxu0 0.0
      %2556 = vmatpush1.msra.mxu0 0.0
      %2557 = vmatprep.subr.mxu0 0.0
      %2558 = vmatpush1.msra.mxu0 0.0
      %2559 = vmatprep.subr.mxu0 0.0
      %2560 = vmatpush1.msra.mxu0 0.0
      %2561 = vmatprep.subr.mxu0 0.0
      %2562 = vmatpush1.msra.mxu0 0.0
      %2563 = vmatprep.subr.mxu0 0.0
      %2564 = vmatpush1.msra.mxu0 0.0
      %2565 = vmatprep.subr.mxu0 0.0
      %2566 = vmatpush1.msra.mxu0 0.0
      %2567 = vmatprep.subr.mxu0 0.0
      %2568 = vmatpush1.msra.mxu0 0.0
      %2569 = vmatprep.subr.mxu0 0.0
      %2570 = vmatpush1.msra.mxu0 0.0
      %2571 = vmatprep.subr.mxu0 0.0
      %2572 = vmatpush1.msra.mxu0 0.0
      %2573 = vmatprep.subr.mxu0 0.0
      %2574 = vmatpush1.msra.mxu0 0.0
      %2575 = vmatprep.subr.mxu0 0.0
      %2576 = vmatpush1.msra.mxu0 0.0
      %2577 = vmatprep.mubr.f32.mxu0 0.0
      %v2578 = vand.u32 %v2192, 4294901760
      %2579 = vmatmul.mubr.f32.gmra.mrb[0].mxu0 %v2578
      %v2580 = vpop.f32.mrb[0].mxu0
      %v2581 = vadd.f32 %v2503, %v2580
      %v2582 = vpop.f32.mrb[0].mxu0
      %v2583 = vadd.f32 %v2505, %v2582
      %2584 = vdwg.mxu0
      %v2585 = vand.u32 %v206, 4294901760
      %2586 = vmatprep.subr.mxu0 %v2585
      %v2587 = vand.u32 %v205, 4294901760
      %2588 = vmatpush1.msra.mxu0 %v2587
      %2589 = vmatprep.subr.mxu0 0.0
      %2590 = vmatpush1.msra.mxu0 0.0
      %2591 = vmatprep.subr.mxu0 0.0
      %2592 = vmatpush1.msra.mxu0 0.0
      %2593 = vmatprep.subr.mxu0 0.0
      %2594 = vmatpush1.msra.mxu0 0.0
      %2595 = vmatprep.subr.mxu0 0.0
      %2596 = vmatpush1.msra.mxu0 0.0
      %2597 = vmatprep.subr.mxu0 0.0
      %2598 = vmatpush1.msra.mxu0 0.0
      %2599 = vmatprep.subr.mxu0 0.0
      %2600 = vmatpush1.msra.mxu0 0.0
      %2601 = vmatprep.subr.mxu0 0.0
      %2602 = vmatpush1.msra.mxu0 0.0
      %2603 = vmatprep.subr.mxu0 0.0
      %2604 = vmatpush1.msra.mxu0 0.0
      %2605 = vmatprep.subr.mxu0 0.0
      %2606 = vmatpush1.msra.mxu0 0.0
      %2607 = vmatprep.subr.mxu0 0.0
      %2608 = vmatpush1.msra.mxu0 0.0
      %2609 = vmatprep.subr.mxu0 0.0
      %2610 = vmatpush1.msra.mxu0 0.0
      %2611 = vmatprep.subr.mxu0 0.0
      %2612 = vmatpush1.msra.mxu0 0.0
      %2613 = vmatprep.subr.mxu0 0.0
      %2614 = vmatpush1.msra.mxu0 0.0
      %2615 = vmatprep.subr.mxu0 0.0
      %2616 = vmatpush1.msra.mxu0 0.0
      %2617 = vmatprep.subr.mxu0 0.0
      %2618 = vmatpush1.msra.mxu0 0.0
      %2619 = vmatprep.subr.mxu0 0.0
      %2620 = vmatpush1.msra.mxu0 0.0
      %2621 = vmatprep.subr.mxu0 0.0
      %2622 = vmatpush1.msra.mxu0 0.0
      %2623 = vmatprep.subr.mxu0 0.0
      %2624 = vmatpush1.msra.mxu0 0.0
      %2625 = vmatprep.subr.mxu0 0.0
      %2626 = vmatpush1.msra.mxu0 0.0
      %2627 = vmatprep.subr.mxu0 0.0
      %2628 = vmatpush1.msra.mxu0 0.0
      %2629 = vmatprep.subr.mxu0 0.0
      %2630 = vmatpush1.msra.mxu0 0.0
      %2631 = vmatprep.subr.mxu0 0.0
      %2632 = vmatpush1.msra.mxu0 0.0
      %2633 = vmatprep.subr.mxu0 0.0
      %2634 = vmatpush1.msra.mxu0 0.0
      %2635 = vmatprep.subr.mxu0 0.0
      %2636 = vmatpush1.msra.mxu0 0.0
      %2637 = vmatprep.subr.mxu0 0.0
      %2638 = vmatpush1.msra.mxu0 0.0
      %2639 = vmatprep.subr.mxu0 0.0
      %2640 = vmatpush1.msra.mxu0 0.0
      %2641 = vmatprep.subr.mxu0 0.0
      %2642 = vmatpush1.msra.mxu0 0.0
      %2643 = vmatprep.subr.mxu0 0.0
      %2644 = vmatpush1.msra.mxu0 0.0
      %2645 = vmatprep.subr.mxu0 0.0
      %2646 = vmatpush1.msra.mxu0 0.0
      %2647 = vmatprep.subr.mxu0 0.0
      %2648 = vmatpush1.msra.mxu0 0.0
      %2649 = vmatprep.subr.mxu0 0.0
      %2650 = vmatpush1.msra.mxu0 0.0
      %2651 = vmatprep.mubr.f32.mxu0 0.0
      %v2652 = vand.u32 %v2192, 4294901760
      %2653 = vmatmul.mubr.f32.gmra.mrb[0].mxu0 %v2652
      %v2654 = vpop.f32.mrb[0].mxu0
      %v2655 = vadd.f32 %v2581, %v2654
      %v2656 = vpop.f32.mrb[0].mxu0
      %v2657 = vadd.f32 %v2583, %v2656
      %2658 = vdwg.mxu0
      %v2659 = vadd.f32 %v2187, %v2655
      %v2660 = vadd.f32 %v2188, %v2657
      %s2661 = scalar_lea.vmem %s2, 40
      %v2662 = vld [vmem:[%s2661] sm:$0xff]
      %v2664 = vsel %vm292, %v2662, 0
      %v2666 = vand.u32 %v1716, 4294901760
      %2667 = vmatprep.subr.mxu0 %v2666
      %v2668 = vand.u32 %v1715, 4294901760
      %2669 = vmatpush1.msra.mxu0 %v2668
      %2670 = vmatprep.subr.mxu0 0.0
      %2671 = vmatpush1.msra.mxu0 0.0
      %2672 = vmatprep.subr.mxu0 0.0
      %2673 = vmatpush1.msra.mxu0 0.0
      %2674 = vmatprep.subr.mxu0 0.0
      %2675 = vmatpush1.msra.mxu0 0.0
      %2676 = vmatprep.subr.mxu0 0.0
      %2677 = vmatpush1.msra.mxu0 0.0
      %2678 = vmatprep.subr.mxu0 0.0
      %2679 = vmatpush1.msra.mxu0 0.0
      %2680 = vmatprep.subr.mxu0 0.0
      %2681 = vmatpush1.msra.mxu0 0.0
      %2682 = vmatprep.subr.mxu0 0.0
      %2683 = vmatpush1.msra.mxu0 0.0
      %2684 = vmatprep.subr.mxu0 0.0
      %2685 = vmatpush1.msra.mxu0 0.0
      %2686 = vmatprep.subr.mxu0 0.0
      %2687 = vmatpush1.msra.mxu0 0.0
      %2688 = vmatprep.subr.mxu0 0.0
      %2689 = vmatpush1.msra.mxu0 0.0
      %2690 = vmatprep.subr.mxu0 0.0
      %2691 = vmatpush1.msra.mxu0 0.0
      %2692 = vmatprep.subr.mxu0 0.0
      %2693 = vmatpush1.msra.mxu0 0.0
      %2694 = vmatprep.subr.mxu0 0.0
      %2695 = vmatpush1.msra.mxu0 0.0
      %2696 = vmatprep.subr.mxu0 0.0
      %2697 = vmatpush1.msra.mxu0 0.0
      %2698 = vmatprep.subr.mxu0 0.0
      %2699 = vmatpush1.msra.mxu0 0.0
      %2700 = vmatprep.subr.mxu0 0.0
      %2701 = vmatpush1.msra.mxu0 0.0
      %2702 = vmatprep.subr.mxu0 0.0
      %2703 = vmatpush1.msra.mxu0 0.0
      %2704 = vmatprep.subr.mxu0 0.0
      %2705 = vmatpush1.msra.mxu0 0.0
      %2706 = vmatprep.subr.mxu0 0.0
      %2707 = vmatpush1.msra.mxu0 0.0
      %2708 = vmatprep.subr.mxu0 0.0
      %2709 = vmatpush1.msra.mxu0 0.0
      %2710 = vmatprep.subr.mxu0 0.0
      %2711 = vmatpush1.msra.mxu0 0.0
      %2712 = vmatprep.subr.mxu0 0.0
      %2713 = vmatpush1.msra.mxu0 0.0
      %2714 = vmatprep.subr.mxu0 0.0
      %2715 = vmatpush1.msra.mxu0 0.0
      %2716 = vmatprep.subr.mxu0 0.0
      %2717 = vmatpush1.msra.mxu0 0.0
      %2718 = vmatprep.subr.mxu0 0.0
      %2719 = vmatpush1.msra.mxu0 0.0
      %2720 = vmatprep.subr.mxu0 0.0
      %2721 = vmatpush1.msra.mxu0 0.0
      %2722 = vmatprep.subr.mxu0 0.0
      %2723 = vmatpush1.msra.mxu0 0.0
      %2724 = vmatprep.subr.mxu0 0.0
      %2725 = vmatpush1.msra.mxu0 0.0
      %2726 = vmatprep.subr.mxu0 0.0
      %2727 = vmatpush1.msra.mxu0 0.0
      %2728 = vmatprep.subr.mxu0 0.0
      %2729 = vmatpush1.msra.mxu0 0.0
      %2730 = vmatprep.subr.mxu0 0.0
      %2731 = vmatpush1.msra.mxu0 0.0
      %2732 = vmatprep.mubr.f32.mxu0 0.0
      %v2733 = vand.u32 %v2664, 4294901760
      %v2734 = vsub.f32 %v2664, %v2733
      %v2735 = vand.u32 %v2734, 4294901760
      %v2736 = vsub.f32 %v2734, %v2735
      %v2737 = vand.u32 %v2736, 4294901760
      %2738 = vmatmul.mubr.f32.gmra.mrb[0].mxu0 %v2737
      %v2739 = vpop.f32.mrb[0].mxu0
      %v2740 = vadd.f32 0.0, %v2739
      %v2741 = vpop.f32.mrb[0].mxu0
      %v2742 = vadd.f32 0.0, %v2741
      %2743 = vdwg.mxu0
      %v2744 = vand.u32 %v1716, 4294901760
      %v2745 = vsub.f32 %v1716, %v2744
      %v2746 = vand.u32 %v2745, 4294901760
      %v2747 = vsub.f32 %v2745, %v2746
      %v2748 = vand.u32 %v2747, 4294901760
      %2749 = vmatprep.subr.mxu0 %v2748
      %v2750 = vand.u32 %v1715, 4294901760
      %v2751 = vsub.f32 %v1715, %v2750
      %v2752 = vand.u32 %v2751, 4294901760
      %v2753 = vsub.f32 %v2751, %v2752
      %v2754 = vand.u32 %v2753, 4294901760
      %2755 = vmatpush1.msra.mxu0 %v2754
      %2756 = vmatprep.subr.mxu0 0.0
      %2757 = vmatpush1.msra.mxu0 0.0
      %2758 = vmatprep.subr.mxu0 0.0
      %2759 = vmatpush1.msra.mxu0 0.0
      %2760 = vmatprep.subr.mxu0 0.0
      %2761 = vmatpush1.msra.mxu0 0.0
      %2762 = vmatprep.subr.mxu0 0.0
      %2763 = vmatpush1.msra.mxu0 0.0
      %2764 = vmatprep.subr.mxu0 0.0
      %2765 = vmatpush1.msra.mxu0 0.0
      %2766 = vmatprep.subr.mxu0 0.0
      %2767 = vmatpush1.msra.mxu0 0.0
      %2768 = vmatprep.subr.mxu0 0.0
      %2769 = vmatpush1.msra.mxu0 0.0
      %2770 = vmatprep.subr.mxu0 0.0
      %2771 = vmatpush1.msra.mxu0 0.0
      %2772 = vmatprep.subr.mxu0 0.0
      %2773 = vmatpush1.msra.mxu0 0.0
      %2774 = vmatprep.subr.mxu0 0.0
      %2775 = vmatpush1.msra.mxu0 0.0
      %2776 = vmatprep.subr.mxu0 0.0
      %2777 = vmatpush1.msra.mxu0 0.0
      %2778 = vmatprep.subr.mxu0 0.0
      %2779 = vmatpush1.msra.mxu0 0.0
      %2780 = vmatprep.subr.mxu0 0.0
      %2781 = vmatpush1.msra.mxu0 0.0
      %2782 = vmatprep.subr.mxu0 0.0
      %2783 = vmatpush1.msra.mxu0 0.0
      %2784 = vmatprep.subr.mxu0 0.0
      %2785 = vmatpush1.msra.mxu0 0.0
      %2786 = vmatprep.subr.mxu0 0.0
      %2787 = vmatpush1.msra.mxu0 0.0
      %2788 = vmatprep.subr.mxu0 0.0
      %2789 = vmatpush1.msra.mxu0 0.0
      %2790 = vmatprep.subr.mxu0 0.0
      %2791 = vmatpush1.msra.mxu0 0.0
      %2792 = vmatprep.subr.mxu0 0.0
      %2793 = vmatpush1.msra.mxu0 0.0
      %2794 = vmatprep.subr.mxu0 0.0
      %2795 = vmatpush1.msra.mxu0 0.0
      %2796 = vmatprep.subr.mxu0 0.0
      %2797 = vmatpush1.msra.mxu0 0.0
      %2798 = vmatprep.subr.mxu0 0.0
      %2799 = vmatpush1.msra.mxu0 0.0
      %2800 = vmatprep.subr.mxu0 0.0
      %2801 = vmatpush1.msra.mxu0 0.0
      %2802 = vmatprep.subr.mxu0 0.0
      %2803 = vmatpush1.msra.mxu0 0.0
      %2804 = vmatprep.subr.mxu0 0.0
      %2805 = vmatpush1.msra.mxu0 0.0
      %2806 = vmatprep.subr.mxu0 0.0
      %2807 = vmatpush1.msra.mxu0 0.0
      %2808 = vmatprep.subr.mxu0 0.0
      %2809 = vmatpush1.msra.mxu0 0.0
      %2810 = vmatprep.subr.mxu0 0.0
      %2811 = vmatpush1.msra.mxu0 0.0
      %2812 = vmatprep.subr.mxu0 0.0
      %2813 = vmatpush1.msra.mxu0 0.0
      %2814 = vmatprep.subr.mxu0 0.0
      %2815 = vmatpush1.msra.mxu0 0.0
      %2816 = vmatprep.subr.mxu0 0.0
      %2817 = vmatpush1.msra.mxu0 0.0
      %2818 = vmatprep.mubr.f32.mxu0 0.0
      %v2819 = vand.u32 %v2664, 4294901760
      %2820 = vmatmul.mubr.f32.gmra.mrb[0].mxu0 %v2819
      %v2821 = vpop.f32.mrb[0].mxu0
      %v2822 = vadd.f32 %v2740, %v2821
      %v2823 = vpop.f32.mrb[0].mxu0
      %v2824 = vadd.f32 %v2742, %v2823
      %2825 = vdwg.mxu0
      %v2826 = vand.u32 %v1716, 4294901760
      %v2827 = vsub.f32 %v1716, %v2826
      %2828 = vmatprep.subr.mxu0 %v2827
      %v2829 = vand.u32 %v1715, 4294901760
      %v2830 = vsub.f32 %v1715, %v2829
      %2831 = vmatpush1.msra.mxu0 %v2830
      %2832 = vmatprep.subr.mxu0 0.0
      %2833 = vmatpush1.msra.mxu0 0.0
      %2834 = vmatprep.subr.mxu0 0.0
      %2835 = vmatpush1.msra.mxu0 0.0
      %2836 = vmatprep.subr.mxu0 0.0
      %2837 = vmatpush1.msra.mxu0 0.0
      %2838 = vmatprep.subr.mxu0 0.0
      %2839 = vmatpush1.msra.mxu0 0.0
      %2840 = vmatprep.subr.mxu0 0.0
      %2841 = vmatpush1.msra.mxu0 0.0
      %2842 = vmatprep.subr.mxu0 0.0
      %2843 = vmatpush1.msra.mxu0 0.0
      %2844 = vmatprep.subr.mxu0 0.0
      %2845 = vmatpush1.msra.mxu0 0.0
      %2846 = vmatprep.subr.mxu0 0.0
      %2847 = vmatpush1.msra.mxu0 0.0
      %2848 = vmatprep.subr.mxu0 0.0
      %2849 = vmatpush1.msra.mxu0 0.0
      %2850 = vmatprep.subr.mxu0 0.0
      %2851 = vmatpush1.msra.mxu0 0.0
      %2852 = vmatprep.subr.mxu0 0.0
      %2853 = vmatpush1.msra.mxu0 0.0
      %2854 = vmatprep.subr.mxu0 0.0
      %2855 = vmatpush1.msra.mxu0 0.0
      %2856 = vmatprep.subr.mxu0 0.0
      %2857 = vmatpush1.msra.mxu0 0.0
      %2858 = vmatprep.subr.mxu0 0.0
      %2859 = vmatpush1.msra.mxu0 0.0
      %2860 = vmatprep.subr.mxu0 0.0
      %2861 = vmatpush1.msra.mxu0 0.0
      %2862 = vmatprep.subr.mxu0 0.0
      %2863 = vmatpush1.msra.mxu0 0.0
      %2864 = vmatprep.subr.mxu0 0.0
      %2865 = vmatpush1.msra.mxu0 0.0
      %2866 = vmatprep.subr.mxu0 0.0
      %2867 = vmatpush1.msra.mxu0 0.0
      %2868 = vmatprep.subr.mxu0 0.0
      %2869 = vmatpush1.msra.mxu0 0.0
      %2870 = vmatprep.subr.mxu0 0.0
      %2871 = vmatpush1.msra.mxu0 0.0
      %2872 = vmatprep.subr.mxu0 0.0
      %2873 = vmatpush1.msra.mxu0 0.0
      %2874 = vmatprep.subr.mxu0 0.0
      %2875 = vmatpush1.msra.mxu0 0.0
      %2876 = vmatprep.subr.mxu0 0.0
      %2877 = vmatpush1.msra.mxu0 0.0
      %2878 = vmatprep.subr.mxu0 0.0
      %2879 = vmatpush1.msra.mxu0 0.0
      %2880 = vmatprep.subr.mxu0 0.0
      %2881 = vmatpush1.msra.mxu0 0.0
      %2882 = vmatprep.subr.mxu0 0.0
      %2883 = vmatpush1.msra.mxu0 0.0
      %2884 = vmatprep.subr.mxu0 0.0
      %2885 = vmatpush1.msra.mxu0 0.0
      %2886 = vmatprep.subr.mxu0 0.0
      %2887 = vmatpush1.msra.mxu0 0.0
      %2888 = vmatprep.subr.mxu0 0.0
      %2889 = vmatpush1.msra.mxu0 0.0
      %2890 = vmatprep.subr.mxu0 0.0
      %2891 = vmatpush1.msra.mxu0 0.0
      %2892 = vmatprep.subr.mxu0 0.0
      %2893 = vmatpush1.msra.mxu0 0.0
      %2894 = vmatprep.mubr.f32.mxu0 0.0
      %v2895 = vand.u32 %v2664, 4294901760
      %v2896 = vsub.f32 %v2664, %v2895
      %2897 = vmatmul.mubr.f32.gmra.mrb[0].mxu0 %v2896
      %v2898 = vpop.f32.mrb[0].mxu0
      %v2899 = vadd.f32 %v2822, %v2898
      %v2900 = vpop.f32.mrb[0].mxu0
      %v2901 = vadd.f32 %v2824, %v2900
      %2902 = vdwg.mxu0
      %v2903 = vand.u32 %v1716, 4294901760
      %2904 = vmatprep.subr.mxu0 %v2903
      %v2905 = vand.u32 %v1715, 4294901760
      %2906 = vmatpush1.msra.mxu0 %v2905
      %2907 = vmatprep.subr.mxu0 0.0
      %2908 = vmatpush1.msra.mxu0 0.0
      %2909 = vmatprep.subr.mxu0 0.0
      %2910 = vmatpush1.msra.mxu0 0.0
      %2911 = vmatprep.subr.mxu0 0.0
      %2912 = vmatpush1.msra.mxu0 0.0
      %2913 = vmatprep.subr.mxu0 0.0
      %2914 = vmatpush1.msra.mxu0 0.0
      %2915 = vmatprep.subr.mxu0 0.0
      %2916 = vmatpush1.msra.mxu0 0.0
      %2917 = vmatprep.subr.mxu0 0.0
      %2918 = vmatpush1.msra.mxu0 0.0
      %2919 = vmatprep.subr.mxu0 0.0
      %2920 = vmatpush1.msra.mxu0 0.0
      %2921 = vmatprep.subr.mxu0 0.0
      %2922 = vmatpush1.msra.mxu0 0.0
      %2923 = vmatprep.subr.mxu0 0.0
      %2924 = vmatpush1.msra.mxu0 0.0
      %2925 = vmatprep.subr.mxu0 0.0
      %2926 = vmatpush1.msra.mxu0 0.0
      %2927 = vmatprep.subr.mxu0 0.0
      %2928 = vmatpush1.msra.mxu0 0.0
      %2929 = vmatprep.subr.mxu0 0.0
      %2930 = vmatpush1.msra.mxu0 0.0
      %2931 = vmatprep.subr.mxu0 0.0
      %2932 = vmatpush1.msra.mxu0 0.0
      %2933 = vmatprep.subr.mxu0 0.0
      %2934 = vmatpush1.msra.mxu0 0.0
      %2935 = vmatprep.subr.mxu0 0.0
      %2936 = vmatpush1.msra.mxu0 0.0
      %2937 = vmatprep.subr.mxu0 0.0
      %2938 = vmatpush1.msra.mxu0 0.0
      %2939 = vmatprep.subr.mxu0 0.0
      %2940 = vmatpush1.msra.mxu0 0.0
      %2941 = vmatprep.subr.mxu0 0.0
      %2942 = vmatpush1.msra.mxu0 0.0
      %2943 = vmatprep.subr.mxu0 0.0
      %2944 = vmatpush1.msra.mxu0 0.0
      %2945 = vmatprep.subr.mxu0 0.0
      %2946 = vmatpush1.msra.mxu0 0.0
      %2947 = vmatprep.subr.mxu0 0.0
      %2948 = vmatpush1.msra.mxu0 0.0
      %2949 = vmatprep.subr.mxu0 0.0
      %2950 = vmatpush1.msra.mxu0 0.0
      %2951 = vmatprep.subr.mxu0 0.0
      %2952 = vmatpush1.msra.mxu0 0.0
      %2953 = vmatprep.subr.mxu0 0.0
      %2954 = vmatpush1.msra.mxu0 0.0
      %2955 = vmatprep.subr.mxu0 0.0
      %2956 = vmatpush1.msra.mxu0 0.0
      %2957 = vmatprep.subr.mxu0 0.0
      %2958 = vmatpush1.msra.mxu0 0.0
      %2959 = vmatprep.subr.mxu0 0.0
      %2960 = vmatpush1.msra.mxu0 0.0
      %2961 = vmatprep.subr.mxu0 0.0
      %2962 = vmatpush1.msra.mxu0 0.0
      %2963 = vmatprep.subr.mxu0 0.0
      %2964 = vmatpush1.msra.mxu0 0.0
      %2965 = vmatprep.subr.mxu0 0.0
      %2966 = vmatpush1.msra.mxu0 0.0
      %2967 = vmatprep.subr.mxu0 0.0
      %2968 = vmatpush1.msra.mxu0 0.0
      %2969 = vmatprep.mubr.f32.mxu0 0.0
      %v2970 = vand.u32 %v2664, 4294901760
      %v2971 = vsub.f32 %v2664, %v2970
      %v2972 = vand.u32 %v2971, 4294901760
      %2973 = vmatmul.mubr.f32.gmra.mrb[0].mxu0 %v2972
      %v2974 = vpop.f32.mrb[0].mxu0
      %v2975 = vadd.f32 %v2899, %v2974
      %v2976 = vpop.f32.mrb[0].mxu0
      %v2977 = vadd.f32 %v2901, %v2976
      %2978 = vdwg.mxu0
      %v2979 = vand.u32 %v1716, 4294901760
      %v2980 = vsub.f32 %v1716, %v2979
      %v2981 = vand.u32 %v2980, 4294901760
      %2982 = vmatprep.subr.mxu0 %v2981
      %v2983 = vand.u32 %v1715, 4294901760
      %v2984 = vsub.f32 %v1715, %v2983
      %v2985 = vand.u32 %v2984, 4294901760
      %2986 = vmatpush1.msra.mxu0 %v2985
      %2987 = vmatprep.subr.mxu0 0.0
      %2988 = vmatpush1.msra.mxu0 0.0
      %2989 = vmatprep.subr.mxu0 0.0
      %2990 = vmatpush1.msra.mxu0 0.0
      %2991 = vmatprep.subr.mxu0 0.0
      %2992 = vmatpush1.msra.mxu0 0.0
      %2993 = vmatprep.subr.mxu0 0.0
      %2994 = vmatpush1.msra.mxu0 0.0
      %2995 = vmatprep.subr.mxu0 0.0
      %2996 = vmatpush1.msra.mxu0 0.0
      %2997 = vmatprep.subr.mxu0 0.0
      %2998 = vmatpush1.msra.mxu0 0.0
      %2999 = vmatprep.subr.mxu0 0.0
      %3000 = vmatpush1.msra.mxu0 0.0
      %3001 = vmatprep.subr.mxu0 0.0
      %3002 = vmatpush1.msra.mxu0 0.0
      %3003 = vmatprep.subr.mxu0 0.0
      %3004 = vmatpush1.msra.mxu0 0.0
      %3005 = vmatprep.subr.mxu0 0.0
      %3006 = vmatpush1.msra.mxu0 0.0
      %3007 = vmatprep.subr.mxu0 0.0
      %3008 = vmatpush1.msra.mxu0 0.0
      %3009 = vmatprep.subr.mxu0 0.0
      %3010 = vmatpush1.msra.mxu0 0.0
      %3011 = vmatprep.subr.mxu0 0.0
      %3012 = vmatpush1.msra.mxu0 0.0
      %3013 = vmatprep.subr.mxu0 0.0
      %3014 = vmatpush1.msra.mxu0 0.0
      %3015 = vmatprep.subr.mxu0 0.0
      %3016 = vmatpush1.msra.mxu0 0.0
      %3017 = vmatprep.subr.mxu0 0.0
      %3018 = vmatpush1.msra.mxu0 0.0
      %3019 = vmatprep.subr.mxu0 0.0
      %3020 = vmatpush1.msra.mxu0 0.0
      %3021 = vmatprep.subr.mxu0 0.0
      %3022 = vmatpush1.msra.mxu0 0.0
      %3023 = vmatprep.subr.mxu0 0.0
      %3024 = vmatpush1.msra.mxu0 0.0
      %3025 = vmatprep.subr.mxu0 0.0
      %3026 = vmatpush1.msra.mxu0 0.0
      %3027 = vmatprep.subr.mxu0 0.0
      %3028 = vmatpush1.msra.mxu0 0.0
      %3029 = vmatprep.subr.mxu0 0.0
      %3030 = vmatpush1.msra.mxu0 0.0
      %3031 = vmatprep.subr.mxu0 0.0
      %3032 = vmatpush1.msra.mxu0 0.0
      %3033 = vmatprep.subr.mxu0 0.0
      %3034 = vmatpush1.msra.mxu0 0.0
      %3035 = vmatprep.subr.mxu0 0.0
      %3036 = vmatpush1.msra.mxu0 0.0
      %3037 = vmatprep.subr.mxu0 0.0
      %3038 = vmatpush1.msra.mxu0 0.0
      %3039 = vmatprep.subr.mxu0 0.0
      %3040 = vmatpush1.msra.mxu0 0.0
      %3041 = vmatprep.subr.mxu0 0.0
      %3042 = vmatpush1.msra.mxu0 0.0
      %3043 = vmatprep.subr.mxu0 0.0
      %3044 = vmatpush1.msra.mxu0 0.0
      %3045 = vmatprep.subr.mxu0 0.0
      %3046 = vmatpush1.msra.mxu0 0.0
      %3047 = vmatprep.subr.mxu0 0.0
      %3048 = vmatpush1.msra.mxu0 0.0
      %3049 = vmatprep.mubr.f32.mxu0 0.0
      %v3050 = vand.u32 %v2664, 4294901760
      %3051 = vmatmul.mubr.f32.gmra.mrb[0].mxu0 %v3050
      %v3052 = vpop.f32.mrb[0].mxu0
      %v3053 = vadd.f32 %v2975, %v3052
      %v3054 = vpop.f32.mrb[0].mxu0
      %v3055 = vadd.f32 %v2977, %v3054
      %3056 = vdwg.mxu0
      %v3057 = vand.u32 %v1716, 4294901760
      %3058 = vmatprep.subr.mxu0 %v3057
      %v3059 = vand.u32 %v1715, 4294901760
      %3060 = vmatpush1.msra.mxu0 %v3059
      %3061 = vmatprep.subr.mxu0 0.0
      %3062 = vmatpush1.msra.mxu0 0.0
      %3063 = vmatprep.subr.mxu0 0.0
      %3064 = vmatpush1.msra.mxu0 0.0
      %3065 = vmatprep.subr.mxu0 0.0
      %3066 = vmatpush1.msra.mxu0 0.0
      %3067 = vmatprep.subr.mxu0 0.0
      %3068 = vmatpush1.msra.mxu0 0.0
      %3069 = vmatprep.subr.mxu0 0.0
      %3070 = vmatpush1.msra.mxu0 0.0
      %3071 = vmatprep.subr.mxu0 0.0
      %3072 = vmatpush1.msra.mxu0 0.0
      %3073 = vmatprep.subr.mxu0 0.0
      %3074 = vmatpush1.msra.mxu0 0.0
      %3075 = vmatprep.subr.mxu0 0.0
      %3076 = vmatpush1.msra.mxu0 0.0
      %3077 = vmatprep.subr.mxu0 0.0
      %3078 = vmatpush1.msra.mxu0 0.0
      %3079 = vmatprep.subr.mxu0 0.0
      %3080 = vmatpush1.msra.mxu0 0.0
      %3081 = vmatprep.subr.mxu0 0.0
      %3082 = vmatpush1.msra.mxu0 0.0
      %3083 = vmatprep.subr.mxu0 0.0
      %3084 = vmatpush1.msra.mxu0 0.0
      %3085 = vmatprep.subr.mxu0 0.0
      %3086 = vmatpush1.msra.mxu0 0.0
      %3087 = vmatprep.subr.mxu0 0.0
      %3088 = vmatpush1.msra.mxu0 0.0
      %3089 = vmatprep.subr.mxu0 0.0
      %3090 = vmatpush1.msra.mxu0 0.0
      %3091 = vmatprep.subr.mxu0 0.0
      %3092 = vmatpush1.msra.mxu0 0.0
      %3093 = vmatprep.subr.mxu0 0.0
      %3094 = vmatpush1.msra.mxu0 0.0
      %3095 = vmatprep.subr.mxu0 0.0
      %3096 = vmatpush1.msra.mxu0 0.0
      %3097 = vmatprep.subr.mxu0 0.0
      %3098 = vmatpush1.msra.mxu0 0.0
      %3099 = vmatprep.subr.mxu0 0.0
      %3100 = vmatpush1.msra.mxu0 0.0
      %3101 = vmatprep.subr.mxu0 0.0
      %3102 = vmatpush1.msra.mxu0 0.0
      %3103 = vmatprep.subr.mxu0 0.0
      %3104 = vmatpush1.msra.mxu0 0.0
      %3105 = vmatprep.subr.mxu0 0.0
      %3106 = vmatpush1.msra.mxu0 0.0
      %3107 = vmatprep.subr.mxu0 0.0
      %3108 = vmatpush1.msra.mxu0 0.0
      %3109 = vmatprep.subr.mxu0 0.0
      %3110 = vmatpush1.msra.mxu0 0.0
      %3111 = vmatprep.subr.mxu0 0.0
      %3112 = vmatpush1.msra.mxu0 0.0
      %3113 = vmatprep.subr.mxu0 0.0
      %3114 = vmatpush1.msra.mxu0 0.0
      %3115 = vmatprep.subr.mxu0 0.0
      %3116 = vmatpush1.msra.mxu0 0.0
      %3117 = vmatprep.subr.mxu0 0.0
      %3118 = vmatpush1.msra.mxu0 0.0
      %3119 = vmatprep.subr.mxu0 0.0
      %3120 = vmatpush1.msra.mxu0 0.0
      %3121 = vmatprep.subr.mxu0 0.0
      %3122 = vmatpush1.msra.mxu0 0.0
      %3123 = vmatprep.mubr.f32.mxu0 0.0
      %v3124 = vand.u32 %v2664, 4294901760
      %3125 = vmatmul.mubr.f32.gmra.mrb[0].mxu0 %v3124
      %v3126 = vpop.f32.mrb[0].mxu0
      %v3127 = vadd.f32 %v3053, %v3126
      %v3128 = vpop.f32.mrb[0].mxu0
      %v3129 = vadd.f32 %v3055, %v3128
      %3130 = vdwg.mxu0
      %v3131 = vadd.f32 %v2659, %v3127
      %v3132 = vadd.f32 %v2660, %v3129
      %3133 = vrot.lane.b32.xlu0 %v247, 1
      %v3134 = vpop.permute.xlu0 %3133
      %3135 = vrot.lane.b32.xlu0 %v248, 1
      %v3136 = vpop.permute.xlu0 %3135
      %v3137 = vsel %vm253, %v3134, %v3136
      %v3138 = vsel %vm253, %v3136, %v3134
      %3139 = vrot.lane.b32.xlu0 %v247, 127
      %v3140 = vpop.permute.xlu0 %3139
      %3141 = vrot.lane.b32.xlu0 %v248, 127
      %v3142 = vpop.permute.xlu0 %3141
      %v3143 = vsel %vm260, %v3140, %v3142
      %v3144 = vsel %vm260, %v3142, %v3140
      %v3145 = vsel %vm272, %v3143, %v3138
      %v3146 = vsel %vm273, %v3144, %v3137
      %v3147 = vsel %vm285, %v3138, %v3143
      %v3148 = vsel %vm286, %v3137, %v3144
      %s3149 = scalar_lea.vmem %s2, 48
      %v3150 = vld [vmem:[%s3149] sm:$0xff]
      %v3152 = vsel %vm292, %v3150, 0
      %v3154 = vand.u32 %v3146, 4294901760
      %3155 = vmatprep.subr.mxu0 %v3154
      %v3156 = vand.u32 %v3145, 4294901760
      %3157 = vmatpush1.msra.mxu0 %v3156
      %3158 = vmatprep.subr.mxu0 0.0
      %3159 = vmatpush1.msra.mxu0 0.0
      %3160 = vmatprep.subr.mxu0 0.0
      %3161 = vmatpush1.msra.mxu0 0.0
      %3162 = vmatprep.subr.mxu0 0.0
      %3163 = vmatpush1.msra.mxu0 0.0
      %3164 = vmatprep.subr.mxu0 0.0
      %3165 = vmatpush1.msra.mxu0 0.0
      %3166 = vmatprep.subr.mxu0 0.0
      %3167 = vmatpush1.msra.mxu0 0.0
      %3168 = vmatprep.subr.mxu0 0.0
      %3169 = vmatpush1.msra.mxu0 0.0
      %3170 = vmatprep.subr.mxu0 0.0
      %3171 = vmatpush1.msra.mxu0 0.0
      %3172 = vmatprep.subr.mxu0 0.0
      %3173 = vmatpush1.msra.mxu0 0.0
      %3174 = vmatprep.subr.mxu0 0.0
      %3175 = vmatpush1.msra.mxu0 0.0
      %3176 = vmatprep.subr.mxu0 0.0
      %3177 = vmatpush1.msra.mxu0 0.0
      %3178 = vmatprep.subr.mxu0 0.0
      %3179 = vmatpush1.msra.mxu0 0.0
      %3180 = vmatprep.subr.mxu0 0.0
      %3181 = vmatpush1.msra.mxu0 0.0
      %3182 = vmatprep.subr.mxu0 0.0
      %3183 = vmatpush1.msra.mxu0 0.0
      %3184 = vmatprep.subr.mxu0 0.0
      %3185 = vmatpush1.msra.mxu0 0.0
      %3186 = vmatprep.subr.mxu0 0.0
      %3187 = vmatpush1.msra.mxu0 0.0
      %3188 = vmatprep.subr.mxu0 0.0
      %3189 = vmatpush1.msra.mxu0 0.0
      %3190 = vmatprep.subr.mxu0 0.0
      %3191 = vmatpush1.msra.mxu0 0.0
      %3192 = vmatprep.subr.mxu0 0.0
      %3193 = vmatpush1.msra.mxu0 0.0
      %3194 = vmatprep.subr.mxu0 0.0
      %3195 = vmatpush1.msra.mxu0 0.0
      %3196 = vmatprep.subr.mxu0 0.0
      %3197 = vmatpush1.msra.mxu0 0.0
      %3198 = vmatprep.subr.mxu0 0.0
      %3199 = vmatpush1.msra.mxu0 0.0
      %3200 = vmatprep.subr.mxu0 0.0
      %3201 = vmatpush1.msra.mxu0 0.0
      %3202 = vmatprep.subr.mxu0 0.0
      %3203 = vmatpush1.msra.mxu0 0.0
      %3204 = vmatprep.subr.mxu0 0.0
      %3205 = vmatpush1.msra.mxu0 0.0
      %3206 = vmatprep.subr.mxu0 0.0
      %3207 = vmatpush1.msra.mxu0 0.0
      %3208 = vmatprep.subr.mxu0 0.0
      %3209 = vmatpush1.msra.mxu0 0.0
      %3210 = vmatprep.subr.mxu0 0.0
      %3211 = vmatpush1.msra.mxu0 0.0
      %3212 = vmatprep.subr.mxu0 0.0
      %3213 = vmatpush1.msra.mxu0 0.0
      %3214 = vmatprep.subr.mxu0 0.0
      %3215 = vmatpush1.msra.mxu0 0.0
      %3216 = vmatprep.subr.mxu0 0.0
      %3217 = vmatpush1.msra.mxu0 0.0
      %3218 = vmatprep.subr.mxu0 0.0
      %3219 = vmatpush1.msra.mxu0 0.0
      %3220 = vmatprep.mubr.f32.mxu0 0.0
      %v3221 = vand.u32 %v3152, 4294901760
      %v3222 = vsub.f32 %v3152, %v3221
      %v3223 = vand.u32 %v3222, 4294901760
      %v3224 = vsub.f32 %v3222, %v3223
      %v3225 = vand.u32 %v3224, 4294901760
      %3226 = vmatmul.mubr.f32.gmra.mrb[0].mxu0 %v3225
      %v3227 = vpop.f32.mrb[0].mxu0
      %v3228 = vadd.f32 0.0, %v3227
      %v3229 = vpop.f32.mrb[0].mxu0
      %v3230 = vadd.f32 0.0, %v3229
      %3231 = vdwg.mxu0
      %v3232 = vand.u32 %v3146, 4294901760
      %v3233 = vsub.f32 %v3146, %v3232
      %v3234 = vand.u32 %v3233, 4294901760
      %v3235 = vsub.f32 %v3233, %v3234
      %v3236 = vand.u32 %v3235, 4294901760
      %3237 = vmatprep.subr.mxu0 %v3236
      %v3238 = vand.u32 %v3145, 4294901760
      %v3239 = vsub.f32 %v3145, %v3238
      %v3240 = vand.u32 %v3239, 4294901760
      %v3241 = vsub.f32 %v3239, %v3240
      %v3242 = vand.u32 %v3241, 4294901760
      %3243 = vmatpush1.msra.mxu0 %v3242
      %3244 = vmatprep.subr.mxu0 0.0
      %3245 = vmatpush1.msra.mxu0 0.0
      %3246 = vmatprep.subr.mxu0 0.0
      %3247 = vmatpush1.msra.mxu0 0.0
      %3248 = vmatprep.subr.mxu0 0.0
      %3249 = vmatpush1.msra.mxu0 0.0
      %3250 = vmatprep.subr.mxu0 0.0
      %3251 = vmatpush1.msra.mxu0 0.0
      %3252 = vmatprep.subr.mxu0 0.0
      %3253 = vmatpush1.msra.mxu0 0.0
      %3254 = vmatprep.subr.mxu0 0.0
      %3255 = vmatpush1.msra.mxu0 0.0
      %3256 = vmatprep.subr.mxu0 0.0
      %3257 = vmatpush1.msra.mxu0 0.0
      %3258 = vmatprep.subr.mxu0 0.0
      %3259 = vmatpush1.msra.mxu0 0.0
      %3260 = vmatprep.subr.mxu0 0.0
      %3261 = vmatpush1.msra.mxu0 0.0
      %3262 = vmatprep.subr.mxu0 0.0
      %3263 = vmatpush1.msra.mxu0 0.0
      %3264 = vmatprep.subr.mxu0 0.0
      %3265 = vmatpush1.msra.mxu0 0.0
      %3266 = vmatprep.subr.mxu0 0.0
      %3267 = vmatpush1.msra.mxu0 0.0
      %3268 = vmatprep.subr.mxu0 0.0
      %3269 = vmatpush1.msra.mxu0 0.0
      %3270 = vmatprep.subr.mxu0 0.0
      %3271 = vmatpush1.msra.mxu0 0.0
      %3272 = vmatprep.subr.mxu0 0.0
      %3273 = vmatpush1.msra.mxu0 0.0
      %3274 = vmatprep.subr.mxu0 0.0
      %3275 = vmatpush1.msra.mxu0 0.0
      %3276 = vmatprep.subr.mxu0 0.0
      %3277 = vmatpush1.msra.mxu0 0.0
      %3278 = vmatprep.subr.mxu0 0.0
      %3279 = vmatpush1.msra.mxu0 0.0
      %3280 = vmatprep.subr.mxu0 0.0
      %3281 = vmatpush1.msra.mxu0 0.0
      %3282 = vmatprep.subr.mxu0 0.0
      %3283 = vmatpush1.msra.mxu0 0.0
      %3284 = vmatprep.subr.mxu0 0.0
      %3285 = vmatpush1.msra.mxu0 0.0
      %3286 = vmatprep.subr.mxu0 0.0
      %3287 = vmatpush1.msra.mxu0 0.0
      %3288 = vmatprep.subr.mxu0 0.0
      %3289 = vmatpush1.msra.mxu0 0.0
      %3290 = vmatprep.subr.mxu0 0.0
      %3291 = vmatpush1.msra.mxu0 0.0
      %3292 = vmatprep.subr.mxu0 0.0
      %3293 = vmatpush1.msra.mxu0 0.0
      %3294 = vmatprep.subr.mxu0 0.0
      %3295 = vmatpush1.msra.mxu0 0.0
      %3296 = vmatprep.subr.mxu0 0.0
      %3297 = vmatpush1.msra.mxu0 0.0
      %3298 = vmatprep.subr.mxu0 0.0
      %3299 = vmatpush1.msra.mxu0 0.0
      %3300 = vmatprep.subr.mxu0 0.0
      %3301 = vmatpush1.msra.mxu0 0.0
      %3302 = vmatprep.subr.mxu0 0.0
      %3303 = vmatpush1.msra.mxu0 0.0
      %3304 = vmatprep.subr.mxu0 0.0
      %3305 = vmatpush1.msra.mxu0 0.0
      %3306 = vmatprep.mubr.f32.mxu0 0.0
      %v3307 = vand.u32 %v3152, 4294901760
      %3308 = vmatmul.mubr.f32.gmra.mrb[0].mxu0 %v3307
      %v3309 = vpop.f32.mrb[0].mxu0
      %v3310 = vadd.f32 %v3228, %v3309
      %v3311 = vpop.f32.mrb[0].mxu0
      %v3312 = vadd.f32 %v3230, %v3311
      %3313 = vdwg.mxu0
      %v3314 = vand.u32 %v3146, 4294901760
      %v3315 = vsub.f32 %v3146, %v3314
      %3316 = vmatprep.subr.mxu0 %v3315
      %v3317 = vand.u32 %v3145, 4294901760
      %v3318 = vsub.f32 %v3145, %v3317
      %3319 = vmatpush1.msra.mxu0 %v3318
      %3320 = vmatprep.subr.mxu0 0.0
      %3321 = vmatpush1.msra.mxu0 0.0
      %3322 = vmatprep.subr.mxu0 0.0
      %3323 = vmatpush1.msra.mxu0 0.0
      %3324 = vmatprep.subr.mxu0 0.0
      %3325 = vmatpush1.msra.mxu0 0.0
      %3326 = vmatprep.subr.mxu0 0.0
      %3327 = vmatpush1.msra.mxu0 0.0
      %3328 = vmatprep.subr.mxu0 0.0
      %3329 = vmatpush1.msra.mxu0 0.0
      %3330 = vmatprep.subr.mxu0 0.0
      %3331 = vmatpush1.msra.mxu0 0.0
      %3332 = vmatprep.subr.mxu0 0.0
      %3333 = vmatpush1.msra.mxu0 0.0
      %3334 = vmatprep.subr.mxu0 0.0
      %3335 = vmatpush1.msra.mxu0 0.0
      %3336 = vmatprep.subr.mxu0 0.0
      %3337 = vmatpush1.msra.mxu0 0.0
      %3338 = vmatprep.subr.mxu0 0.0
      %3339 = vmatpush1.msra.mxu0 0.0
      %3340 = vmatprep.subr.mxu0 0.0
      %3341 = vmatpush1.msra.mxu0 0.0
      %3342 = vmatprep.subr.mxu0 0.0
      %3343 = vmatpush1.msra.mxu0 0.0
      %3344 = vmatprep.subr.mxu0 0.0
      %3345 = vmatpush1.msra.mxu0 0.0
      %3346 = vmatprep.subr.mxu0 0.0
      %3347 = vmatpush1.msra.mxu0 0.0
      %3348 = vmatprep.subr.mxu0 0.0
      %3349 = vmatpush1.msra.mxu0 0.0
      %3350 = vmatprep.subr.mxu0 0.0
      %3351 = vmatpush1.msra.mxu0 0.0
      %3352 = vmatprep.subr.mxu0 0.0
      %3353 = vmatpush1.msra.mxu0 0.0
      %3354 = vmatprep.subr.mxu0 0.0
      %3355 = vmatpush1.msra.mxu0 0.0
      %3356 = vmatprep.subr.mxu0 0.0
      %3357 = vmatpush1.msra.mxu0 0.0
      %3358 = vmatprep.subr.mxu0 0.0
      %3359 = vmatpush1.msra.mxu0 0.0
      %3360 = vmatprep.subr.mxu0 0.0
      %3361 = vmatpush1.msra.mxu0 0.0
      %3362 = vmatprep.subr.mxu0 0.0
      %3363 = vmatpush1.msra.mxu0 0.0
      %3364 = vmatprep.subr.mxu0 0.0
      %3365 = vmatpush1.msra.mxu0 0.0
      %3366 = vmatprep.subr.mxu0 0.0
      %3367 = vmatpush1.msra.mxu0 0.0
      %3368 = vmatprep.subr.mxu0 0.0
      %3369 = vmatpush1.msra.mxu0 0.0
      %3370 = vmatprep.subr.mxu0 0.0
      %3371 = vmatpush1.msra.mxu0 0.0
      %3372 = vmatprep.subr.mxu0 0.0
      %3373 = vmatpush1.msra.mxu0 0.0
      %3374 = vmatprep.subr.mxu0 0.0
      %3375 = vmatpush1.msra.mxu0 0.0
      %3376 = vmatprep.subr.mxu0 0.0
      %3377 = vmatpush1.msra.mxu0 0.0
      %3378 = vmatprep.subr.mxu0 0.0
      %3379 = vmatpush1.msra.mxu0 0.0
      %3380 = vmatprep.subr.mxu0 0.0
      %3381 = vmatpush1.msra.mxu0 0.0
      %3382 = vmatprep.mubr.f32.mxu0 0.0
      %v3383 = vand.u32 %v3152, 4294901760
      %v3384 = vsub.f32 %v3152, %v3383
      %3385 = vmatmul.mubr.f32.gmra.mrb[0].mxu0 %v3384
      %v3386 = vpop.f32.mrb[0].mxu0
      %v3387 = vadd.f32 %v3310, %v3386
      %v3388 = vpop.f32.mrb[0].mxu0
      %v3389 = vadd.f32 %v3312, %v3388
      %3390 = vdwg.mxu0
      %v3391 = vand.u32 %v3146, 4294901760
      %3392 = vmatprep.subr.mxu0 %v3391
      %v3393 = vand.u32 %v3145, 4294901760
      %3394 = vmatpush1.msra.mxu0 %v3393
      %3395 = vmatprep.subr.mxu0 0.0
      %3396 = vmatpush1.msra.mxu0 0.0
      %3397 = vmatprep.subr.mxu0 0.0
      %3398 = vmatpush1.msra.mxu0 0.0
      %3399 = vmatprep.subr.mxu0 0.0
      %3400 = vmatpush1.msra.mxu0 0.0
      %3401 = vmatprep.subr.mxu0 0.0
      %3402 = vmatpush1.msra.mxu0 0.0
      %3403 = vmatprep.subr.mxu0 0.0
      %3404 = vmatpush1.msra.mxu0 0.0
      %3405 = vmatprep.subr.mxu0 0.0
      %3406 = vmatpush1.msra.mxu0 0.0
      %3407 = vmatprep.subr.mxu0 0.0
      %3408 = vmatpush1.msra.mxu0 0.0
      %3409 = vmatprep.subr.mxu0 0.0
      %3410 = vmatpush1.msra.mxu0 0.0
      %3411 = vmatprep.subr.mxu0 0.0
      %3412 = vmatpush1.msra.mxu0 0.0
      %3413 = vmatprep.subr.mxu0 0.0
      %3414 = vmatpush1.msra.mxu0 0.0
      %3415 = vmatprep.subr.mxu0 0.0
      %3416 = vmatpush1.msra.mxu0 0.0
      %3417 = vmatprep.subr.mxu0 0.0
      %3418 = vmatpush1.msra.mxu0 0.0
      %3419 = vmatprep.subr.mxu0 0.0
      %3420 = vmatpush1.msra.mxu0 0.0
      %3421 = vmatprep.subr.mxu0 0.0
      %3422 = vmatpush1.msra.mxu0 0.0
      %3423 = vmatprep.subr.mxu0 0.0
      %3424 = vmatpush1.msra.mxu0 0.0
      %3425 = vmatprep.subr.mxu0 0.0
      %3426 = vmatpush1.msra.mxu0 0.0
      %3427 = vmatprep.subr.mxu0 0.0
      %3428 = vmatpush1.msra.mxu0 0.0
      %3429 = vmatprep.subr.mxu0 0.0
      %3430 = vmatpush1.msra.mxu0 0.0
      %3431 = vmatprep.subr.mxu0 0.0
      %3432 = vmatpush1.msra.mxu0 0.0
      %3433 = vmatprep.subr.mxu0 0.0
      %3434 = vmatpush1.msra.mxu0 0.0
      %3435 = vmatprep.subr.mxu0 0.0
      %3436 = vmatpush1.msra.mxu0 0.0
      %3437 = vmatprep.subr.mxu0 0.0
      %3438 = vmatpush1.msra.mxu0 0.0
      %3439 = vmatprep.subr.mxu0 0.0
      %3440 = vmatpush1.msra.mxu0 0.0
      %3441 = vmatprep.subr.mxu0 0.0
      %3442 = vmatpush1.msra.mxu0 0.0
      %3443 = vmatprep.subr.mxu0 0.0
      %3444 = vmatpush1.msra.mxu0 0.0
      %3445 = vmatprep.subr.mxu0 0.0
      %3446 = vmatpush1.msra.mxu0 0.0
      %3447 = vmatprep.subr.mxu0 0.0
      %3448 = vmatpush1.msra.mxu0 0.0
      %3449 = vmatprep.subr.mxu0 0.0
      %3450 = vmatpush1.msra.mxu0 0.0
      %3451 = vmatprep.subr.mxu0 0.0
      %3452 = vmatpush1.msra.mxu0 0.0
      %3453 = vmatprep.subr.mxu0 0.0
      %3454 = vmatpush1.msra.mxu0 0.0
      %3455 = vmatprep.subr.mxu0 0.0
      %3456 = vmatpush1.msra.mxu0 0.0
      %3457 = vmatprep.mubr.f32.mxu0 0.0
      %v3458 = vand.u32 %v3152, 4294901760
      %v3459 = vsub.f32 %v3152, %v3458
      %v3460 = vand.u32 %v3459, 4294901760
      %3461 = vmatmul.mubr.f32.gmra.mrb[0].mxu0 %v3460
      %v3462 = vpop.f32.mrb[0].mxu0
      %v3463 = vadd.f32 %v3387, %v3462
      %v3464 = vpop.f32.mrb[0].mxu0
      %v3465 = vadd.f32 %v3389, %v3464
      %3466 = vdwg.mxu0
      %v3467 = vand.u32 %v3146, 4294901760
      %v3468 = vsub.f32 %v3146, %v3467
      %v3469 = vand.u32 %v3468, 4294901760
      %3470 = vmatprep.subr.mxu0 %v3469
      %v3471 = vand.u32 %v3145, 4294901760
      %v3472 = vsub.f32 %v3145, %v3471
      %v3473 = vand.u32 %v3472, 4294901760
      %3474 = vmatpush1.msra.mxu0 %v3473
      %3475 = vmatprep.subr.mxu0 0.0
      %3476 = vmatpush1.msra.mxu0 0.0
      %3477 = vmatprep.subr.mxu0 0.0
      %3478 = vmatpush1.msra.mxu0 0.0
      %3479 = vmatprep.subr.mxu0 0.0
      %3480 = vmatpush1.msra.mxu0 0.0
      %3481 = vmatprep.subr.mxu0 0.0
      %3482 = vmatpush1.msra.mxu0 0.0
      %3483 = vmatprep.subr.mxu0 0.0
      %3484 = vmatpush1.msra.mxu0 0.0
      %3485 = vmatprep.subr.mxu0 0.0
      %3486 = vmatpush1.msra.mxu0 0.0
      %3487 = vmatprep.subr.mxu0 0.0
      %3488 = vmatpush1.msra.mxu0 0.0
      %3489 = vmatprep.subr.mxu0 0.0
      %3490 = vmatpush1.msra.mxu0 0.0
      %3491 = vmatprep.subr.mxu0 0.0
      %3492 = vmatpush1.msra.mxu0 0.0
      %3493 = vmatprep.subr.mxu0 0.0
      %3494 = vmatpush1.msra.mxu0 0.0
      %3495 = vmatprep.subr.mxu0 0.0
      %3496 = vmatpush1.msra.mxu0 0.0
      %3497 = vmatprep.subr.mxu0 0.0
      %3498 = vmatpush1.msra.mxu0 0.0
      %3499 = vmatprep.subr.mxu0 0.0
      %3500 = vmatpush1.msra.mxu0 0.0
      %3501 = vmatprep.subr.mxu0 0.0
      %3502 = vmatpush1.msra.mxu0 0.0
      %3503 = vmatprep.subr.mxu0 0.0
      %3504 = vmatpush1.msra.mxu0 0.0
      %3505 = vmatprep.subr.mxu0 0.0
      %3506 = vmatpush1.msra.mxu0 0.0
      %3507 = vmatprep.subr.mxu0 0.0
      %3508 = vmatpush1.msra.mxu0 0.0
      %3509 = vmatprep.subr.mxu0 0.0
      %3510 = vmatpush1.msra.mxu0 0.0
      %3511 = vmatprep.subr.mxu0 0.0
      %3512 = vmatpush1.msra.mxu0 0.0
      %3513 = vmatprep.subr.mxu0 0.0
      %3514 = vmatpush1.msra.mxu0 0.0
      %3515 = vmatprep.subr.mxu0 0.0
      %3516 = vmatpush1.msra.mxu0 0.0
      %3517 = vmatprep.subr.mxu0 0.0
      %3518 = vmatpush1.msra.mxu0 0.0
      %3519 = vmatprep.subr.mxu0 0.0
      %3520 = vmatpush1.msra.mxu0 0.0
      %3521 = vmatprep.subr.mxu0 0.0
      %3522 = vmatpush1.msra.mxu0 0.0
      %3523 = vmatprep.subr.mxu0 0.0
      %3524 = vmatpush1.msra.mxu0 0.0
      %3525 = vmatprep.subr.mxu0 0.0
      %3526 = vmatpush1.msra.mxu0 0.0
      %3527 = vmatprep.subr.mxu0 0.0
      %3528 = vmatpush1.msra.mxu0 0.0
      %3529 = vmatprep.subr.mxu0 0.0
      %3530 = vmatpush1.msra.mxu0 0.0
      %3531 = vmatprep.subr.mxu0 0.0
      %3532 = vmatpush1.msra.mxu0 0.0
      %3533 = vmatprep.subr.mxu0 0.0
      %3534 = vmatpush1.msra.mxu0 0.0
      %3535 = vmatprep.subr.mxu0 0.0
      %3536 = vmatpush1.msra.mxu0 0.0
      %3537 = vmatprep.mubr.f32.mxu0 0.0
      %v3538 = vand.u32 %v3152, 4294901760
      %3539 = vmatmul.mubr.f32.gmra.mrb[0].mxu0 %v3538
      %v3540 = vpop.f32.mrb[0].mxu0
      %v3541 = vadd.f32 %v3463, %v3540
      %v3542 = vpop.f32.mrb[0].mxu0
      %v3543 = vadd.f32 %v3465, %v3542
      %3544 = vdwg.mxu0
      %v3545 = vand.u32 %v3146, 4294901760
      %3546 = vmatprep.subr.mxu0 %v3545
      %v3547 = vand.u32 %v3145, 4294901760
      %3548 = vmatpush1.msra.mxu0 %v3547
      %3549 = vmatprep.subr.mxu0 0.0
      %3550 = vmatpush1.msra.mxu0 0.0
      %3551 = vmatprep.subr.mxu0 0.0
      %3552 = vmatpush1.msra.mxu0 0.0
      %3553 = vmatprep.subr.mxu0 0.0
      %3554 = vmatpush1.msra.mxu0 0.0
      %3555 = vmatprep.subr.mxu0 0.0
      %3556 = vmatpush1.msra.mxu0 0.0
      %3557 = vmatprep.subr.mxu0 0.0
      %3558 = vmatpush1.msra.mxu0 0.0
      %3559 = vmatprep.subr.mxu0 0.0
      %3560 = vmatpush1.msra.mxu0 0.0
      %3561 = vmatprep.subr.mxu0 0.0
      %3562 = vmatpush1.msra.mxu0 0.0
      %3563 = vmatprep.subr.mxu0 0.0
      %3564 = vmatpush1.msra.mxu0 0.0
      %3565 = vmatprep.subr.mxu0 0.0
      %3566 = vmatpush1.msra.mxu0 0.0
      %3567 = vmatprep.subr.mxu0 0.0
      %3568 = vmatpush1.msra.mxu0 0.0
      %3569 = vmatprep.subr.mxu0 0.0
      %3570 = vmatpush1.msra.mxu0 0.0
      %3571 = vmatprep.subr.mxu0 0.0
      %3572 = vmatpush1.msra.mxu0 0.0
      %3573 = vmatprep.subr.mxu0 0.0
      %3574 = vmatpush1.msra.mxu0 0.0
      %3575 = vmatprep.subr.mxu0 0.0
      %3576 = vmatpush1.msra.mxu0 0.0
      %3577 = vmatprep.subr.mxu0 0.0
      %3578 = vmatpush1.msra.mxu0 0.0
      %3579 = vmatprep.subr.mxu0 0.0
      %3580 = vmatpush1.msra.mxu0 0.0
      %3581 = vmatprep.subr.mxu0 0.0
      %3582 = vmatpush1.msra.mxu0 0.0
      %3583 = vmatprep.subr.mxu0 0.0
      %3584 = vmatpush1.msra.mxu0 0.0
      %3585 = vmatprep.subr.mxu0 0.0
      %3586 = vmatpush1.msra.mxu0 0.0
      %3587 = vmatprep.subr.mxu0 0.0
      %3588 = vmatpush1.msra.mxu0 0.0
      %3589 = vmatprep.subr.mxu0 0.0
      %3590 = vmatpush1.msra.mxu0 0.0
      %3591 = vmatprep.subr.mxu0 0.0
      %3592 = vmatpush1.msra.mxu0 0.0
      %3593 = vmatprep.subr.mxu0 0.0
      %3594 = vmatpush1.msra.mxu0 0.0
      %3595 = vmatprep.subr.mxu0 0.0
      %3596 = vmatpush1.msra.mxu0 0.0
      %3597 = vmatprep.subr.mxu0 0.0
      %3598 = vmatpush1.msra.mxu0 0.0
      %3599 = vmatprep.subr.mxu0 0.0
      %3600 = vmatpush1.msra.mxu0 0.0
      %3601 = vmatprep.subr.mxu0 0.0
      %3602 = vmatpush1.msra.mxu0 0.0
      %3603 = vmatprep.subr.mxu0 0.0
      %3604 = vmatpush1.msra.mxu0 0.0
      %3605 = vmatprep.subr.mxu0 0.0
      %3606 = vmatpush1.msra.mxu0 0.0
      %3607 = vmatprep.subr.mxu0 0.0
      %3608 = vmatpush1.msra.mxu0 0.0
      %3609 = vmatprep.subr.mxu0 0.0
      %3610 = vmatpush1.msra.mxu0 0.0
      %3611 = vmatprep.mubr.f32.mxu0 0.0
      %v3612 = vand.u32 %v3152, 4294901760
      %3613 = vmatmul.mubr.f32.gmra.mrb[0].mxu0 %v3612
      %v3614 = vpop.f32.mrb[0].mxu0
      %v3615 = vadd.f32 %v3541, %v3614
      %v3616 = vpop.f32.mrb[0].mxu0
      %v3617 = vadd.f32 %v3543, %v3616
      %3618 = vdwg.mxu0
      %v3619 = vadd.f32 %v3131, %v3615
      %v3620 = vadd.f32 %v3132, %v3617
      %s3621 = scalar_lea.vmem %s2, 56
      %v3622 = vld [vmem:[%s3621] sm:$0xff]
      %v3624 = vsel %vm292, %v3622, 0
      %v3626 = vand.u32 %v248, 4294901760
      %3627 = vmatprep.subr.mxu0 %v3626
      %v3628 = vand.u32 %v247, 4294901760
      %3629 = vmatpush1.msra.mxu0 %v3628
      %3630 = vmatprep.subr.mxu0 0.0
      %3631 = vmatpush1.msra.mxu0 0.0
      %3632 = vmatprep.subr.mxu0 0.0
      %3633 = vmatpush1.msra.mxu0 0.0
      %3634 = vmatprep.subr.mxu0 0.0
      %3635 = vmatpush1.msra.mxu0 0.0
      %3636 = vmatprep.subr.mxu0 0.0
      %3637 = vmatpush1.msra.mxu0 0.0
      %3638 = vmatprep.subr.mxu0 0.0
      %3639 = vmatpush1.msra.mxu0 0.0
      %3640 = vmatprep.subr.mxu0 0.0
      %3641 = vmatpush1.msra.mxu0 0.0
      %3642 = vmatprep.subr.mxu0 0.0
      %3643 = vmatpush1.msra.mxu0 0.0
      %3644 = vmatprep.subr.mxu0 0.0
      %3645 = vmatpush1.msra.mxu0 0.0
      %3646 = vmatprep.subr.mxu0 0.0
      %3647 = vmatpush1.msra.mxu0 0.0
      %3648 = vmatprep.subr.mxu0 0.0
      %3649 = vmatpush1.msra.mxu0 0.0
      %3650 = vmatprep.subr.mxu0 0.0
      %3651 = vmatpush1.msra.mxu0 0.0
      %3652 = vmatprep.subr.mxu0 0.0
      %3653 = vmatpush1.msra.mxu0 0.0
      %3654 = vmatprep.subr.mxu0 0.0
      %3655 = vmatpush1.msra.mxu0 0.0
      %3656 = vmatprep.subr.mxu0 0.0
      %3657 = vmatpush1.msra.mxu0 0.0
      %3658 = vmatprep.subr.mxu0 0.0
      %3659 = vmatpush1.msra.mxu0 0.0
      %3660 = vmatprep.subr.mxu0 0.0
      %3661 = vmatpush1.msra.mxu0 0.0
      %3662 = vmatprep.subr.mxu0 0.0
      %3663 = vmatpush1.msra.mxu0 0.0
      %3664 = vmatprep.subr.mxu0 0.0
      %3665 = vmatpush1.msra.mxu0 0.0
      %3666 = vmatprep.subr.mxu0 0.0
      %3667 = vmatpush1.msra.mxu0 0.0
      %3668 = vmatprep.subr.mxu0 0.0
      %3669 = vmatpush1.msra.mxu0 0.0
      %3670 = vmatprep.subr.mxu0 0.0
      %3671 = vmatpush1.msra.mxu0 0.0
      %3672 = vmatprep.subr.mxu0 0.0
      %3673 = vmatpush1.msra.mxu0 0.0
      %3674 = vmatprep.subr.mxu0 0.0
      %3675 = vmatpush1.msra.mxu0 0.0
      %3676 = vmatprep.subr.mxu0 0.0
      %3677 = vmatpush1.msra.mxu0 0.0
      %3678 = vmatprep.subr.mxu0 0.0
      %3679 = vmatpush1.msra.mxu0 0.0
      %3680 = vmatprep.subr.mxu0 0.0
      %3681 = vmatpush1.msra.mxu0 0.0
      %3682 = vmatprep.subr.mxu0 0.0
      %3683 = vmatpush1.msra.mxu0 0.0
      %3684 = vmatprep.subr.mxu0 0.0
      %3685 = vmatpush1.msra.mxu0 0.0
      %3686 = vmatprep.subr.mxu0 0.0
      %3687 = vmatpush1.msra.mxu0 0.0
      %3688 = vmatprep.subr.mxu0 0.0
      %3689 = vmatpush1.msra.mxu0 0.0
      %3690 = vmatprep.subr.mxu0 0.0
      %3691 = vmatpush1.msra.mxu0 0.0
      %3692 = vmatprep.mubr.f32.mxu0 0.0
      %v3693 = vand.u32 %v3624, 4294901760
      %v3694 = vsub.f32 %v3624, %v3693
      %v3695 = vand.u32 %v3694, 4294901760
      %v3696 = vsub.f32 %v3694, %v3695
      %v3697 = vand.u32 %v3696, 4294901760
      %3698 = vmatmul.mubr.f32.gmra.mrb[0].mxu0 %v3697
      %v3699 = vpop.f32.mrb[0].mxu0
      %v3700 = vadd.f32 0.0, %v3699
      %v3701 = vpop.f32.mrb[0].mxu0
      %v3702 = vadd.f32 0.0, %v3701
      %3703 = vdwg.mxu0
      %v3704 = vand.u32 %v248, 4294901760
      %v3705 = vsub.f32 %v248, %v3704
      %v3706 = vand.u32 %v3705, 4294901760
      %v3707 = vsub.f32 %v3705, %v3706
      %v3708 = vand.u32 %v3707, 4294901760
      %3709 = vmatprep.subr.mxu0 %v3708
      %v3710 = vand.u32 %v247, 4294901760
      %v3711 = vsub.f32 %v247, %v3710
      %v3712 = vand.u32 %v3711, 4294901760
      %v3713 = vsub.f32 %v3711, %v3712
      %v3714 = vand.u32 %v3713, 4294901760
      %3715 = vmatpush1.msra.mxu0 %v3714
      %3716 = vmatprep.subr.mxu0 0.0
      %3717 = vmatpush1.msra.mxu0 0.0
      %3718 = vmatprep.subr.mxu0 0.0
      %3719 = vmatpush1.msra.mxu0 0.0
      %3720 = vmatprep.subr.mxu0 0.0
      %3721 = vmatpush1.msra.mxu0 0.0
      %3722 = vmatprep.subr.mxu0 0.0
      %3723 = vmatpush1.msra.mxu0 0.0
      %3724 = vmatprep.subr.mxu0 0.0
      %3725 = vmatpush1.msra.mxu0 0.0
      %3726 = vmatprep.subr.mxu0 0.0
      %3727 = vmatpush1.msra.mxu0 0.0
      %3728 = vmatprep.subr.mxu0 0.0
      %3729 = vmatpush1.msra.mxu0 0.0
      %3730 = vmatprep.subr.mxu0 0.0
      %3731 = vmatpush1.msra.mxu0 0.0
      %3732 = vmatprep.subr.mxu0 0.0
      %3733 = vmatpush1.msra.mxu0 0.0
      %3734 = vmatprep.subr.mxu0 0.0
      %3735 = vmatpush1.msra.mxu0 0.0
      %3736 = vmatprep.subr.mxu0 0.0
      %3737 = vmatpush1.msra.mxu0 0.0
      %3738 = vmatprep.subr.mxu0 0.0
      %3739 = vmatpush1.msra.mxu0 0.0
      %3740 = vmatprep.subr.mxu0 0.0
      %3741 = vmatpush1.msra.mxu0 0.0
      %3742 = vmatprep.subr.mxu0 0.0
      %3743 = vmatpush1.msra.mxu0 0.0
      %3744 = vmatprep.subr.mxu0 0.0
      %3745 = vmatpush1.msra.mxu0 0.0
      %3746 = vmatprep.subr.mxu0 0.0
      %3747 = vmatpush1.msra.mxu0 0.0
      %3748 = vmatprep.subr.mxu0 0.0
      %3749 = vmatpush1.msra.mxu0 0.0
      %3750 = vmatprep.subr.mxu0 0.0
      %3751 = vmatpush1.msra.mxu0 0.0
      %3752 = vmatprep.subr.mxu0 0.0
      %3753 = vmatpush1.msra.mxu0 0.0
      %3754 = vmatprep.subr.mxu0 0.0
      %3755 = vmatpush1.msra.mxu0 0.0
      %3756 = vmatprep.subr.mxu0 0.0
      %3757 = vmatpush1.msra.mxu0 0.0
      %3758 = vmatprep.subr.mxu0 0.0
      %3759 = vmatpush1.msra.mxu0 0.0
      %3760 = vmatprep.subr.mxu0 0.0
      %3761 = vmatpush1.msra.mxu0 0.0
      %3762 = vmatprep.subr.mxu0 0.0
      %3763 = vmatpush1.msra.mxu0 0.0
      %3764 = vmatprep.subr.mxu0 0.0
      %3765 = vmatpush1.msra.mxu0 0.0
      %3766 = vmatprep.subr.mxu0 0.0
      %3767 = vmatpush1.msra.mxu0 0.0
      %3768 = vmatprep.subr.mxu0 0.0
      %3769 = vmatpush1.msra.mxu0 0.0
      %3770 = vmatprep.subr.mxu0 0.0
      %3771 = vmatpush1.msra.mxu0 0.0
      %3772 = vmatprep.subr.mxu0 0.0
      %3773 = vmatpush1.msra.mxu0 0.0
      %3774 = vmatprep.subr.mxu0 0.0
      %3775 = vmatpush1.msra.mxu0 0.0
      %3776 = vmatprep.subr.mxu0 0.0
      %3777 = vmatpush1.msra.mxu0 0.0
      %3778 = vmatprep.mubr.f32.mxu0 0.0
      %v3779 = vand.u32 %v3624, 4294901760
      %3780 = vmatmul.mubr.f32.gmra.mrb[0].mxu0 %v3779
      %v3781 = vpop.f32.mrb[0].mxu0
      %v3782 = vadd.f32 %v3700, %v3781
      %v3783 = vpop.f32.mrb[0].mxu0
      %v3784 = vadd.f32 %v3702, %v3783
      %3785 = vdwg.mxu0
      %v3786 = vand.u32 %v248, 4294901760
      %v3787 = vsub.f32 %v248, %v3786
      %3788 = vmatprep.subr.mxu0 %v3787
      %v3789 = vand.u32 %v247, 4294901760
      %v3790 = vsub.f32 %v247, %v3789
      %3791 = vmatpush1.msra.mxu0 %v3790
      %3792 = vmatprep.subr.mxu0 0.0
      %3793 = vmatpush1.msra.mxu0 0.0
      %3794 = vmatprep.subr.mxu0 0.0
      %3795 = vmatpush1.msra.mxu0 0.0
      %3796 = vmatprep.subr.mxu0 0.0
      %3797 = vmatpush1.msra.mxu0 0.0
      %3798 = vmatprep.subr.mxu0 0.0
      %3799 = vmatpush1.msra.mxu0 0.0
      %3800 = vmatprep.subr.mxu0 0.0
      %3801 = vmatpush1.msra.mxu0 0.0
      %3802 = vmatprep.subr.mxu0 0.0
      %3803 = vmatpush1.msra.mxu0 0.0
      %3804 = vmatprep.subr.mxu0 0.0
      %3805 = vmatpush1.msra.mxu0 0.0
      %3806 = vmatprep.subr.mxu0 0.0
      %3807 = vmatpush1.msra.mxu0 0.0
      %3808 = vmatprep.subr.mxu0 0.0
      %3809 = vmatpush1.msra.mxu0 0.0
      %3810 = vmatprep.subr.mxu0 0.0
      %3811 = vmatpush1.msra.mxu0 0.0
      %3812 = vmatprep.subr.mxu0 0.0
      %3813 = vmatpush1.msra.mxu0 0.0
      %3814 = vmatprep.subr.mxu0 0.0
      %3815 = vmatpush1.msra.mxu0 0.0
      %3816 = vmatprep.subr.mxu0 0.0
      %3817 = vmatpush1.msra.mxu0 0.0
      %3818 = vmatprep.subr.mxu0 0.0
      %3819 = vmatpush1.msra.mxu0 0.0
      %3820 = vmatprep.subr.mxu0 0.0
      %3821 = vmatpush1.msra.mxu0 0.0
      %3822 = vmatprep.subr.mxu0 0.0
      %3823 = vmatpush1.msra.mxu0 0.0
      %3824 = vmatprep.subr.mxu0 0.0
      %3825 = vmatpush1.msra.mxu0 0.0
      %3826 = vmatprep.subr.mxu0 0.0
      %3827 = vmatpush1.msra.mxu0 0.0
      %3828 = vmatprep.subr.mxu0 0.0
      %3829 = vmatpush1.msra.mxu0 0.0
      %3830 = vmatprep.subr.mxu0 0.0
      %3831 = vmatpush1.msra.mxu0 0.0
      %3832 = vmatprep.subr.mxu0 0.0
      %3833 = vmatpush1.msra.mxu0 0.0
      %3834 = vmatprep.subr.mxu0 0.0
      %3835 = vmatpush1.msra.mxu0 0.0
      %3836 = vmatprep.subr.mxu0 0.0
      %3837 = vmatpush1.msra.mxu0 0.0
      %3838 = vmatprep.subr.mxu0 0.0
      %3839 = vmatpush1.msra.mxu0 0.0
      %3840 = vmatprep.subr.mxu0 0.0
      %3841 = vmatpush1.msra.mxu0 0.0
      %3842 = vmatprep.subr.mxu0 0.0
      %3843 = vmatpush1.msra.mxu0 0.0
      %3844 = vmatprep.subr.mxu0 0.0
      %3845 = vmatpush1.msra.mxu0 0.0
      %3846 = vmatprep.subr.mxu0 0.0
      %3847 = vmatpush1.msra.mxu0 0.0
      %3848 = vmatprep.subr.mxu0 0.0
      %3849 = vmatpush1.msra.mxu0 0.0
      %3850 = vmatprep.subr.mxu0 0.0
      %3851 = vmatpush1.msra.mxu0 0.0
      %3852 = vmatprep.subr.mxu0 0.0
      %3853 = vmatpush1.msra.mxu0 0.0
      %3854 = vmatprep.mubr.f32.mxu0 0.0
      %v3855 = vand.u32 %v3624, 4294901760
      %v3856 = vsub.f32 %v3624, %v3855
      %3857 = vmatmul.mubr.f32.gmra.mrb[0].mxu0 %v3856
      %v3858 = vpop.f32.mrb[0].mxu0
      %v3859 = vadd.f32 %v3782, %v3858
      %v3860 = vpop.f32.mrb[0].mxu0
      %v3861 = vadd.f32 %v3784, %v3860
      %3862 = vdwg.mxu0
      %v3863 = vand.u32 %v248, 4294901760
      %3864 = vmatprep.subr.mxu0 %v3863
      %v3865 = vand.u32 %v247, 4294901760
      %3866 = vmatpush1.msra.mxu0 %v3865
      %3867 = vmatprep.subr.mxu0 0.0
      %3868 = vmatpush1.msra.mxu0 0.0
      %3869 = vmatprep.subr.mxu0 0.0
      %3870 = vmatpush1.msra.mxu0 0.0
      %3871 = vmatprep.subr.mxu0 0.0
      %3872 = vmatpush1.msra.mxu0 0.0
      %3873 = vmatprep.subr.mxu0 0.0
      %3874 = vmatpush1.msra.mxu0 0.0
      %3875 = vmatprep.subr.mxu0 0.0
      %3876 = vmatpush1.msra.mxu0 0.0
      %3877 = vmatprep.subr.mxu0 0.0
      %3878 = vmatpush1.msra.mxu0 0.0
      %3879 = vmatprep.subr.mxu0 0.0
      %3880 = vmatpush1.msra.mxu0 0.0
      %3881 = vmatprep.subr.mxu0 0.0
      %3882 = vmatpush1.msra.mxu0 0.0
      %3883 = vmatprep.subr.mxu0 0.0
      %3884 = vmatpush1.msra.mxu0 0.0
      %3885 = vmatprep.subr.mxu0 0.0
      %3886 = vmatpush1.msra.mxu0 0.0
      %3887 = vmatprep.subr.mxu0 0.0
      %3888 = vmatpush1.msra.mxu0 0.0
      %3889 = vmatprep.subr.mxu0 0.0
      %3890 = vmatpush1.msra.mxu0 0.0
      %3891 = vmatprep.subr.mxu0 0.0
      %3892 = vmatpush1.msra.mxu0 0.0
      %3893 = vmatprep.subr.mxu0 0.0
      %3894 = vmatpush1.msra.mxu0 0.0
      %3895 = vmatprep.subr.mxu0 0.0
      %3896 = vmatpush1.msra.mxu0 0.0
      %3897 = vmatprep.subr.mxu0 0.0
      %3898 = vmatpush1.msra.mxu0 0.0
      %3899 = vmatprep.subr.mxu0 0.0
      %3900 = vmatpush1.msra.mxu0 0.0
      %3901 = vmatprep.subr.mxu0 0.0
      %3902 = vmatpush1.msra.mxu0 0.0
      %3903 = vmatprep.subr.mxu0 0.0
      %3904 = vmatpush1.msra.mxu0 0.0
      %3905 = vmatprep.subr.mxu0 0.0
      %3906 = vmatpush1.msra.mxu0 0.0
      %3907 = vmatprep.subr.mxu0 0.0
      %3908 = vmatpush1.msra.mxu0 0.0
      %3909 = vmatprep.subr.mxu0 0.0
      %3910 = vmatpush1.msra.mxu0 0.0
      %3911 = vmatprep.subr.mxu0 0.0
      %3912 = vmatpush1.msra.mxu0 0.0
      %3913 = vmatprep.subr.mxu0 0.0
      %3914 = vmatpush1.msra.mxu0 0.0
      %3915 = vmatprep.subr.mxu0 0.0
      %3916 = vmatpush1.msra.mxu0 0.0
      %3917 = vmatprep.subr.mxu0 0.0
      %3918 = vmatpush1.msra.mxu0 0.0
      %3919 = vmatprep.subr.mxu0 0.0
      %3920 = vmatpush1.msra.mxu0 0.0
      %3921 = vmatprep.subr.mxu0 0.0
      %3922 = vmatpush1.msra.mxu0 0.0
      %3923 = vmatprep.subr.mxu0 0.0
      %3924 = vmatpush1.msra.mxu0 0.0
      %3925 = vmatprep.subr.mxu0 0.0
      %3926 = vmatpush1.msra.mxu0 0.0
      %3927 = vmatprep.subr.mxu0 0.0
      %3928 = vmatpush1.msra.mxu0 0.0
      %3929 = vmatprep.mubr.f32.mxu0 0.0
      %v3930 = vand.u32 %v3624, 4294901760
      %v3931 = vsub.f32 %v3624, %v3930
      %v3932 = vand.u32 %v3931, 4294901760
      %3933 = vmatmul.mubr.f32.gmra.mrb[0].mxu0 %v3932
      %v3934 = vpop.f32.mrb[0].mxu0
      %v3935 = vadd.f32 %v3859, %v3934
      %v3936 = vpop.f32.mrb[0].mxu0
      %v3937 = vadd.f32 %v3861, %v3936
      %3938 = vdwg.mxu0
      %v3939 = vand.u32 %v248, 4294901760
      %v3940 = vsub.f32 %v248, %v3939
      %v3941 = vand.u32 %v3940, 4294901760
      %3942 = vmatprep.subr.mxu0 %v3941
      %v3943 = vand.u32 %v247, 4294901760
      %v3944 = vsub.f32 %v247, %v3943
      %v3945 = vand.u32 %v3944, 4294901760
      %3946 = vmatpush1.msra.mxu0 %v3945
      %3947 = vmatprep.subr.mxu0 0.0
      %3948 = vmatpush1.msra.mxu0 0.0
      %3949 = vmatprep.subr.mxu0 0.0
      %3950 = vmatpush1.msra.mxu0 0.0
      %3951 = vmatprep.subr.mxu0 0.0
      %3952 = vmatpush1.msra.mxu0 0.0
      %3953 = vmatprep.subr.mxu0 0.0
      %3954 = vmatpush1.msra.mxu0 0.0
      %3955 = vmatprep.subr.mxu0 0.0
      %3956 = vmatpush1.msra.mxu0 0.0
      %3957 = vmatprep.subr.mxu0 0.0
      %3958 = vmatpush1.msra.mxu0 0.0
      %3959 = vmatprep.subr.mxu0 0.0
      %3960 = vmatpush1.msra.mxu0 0.0
      %3961 = vmatprep.subr.mxu0 0.0
      %3962 = vmatpush1.msra.mxu0 0.0
      %3963 = vmatprep.subr.mxu0 0.0
      %3964 = vmatpush1.msra.mxu0 0.0
      %3965 = vmatprep.subr.mxu0 0.0
      %3966 = vmatpush1.msra.mxu0 0.0
      %3967 = vmatprep.subr.mxu0 0.0
      %3968 = vmatpush1.msra.mxu0 0.0
      %3969 = vmatprep.subr.mxu0 0.0
      %3970 = vmatpush1.msra.mxu0 0.0
      %3971 = vmatprep.subr.mxu0 0.0
      %3972 = vmatpush1.msra.mxu0 0.0
      %3973 = vmatprep.subr.mxu0 0.0
      %3974 = vmatpush1.msra.mxu0 0.0
      %3975 = vmatprep.subr.mxu0 0.0
      %3976 = vmatpush1.msra.mxu0 0.0
      %3977 = vmatprep.subr.mxu0 0.0
      %3978 = vmatpush1.msra.mxu0 0.0
      %3979 = vmatprep.subr.mxu0 0.0
      %3980 = vmatpush1.msra.mxu0 0.0
      %3981 = vmatprep.subr.mxu0 0.0
      %3982 = vmatpush1.msra.mxu0 0.0
      %3983 = vmatprep.subr.mxu0 0.0
      %3984 = vmatpush1.msra.mxu0 0.0
      %3985 = vmatprep.subr.mxu0 0.0
      %3986 = vmatpush1.msra.mxu0 0.0
      %3987 = vmatprep.subr.mxu0 0.0
      %3988 = vmatpush1.msra.mxu0 0.0
      %3989 = vmatprep.subr.mxu0 0.0
      %3990 = vmatpush1.msra.mxu0 0.0
      %3991 = vmatprep.subr.mxu0 0.0
      %3992 = vmatpush1.msra.mxu0 0.0
      %3993 = vmatprep.subr.mxu0 0.0
      %3994 = vmatpush1.msra.mxu0 0.0
      %3995 = vmatprep.subr.mxu0 0.0
      %3996 = vmatpush1.msra.mxu0 0.0
      %3997 = vmatprep.subr.mxu0 0.0
      %3998 = vmatpush1.msra.mxu0 0.0
      %3999 = vmatprep.subr.mxu0 0.0
      %4000 = vmatpush1.msra.mxu0 0.0
      %4001 = vmatprep.subr.mxu0 0.0
      %4002 = vmatpush1.msra.mxu0 0.0
      %4003 = vmatprep.subr.mxu0 0.0
      %4004 = vmatpush1.msra.mxu0 0.0
      %4005 = vmatprep.subr.mxu0 0.0
      %4006 = vmatpush1.msra.mxu0 0.0
      %4007 = vmatprep.subr.mxu0 0.0
      %4008 = vmatpush1.msra.mxu0 0.0
      %4009 = vmatprep.mubr.f32.mxu0 0.0
      %v4010 = vand.u32 %v3624, 4294901760
      %4011 = vmatmul.mubr.f32.gmra.mrb[0].mxu0 %v4010
      %v4012 = vpop.f32.mrb[0].mxu0
      %v4013 = vadd.f32 %v3935, %v4012
      %v4014 = vpop.f32.mrb[0].mxu0
      %v4015 = vadd.f32 %v3937, %v4014
      %4016 = vdwg.mxu0
      %v4017 = vand.u32 %v248, 4294901760
      %4018 = vmatprep.subr.mxu0 %v4017
      %v4019 = vand.u32 %v247, 4294901760
      %4020 = vmatpush1.msra.mxu0 %v4019
      %4021 = vmatprep.subr.mxu0 0.0
      %4022 = vmatpush1.msra.mxu0 0.0
      %4023 = vmatprep.subr.mxu0 0.0
      %4024 = vmatpush1.msra.mxu0 0.0
      %4025 = vmatprep.subr.mxu0 0.0
      %4026 = vmatpush1.msra.mxu0 0.0
      %4027 = vmatprep.subr.mxu0 0.0
      %4028 = vmatpush1.msra.mxu0 0.0
      %4029 = vmatprep.subr.mxu0 0.0
      %4030 = vmatpush1.msra.mxu0 0.0
      %4031 = vmatprep.subr.mxu0 0.0
      %4032 = vmatpush1.msra.mxu0 0.0
      %4033 = vmatprep.subr.mxu0 0.0
      %4034 = vmatpush1.msra.mxu0 0.0
      %4035 = vmatprep.subr.mxu0 0.0
      %4036 = vmatpush1.msra.mxu0 0.0
      %4037 = vmatprep.subr.mxu0 0.0
      %4038 = vmatpush1.msra.mxu0 0.0
      %4039 = vmatprep.subr.mxu0 0.0
      %4040 = vmatpush1.msra.mxu0 0.0
      %4041 = vmatprep.subr.mxu0 0.0
      %4042 = vmatpush1.msra.mxu0 0.0
      %4043 = vmatprep.subr.mxu0 0.0
      %4044 = vmatpush1.msra.mxu0 0.0
      %4045 = vmatprep.subr.mxu0 0.0
      %4046 = vmatpush1.msra.mxu0 0.0
      %4047 = vmatprep.subr.mxu0 0.0
      %4048 = vmatpush1.msra.mxu0 0.0
      %4049 = vmatprep.subr.mxu0 0.0
      %4050 = vmatpush1.msra.mxu0 0.0
      %4051 = vmatprep.subr.mxu0 0.0
      %4052 = vmatpush1.msra.mxu0 0.0
      %4053 = vmatprep.subr.mxu0 0.0
      %4054 = vmatpush1.msra.mxu0 0.0
      %4055 = vmatprep.subr.mxu0 0.0
      %4056 = vmatpush1.msra.mxu0 0.0
      %4057 = vmatprep.subr.mxu0 0.0
      %4058 = vmatpush1.msra.mxu0 0.0
      %4059 = vmatprep.subr.mxu0 0.0
      %4060 = vmatpush1.msra.mxu0 0.0
      %4061 = vmatprep.subr.mxu0 0.0
      %4062 = vmatpush1.msra.mxu0 0.0
      %4063 = vmatprep.subr.mxu0 0.0
      %4064 = vmatpush1.msra.mxu0 0.0
      %4065 = vmatprep.subr.mxu0 0.0
      %4066 = vmatpush1.msra.mxu0 0.0
      %4067 = vmatprep.subr.mxu0 0.0
      %4068 = vmatpush1.msra.mxu0 0.0
      %4069 = vmatprep.subr.mxu0 0.0
      %4070 = vmatpush1.msra.mxu0 0.0
      %4071 = vmatprep.subr.mxu0 0.0
      %4072 = vmatpush1.msra.mxu0 0.0
      %4073 = vmatprep.subr.mxu0 0.0
      %4074 = vmatpush1.msra.mxu0 0.0
      %4075 = vmatprep.subr.mxu0 0.0
      %4076 = vmatpush1.msra.mxu0 0.0
      %4077 = vmatprep.subr.mxu0 0.0
      %4078 = vmatpush1.msra.mxu0 0.0
      %4079 = vmatprep.subr.mxu0 0.0
      %4080 = vmatpush1.msra.mxu0 0.0
      %4081 = vmatprep.subr.mxu0 0.0
      %4082 = vmatpush1.msra.mxu0 0.0
      %4083 = vmatprep.mubr.f32.mxu0 0.0
      %v4084 = vand.u32 %v3624, 4294901760
      %4085 = vmatmul.mubr.f32.gmra.mrb[0].mxu0 %v4084
      %v4086 = vpop.f32.mrb[0].mxu0
      %v4087 = vadd.f32 %v4013, %v4086
      %v4088 = vpop.f32.mrb[0].mxu0
      %v4089 = vadd.f32 %v4015, %v4088
      %4090 = vdwg.mxu0
      %v4091 = vadd.f32 %v3619, %v4087
      %v4092 = vadd.f32 %v3620, %v4089
      %s4093 = scalar_lea.vmem %s2, 64
      %v4094 = vld [vmem:[%s4093] sm:$0xff]
      %v4096 = vsel %vm292, %v4094, 0
      %v4098 = vand.u32 %v3148, 4294901760
      %4099 = vmatprep.subr.mxu0 %v4098
      %v4100 = vand.u32 %v3147, 4294901760
      %4101 = vmatpush1.msra.mxu0 %v4100
      %4102 = vmatprep.subr.mxu0 0.0
      %4103 = vmatpush1.msra.mxu0 0.0
      %4104 = vmatprep.subr.mxu0 0.0
      %4105 = vmatpush1.msra.mxu0 0.0
      %4106 = vmatprep.subr.mxu0 0.0
      %4107 = vmatpush1.msra.mxu0 0.0
      %4108 = vmatprep.subr.mxu0 0.0
      %4109 = vmatpush1.msra.mxu0 0.0
      %4110 = vmatprep.subr.mxu0 0.0
      %4111 = vmatpush1.msra.mxu0 0.0
      %4112 = vmatprep.subr.mxu0 0.0
      %4113 = vmatpush1.msra.mxu0 0.0
      %4114 = vmatprep.subr.mxu0 0.0
      %4115 = vmatpush1.msra.mxu0 0.0
      %4116 = vmatprep.subr.mxu0 0.0
      %4117 = vmatpush1.msra.mxu0 0.0
      %4118 = vmatprep.subr.mxu0 0.0
      %4119 = vmatpush1.msra.mxu0 0.0
      %4120 = vmatprep.subr.mxu0 0.0
      %4121 = vmatpush1.msra.mxu0 0.0
      %4122 = vmatprep.subr.mxu0 0.0
      %4123 = vmatpush1.msra.mxu0 0.0
      %4124 = vmatprep.subr.mxu0 0.0
      %4125 = vmatpush1.msra.mxu0 0.0
      %4126 = vmatprep.subr.mxu0 0.0
      %4127 = vmatpush1.msra.mxu0 0.0
      %4128 = vmatprep.subr.mxu0 0.0
      %4129 = vmatpush1.msra.mxu0 0.0
      %4130 = vmatprep.subr.mxu0 0.0
      %4131 = vmatpush1.msra.mxu0 0.0
      %4132 = vmatprep.subr.mxu0 0.0
      %4133 = vmatpush1.msra.mxu0 0.0
      %4134 = vmatprep.subr.mxu0 0.0
      %4135 = vmatpush1.msra.mxu0 0.0
      %4136 = vmatprep.subr.mxu0 0.0
      %4137 = vmatpush1.msra.mxu0 0.0
      %4138 = vmatprep.subr.mxu0 0.0
      %4139 = vmatpush1.msra.mxu0 0.0
      %4140 = vmatprep.subr.mxu0 0.0
      %4141 = vmatpush1.msra.mxu0 0.0
      %4142 = vmatprep.subr.mxu0 0.0
      %4143 = vmatpush1.msra.mxu0 0.0
      %4144 = vmatprep.subr.mxu0 0.0
      %4145 = vmatpush1.msra.mxu0 0.0
      %4146 = vmatprep.subr.mxu0 0.0
      %4147 = vmatpush1.msra.mxu0 0.0
      %4148 = vmatprep.subr.mxu0 0.0
      %4149 = vmatpush1.msra.mxu0 0.0
      %4150 = vmatprep.subr.mxu0 0.0
      %4151 = vmatpush1.msra.mxu0 0.0
      %4152 = vmatprep.subr.mxu0 0.0
      %4153 = vmatpush1.msra.mxu0 0.0
      %4154 = vmatprep.subr.mxu0 0.0
      %4155 = vmatpush1.msra.mxu0 0.0
      %4156 = vmatprep.subr.mxu0 0.0
      %4157 = vmatpush1.msra.mxu0 0.0
      %4158 = vmatprep.subr.mxu0 0.0
      %4159 = vmatpush1.msra.mxu0 0.0
      %4160 = vmatprep.subr.mxu0 0.0
      %4161 = vmatpush1.msra.mxu0 0.0
      %4162 = vmatprep.subr.mxu0 0.0
      %4163 = vmatpush1.msra.mxu0 0.0
      %4164 = vmatprep.mubr.f32.mxu0 0.0
      %v4165 = vand.u32 %v4096, 4294901760
      %v4166 = vsub.f32 %v4096, %v4165
      %v4167 = vand.u32 %v4166, 4294901760
      %v4168 = vsub.f32 %v4166, %v4167
      %v4169 = vand.u32 %v4168, 4294901760
      %4170 = vmatmul.mubr.f32.gmra.mrb[0].mxu0 %v4169
      %v4171 = vpop.f32.mrb[0].mxu0
      %v4172 = vadd.f32 0.0, %v4171
      %v4173 = vpop.f32.mrb[0].mxu0
      %v4174 = vadd.f32 0.0, %v4173
      %4175 = vdwg.mxu0
      %v4176 = vand.u32 %v3148, 4294901760
      %v4177 = vsub.f32 %v3148, %v4176
      %v4178 = vand.u32 %v4177, 4294901760
      %v4179 = vsub.f32 %v4177, %v4178
      %v4180 = vand.u32 %v4179, 4294901760
      %4181 = vmatprep.subr.mxu0 %v4180
      %v4182 = vand.u32 %v3147, 4294901760
      %v4183 = vsub.f32 %v3147, %v4182
      %v4184 = vand.u32 %v4183, 4294901760
      %v4185 = vsub.f32 %v4183, %v4184
      %v4186 = vand.u32 %v4185, 4294901760
      %4187 = vmatpush1.msra.mxu0 %v4186
      %4188 = vmatprep.subr.mxu0 0.0
      %4189 = vmatpush1.msra.mxu0 0.0
      %4190 = vmatprep.subr.mxu0 0.0
      %4191 = vmatpush1.msra.mxu0 0.0
      %4192 = vmatprep.subr.mxu0 0.0
      %4193 = vmatpush1.msra.mxu0 0.0
      %4194 = vmatprep.subr.mxu0 0.0
      %4195 = vmatpush1.msra.mxu0 0.0
      %4196 = vmatprep.subr.mxu0 0.0
      %4197 = vmatpush1.msra.mxu0 0.0
      %4198 = vmatprep.subr.mxu0 0.0
      %4199 = vmatpush1.msra.mxu0 0.0
      %4200 = vmatprep.subr.mxu0 0.0
      %4201 = vmatpush1.msra.mxu0 0.0
      %4202 = vmatprep.subr.mxu0 0.0
      %4203 = vmatpush1.msra.mxu0 0.0
      %4204 = vmatprep.subr.mxu0 0.0
      %4205 = vmatpush1.msra.mxu0 0.0
      %4206 = vmatprep.subr.mxu0 0.0
      %4207 = vmatpush1.msra.mxu0 0.0
      %4208 = vmatprep.subr.mxu0 0.0
      %4209 = vmatpush1.msra.mxu0 0.0
      %4210 = vmatprep.subr.mxu0 0.0
      %4211 = vmatpush1.msra.mxu0 0.0
      %4212 = vmatprep.subr.mxu0 0.0
      %4213 = vmatpush1.msra.mxu0 0.0
      %4214 = vmatprep.subr.mxu0 0.0
      %4215 = vmatpush1.msra.mxu0 0.0
      %4216 = vmatprep.subr.mxu0 0.0
      %4217 = vmatpush1.msra.mxu0 0.0
      %4218 = vmatprep.subr.mxu0 0.0
      %4219 = vmatpush1.msra.mxu0 0.0
      %4220 = vmatprep.subr.mxu0 0.0
      %4221 = vmatpush1.msra.mxu0 0.0
      %4222 = vmatprep.subr.mxu0 0.0
      %4223 = vmatpush1.msra.mxu0 0.0
      %4224 = vmatprep.subr.mxu0 0.0
      %4225 = vmatpush1.msra.mxu0 0.0
      %4226 = vmatprep.subr.mxu0 0.0
      %4227 = vmatpush1.msra.mxu0 0.0
      %4228 = vmatprep.subr.mxu0 0.0
      %4229 = vmatpush1.msra.mxu0 0.0
      %4230 = vmatprep.subr.mxu0 0.0
      %4231 = vmatpush1.msra.mxu0 0.0
      %4232 = vmatprep.subr.mxu0 0.0
      %4233 = vmatpush1.msra.mxu0 0.0
      %4234 = vmatprep.subr.mxu0 0.0
      %4235 = vmatpush1.msra.mxu0 0.0
      %4236 = vmatprep.subr.mxu0 0.0
      %4237 = vmatpush1.msra.mxu0 0.0
      %4238 = vmatprep.subr.mxu0 0.0
      %4239 = vmatpush1.msra.mxu0 0.0
      %4240 = vmatprep.subr.mxu0 0.0
      %4241 = vmatpush1.msra.mxu0 0.0
      %4242 = vmatprep.subr.mxu0 0.0
      %4243 = vmatpush1.msra.mxu0 0.0
      %4244 = vmatprep.subr.mxu0 0.0
      %4245 = vmatpush1.msra.mxu0 0.0
      %4246 = vmatprep.subr.mxu0 0.0
      %4247 = vmatpush1.msra.mxu0 0.0
      %4248 = vmatprep.subr.mxu0 0.0
      %4249 = vmatpush1.msra.mxu0 0.0
      %4250 = vmatprep.mubr.f32.mxu0 0.0
      %v4251 = vand.u32 %v4096, 4294901760
      %4252 = vmatmul.mubr.f32.gmra.mrb[0].mxu0 %v4251
      %v4253 = vpop.f32.mrb[0].mxu0
      %v4254 = vadd.f32 %v4172, %v4253
      %v4255 = vpop.f32.mrb[0].mxu0
      %v4256 = vadd.f32 %v4174, %v4255
      %4257 = vdwg.mxu0
      %v4258 = vand.u32 %v3148, 4294901760
      %v4259 = vsub.f32 %v3148, %v4258
      %4260 = vmatprep.subr.mxu0 %v4259
      %v4261 = vand.u32 %v3147, 4294901760
      %v4262 = vsub.f32 %v3147, %v4261
      %4263 = vmatpush1.msra.mxu0 %v4262
      %4264 = vmatprep.subr.mxu0 0.0
      %4265 = vmatpush1.msra.mxu0 0.0
      %4266 = vmatprep.subr.mxu0 0.0
      %4267 = vmatpush1.msra.mxu0 0.0
      %4268 = vmatprep.subr.mxu0 0.0
      %4269 = vmatpush1.msra.mxu0 0.0
      %4270 = vmatprep.subr.mxu0 0.0
      %4271 = vmatpush1.msra.mxu0 0.0
      %4272 = vmatprep.subr.mxu0 0.0
      %4273 = vmatpush1.msra.mxu0 0.0
      %4274 = vmatprep.subr.mxu0 0.0
      %4275 = vmatpush1.msra.mxu0 0.0
      %4276 = vmatprep.subr.mxu0 0.0
      %4277 = vmatpush1.msra.mxu0 0.0
      %4278 = vmatprep.subr.mxu0 0.0
      %4279 = vmatpush1.msra.mxu0 0.0
      %4280 = vmatprep.subr.mxu0 0.0
      %4281 = vmatpush1.msra.mxu0 0.0
      %4282 = vmatprep.subr.mxu0 0.0
      %4283 = vmatpush1.msra.mxu0 0.0
      %4284 = vmatprep.subr.mxu0 0.0
      %4285 = vmatpush1.msra.mxu0 0.0
      %4286 = vmatprep.subr.mxu0 0.0
      %4287 = vmatpush1.msra.mxu0 0.0
      %4288 = vmatprep.subr.mxu0 0.0
      %4289 = vmatpush1.msra.mxu0 0.0
      %4290 = vmatprep.subr.mxu0 0.0
      %4291 = vmatpush1.msra.mxu0 0.0
      %4292 = vmatprep.subr.mxu0 0.0
      %4293 = vmatpush1.msra.mxu0 0.0
      %4294 = vmatprep.subr.mxu0 0.0
      %4295 = vmatpush1.msra.mxu0 0.0
      %4296 = vmatprep.subr.mxu0 0.0
      %4297 = vmatpush1.msra.mxu0 0.0
      %4298 = vmatprep.subr.mxu0 0.0
      %4299 = vmatpush1.msra.mxu0 0.0
      %4300 = vmatprep.subr.mxu0 0.0
      %4301 = vmatpush1.msra.mxu0 0.0
      %4302 = vmatprep.subr.mxu0 0.0
      %4303 = vmatpush1.msra.mxu0 0.0
      %4304 = vmatprep.subr.mxu0 0.0
      %4305 = vmatpush1.msra.mxu0 0.0
      %4306 = vmatprep.subr.mxu0 0.0
      %4307 = vmatpush1.msra.mxu0 0.0
      %4308 = vmatprep.subr.mxu0 0.0
      %4309 = vmatpush1.msra.mxu0 0.0
      %4310 = vmatprep.subr.mxu0 0.0
      %4311 = vmatpush1.msra.mxu0 0.0
      %4312 = vmatprep.subr.mxu0 0.0
      %4313 = vmatpush1.msra.mxu0 0.0
      %4314 = vmatprep.subr.mxu0 0.0
      %4315 = vmatpush1.msra.mxu0 0.0
      %4316 = vmatprep.subr.mxu0 0.0
      %4317 = vmatpush1.msra.mxu0 0.0
      %4318 = vmatprep.subr.mxu0 0.0
      %4319 = vmatpush1.msra.mxu0 0.0
      %4320 = vmatprep.subr.mxu0 0.0
      %4321 = vmatpush1.msra.mxu0 0.0
      %4322 = vmatprep.subr.mxu0 0.0
      %4323 = vmatpush1.msra.mxu0 0.0
      %4324 = vmatprep.subr.mxu0 0.0
      %4325 = vmatpush1.msra.mxu0 0.0
      %4326 = vmatprep.mubr.f32.mxu0 0.0
      %v4327 = vand.u32 %v4096, 4294901760
      %v4328 = vsub.f32 %v4096, %v4327
      %4329 = vmatmul.mubr.f32.gmra.mrb[0].mxu0 %v4328
      %v4330 = vpop.f32.mrb[0].mxu0
      %v4331 = vadd.f32 %v4254, %v4330
      %v4332 = vpop.f32.mrb[0].mxu0
      %v4333 = vadd.f32 %v4256, %v4332
      %4334 = vdwg.mxu0
      %v4335 = vand.u32 %v3148, 4294901760
      %4336 = vmatprep.subr.mxu0 %v4335
      %v4337 = vand.u32 %v3147, 4294901760
      %4338 = vmatpush1.msra.mxu0 %v4337
      %4339 = vmatprep.subr.mxu0 0.0
      %4340 = vmatpush1.msra.mxu0 0.0
      %4341 = vmatprep.subr.mxu0 0.0
      %4342 = vmatpush1.msra.mxu0 0.0
      %4343 = vmatprep.subr.mxu0 0.0
      %4344 = vmatpush1.msra.mxu0 0.0
      %4345 = vmatprep.subr.mxu0 0.0
      %4346 = vmatpush1.msra.mxu0 0.0
      %4347 = vmatprep.subr.mxu0 0.0
      %4348 = vmatpush1.msra.mxu0 0.0
      %4349 = vmatprep.subr.mxu0 0.0
      %4350 = vmatpush1.msra.mxu0 0.0
      %4351 = vmatprep.subr.mxu0 0.0
      %4352 = vmatpush1.msra.mxu0 0.0
      %4353 = vmatprep.subr.mxu0 0.0
      %4354 = vmatpush1.msra.mxu0 0.0
      %4355 = vmatprep.subr.mxu0 0.0
      %4356 = vmatpush1.msra.mxu0 0.0
      %4357 = vmatprep.subr.mxu0 0.0
      %4358 = vmatpush1.msra.mxu0 0.0
      %4359 = vmatprep.subr.mxu0 0.0
      %4360 = vmatpush1.msra.mxu0 0.0
      %4361 = vmatprep.subr.mxu0 0.0
      %4362 = vmatpush1.msra.mxu0 0.0
      %4363 = vmatprep.subr.mxu0 0.0
      %4364 = vmatpush1.msra.mxu0 0.0
      %4365 = vmatprep.subr.mxu0 0.0
      %4366 = vmatpush1.msra.mxu0 0.0
      %4367 = vmatprep.subr.mxu0 0.0
      %4368 = vmatpush1.msra.mxu0 0.0
      %4369 = vmatprep.subr.mxu0 0.0
      %4370 = vmatpush1.msra.mxu0 0.0
      %4371 = vmatprep.subr.mxu0 0.0
      %4372 = vmatpush1.msra.mxu0 0.0
      %4373 = vmatprep.subr.mxu0 0.0
      %4374 = vmatpush1.msra.mxu0 0.0
      %4375 = vmatprep.subr.mxu0 0.0
      %4376 = vmatpush1.msra.mxu0 0.0
      %4377 = vmatprep.subr.mxu0 0.0
      %4378 = vmatpush1.msra.mxu0 0.0
      %4379 = vmatprep.subr.mxu0 0.0
      %4380 = vmatpush1.msra.mxu0 0.0
      %4381 = vmatprep.subr.mxu0 0.0
      %4382 = vmatpush1.msra.mxu0 0.0
      %4383 = vmatprep.subr.mxu0 0.0
      %4384 = vmatpush1.msra.mxu0 0.0
      %4385 = vmatprep.subr.mxu0 0.0
      %4386 = vmatpush1.msra.mxu0 0.0
      %4387 = vmatprep.subr.mxu0 0.0
      %4388 = vmatpush1.msra.mxu0 0.0
      %4389 = vmatprep.subr.mxu0 0.0
      %4390 = vmatpush1.msra.mxu0 0.0
      %4391 = vmatprep.subr.mxu0 0.0
      %4392 = vmatpush1.msra.mxu0 0.0
      %4393 = vmatprep.subr.mxu0 0.0
      %4394 = vmatpush1.msra.mxu0 0.0
      %4395 = vmatprep.subr.mxu0 0.0
      %4396 = vmatpush1.msra.mxu0 0.0
      %4397 = vmatprep.subr.mxu0 0.0
      %4398 = vmatpush1.msra.mxu0 0.0
      %4399 = vmatprep.subr.mxu0 0.0
      %4400 = vmatpush1.msra.mxu0 0.0
      %4401 = vmatprep.mubr.f32.mxu0 0.0
      %v4402 = vand.u32 %v4096, 4294901760
      %v4403 = vsub.f32 %v4096, %v4402
      %v4404 = vand.u32 %v4403, 4294901760
      %4405 = vmatmul.mubr.f32.gmra.mrb[0].mxu0 %v4404
      %v4406 = vpop.f32.mrb[0].mxu0
      %v4407 = vadd.f32 %v4331, %v4406
      %v4408 = vpop.f32.mrb[0].mxu0
      %v4409 = vadd.f32 %v4333, %v4408
      %4410 = vdwg.mxu0
      %v4411 = vand.u32 %v3148, 4294901760
      %v4412 = vsub.f32 %v3148, %v4411
      %v4413 = vand.u32 %v4412, 4294901760
      %4414 = vmatprep.subr.mxu0 %v4413
      %v4415 = vand.u32 %v3147, 4294901760
      %v4416 = vsub.f32 %v3147, %v4415
      %v4417 = vand.u32 %v4416, 4294901760
      %4418 = vmatpush1.msra.mxu0 %v4417
      %4419 = vmatprep.subr.mxu0 0.0
      %4420 = vmatpush1.msra.mxu0 0.0
      %4421 = vmatprep.subr.mxu0 0.0
      %4422 = vmatpush1.msra.mxu0 0.0
      %4423 = vmatprep.subr.mxu0 0.0
      %4424 = vmatpush1.msra.mxu0 0.0
      %4425 = vmatprep.subr.mxu0 0.0
      %4426 = vmatpush1.msra.mxu0 0.0
      %4427 = vmatprep.subr.mxu0 0.0
      %4428 = vmatpush1.msra.mxu0 0.0
      %4429 = vmatprep.subr.mxu0 0.0
      %4430 = vmatpush1.msra.mxu0 0.0
      %4431 = vmatprep.subr.mxu0 0.0
      %4432 = vmatpush1.msra.mxu0 0.0
      %4433 = vmatprep.subr.mxu0 0.0
      %4434 = vmatpush1.msra.mxu0 0.0
      %4435 = vmatprep.subr.mxu0 0.0
      %4436 = vmatpush1.msra.mxu0 0.0
      %4437 = vmatprep.subr.mxu0 0.0
      %4438 = vmatpush1.msra.mxu0 0.0
      %4439 = vmatprep.subr.mxu0 0.0
      %4440 = vmatpush1.msra.mxu0 0.0
      %4441 = vmatprep.subr.mxu0 0.0
      %4442 = vmatpush1.msra.mxu0 0.0
      %4443 = vmatprep.subr.mxu0 0.0
      %4444 = vmatpush1.msra.mxu0 0.0
      %4445 = vmatprep.subr.mxu0 0.0
      %4446 = vmatpush1.msra.mxu0 0.0
      %4447 = vmatprep.subr.mxu0 0.0
      %4448 = vmatpush1.msra.mxu0 0.0
      %4449 = vmatprep.subr.mxu0 0.0
      %4450 = vmatpush1.msra.mxu0 0.0
      %4451 = vmatprep.subr.mxu0 0.0
      %4452 = vmatpush1.msra.mxu0 0.0
      %4453 = vmatprep.subr.mxu0 0.0
      %4454 = vmatpush1.msra.mxu0 0.0
      %4455 = vmatprep.subr.mxu0 0.0
      %4456 = vmatpush1.msra.mxu0 0.0
      %4457 = vmatprep.subr.mxu0 0.0
      %4458 = vmatpush1.msra.mxu0 0.0
      %4459 = vmatprep.subr.mxu0 0.0
      %4460 = vmatpush1.msra.mxu0 0.0
      %4461 = vmatprep.subr.mxu0 0.0
      %4462 = vmatpush1.msra.mxu0 0.0
      %4463 = vmatprep.subr.mxu0 0.0
      %4464 = vmatpush1.msra.mxu0 0.0
      %4465 = vmatprep.subr.mxu0 0.0
      %4466 = vmatpush1.msra.mxu0 0.0
      %4467 = vmatprep.subr.mxu0 0.0
      %4468 = vmatpush1.msra.mxu0 0.0
      %4469 = vmatprep.subr.mxu0 0.0
      %4470 = vmatpush1.msra.mxu0 0.0
      %4471 = vmatprep.subr.mxu0 0.0
      %4472 = vmatpush1.msra.mxu0 0.0
      %4473 = vmatprep.subr.mxu0 0.0
      %4474 = vmatpush1.msra.mxu0 0.0
      %4475 = vmatprep.subr.mxu0 0.0
      %4476 = vmatpush1.msra.mxu0 0.0
      %4477 = vmatprep.subr.mxu0 0.0
      %4478 = vmatpush1.msra.mxu0 0.0
      %4479 = vmatprep.subr.mxu0 0.0
      %4480 = vmatpush1.msra.mxu0 0.0
      %4481 = vmatprep.mubr.f32.mxu0 0.0
      %v4482 = vand.u32 %v4096, 4294901760
      %4483 = vmatmul.mubr.f32.gmra.mrb[0].mxu0 %v4482
      %v4484 = vpop.f32.mrb[0].mxu0
      %v4485 = vadd.f32 %v4407, %v4484
      %v4486 = vpop.f32.mrb[0].mxu0
      %v4487 = vadd.f32 %v4409, %v4486
      %4488 = vdwg.mxu0
      %v4489 = vand.u32 %v3148, 4294901760
      %4490 = vmatprep.subr.mxu0 %v4489
      %v4491 = vand.u32 %v3147, 4294901760
      %4492 = vmatpush1.msra.mxu0 %v4491
      %4493 = vmatprep.subr.mxu0 0.0
      %4494 = vmatpush1.msra.mxu0 0.0
      %4495 = vmatprep.subr.mxu0 0.0
      %4496 = vmatpush1.msra.mxu0 0.0
      %4497 = vmatprep.subr.mxu0 0.0
      %4498 = vmatpush1.msra.mxu0 0.0
      %4499 = vmatprep.subr.mxu0 0.0
      %4500 = vmatpush1.msra.mxu0 0.0
      %4501 = vmatprep.subr.mxu0 0.0
      %4502 = vmatpush1.msra.mxu0 0.0
      %4503 = vmatprep.subr.mxu0 0.0
      %4504 = vmatpush1.msra.mxu0 0.0
      %4505 = vmatprep.subr.mxu0 0.0
      %4506 = vmatpush1.msra.mxu0 0.0
      %4507 = vmatprep.subr.mxu0 0.0
      %4508 = vmatpush1.msra.mxu0 0.0
      %4509 = vmatprep.subr.mxu0 0.0
      %4510 = vmatpush1.msra.mxu0 0.0
      %4511 = vmatprep.subr.mxu0 0.0
      %4512 = vmatpush1.msra.mxu0 0.0
      %4513 = vmatprep.subr.mxu0 0.0
      %4514 = vmatpush1.msra.mxu0 0.0
      %4515 = vmatprep.subr.mxu0 0.0
      %4516 = vmatpush1.msra.mxu0 0.0
      %4517 = vmatprep.subr.mxu0 0.0
      %4518 = vmatpush1.msra.mxu0 0.0
      %4519 = vmatprep.subr.mxu0 0.0
      %4520 = vmatpush1.msra.mxu0 0.0
      %4521 = vmatprep.subr.mxu0 0.0
      %4522 = vmatpush1.msra.mxu0 0.0
      %4523 = vmatprep.subr.mxu0 0.0
      %4524 = vmatpush1.msra.mxu0 0.0
      %4525 = vmatprep.subr.mxu0 0.0
      %4526 = vmatpush1.msra.mxu0 0.0
      %4527 = vmatprep.subr.mxu0 0.0
      %4528 = vmatpush1.msra.mxu0 0.0
      %4529 = vmatprep.subr.mxu0 0.0
      %4530 = vmatpush1.msra.mxu0 0.0
      %4531 = vmatprep.subr.mxu0 0.0
      %4532 = vmatpush1.msra.mxu0 0.0
      %4533 = vmatprep.subr.mxu0 0.0
      %4534 = vmatpush1.msra.mxu0 0.0
      %4535 = vmatprep.subr.mxu0 0.0
      %4536 = vmatpush1.msra.mxu0 0.0
      %4537 = vmatprep.subr.mxu0 0.0
      %4538 = vmatpush1.msra.mxu0 0.0
      %4539 = vmatprep.subr.mxu0 0.0
      %4540 = vmatpush1.msra.mxu0 0.0
      %4541 = vmatprep.subr.mxu0 0.0
      %4542 = vmatpush1.msra.mxu0 0.0
      %4543 = vmatprep.subr.mxu0 0.0
      %4544 = vmatpush1.msra.mxu0 0.0
      %4545 = vmatprep.subr.mxu0 0.0
      %4546 = vmatpush1.msra.mxu0 0.0
      %4547 = vmatprep.subr.mxu0 0.0
      %4548 = vmatpush1.msra.mxu0 0.0
      %4549 = vmatprep.subr.mxu0 0.0
      %4550 = vmatpush1.msra.mxu0 0.0
      %4551 = vmatprep.subr.mxu0 0.0
      %4552 = vmatpush1.msra.mxu0 0.0
      %4553 = vmatprep.subr.mxu0 0.0
      %4554 = vmatpush1.msra.mxu0 0.0
      %4555 = vmatprep.mubr.f32.mxu0 0.0
      %v4556 = vand.u32 %v4096, 4294901760
      %4557 = vmatmul.mubr.f32.gmra.mrb[0].mxu0 %v4556
      %v4558 = vpop.f32.mrb[0].mxu0
      %v4559 = vadd.f32 %v4485, %v4558
      %v4560 = vpop.f32.mrb[0].mxu0
      %v4561 = vadd.f32 %v4487, %v4560
      %4562 = vdwg.mxu0
      %v4563 = vadd.f32 %v4091, %v4559
      %v4564 = vadd.f32 %v4092, %v4561
      %v4565 = vadd.f32 %v4563, %v4564
      %4566 = vadd.xlane.f32.xlu0 %v4565
      %v4567 = vpop.xlane.xlu0 %4566
      %v4568 = vmul.f32 %v4563, %v4563
      %v4569 = vmul.f32 %v4564, %v4564
      %v4570 = vadd.f32 %v4568, %v4569
      %4571 = vadd.xlane.f32.xlu0 %v4570
      %v4572 = vpop.xlane.xlu0 %4571
      %v4573 = vmul.f32 %v4567, 0.00390625
      %v4574 = vmul.f32 %v4572, 0.00390625
      %v4575 = vmul.f32 %v4573, %v4573
      %v4576 = vsub.f32 %v4574, %v4575
      %v4577 = vmax.f32 %v4576, 0.0
      %v4578 = vsub.f32 %v4563, %v4573
      %v4579 = vsub.f32 %v4564, %v4573
      %v4580 = vadd.f32 %v4577, 1e-05
      %v4581 = vrsqrt.pop %v4580
      %v4582 = vmul.f32 %v4578, %v4581
      %v4583 = vmul.f32 %v4579, %v4581
      %v4584 = vmax.f32 %v4582, 0.0
      %v4585 = vmax.f32 %v4583, 0.0
      %4586 = vrot.lane.b32.xlu0 %v4584, 16
      %v4587 = vpop.permute.xlu0 %4586
      %4588 = vrot.lane.b32.xlu0 %v4585, 16
      %v4589 = vpop.permute.xlu0 %4588
      %v4590 = vsel %vm213, %v4587, %v4589
      %v4591 = vsel %vm213, %v4589, %v4587
      %4592 = vrot.lane.b32.xlu0 %v4584, 112
      %v4593 = vpop.permute.xlu0 %4592
      %4594 = vrot.lane.b32.xlu0 %v4585, 112
      %v4595 = vpop.permute.xlu0 %4594
      %v4596 = vsel %vm220, %v4593, %v4595
      %v4597 = vsel %vm220, %v4595, %v4593
      %v4598 = vsel %vm232, %v4596, %v4591
      %v4599 = vsel %vm233, %v4597, %v4590
      %v4600 = vsel %vm245, %v4591, %v4596
      %v4601 = vsel %vm246, %v4590, %v4597
      %4602 = vrot.lane.b32.xlu0 %v4598, 1
      %v4603 = vpop.permute.xlu0 %4602
      %4604 = vrot.lane.b32.xlu0 %v4599, 1
      %v4605 = vpop.permute.xlu0 %4604
      %v4606 = vsel %vm253, %v4603, %v4605
      %v4607 = vsel %vm253, %v4605, %v4603
      %4608 = vrot.lane.b32.xlu0 %v4598, 127
      %v4609 = vpop.permute.xlu0 %4608
      %4610 = vrot.lane.b32.xlu0 %v4599, 127
      %v4611 = vpop.permute.xlu0 %4610
      %v4612 = vsel %vm260, %v4609, %v4611
      %v4613 = vsel %vm260, %v4611, %v4609
      %v4614 = vsel %vm272, %v4612, %v4607
      %v4615 = vsel %vm273, %v4613, %v4606
      %v4616 = vsel %vm285, %v4607, %v4612
      %v4617 = vsel %vm286, %v4606, %v4613
      %v4618 = vld [vmem:[%s3] sm:$0xff]
      %s4619 = scalar_lea.vmem %s3, 8
      %v4620 = vld [vmem:[%s4619] sm:$0xff]
      %v4622 = vsel %vm292, %v4620, 0
      %v4624 = vand.u32 %v4599, 4294901760
      %4625 = vmatprep.subr.mxu0 %v4624
      %v4626 = vand.u32 %v4598, 4294901760
      %4627 = vmatpush1.msra.mxu0 %v4626
      %4628 = vmatprep.subr.mxu0 0.0
      %4629 = vmatpush1.msra.mxu0 0.0
      %4630 = vmatprep.subr.mxu0 0.0
      %4631 = vmatpush1.msra.mxu0 0.0
      %4632 = vmatprep.subr.mxu0 0.0
      %4633 = vmatpush1.msra.mxu0 0.0
      %4634 = vmatprep.subr.mxu0 0.0
      %4635 = vmatpush1.msra.mxu0 0.0
      %4636 = vmatprep.subr.mxu0 0.0
      %4637 = vmatpush1.msra.mxu0 0.0
      %4638 = vmatprep.subr.mxu0 0.0
      %4639 = vmatpush1.msra.mxu0 0.0
      %4640 = vmatprep.subr.mxu0 0.0
      %4641 = vmatpush1.msra.mxu0 0.0
      %4642 = vmatprep.subr.mxu0 0.0
      %4643 = vmatpush1.msra.mxu0 0.0
      %4644 = vmatprep.subr.mxu0 0.0
      %4645 = vmatpush1.msra.mxu0 0.0
      %4646 = vmatprep.subr.mxu0 0.0
      %4647 = vmatpush1.msra.mxu0 0.0
      %4648 = vmatprep.subr.mxu0 0.0
      %4649 = vmatpush1.msra.mxu0 0.0
      %4650 = vmatprep.subr.mxu0 0.0
      %4651 = vmatpush1.msra.mxu0 0.0
      %4652 = vmatprep.subr.mxu0 0.0
      %4653 = vmatpush1.msra.mxu0 0.0
      %4654 = vmatprep.subr.mxu0 0.0
      %4655 = vmatpush1.msra.mxu0 0.0
      %4656 = vmatprep.subr.mxu0 0.0
      %4657 = vmatpush1.msra.mxu0 0.0
      %4658 = vmatprep.subr.mxu0 0.0
      %4659 = vmatpush1.msra.mxu0 0.0
      %4660 = vmatprep.subr.mxu0 0.0
      %4661 = vmatpush1.msra.mxu0 0.0
      %4662 = vmatprep.subr.mxu0 0.0
      %4663 = vmatpush1.msra.mxu0 0.0
      %4664 = vmatprep.subr.mxu0 0.0
      %4665 = vmatpush1.msra.mxu0 0.0
      %4666 = vmatprep.subr.mxu0 0.0
      %4667 = vmatpush1.msra.mxu0 0.0
      %4668 = vmatprep.subr.mxu0 0.0
      %4669 = vmatpush1.msra.mxu0 0.0
      %4670 = vmatprep.subr.mxu0 0.0
      %4671 = vmatpush1.msra.mxu0 0.0
      %4672 = vmatprep.subr.mxu0 0.0
      %4673 = vmatpush1.msra.mxu0 0.0
      %4674 = vmatprep.subr.mxu0 0.0
      %4675 = vmatpush1.msra.mxu0 0.0
      %4676 = vmatprep.subr.mxu0 0.0
      %4677 = vmatpush1.msra.mxu0 0.0
      %4678 = vmatprep.subr.mxu0 0.0
      %4679 = vmatpush1.msra.mxu0 0.0
      %4680 = vmatprep.subr.mxu0 0.0
      %4681 = vmatpush1.msra.mxu0 0.0
      %4682 = vmatprep.subr.mxu0 0.0
      %4683 = vmatpush1.msra.mxu0 0.0
      %4684 = vmatprep.subr.mxu0 0.0
      %4685 = vmatpush1.msra.mxu0 0.0
      %4686 = vmatprep.subr.mxu0 0.0
      %4687 = vmatpush1.msra.mxu0 0.0
      %4688 = vmatprep.subr.mxu0 0.0
      %4689 = vmatpush1.msra.mxu0 0.0
      %4690 = vmatprep.mubr.f32.mxu0 0.0
      %v4691 = vand.u32 %v4622, 4294901760
      %v4692 = vsub.f32 %v4622, %v4691
      %v4693 = vand.u32 %v4692, 4294901760
      %v4694 = vsub.f32 %v4692, %v4693
      %v4695 = vand.u32 %v4694, 4294901760
      %4696 = vmatmul.mubr.f32.gmra.mrb[0].mxu0 %v4695
      %v4697 = vpop.f32.mrb[0].mxu0
      %v4698 = vadd.f32 0.0, %v4697
      %v4699 = vpop.f32.mrb[0].mxu0
      %v4700 = vadd.f32 0.0, %v4699
      %4701 = vdwg.mxu0
      %v4702 = vand.u32 %v4599, 4294901760
      %v4703 = vsub.f32 %v4599, %v4702
      %v4704 = vand.u32 %v4703, 4294901760
      %v4705 = vsub.f32 %v4703, %v4704
      %v4706 = vand.u32 %v4705, 4294901760
      %4707 = vmatprep.subr.mxu0 %v4706
      %v4708 = vand.u32 %v4598, 4294901760
      %v4709 = vsub.f32 %v4598, %v4708
      %v4710 = vand.u32 %v4709, 4294901760
      %v4711 = vsub.f32 %v4709, %v4710
      %v4712 = vand.u32 %v4711, 4294901760
      %4713 = vmatpush1.msra.mxu0 %v4712
      %4714 = vmatprep.subr.mxu0 0.0
      %4715 = vmatpush1.msra.mxu0 0.0
      %4716 = vmatprep.subr.mxu0 0.0
      %4717 = vmatpush1.msra.mxu0 0.0
      %4718 = vmatprep.subr.mxu0 0.0
      %4719 = vmatpush1.msra.mxu0 0.0
      %4720 = vmatprep.subr.mxu0 0.0
      %4721 = vmatpush1.msra.mxu0 0.0
      %4722 = vmatprep.subr.mxu0 0.0
      %4723 = vmatpush1.msra.mxu0 0.0
      %4724 = vmatprep.subr.mxu0 0.0
      %4725 = vmatpush1.msra.mxu0 0.0
      %4726 = vmatprep.subr.mxu0 0.0
      %4727 = vmatpush1.msra.mxu0 0.0
      %4728 = vmatprep.subr.mxu0 0.0
      %4729 = vmatpush1.msra.mxu0 0.0
      %4730 = vmatprep.subr.mxu0 0.0
      %4731 = vmatpush1.msra.mxu0 0.0
      %4732 = vmatprep.subr.mxu0 0.0
      %4733 = vmatpush1.msra.mxu0 0.0
      %4734 = vmatprep.subr.mxu0 0.0
      %4735 = vmatpush1.msra.mxu0 0.0
      %4736 = vmatprep.subr.mxu0 0.0
      %4737 = vmatpush1.msra.mxu0 0.0
      %4738 = vmatprep.subr.mxu0 0.0
      %4739 = vmatpush1.msra.mxu0 0.0
      %4740 = vmatprep.subr.mxu0 0.0
      %4741 = vmatpush1.msra.mxu0 0.0
      %4742 = vmatprep.subr.mxu0 0.0
      %4743 = vmatpush1.msra.mxu0 0.0
      %4744 = vmatprep.subr.mxu0 0.0
      %4745 = vmatpush1.msra.mxu0 0.0
      %4746 = vmatprep.subr.mxu0 0.0
      %4747 = vmatpush1.msra.mxu0 0.0
      %4748 = vmatprep.subr.mxu0 0.0
      %4749 = vmatpush1.msra.mxu0 0.0
      %4750 = vmatprep.subr.mxu0 0.0
      %4751 = vmatpush1.msra.mxu0 0.0
      %4752 = vmatprep.subr.mxu0 0.0
      %4753 = vmatpush1.msra.mxu0 0.0
      %4754 = vmatprep.subr.mxu0 0.0
      %4755 = vmatpush1.msra.mxu0 0.0
      %4756 = vmatprep.subr.mxu0 0.0
      %4757 = vmatpush1.msra.mxu0 0.0
      %4758 = vmatprep.subr.mxu0 0.0
      %4759 = vmatpush1.msra.mxu0 0.0
      %4760 = vmatprep.subr.mxu0 0.0
      %4761 = vmatpush1.msra.mxu0 0.0
      %4762 = vmatprep.subr.mxu0 0.0
      %4763 = vmatpush1.msra.mxu0 0.0
      %4764 = vmatprep.subr.mxu0 0.0
      %4765 = vmatpush1.msra.mxu0 0.0
      %4766 = vmatprep.subr.mxu0 0.0
      %4767 = vmatpush1.msra.mxu0 0.0
      %4768 = vmatprep.subr.mxu0 0.0
      %4769 = vmatpush1.msra.mxu0 0.0
      %4770 = vmatprep.subr.mxu0 0.0
      %4771 = vmatpush1.msra.mxu0 0.0
      %4772 = vmatprep.subr.mxu0 0.0
      %4773 = vmatpush1.msra.mxu0 0.0
      %4774 = vmatprep.subr.mxu0 0.0
      %4775 = vmatpush1.msra.mxu0 0.0
      %4776 = vmatprep.mubr.f32.mxu0 0.0
      %v4777 = vand.u32 %v4622, 4294901760
      %4778 = vmatmul.mubr.f32.gmra.mrb[0].mxu0 %v4777
      %v4779 = vpop.f32.mrb[0].mxu0
      %v4780 = vadd.f32 %v4698, %v4779
      %v4781 = vpop.f32.mrb[0].mxu0
      %v4782 = vadd.f32 %v4700, %v4781
      %4783 = vdwg.mxu0
      %v4784 = vand.u32 %v4599, 4294901760
      %v4785 = vsub.f32 %v4599, %v4784
      %4786 = vmatprep.subr.mxu0 %v4785
      %v4787 = vand.u32 %v4598, 4294901760
      %v4788 = vsub.f32 %v4598, %v4787
      %4789 = vmatpush1.msra.mxu0 %v4788
      %4790 = vmatprep.subr.mxu0 0.0
      %4791 = vmatpush1.msra.mxu0 0.0
      %4792 = vmatprep.subr.mxu0 0.0
      %4793 = vmatpush1.msra.mxu0 0.0
      %4794 = vmatprep.subr.mxu0 0.0
      %4795 = vmatpush1.msra.mxu0 0.0
      %4796 = vmatprep.subr.mxu0 0.0
      %4797 = vmatpush1.msra.mxu0 0.0
      %4798 = vmatprep.subr.mxu0 0.0
      %4799 = vmatpush1.msra.mxu0 0.0
      %4800 = vmatprep.subr.mxu0 0.0
      %4801 = vmatpush1.msra.mxu0 0.0
      %4802 = vmatprep.subr.mxu0 0.0
      %4803 = vmatpush1.msra.mxu0 0.0
      %4804 = vmatprep.subr.mxu0 0.0
      %4805 = vmatpush1.msra.mxu0 0.0
      %4806 = vmatprep.subr.mxu0 0.0
      %4807 = vmatpush1.msra.mxu0 0.0
      %4808 = vmatprep.subr.mxu0 0.0
      %4809 = vmatpush1.msra.mxu0 0.0
      %4810 = vmatprep.subr.mxu0 0.0
      %4811 = vmatpush1.msra.mxu0 0.0
      %4812 = vmatprep.subr.mxu0 0.0
      %4813 = vmatpush1.msra.mxu0 0.0
      %4814 = vmatprep.subr.mxu0 0.0
      %4815 = vmatpush1.msra.mxu0 0.0
      %4816 = vmatprep.subr.mxu0 0.0
      %4817 = vmatpush1.msra.mxu0 0.0
      %4818 = vmatprep.subr.mxu0 0.0
      %4819 = vmatpush1.msra.mxu0 0.0
      %4820 = vmatprep.subr.mxu0 0.0
      %4821 = vmatpush1.msra.mxu0 0.0
      %4822 = vmatprep.subr.mxu0 0.0
      %4823 = vmatpush1.msra.mxu0 0.0
      %4824 = vmatprep.subr.mxu0 0.0
      %4825 = vmatpush1.msra.mxu0 0.0
      %4826 = vmatprep.subr.mxu0 0.0
      %4827 = vmatpush1.msra.mxu0 0.0
      %4828 = vmatprep.subr.mxu0 0.0
      %4829 = vmatpush1.msra.mxu0 0.0
      %4830 = vmatprep.subr.mxu0 0.0
      %4831 = vmatpush1.msra.mxu0 0.0
      %4832 = vmatprep.subr.mxu0 0.0
      %4833 = vmatpush1.msra.mxu0 0.0
      %4834 = vmatprep.subr.mxu0 0.0
      %4835 = vmatpush1.msra.mxu0 0.0
      %4836 = vmatprep.subr.mxu0 0.0
      %4837 = vmatpush1.msra.mxu0 0.0
      %4838 = vmatprep.subr.mxu0 0.0
      %4839 = vmatpush1.msra.mxu0 0.0
      %4840 = vmatprep.subr.mxu0 0.0
      %4841 = vmatpush1.msra.mxu0 0.0
      %4842 = vmatprep.subr.mxu0 0.0
      %4843 = vmatpush1.msra.mxu0 0.0
      %4844 = vmatprep.subr.mxu0 0.0
      %4845 = vmatpush1.msra.mxu0 0.0
      %4846 = vmatprep.subr.mxu0 0.0
      %4847 = vmatpush1.msra.mxu0 0.0
      %4848 = vmatprep.subr.mxu0 0.0
      %4849 = vmatpush1.msra.mxu0 0.0
      %4850 = vmatprep.subr.mxu0 0.0
      %4851 = vmatpush1.msra.mxu0 0.0
      %4852 = vmatprep.mubr.f32.mxu0 0.0
      %v4853 = vand.u32 %v4622, 4294901760
      %v4854 = vsub.f32 %v4622, %v4853
      %4855 = vmatmul.mubr.f32.gmra.mrb[0].mxu0 %v4854
      %v4856 = vpop.f32.mrb[0].mxu0
      %v4857 = vadd.f32 %v4780, %v4856
      %v4858 = vpop.f32.mrb[0].mxu0
      %v4859 = vadd.f32 %v4782, %v4858
      %4860 = vdwg.mxu0
      %v4861 = vand.u32 %v4599, 4294901760
      %4862 = vmatprep.subr.mxu0 %v4861
      %v4863 = vand.u32 %v4598, 4294901760
      %4864 = vmatpush1.msra.mxu0 %v4863
      %4865 = vmatprep.subr.mxu0 0.0
      %4866 = vmatpush1.msra.mxu0 0.0
      %4867 = vmatprep.subr.mxu0 0.0
      %4868 = vmatpush1.msra.mxu0 0.0
      %4869 = vmatprep.subr.mxu0 0.0
      %4870 = vmatpush1.msra.mxu0 0.0
      %4871 = vmatprep.subr.mxu0 0.0
      %4872 = vmatpush1.msra.mxu0 0.0
      %4873 = vmatprep.subr.mxu0 0.0
      %4874 = vmatpush1.msra.mxu0 0.0
      %4875 = vmatprep.subr.mxu0 0.0
      %4876 = vmatpush1.msra.mxu0 0.0
      %4877 = vmatprep.subr.mxu0 0.0
      %4878 = vmatpush1.msra.mxu0 0.0
      %4879 = vmatprep.subr.mxu0 0.0
      %4880 = vmatpush1.msra.mxu0 0.0
      %4881 = vmatprep.subr.mxu0 0.0
      %4882 = vmatpush1.msra.mxu0 0.0
      %4883 = vmatprep.subr.mxu0 0.0
      %4884 = vmatpush1.msra.mxu0 0.0
      %4885 = vmatprep.subr.mxu0 0.0
      %4886 = vmatpush1.msra.mxu0 0.0
      %4887 = vmatprep.subr.mxu0 0.0
      %4888 = vmatpush1.msra.mxu0 0.0
      %4889 = vmatprep.subr.mxu0 0.0
      %4890 = vmatpush1.msra.mxu0 0.0
      %4891 = vmatprep.subr.mxu0 0.0
      %4892 = vmatpush1.msra.mxu0 0.0
      %4893 = vmatprep.subr.mxu0 0.0
      %4894 = vmatpush1.msra.mxu0 0.0
      %4895 = vmatprep.subr.mxu0 0.0
      %4896 = vmatpush1.msra.mxu0 0.0
      %4897 = vmatprep.subr.mxu0 0.0
      %4898 = vmatpush1.msra.mxu0 0.0
      %4899 = vmatprep.subr.mxu0 0.0
      %4900 = vmatpush1.msra.mxu0 0.0
      %4901 = vmatprep.subr.mxu0 0.0
      %4902 = vmatpush1.msra.mxu0 0.0
      %4903 = vmatprep.subr.mxu0 0.0
      %4904 = vmatpush1.msra.mxu0 0.0
      %4905 = vmatprep.subr.mxu0 0.0
      %4906 = vmatpush1.msra.mxu0 0.0
      %4907 = vmatprep.subr.mxu0 0.0
      %4908 = vmatpush1.msra.mxu0 0.0
      %4909 = vmatprep.subr.mxu0 0.0
      %4910 = vmatpush1.msra.mxu0 0.0
      %4911 = vmatprep.subr.mxu0 0.0
      %4912 = vmatpush1.msra.mxu0 0.0
      %4913 = vmatprep.subr.mxu0 0.0
      %4914 = vmatpush1.msra.mxu0 0.0
      %4915 = vmatprep.subr.mxu0 0.0
      %4916 = vmatpush1.msra.mxu0 0.0
      %4917 = vmatprep.subr.mxu0 0.0
      %4918 = vmatpush1.msra.mxu0 0.0
      %4919 = vmatprep.subr.mxu0 0.0
      %4920 = vmatpush1.msra.mxu0 0.0
      %4921 = vmatprep.subr.mxu0 0.0
      %4922 = vmatpush1.msra.mxu0 0.0
      %4923 = vmatprep.subr.mxu0 0.0
      %4924 = vmatpush1.msra.mxu0 0.0
      %4925 = vmatprep.subr.mxu0 0.0
      %4926 = vmatpush1.msra.mxu0 0.0
      %4927 = vmatprep.mubr.f32.mxu0 0.0
      %v4928 = vand.u32 %v4622, 4294901760
      %v4929 = vsub.f32 %v4622, %v4928
      %v4930 = vand.u32 %v4929, 4294901760
      %4931 = vmatmul.mubr.f32.gmra.mrb[0].mxu0 %v4930
      %v4932 = vpop.f32.mrb[0].mxu0
      %v4933 = vadd.f32 %v4857, %v4932
      %v4934 = vpop.f32.mrb[0].mxu0
      %v4935 = vadd.f32 %v4859, %v4934
      %4936 = vdwg.mxu0
      %v4937 = vand.u32 %v4599, 4294901760
      %v4938 = vsub.f32 %v4599, %v4937
      %v4939 = vand.u32 %v4938, 4294901760
      %4940 = vmatprep.subr.mxu0 %v4939
      %v4941 = vand.u32 %v4598, 4294901760
      %v4942 = vsub.f32 %v4598, %v4941
      %v4943 = vand.u32 %v4942, 4294901760
      %4944 = vmatpush1.msra.mxu0 %v4943
      %4945 = vmatprep.subr.mxu0 0.0
      %4946 = vmatpush1.msra.mxu0 0.0
      %4947 = vmatprep.subr.mxu0 0.0
      %4948 = vmatpush1.msra.mxu0 0.0
      %4949 = vmatprep.subr.mxu0 0.0
      %4950 = vmatpush1.msra.mxu0 0.0
      %4951 = vmatprep.subr.mxu0 0.0
      %4952 = vmatpush1.msra.mxu0 0.0
      %4953 = vmatprep.subr.mxu0 0.0
      %4954 = vmatpush1.msra.mxu0 0.0
      %4955 = vmatprep.subr.mxu0 0.0
      %4956 = vmatpush1.msra.mxu0 0.0
      %4957 = vmatprep.subr.mxu0 0.0
      %4958 = vmatpush1.msra.mxu0 0.0
      %4959 = vmatprep.subr.mxu0 0.0
      %4960 = vmatpush1.msra.mxu0 0.0
      %4961 = vmatprep.subr.mxu0 0.0
      %4962 = vmatpush1.msra.mxu0 0.0
      %4963 = vmatprep.subr.mxu0 0.0
      %4964 = vmatpush1.msra.mxu0 0.0
      %4965 = vmatprep.subr.mxu0 0.0
      %4966 = vmatpush1.msra.mxu0 0.0
      %4967 = vmatprep.subr.mxu0 0.0
      %4968 = vmatpush1.msra.mxu0 0.0
      %4969 = vmatprep.subr.mxu0 0.0
      %4970 = vmatpush1.msra.mxu0 0.0
      %4971 = vmatprep.subr.mxu0 0.0
      %4972 = vmatpush1.msra.mxu0 0.0
      %4973 = vmatprep.subr.mxu0 0.0
      %4974 = vmatpush1.msra.mxu0 0.0
      %4975 = vmatprep.subr.mxu0 0.0
      %4976 = vmatpush1.msra.mxu0 0.0
      %4977 = vmatprep.subr.mxu0 0.0
      %4978 = vmatpush1.msra.mxu0 0.0
      %4979 = vmatprep.subr.mxu0 0.0
      %4980 = vmatpush1.msra.mxu0 0.0
      %4981 = vmatprep.subr.mxu0 0.0
      %4982 = vmatpush1.msra.mxu0 0.0
      %4983 = vmatprep.subr.mxu0 0.0
      %4984 = vmatpush1.msra.mxu0 0.0
      %4985 = vmatprep.subr.mxu0 0.0
      %4986 = vmatpush1.msra.mxu0 0.0
      %4987 = vmatprep.subr.mxu0 0.0
      %4988 = vmatpush1.msra.mxu0 0.0
      %4989 = vmatprep.subr.mxu0 0.0
      %4990 = vmatpush1.msra.mxu0 0.0
      %4991 = vmatprep.subr.mxu0 0.0
      %4992 = vmatpush1.msra.mxu0 0.0
      %4993 = vmatprep.subr.mxu0 0.0
      %4994 = vmatpush1.msra.mxu0 0.0
      %4995 = vmatprep.subr.mxu0 0.0
      %4996 = vmatpush1.msra.mxu0 0.0
      %4997 = vmatprep.subr.mxu0 0.0
      %4998 = vmatpush1.msra.mxu0 0.0
      %4999 = vmatprep.subr.mxu0 0.0
      %5000 = vmatpush1.msra.mxu0 0.0
      %5001 = vmatprep.subr.mxu0 0.0
      %5002 = vmatpush1.msra.mxu0 0.0
      %5003 = vmatprep.subr.mxu0 0.0
      %5004 = vmatpush1.msra.mxu0 0.0
      %5005 = vmatprep.subr.mxu0 0.0
      %5006 = vmatpush1.msra.mxu0 0.0
      %5007 = vmatprep.mubr.f32.mxu0 0.0
      %v5008 = vand.u32 %v4622, 4294901760
      %5009 = vmatmul.mubr.f32.gmra.mrb[0].mxu0 %v5008
      %v5010 = vpop.f32.mrb[0].mxu0
      %v5011 = vadd.f32 %v4933, %v5010
      %v5012 = vpop.f32.mrb[0].mxu0
      %v5013 = vadd.f32 %v4935, %v5012
      %5014 = vdwg.mxu0
      %v5015 = vand.u32 %v4599, 4294901760
      %5016 = vmatprep.subr.mxu0 %v5015
      %v5017 = vand.u32 %v4598, 4294901760
      %5018 = vmatpush1.msra.mxu0 %v5017
      %5019 = vmatprep.subr.mxu0 0.0
      %5020 = vmatpush1.msra.mxu0 0.0
      %5021 = vmatprep.subr.mxu0 0.0
      %5022 = vmatpush1.msra.mxu0 0.0
      %5023 = vmatprep.subr.mxu0 0.0
      %5024 = vmatpush1.msra.mxu0 0.0
      %5025 = vmatprep.subr.mxu0 0.0
      %5026 = vmatpush1.msra.mxu0 0.0
      %5027 = vmatprep.subr.mxu0 0.0
      %5028 = vmatpush1.msra.mxu0 0.0
      %5029 = vmatprep.subr.mxu0 0.0
      %5030 = vmatpush1.msra.mxu0 0.0
      %5031 = vmatprep.subr.mxu0 0.0
      %5032 = vmatpush1.msra.mxu0 0.0
      %5033 = vmatprep.subr.mxu0 0.0
      %5034 = vmatpush1.msra.mxu0 0.0
      %5035 = vmatprep.subr.mxu0 0.0
      %5036 = vmatpush1.msra.mxu0 0.0
      %5037 = vmatprep.subr.mxu0 0.0
      %5038 = vmatpush1.msra.mxu0 0.0
      %5039 = vmatprep.subr.mxu0 0.0
      %5040 = vmatpush1.msra.mxu0 0.0
      %5041 = vmatprep.subr.mxu0 0.0
      %5042 = vmatpush1.msra.mxu0 0.0
      %5043 = vmatprep.subr.mxu0 0.0
      %5044 = vmatpush1.msra.mxu0 0.0
      %5045 = vmatprep.subr.mxu0 0.0
      %5046 = vmatpush1.msra.mxu0 0.0
      %5047 = vmatprep.subr.mxu0 0.0
      %5048 = vmatpush1.msra.mxu0 0.0
      %5049 = vmatprep.subr.mxu0 0.0
      %5050 = vmatpush1.msra.mxu0 0.0
      %5051 = vmatprep.subr.mxu0 0.0
      %5052 = vmatpush1.msra.mxu0 0.0
      %5053 = vmatprep.subr.mxu0 0.0
      %5054 = vmatpush1.msra.mxu0 0.0
      %5055 = vmatprep.subr.mxu0 0.0
      %5056 = vmatpush1.msra.mxu0 0.0
      %5057 = vmatprep.subr.mxu0 0.0
      %5058 = vmatpush1.msra.mxu0 0.0
      %5059 = vmatprep.subr.mxu0 0.0
      %5060 = vmatpush1.msra.mxu0 0.0
      %5061 = vmatprep.subr.mxu0 0.0
      %5062 = vmatpush1.msra.mxu0 0.0
      %5063 = vmatprep.subr.mxu0 0.0
      %5064 = vmatpush1.msra.mxu0 0.0
      %5065 = vmatprep.subr.mxu0 0.0
      %5066 = vmatpush1.msra.mxu0 0.0
      %5067 = vmatprep.subr.mxu0 0.0
      %5068 = vmatpush1.msra.mxu0 0.0
      %5069 = vmatprep.subr.mxu0 0.0
      %5070 = vmatpush1.msra.mxu0 0.0
      %5071 = vmatprep.subr.mxu0 0.0
      %5072 = vmatpush1.msra.mxu0 0.0
      %5073 = vmatprep.subr.mxu0 0.0
      %5074 = vmatpush1.msra.mxu0 0.0
      %5075 = vmatprep.subr.mxu0 0.0
      %5076 = vmatpush1.msra.mxu0 0.0
      %5077 = vmatprep.subr.mxu0 0.0
      %5078 = vmatpush1.msra.mxu0 0.0
      %5079 = vmatprep.subr.mxu0 0.0
      %5080 = vmatpush1.msra.mxu0 0.0
      %5081 = vmatprep.mubr.f32.mxu0 0.0
      %v5082 = vand.u32 %v4622, 4294901760
      %5083 = vmatmul.mubr.f32.gmra.mrb[0].mxu0 %v5082
      %v5084 = vpop.f32.mrb[0].mxu0
      %v5085 = vadd.f32 %v5011, %v5084
      %v5086 = vpop.f32.mrb[0].mxu0
      %v5087 = vadd.f32 %v5013, %v5086
      %5088 = vdwg.mxu0
      %v5090 = vsel %vm292, %v4618, 0
      %v5092 = vand.u32 %v4615, 4294901760
      %5093 = vmatprep.subr.mxu0 %v5092
      %v5094 = vand.u32 %v4614, 4294901760
      %5095 = vmatpush1.msra.mxu0 %v5094
      %5096 = vmatprep.subr.mxu0 0.0
      %5097 = vmatpush1.msra.mxu0 0.0
      %5098 = vmatprep.subr.mxu0 0.0
      %5099 = vmatpush1.msra.mxu0 0.0
      %5100 = vmatprep.subr.mxu0 0.0
      %5101 = vmatpush1.msra.mxu0 0.0
      %5102 = vmatprep.subr.mxu0 0.0
      %5103 = vmatpush1.msra.mxu0 0.0
      %5104 = vmatprep.subr.mxu0 0.0
      %5105 = vmatpush1.msra.mxu0 0.0
      %5106 = vmatprep.subr.mxu0 0.0
      %5107 = vmatpush1.msra.mxu0 0.0
      %5108 = vmatprep.subr.mxu0 0.0
      %5109 = vmatpush1.msra.mxu0 0.0
      %5110 = vmatprep.subr.mxu0 0.0
      %5111 = vmatpush1.msra.mxu0 0.0
      %5112 = vmatprep.subr.mxu0 0.0
      %5113 = vmatpush1.msra.mxu0 0.0
      %5114 = vmatprep.subr.mxu0 0.0
      %5115 = vmatpush1.msra.mxu0 0.0
      %5116 = vmatprep.subr.mxu0 0.0
      %5117 = vmatpush1.msra.mxu0 0.0
      %5118 = vmatprep.subr.mxu0 0.0
      %5119 = vmatpush1.msra.mxu0 0.0
      %5120 = vmatprep.subr.mxu0 0.0
      %5121 = vmatpush1.msra.mxu0 0.0
      %5122 = vmatprep.subr.mxu0 0.0
      %5123 = vmatpush1.msra.mxu0 0.0
      %5124 = vmatprep.subr.mxu0 0.0
      %5125 = vmatpush1.msra.mxu0 0.0
      %5126 = vmatprep.subr.mxu0 0.0
      %5127 = vmatpush1.msra.mxu0 0.0
      %5128 = vmatprep.subr.mxu0 0.0
      %5129 = vmatpush1.msra.mxu0 0.0
      %5130 = vmatprep.subr.mxu0 0.0
      %5131 = vmatpush1.msra.mxu0 0.0
      %5132 = vmatprep.subr.mxu0 0.0
      %5133 = vmatpush1.msra.mxu0 0.0
      %5134 = vmatprep.subr.mxu0 0.0
      %5135 = vmatpush1.msra.mxu0 0.0
      %5136 = vmatprep.subr.mxu0 0.0
      %5137 = vmatpush1.msra.mxu0 0.0
      %5138 = vmatprep.subr.mxu0 0.0
      %5139 = vmatpush1.msra.mxu0 0.0
      %5140 = vmatprep.subr.mxu0 0.0
      %5141 = vmatpush1.msra.mxu0 0.0
      %5142 = vmatprep.subr.mxu0 0.0
      %5143 = vmatpush1.msra.mxu0 0.0
      %5144 = vmatprep.subr.mxu0 0.0
      %5145 = vmatpush1.msra.mxu0 0.0
      %5146 = vmatprep.subr.mxu0 0.0
      %5147 = vmatpush1.msra.mxu0 0.0
      %5148 = vmatprep.subr.mxu0 0.0
      %5149 = vmatpush1.msra.mxu0 0.0
      %5150 = vmatprep.subr.mxu0 0.0
      %5151 = vmatpush1.msra.mxu0 0.0
      %5152 = vmatprep.subr.mxu0 0.0
      %5153 = vmatpush1.msra.mxu0 0.0
      %5154 = vmatprep.subr.mxu0 0.0
      %5155 = vmatpush1.msra.mxu0 0.0
      %5156 = vmatprep.subr.mxu0 0.0
      %5157 = vmatpush1.msra.mxu0 0.0
      %5158 = vmatprep.mubr.f32.mxu0 0.0
      %v5159 = vand.u32 %v5090, 4294901760
      %v5160 = vsub.f32 %v5090, %v5159
      %v5161 = vand.u32 %v5160, 4294901760
      %v5162 = vsub.f32 %v5160, %v5161
      %v5163 = vand.u32 %v5162, 4294901760
      %5164 = vmatmul.mubr.f32.gmra.mrb[0].mxu0 %v5163
      %v5165 = vpop.f32.mrb[0].mxu0
      %v5166 = vadd.f32 %v5085, %v5165
      %v5167 = vpop.f32.mrb[0].mxu0
      %v5168 = vadd.f32 %v5087, %v5167
      %5169 = vdwg.mxu0
      %v5170 = vand.u32 %v4615, 4294901760
      %v5171 = vsub.f32 %v4615, %v5170
      %v5172 = vand.u32 %v5171, 4294901760
      %v5173 = vsub.f32 %v5171, %v5172
      %v5174 = vand.u32 %v5173, 4294901760
      %5175 = vmatprep.subr.mxu0 %v5174
      %v5176 = vand.u32 %v4614, 4294901760
      %v5177 = vsub.f32 %v4614, %v5176
      %v5178 = vand.u32 %v5177, 4294901760
      %v5179 = vsub.f32 %v5177, %v5178
      %v5180 = vand.u32 %v5179, 4294901760
      %5181 = vmatpush1.msra.mxu0 %v5180
      %5182 = vmatprep.subr.mxu0 0.0
      %5183 = vmatpush1.msra.mxu0 0.0
      %5184 = vmatprep.subr.mxu0 0.0
      %5185 = vmatpush1.msra.mxu0 0.0
      %5186 = vmatprep.subr.mxu0 0.0
      %5187 = vmatpush1.msra.mxu0 0.0
      %5188 = vmatprep.subr.mxu0 0.0
      %5189 = vmatpush1.msra.mxu0 0.0
      %5190 = vmatprep.subr.mxu0 0.0
      %5191 = vmatpush1.msra.mxu0 0.0
      %5192 = vmatprep.subr.mxu0 0.0
      %5193 = vmatpush1.msra.mxu0 0.0
      %5194 = vmatprep.subr.mxu0 0.0
      %5195 = vmatpush1.msra.mxu0 0.0
      %5196 = vmatprep.subr.mxu0 0.0
      %5197 = vmatpush1.msra.mxu0 0.0
      %5198 = vmatprep.subr.mxu0 0.0
      %5199 = vmatpush1.msra.mxu0 0.0
      %5200 = vmatprep.subr.mxu0 0.0
      %5201 = vmatpush1.msra.mxu0 0.0
      %5202 = vmatprep.subr.mxu0 0.0
      %5203 = vmatpush1.msra.mxu0 0.0
      %5204 = vmatprep.subr.mxu0 0.0
      %5205 = vmatpush1.msra.mxu0 0.0
      %5206 = vmatprep.subr.mxu0 0.0
      %5207 = vmatpush1.msra.mxu0 0.0
      %5208 = vmatprep.subr.mxu0 0.0
      %5209 = vmatpush1.msra.mxu0 0.0
      %5210 = vmatprep.subr.mxu0 0.0
      %5211 = vmatpush1.msra.mxu0 0.0
      %5212 = vmatprep.subr.mxu0 0.0
      %5213 = vmatpush1.msra.mxu0 0.0
      %5214 = vmatprep.subr.mxu0 0.0
      %5215 = vmatpush1.msra.mxu0 0.0
      %5216 = vmatprep.subr.mxu0 0.0
      %5217 = vmatpush1.msra.mxu0 0.0
      %5218 = vmatprep.subr.mxu0 0.0
      %5219 = vmatpush1.msra.mxu0 0.0
      %5220 = vmatprep.subr.mxu0 0.0
      %5221 = vmatpush1.msra.mxu0 0.0
      %5222 = vmatprep.subr.mxu0 0.0
      %5223 = vmatpush1.msra.mxu0 0.0
      %5224 = vmatprep.subr.mxu0 0.0
      %5225 = vmatpush1.msra.mxu0 0.0
      %5226 = vmatprep.subr.mxu0 0.0
      %5227 = vmatpush1.msra.mxu0 0.0
      %5228 = vmatprep.subr.mxu0 0.0
      %5229 = vmatpush1.msra.mxu0 0.0
      %5230 = vmatprep.subr.mxu0 0.0
      %5231 = vmatpush1.msra.mxu0 0.0
      %5232 = vmatprep.subr.mxu0 0.0
      %5233 = vmatpush1.msra.mxu0 0.0
      %5234 = vmatprep.subr.mxu0 0.0
      %5235 = vmatpush1.msra.mxu0 0.0
      %5236 = vmatprep.subr.mxu0 0.0
      %5237 = vmatpush1.msra.mxu0 0.0
      %5238 = vmatprep.subr.mxu0 0.0
      %5239 = vmatpush1.msra.mxu0 0.0
      %5240 = vmatprep.subr.mxu0 0.0
      %5241 = vmatpush1.msra.mxu0 0.0
      %5242 = vmatprep.subr.mxu0 0.0
      %5243 = vmatpush1.msra.mxu0 0.0
      %5244 = vmatprep.mubr.f32.mxu0 0.0
      %v5245 = vand.u32 %v5090, 4294901760
      %5246 = vmatmul.mubr.f32.gmra.mrb[0].mxu0 %v5245
      %v5247 = vpop.f32.mrb[0].mxu0
      %v5248 = vadd.f32 %v5166, %v5247
      %v5249 = vpop.f32.mrb[0].mxu0
      %v5250 = vadd.f32 %v5168, %v5249
      %5251 = vdwg.mxu0
      %v5252 = vand.u32 %v4615, 4294901760
      %v5253 = vsub.f32 %v4615, %v5252
      %5254 = vmatprep.subr.mxu0 %v5253
      %v5255 = vand.u32 %v4614, 4294901760
      %v5256 = vsub.f32 %v4614, %v5255
      %5257 = vmatpush1.msra.mxu0 %v5256
      %5258 = vmatprep.subr.mxu0 0.0
      %5259 = vmatpush1.msra.mxu0 0.0
      %5260 = vmatprep.subr.mxu0 0.0
      %5261 = vmatpush1.msra.mxu0 0.0
      %5262 = vmatprep.subr.mxu0 0.0
      %5263 = vmatpush1.msra.mxu0 0.0
      %5264 = vmatprep.subr.mxu0 0.0
      %5265 = vmatpush1.msra.mxu0 0.0
      %5266 = vmatprep.subr.mxu0 0.0
      %5267 = vmatpush1.msra.mxu0 0.0
      %5268 = vmatprep.subr.mxu0 0.0
      %5269 = vmatpush1.msra.mxu0 0.0
      %5270 = vmatprep.subr.mxu0 0.0
      %5271 = vmatpush1.msra.mxu0 0.0
      %5272 = vmatprep.subr.mxu0 0.0
      %5273 = vmatpush1.msra.mxu0 0.0
      %5274 = vmatprep.subr.mxu0 0.0
      %5275 = vmatpush1.msra.mxu0 0.0
      %5276 = vmatprep.subr.mxu0 0.0
      %5277 = vmatpush1.msra.mxu0 0.0
      %5278 = vmatprep.subr.mxu0 0.0
      %5279 = vmatpush1.msra.mxu0 0.0
      %5280 = vmatprep.subr.mxu0 0.0
      %5281 = vmatpush1.msra.mxu0 0.0
      %5282 = vmatprep.subr.mxu0 0.0
      %5283 = vmatpush1.msra.mxu0 0.0
      %5284 = vmatprep.subr.mxu0 0.0
      %5285 = vmatpush1.msra.mxu0 0.0
      %5286 = vmatprep.subr.mxu0 0.0
      %5287 = vmatpush1.msra.mxu0 0.0
      %5288 = vmatprep.subr.mxu0 0.0
      %5289 = vmatpush1.msra.mxu0 0.0
      %5290 = vmatprep.subr.mxu0 0.0
      %5291 = vmatpush1.msra.mxu0 0.0
      %5292 = vmatprep.subr.mxu0 0.0
      %5293 = vmatpush1.msra.mxu0 0.0
      %5294 = vmatprep.subr.mxu0 0.0
      %5295 = vmatpush1.msra.mxu0 0.0
      %5296 = vmatprep.subr.mxu0 0.0
      %5297 = vmatpush1.msra.mxu0 0.0
      %5298 = vmatprep.subr.mxu0 0.0
      %5299 = vmatpush1.msra.mxu0 0.0
      %5300 = vmatprep.subr.mxu0 0.0
      %5301 = vmatpush1.msra.mxu0 0.0
      %5302 = vmatprep.subr.mxu0 0.0
      %5303 = vmatpush1.msra.mxu0 0.0
      %5304 = vmatprep.subr.mxu0 0.0
      %5305 = vmatpush1.msra.mxu0 0.0
      %5306 = vmatprep.subr.mxu0 0.0
      %5307 = vmatpush1.msra.mxu0 0.0
      %5308 = vmatprep.subr.mxu0 0.0
      %5309 = vmatpush1.msra.mxu0 0.0
      %5310 = vmatprep.subr.mxu0 0.0
      %5311 = vmatpush1.msra.mxu0 0.0
      %5312 = vmatprep.subr.mxu0 0.0
      %5313 = vmatpush1.msra.mxu0 0.0
      %5314 = vmatprep.subr.mxu0 0.0
      %5315 = vmatpush1.msra.mxu0 0.0
      %5316 = vmatprep.subr.mxu0 0.0
      %5317 = vmatpush1.msra.mxu0 0.0
      %5318 = vmatprep.subr.mxu0 0.0
      %5319 = vmatpush1.msra.mxu0 0.0
      %5320 = vmatprep.mubr.f32.mxu0 0.0
      %v5321 = vand.u32 %v5090, 4294901760
      %v5322 = vsub.f32 %v5090, %v5321
      %5323 = vmatmul.mubr.f32.gmra.mrb[0].mxu0 %v5322
      %v5324 = vpop.f32.mrb[0].mxu0
      %v5325 = vadd.f32 %v5248, %v5324
      %v5326 = vpop.f32.mrb[0].mxu0
      %v5327 = vadd.f32 %v5250, %v5326
      %5328 = vdwg.mxu0
      %v5329 = vand.u32 %v4615, 4294901760
      %5330 = vmatprep.subr.mxu0 %v5329
      %v5331 = vand.u32 %v4614, 4294901760
      %5332 = vmatpush1.msra.mxu0 %v5331
      %5333 = vmatprep.subr.mxu0 0.0
      %5334 = vmatpush1.msra.mxu0 0.0
      %5335 = vmatprep.subr.mxu0 0.0
      %5336 = vmatpush1.msra.mxu0 0.0
      %5337 = vmatprep.subr.mxu0 0.0
      %5338 = vmatpush1.msra.mxu0 0.0
      %5339 = vmatprep.subr.mxu0 0.0
      %5340 = vmatpush1.msra.mxu0 0.0
      %5341 = vmatprep.subr.mxu0 0.0
      %5342 = vmatpush1.msra.mxu0 0.0
      %5343 = vmatprep.subr.mxu0 0.0
      %5344 = vmatpush1.msra.mxu0 0.0
      %5345 = vmatprep.subr.mxu0 0.0
      %5346 = vmatpush1.msra.mxu0 0.0
      %5347 = vmatprep.subr.mxu0 0.0
      %5348 = vmatpush1.msra.mxu0 0.0
      %5349 = vmatprep.subr.mxu0 0.0
      %5350 = vmatpush1.msra.mxu0 0.0
      %5351 = vmatprep.subr.mxu0 0.0
      %5352 = vmatpush1.msra.mxu0 0.0
      %5353 = vmatprep.subr.mxu0 0.0
      %5354 = vmatpush1.msra.mxu0 0.0
      %5355 = vmatprep.subr.mxu0 0.0
      %5356 = vmatpush1.msra.mxu0 0.0
      %5357 = vmatprep.subr.mxu0 0.0
      %5358 = vmatpush1.msra.mxu0 0.0
      %5359 = vmatprep.subr.mxu0 0.0
      %5360 = vmatpush1.msra.mxu0 0.0
      %5361 = vmatprep.subr.mxu0 0.0
      %5362 = vmatpush1.msra.mxu0 0.0
      %5363 = vmatprep.subr.mxu0 0.0
      %5364 = vmatpush1.msra.mxu0 0.0
      %5365 = vmatprep.subr.mxu0 0.0
      %5366 = vmatpush1.msra.mxu0 0.0
      %5367 = vmatprep.subr.mxu0 0.0
      %5368 = vmatpush1.msra.mxu0 0.0
      %5369 = vmatprep.subr.mxu0 0.0
      %5370 = vmatpush1.msra.mxu0 0.0
      %5371 = vmatprep.subr.mxu0 0.0
      %5372 = vmatpush1.msra.mxu0 0.0
      %5373 = vmatprep.subr.mxu0 0.0
      %5374 = vmatpush1.msra.mxu0 0.0
      %5375 = vmatprep.subr.mxu0 0.0
      %5376 = vmatpush1.msra.mxu0 0.0
      %5377 = vmatprep.subr.mxu0 0.0
      %5378 = vmatpush1.msra.mxu0 0.0
      %5379 = vmatprep.subr.mxu0 0.0
      %5380 = vmatpush1.msra.mxu0 0.0
      %5381 = vmatprep.subr.mxu0 0.0
      %5382 = vmatpush1.msra.mxu0 0.0
      %5383 = vmatprep.subr.mxu0 0.0
      %5384 = vmatpush1.msra.mxu0 0.0
      %5385 = vmatprep.subr.mxu0 0.0
      %5386 = vmatpush1.msra.mxu0 0.0
      %5387 = vmatprep.subr.mxu0 0.0
      %5388 = vmatpush1.msra.mxu0 0.0
      %5389 = vmatprep.subr.mxu0 0.0
      %5390 = vmatpush1.msra.mxu0 0.0
      %5391 = vmatprep.subr.mxu0 0.0
      %5392 = vmatpush1.msra.mxu0 0.0
      %5393 = vmatprep.subr.mxu0 0.0
      %5394 = vmatpush1.msra.mxu0 0.0
      %5395 = vmatprep.mubr.f32.mxu0 0.0
      %v5396 = vand.u32 %v5090, 4294901760
      %v5397 = vsub.f32 %v5090, %v5396
      %v5398 = vand.u32 %v5397, 4294901760
      %5399 = vmatmul.mubr.f32.gmra.mrb[0].mxu0 %v5398
      %v5400 = vpop.f32.mrb[0].mxu0
      %v5401 = vadd.f32 %v5325, %v5400
      %v5402 = vpop.f32.mrb[0].mxu0
      %v5403 = vadd.f32 %v5327, %v5402
      %5404 = vdwg.mxu0
      %v5405 = vand.u32 %v4615, 4294901760
      %v5406 = vsub.f32 %v4615, %v5405
      %v5407 = vand.u32 %v5406, 4294901760
      %5408 = vmatprep.subr.mxu0 %v5407
      %v5409 = vand.u32 %v4614, 4294901760
      %v5410 = vsub.f32 %v4614, %v5409
      %v5411 = vand.u32 %v5410, 4294901760
      %5412 = vmatpush1.msra.mxu0 %v5411
      %5413 = vmatprep.subr.mxu0 0.0
      %5414 = vmatpush1.msra.mxu0 0.0
      %5415 = vmatprep.subr.mxu0 0.0
      %5416 = vmatpush1.msra.mxu0 0.0
      %5417 = vmatprep.subr.mxu0 0.0
      %5418 = vmatpush1.msra.mxu0 0.0
      %5419 = vmatprep.subr.mxu0 0.0
      %5420 = vmatpush1.msra.mxu0 0.0
      %5421 = vmatprep.subr.mxu0 0.0
      %5422 = vmatpush1.msra.mxu0 0.0
      %5423 = vmatprep.subr.mxu0 0.0
      %5424 = vmatpush1.msra.mxu0 0.0
      %5425 = vmatprep.subr.mxu0 0.0
      %5426 = vmatpush1.msra.mxu0 0.0
      %5427 = vmatprep.subr.mxu0 0.0
      %5428 = vmatpush1.msra.mxu0 0.0
      %5429 = vmatprep.subr.mxu0 0.0
      %5430 = vmatpush1.msra.mxu0 0.0
      %5431 = vmatprep.subr.mxu0 0.0
      %5432 = vmatpush1.msra.mxu0 0.0
      %5433 = vmatprep.subr.mxu0 0.0
      %5434 = vmatpush1.msra.mxu0 0.0
      %5435 = vmatprep.subr.mxu0 0.0
      %5436 = vmatpush1.msra.mxu0 0.0
      %5437 = vmatprep.subr.mxu0 0.0
      %5438 = vmatpush1.msra.mxu0 0.0
      %5439 = vmatprep.subr.mxu0 0.0
      %5440 = vmatpush1.msra.mxu0 0.0
      %5441 = vmatprep.subr.mxu0 0.0
      %5442 = vmatpush1.msra.mxu0 0.0
      %5443 = vmatprep.subr.mxu0 0.0
      %5444 = vmatpush1.msra.mxu0 0.0
      %5445 = vmatprep.subr.mxu0 0.0
      %5446 = vmatpush1.msra.mxu0 0.0
      %5447 = vmatprep.subr.mxu0 0.0
      %5448 = vmatpush1.msra.mxu0 0.0
      %5449 = vmatprep.subr.mxu0 0.0
      %5450 = vmatpush1.msra.mxu0 0.0
      %5451 = vmatprep.subr.mxu0 0.0
      %5452 = vmatpush1.msra.mxu0 0.0
      %5453 = vmatprep.subr.mxu0 0.0
      %5454 = vmatpush1.msra.mxu0 0.0
      %5455 = vmatprep.subr.mxu0 0.0
      %5456 = vmatpush1.msra.mxu0 0.0
      %5457 = vmatprep.subr.mxu0 0.0
      %5458 = vmatpush1.msra.mxu0 0.0
      %5459 = vmatprep.subr.mxu0 0.0
      %5460 = vmatpush1.msra.mxu0 0.0
      %5461 = vmatprep.subr.mxu0 0.0
      %5462 = vmatpush1.msra.mxu0 0.0
      %5463 = vmatprep.subr.mxu0 0.0
      %5464 = vmatpush1.msra.mxu0 0.0
      %5465 = vmatprep.subr.mxu0 0.0
      %5466 = vmatpush1.msra.mxu0 0.0
      %5467 = vmatprep.subr.mxu0 0.0
      %5468 = vmatpush1.msra.mxu0 0.0
      %5469 = vmatprep.subr.mxu0 0.0
      %5470 = vmatpush1.msra.mxu0 0.0
      %5471 = vmatprep.subr.mxu0 0.0
      %5472 = vmatpush1.msra.mxu0 0.0
      %5473 = vmatprep.subr.mxu0 0.0
      %5474 = vmatpush1.msra.mxu0 0.0
      %5475 = vmatprep.mubr.f32.mxu0 0.0
      %v5476 = vand.u32 %v5090, 4294901760
      %5477 = vmatmul.mubr.f32.gmra.mrb[0].mxu0 %v5476
      %v5478 = vpop.f32.mrb[0].mxu0
      %v5479 = vadd.f32 %v5401, %v5478
      %v5480 = vpop.f32.mrb[0].mxu0
      %v5481 = vadd.f32 %v5403, %v5480
      %5482 = vdwg.mxu0
      %v5483 = vand.u32 %v4615, 4294901760
      %5484 = vmatprep.subr.mxu0 %v5483
      %v5485 = vand.u32 %v4614, 4294901760
      %5486 = vmatpush1.msra.mxu0 %v5485
      %5487 = vmatprep.subr.mxu0 0.0
      %5488 = vmatpush1.msra.mxu0 0.0
      %5489 = vmatprep.subr.mxu0 0.0
      %5490 = vmatpush1.msra.mxu0 0.0
      %5491 = vmatprep.subr.mxu0 0.0
      %5492 = vmatpush1.msra.mxu0 0.0
      %5493 = vmatprep.subr.mxu0 0.0
      %5494 = vmatpush1.msra.mxu0 0.0
      %5495 = vmatprep.subr.mxu0 0.0
      %5496 = vmatpush1.msra.mxu0 0.0
      %5497 = vmatprep.subr.mxu0 0.0
      %5498 = vmatpush1.msra.mxu0 0.0
      %5499 = vmatprep.subr.mxu0 0.0
      %5500 = vmatpush1.msra.mxu0 0.0
      %5501 = vmatprep.subr.mxu0 0.0
      %5502 = vmatpush1.msra.mxu0 0.0
      %5503 = vmatprep.subr.mxu0 0.0
      %5504 = vmatpush1.msra.mxu0 0.0
      %5505 = vmatprep.subr.mxu0 0.0
      %5506 = vmatpush1.msra.mxu0 0.0
      %5507 = vmatprep.subr.mxu0 0.0
      %5508 = vmatpush1.msra.mxu0 0.0
      %5509 = vmatprep.subr.mxu0 0.0
      %5510 = vmatpush1.msra.mxu0 0.0
      %5511 = vmatprep.subr.mxu0 0.0
      %5512 = vmatpush1.msra.mxu0 0.0
      %5513 = vmatprep.subr.mxu0 0.0
      %5514 = vmatpush1.msra.mxu0 0.0
      %5515 = vmatprep.subr.mxu0 0.0
      %5516 = vmatpush1.msra.mxu0 0.0
      %5517 = vmatprep.subr.mxu0 0.0
      %5518 = vmatpush1.msra.mxu0 0.0
      %5519 = vmatprep.subr.mxu0 0.0
      %5520 = vmatpush1.msra.mxu0 0.0
      %5521 = vmatprep.subr.mxu0 0.0
      %5522 = vmatpush1.msra.mxu0 0.0
      %5523 = vmatprep.subr.mxu0 0.0
      %5524 = vmatpush1.msra.mxu0 0.0
      %5525 = vmatprep.subr.mxu0 0.0
      %5526 = vmatpush1.msra.mxu0 0.0
      %5527 = vmatprep.subr.mxu0 0.0
      %5528 = vmatpush1.msra.mxu0 0.0
      %5529 = vmatprep.subr.mxu0 0.0
      %5530 = vmatpush1.msra.mxu0 0.0
      %5531 = vmatprep.subr.mxu0 0.0
      %5532 = vmatpush1.msra.mxu0 0.0
      %5533 = vmatprep.subr.mxu0 0.0
      %5534 = vmatpush1.msra.mxu0 0.0
      %5535 = vmatprep.subr.mxu0 0.0
      %5536 = vmatpush1.msra.mxu0 0.0
      %5537 = vmatprep.subr.mxu0 0.0
      %5538 = vmatpush1.msra.mxu0 0.0
      %5539 = vmatprep.subr.mxu0 0.0
      %5540 = vmatpush1.msra.mxu0 0.0
      %5541 = vmatprep.subr.mxu0 0.0
      %5542 = vmatpush1.msra.mxu0 0.0
      %5543 = vmatprep.subr.mxu0 0.0
      %5544 = vmatpush1.msra.mxu0 0.0
      %5545 = vmatprep.subr.mxu0 0.0
      %5546 = vmatpush1.msra.mxu0 0.0
      %5547 = vmatprep.subr.mxu0 0.0
      %5548 = vmatpush1.msra.mxu0 0.0
      %5549 = vmatprep.mubr.f32.mxu0 0.0
      %v5550 = vand.u32 %v5090, 4294901760
      %5551 = vmatmul.mubr.f32.gmra.mrb[0].mxu0 %v5550
      %v5552 = vpop.f32.mrb[0].mxu0
      %v5553 = vadd.f32 %v5479, %v5552
      %v5554 = vpop.f32.mrb[0].mxu0
      %v5555 = vadd.f32 %v5481, %v5554
      %5556 = vdwg.mxu0
      %s5557 = scalar_lea.vmem %s3, 16
      %v5558 = vld [vmem:[%s5557] sm:$0xff]
      %v5560 = vsel %vm292, %v5558, 0
      %v5562 = vand.u32 %v4617, 4294901760
      %5563 = vmatprep.subr.mxu0 %v5562
      %v5564 = vand.u32 %v4616, 4294901760
      %5565 = vmatpush1.msra.mxu0 %v5564
      %5566 = vmatprep.subr.mxu0 0.0
      %5567 = vmatpush1.msra.mxu0 0.0
      %5568 = vmatprep.subr.mxu0 0.0
      %5569 = vmatpush1.msra.mxu0 0.0
      %5570 = vmatprep.subr.mxu0 0.0
      %5571 = vmatpush1.msra.mxu0 0.0
      %5572 = vmatprep.subr.mxu0 0.0
      %5573 = vmatpush1.msra.mxu0 0.0
      %5574 = vmatprep.subr.mxu0 0.0
      %5575 = vmatpush1.msra.mxu0 0.0
      %5576 = vmatprep.subr.mxu0 0.0
      %5577 = vmatpush1.msra.mxu0 0.0
      %5578 = vmatprep.subr.mxu0 0.0
      %5579 = vmatpush1.msra.mxu0 0.0
      %5580 = vmatprep.subr.mxu0 0.0
      %5581 = vmatpush1.msra.mxu0 0.0
      %5582 = vmatprep.subr.mxu0 0.0
      %5583 = vmatpush1.msra.mxu0 0.0
      %5584 = vmatprep.subr.mxu0 0.0
      %5585 = vmatpush1.msra.mxu0 0.0
      %5586 = vmatprep.subr.mxu0 0.0
      %5587 = vmatpush1.msra.mxu0 0.0
      %5588 = vmatprep.subr.mxu0 0.0
      %5589 = vmatpush1.msra.mxu0 0.0
      %5590 = vmatprep.subr.mxu0 0.0
      %5591 = vmatpush1.msra.mxu0 0.0
      %5592 = vmatprep.subr.mxu0 0.0
      %5593 = vmatpush1.msra.mxu0 0.0
      %5594 = vmatprep.subr.mxu0 0.0
      %5595 = vmatpush1.msra.mxu0 0.0
      %5596 = vmatprep.subr.mxu0 0.0
      %5597 = vmatpush1.msra.mxu0 0.0
      %5598 = vmatprep.subr.mxu0 0.0
      %5599 = vmatpush1.msra.mxu0 0.0
      %5600 = vmatprep.subr.mxu0 0.0
      %5601 = vmatpush1.msra.mxu0 0.0
      %5602 = vmatprep.subr.mxu0 0.0
      %5603 = vmatpush1.msra.mxu0 0.0
      %5604 = vmatprep.subr.mxu0 0.0
      %5605 = vmatpush1.msra.mxu0 0.0
      %5606 = vmatprep.subr.mxu0 0.0
      %5607 = vmatpush1.msra.mxu0 0.0
      %5608 = vmatprep.subr.mxu0 0.0
      %5609 = vmatpush1.msra.mxu0 0.0
      %5610 = vmatprep.subr.mxu0 0.0
      %5611 = vmatpush1.msra.mxu0 0.0
      %5612 = vmatprep.subr.mxu0 0.0
      %5613 = vmatpush1.msra.mxu0 0.0
      %5614 = vmatprep.subr.mxu0 0.0
      %5615 = vmatpush1.msra.mxu0 0.0
      %5616 = vmatprep.subr.mxu0 0.0
      %5617 = vmatpush1.msra.mxu0 0.0
      %5618 = vmatprep.subr.mxu0 0.0
      %5619 = vmatpush1.msra.mxu0 0.0
      %5620 = vmatprep.subr.mxu0 0.0
      %5621 = vmatpush1.msra.mxu0 0.0
      %5622 = vmatprep.subr.mxu0 0.0
      %5623 = vmatpush1.msra.mxu0 0.0
      %5624 = vmatprep.subr.mxu0 0.0
      %5625 = vmatpush1.msra.mxu0 0.0
      %5626 = vmatprep.subr.mxu0 0.0
      %5627 = vmatpush1.msra.mxu0 0.0
      %5628 = vmatprep.mubr.f32.mxu0 0.0
      %v5629 = vand.u32 %v5560, 4294901760
      %v5630 = vsub.f32 %v5560, %v5629
      %v5631 = vand.u32 %v5630, 4294901760
      %v5632 = vsub.f32 %v5630, %v5631
      %v5633 = vand.u32 %v5632, 4294901760
      %5634 = vmatmul.mubr.f32.gmra.mrb[0].mxu0 %v5633
      %v5635 = vpop.f32.mrb[0].mxu0
      %v5636 = vadd.f32 0.0, %v5635
      %v5637 = vpop.f32.mrb[0].mxu0
      %v5638 = vadd.f32 0.0, %v5637
      %5639 = vdwg.mxu0
      %v5640 = vand.u32 %v4617, 4294901760
      %v5641 = vsub.f32 %v4617, %v5640
      %v5642 = vand.u32 %v5641, 4294901760
      %v5643 = vsub.f32 %v5641, %v5642
      %v5644 = vand.u32 %v5643, 4294901760
      %5645 = vmatprep.subr.mxu0 %v5644
      %v5646 = vand.u32 %v4616, 4294901760
      %v5647 = vsub.f32 %v4616, %v5646
      %v5648 = vand.u32 %v5647, 4294901760
      %v5649 = vsub.f32 %v5647, %v5648
      %v5650 = vand.u32 %v5649, 4294901760
      %5651 = vmatpush1.msra.mxu0 %v5650
      %5652 = vmatprep.subr.mxu0 0.0
      %5653 = vmatpush1.msra.mxu0 0.0
      %5654 = vmatprep.subr.mxu0 0.0
      %5655 = vmatpush1.msra.mxu0 0.0
      %5656 = vmatprep.subr.mxu0 0.0
      %5657 = vmatpush1.msra.mxu0 0.0
      %5658 = vmatprep.subr.mxu0 0.0
      %5659 = vmatpush1.msra.mxu0 0.0
      %5660 = vmatprep.subr.mxu0 0.0
      %5661 = vmatpush1.msra.mxu0 0.0
      %5662 = vmatprep.subr.mxu0 0.0
      %5663 = vmatpush1.msra.mxu0 0.0
      %5664 = vmatprep.subr.mxu0 0.0
      %5665 = vmatpush1.msra.mxu0 0.0
      %5666 = vmatprep.subr.mxu0 0.0
      %5667 = vmatpush1.msra.mxu0 0.0
      %5668 = vmatprep.subr.mxu0 0.0
      %5669 = vmatpush1.msra.mxu0 0.0
      %5670 = vmatprep.subr.mxu0 0.0
      %5671 = vmatpush1.msra.mxu0 0.0
      %5672 = vmatprep.subr.mxu0 0.0
      %5673 = vmatpush1.msra.mxu0 0.0
      %5674 = vmatprep.subr.mxu0 0.0
      %5675 = vmatpush1.msra.mxu0 0.0
      %5676 = vmatprep.subr.mxu0 0.0
      %5677 = vmatpush1.msra.mxu0 0.0
      %5678 = vmatprep.subr.mxu0 0.0
      %5679 = vmatpush1.msra.mxu0 0.0
      %5680 = vmatprep.subr.mxu0 0.0
      %5681 = vmatpush1.msra.mxu0 0.0
      %5682 = vmatprep.subr.mxu0 0.0
      %5683 = vmatpush1.msra.mxu0 0.0
      %5684 = vmatprep.subr.mxu0 0.0
      %5685 = vmatpush1.msra.mxu0 0.0
      %5686 = vmatprep.subr.mxu0 0.0
      %5687 = vmatpush1.msra.mxu0 0.0
      %5688 = vmatprep.subr.mxu0 0.0
      %5689 = vmatpush1.msra.mxu0 0.0
      %5690 = vmatprep.subr.mxu0 0.0
      %5691 = vmatpush1.msra.mxu0 0.0
      %5692 = vmatprep.subr.mxu0 0.0
      %5693 = vmatpush1.msra.mxu0 0.0
      %5694 = vmatprep.subr.mxu0 0.0
      %5695 = vmatpush1.msra.mxu0 0.0
      %5696 = vmatprep.subr.mxu0 0.0
      %5697 = vmatpush1.msra.mxu0 0.0
      %5698 = vmatprep.subr.mxu0 0.0
      %5699 = vmatpush1.msra.mxu0 0.0
      %5700 = vmatprep.subr.mxu0 0.0
      %5701 = vmatpush1.msra.mxu0 0.0
      %5702 = vmatprep.subr.mxu0 0.0
      %5703 = vmatpush1.msra.mxu0 0.0
      %5704 = vmatprep.subr.mxu0 0.0
      %5705 = vmatpush1.msra.mxu0 0.0
      %5706 = vmatprep.subr.mxu0 0.0
      %5707 = vmatpush1.msra.mxu0 0.0
      %5708 = vmatprep.subr.mxu0 0.0
      %5709 = vmatpush1.msra.mxu0 0.0
      %5710 = vmatprep.subr.mxu0 0.0
      %5711 = vmatpush1.msra.mxu0 0.0
      %5712 = vmatprep.subr.mxu0 0.0
      %5713 = vmatpush1.msra.mxu0 0.0
      %5714 = vmatprep.mubr.f32.mxu0 0.0
      %v5715 = vand.u32 %v5560, 4294901760
      %5716 = vmatmul.mubr.f32.gmra.mrb[0].mxu0 %v5715
      %v5717 = vpop.f32.mrb[0].mxu0
      %v5718 = vadd.f32 %v5636, %v5717
      %v5719 = vpop.f32.mrb[0].mxu0
      %v5720 = vadd.f32 %v5638, %v5719
      %5721 = vdwg.mxu0
      %v5722 = vand.u32 %v4617, 4294901760
      %v5723 = vsub.f32 %v4617, %v5722
      %5724 = vmatprep.subr.mxu0 %v5723
      %v5725 = vand.u32 %v4616, 4294901760
      %v5726 = vsub.f32 %v4616, %v5725
      %5727 = vmatpush1.msra.mxu0 %v5726
      %5728 = vmatprep.subr.mxu0 0.0
      %5729 = vmatpush1.msra.mxu0 0.0
      %5730 = vmatprep.subr.mxu0 0.0
      %5731 = vmatpush1.msra.mxu0 0.0
      %5732 = vmatprep.subr.mxu0 0.0
      %5733 = vmatpush1.msra.mxu0 0.0
      %5734 = vmatprep.subr.mxu0 0.0
      %5735 = vmatpush1.msra.mxu0 0.0
      %5736 = vmatprep.subr.mxu0 0.0
      %5737 = vmatpush1.msra.mxu0 0.0
      %5738 = vmatprep.subr.mxu0 0.0
      %5739 = vmatpush1.msra.mxu0 0.0
      %5740 = vmatprep.subr.mxu0 0.0
      %5741 = vmatpush1.msra.mxu0 0.0
      %5742 = vmatprep.subr.mxu0 0.0
      %5743 = vmatpush1.msra.mxu0 0.0
      %5744 = vmatprep.subr.mxu0 0.0
      %5745 = vmatpush1.msra.mxu0 0.0
      %5746 = vmatprep.subr.mxu0 0.0
      %5747 = vmatpush1.msra.mxu0 0.0
      %5748 = vmatprep.subr.mxu0 0.0
      %5749 = vmatpush1.msra.mxu0 0.0
      %5750 = vmatprep.subr.mxu0 0.0
      %5751 = vmatpush1.msra.mxu0 0.0
      %5752 = vmatprep.subr.mxu0 0.0
      %5753 = vmatpush1.msra.mxu0 0.0
      %5754 = vmatprep.subr.mxu0 0.0
      %5755 = vmatpush1.msra.mxu0 0.0
      %5756 = vmatprep.subr.mxu0 0.0
      %5757 = vmatpush1.msra.mxu0 0.0
      %5758 = vmatprep.subr.mxu0 0.0
      %5759 = vmatpush1.msra.mxu0 0.0
      %5760 = vmatprep.subr.mxu0 0.0
      %5761 = vmatpush1.msra.mxu0 0.0
      %5762 = vmatprep.subr.mxu0 0.0
      %5763 = vmatpush1.msra.mxu0 0.0
      %5764 = vmatprep.subr.mxu0 0.0
      %5765 = vmatpush1.msra.mxu0 0.0
      %5766 = vmatprep.subr.mxu0 0.0
      %5767 = vmatpush1.msra.mxu0 0.0
      %5768 = vmatprep.subr.mxu0 0.0
      %5769 = vmatpush1.msra.mxu0 0.0
      %5770 = vmatprep.subr.mxu0 0.0
      %5771 = vmatpush1.msra.mxu0 0.0
      %5772 = vmatprep.subr.mxu0 0.0
      %5773 = vmatpush1.msra.mxu0 0.0
      %5774 = vmatprep.subr.mxu0 0.0
      %5775 = vmatpush1.msra.mxu0 0.0
      %5776 = vmatprep.subr.mxu0 0.0
      %5777 = vmatpush1.msra.mxu0 0.0
      %5778 = vmatprep.subr.mxu0 0.0
      %5779 = vmatpush1.msra.mxu0 0.0
      %5780 = vmatprep.subr.mxu0 0.0
      %5781 = vmatpush1.msra.mxu0 0.0
      %5782 = vmatprep.subr.mxu0 0.0
      %5783 = vmatpush1.msra.mxu0 0.0
      %5784 = vmatprep.subr.mxu0 0.0
      %5785 = vmatpush1.msra.mxu0 0.0
      %5786 = vmatprep.subr.mxu0 0.0
      %5787 = vmatpush1.msra.mxu0 0.0
      %5788 = vmatprep.subr.mxu0 0.0
      %5789 = vmatpush1.msra.mxu0 0.0
      %5790 = vmatprep.mubr.f32.mxu0 0.0
      %v5791 = vand.u32 %v5560, 4294901760
      %v5792 = vsub.f32 %v5560, %v5791
      %5793 = vmatmul.mubr.f32.gmra.mrb[0].mxu0 %v5792
      %v5794 = vpop.f32.mrb[0].mxu0
      %v5795 = vadd.f32 %v5718, %v5794
      %v5796 = vpop.f32.mrb[0].mxu0
      %v5797 = vadd.f32 %v5720, %v5796
      %5798 = vdwg.mxu0
      %v5799 = vand.u32 %v4617, 4294901760
      %5800 = vmatprep.subr.mxu0 %v5799
      %v5801 = vand.u32 %v4616, 4294901760
      %5802 = vmatpush1.msra.mxu0 %v5801
      %5803 = vmatprep.subr.mxu0 0.0
      %5804 = vmatpush1.msra.mxu0 0.0
      %5805 = vmatprep.subr.mxu0 0.0
      %5806 = vmatpush1.msra.mxu0 0.0
      %5807 = vmatprep.subr.mxu0 0.0
      %5808 = vmatpush1.msra.mxu0 0.0
      %5809 = vmatprep.subr.mxu0 0.0
      %5810 = vmatpush1.msra.mxu0 0.0
      %5811 = vmatprep.subr.mxu0 0.0
      %5812 = vmatpush1.msra.mxu0 0.0
      %5813 = vmatprep.subr.mxu0 0.0
      %5814 = vmatpush1.msra.mxu0 0.0
      %5815 = vmatprep.subr.mxu0 0.0
      %5816 = vmatpush1.msra.mxu0 0.0
      %5817 = vmatprep.subr.mxu0 0.0
      %5818 = vmatpush1.msra.mxu0 0.0
      %5819 = vmatprep.subr.mxu0 0.0
      %5820 = vmatpush1.msra.mxu0 0.0
      %5821 = vmatprep.subr.mxu0 0.0
      %5822 = vmatpush1.msra.mxu0 0.0
      %5823 = vmatprep.subr.mxu0 0.0
      %5824 = vmatpush1.msra.mxu0 0.0
      %5825 = vmatprep.subr.mxu0 0.0
      %5826 = vmatpush1.msra.mxu0 0.0
      %5827 = vmatprep.subr.mxu0 0.0
      %5828 = vmatpush1.msra.mxu0 0.0
      %5829 = vmatprep.subr.mxu0 0.0
      %5830 = vmatpush1.msra.mxu0 0.0
      %5831 = vmatprep.subr.mxu0 0.0
      %5832 = vmatpush1.msra.mxu0 0.0
      %5833 = vmatprep.subr.mxu0 0.0
      %5834 = vmatpush1.msra.mxu0 0.0
      %5835 = vmatprep.subr.mxu0 0.0
      %5836 = vmatpush1.msra.mxu0 0.0
      %5837 = vmatprep.subr.mxu0 0.0
      %5838 = vmatpush1.msra.mxu0 0.0
      %5839 = vmatprep.subr.mxu0 0.0
      %5840 = vmatpush1.msra.mxu0 0.0
      %5841 = vmatprep.subr.mxu0 0.0
      %5842 = vmatpush1.msra.mxu0 0.0
      %5843 = vmatprep.subr.mxu0 0.0
      %5844 = vmatpush1.msra.mxu0 0.0
      %5845 = vmatprep.subr.mxu0 0.0
      %5846 = vmatpush1.msra.mxu0 0.0
      %5847 = vmatprep.subr.mxu0 0.0
      %5848 = vmatpush1.msra.mxu0 0.0
      %5849 = vmatprep.subr.mxu0 0.0
      %5850 = vmatpush1.msra.mxu0 0.0
      %5851 = vmatprep.subr.mxu0 0.0
      %5852 = vmatpush1.msra.mxu0 0.0
      %5853 = vmatprep.subr.mxu0 0.0
      %5854 = vmatpush1.msra.mxu0 0.0
      %5855 = vmatprep.subr.mxu0 0.0
      %5856 = vmatpush1.msra.mxu0 0.0
      %5857 = vmatprep.subr.mxu0 0.0
      %5858 = vmatpush1.msra.mxu0 0.0
      %5859 = vmatprep.subr.mxu0 0.0
      %5860 = vmatpush1.msra.mxu0 0.0
      %5861 = vmatprep.subr.mxu0 0.0
      %5862 = vmatpush1.msra.mxu0 0.0
      %5863 = vmatprep.subr.mxu0 0.0
      %5864 = vmatpush1.msra.mxu0 0.0
      %5865 = vmatprep.mubr.f32.mxu0 0.0
      %v5866 = vand.u32 %v5560, 4294901760
      %v5867 = vsub.f32 %v5560, %v5866
      %v5868 = vand.u32 %v5867, 4294901760
      %5869 = vmatmul.mubr.f32.gmra.mrb[0].mxu0 %v5868
      %v5870 = vpop.f32.mrb[0].mxu0
      %v5871 = vadd.f32 %v5795, %v5870
      %v5872 = vpop.f32.mrb[0].mxu0
      %v5873 = vadd.f32 %v5797, %v5872
      %5874 = vdwg.mxu0
      %v5875 = vand.u32 %v4617, 4294901760
      %v5876 = vsub.f32 %v4617, %v5875
      %v5877 = vand.u32 %v5876, 4294901760
      %5878 = vmatprep.subr.mxu0 %v5877
      %v5879 = vand.u32 %v4616, 4294901760
      %v5880 = vsub.f32 %v4616, %v5879
      %v5881 = vand.u32 %v5880, 4294901760
      %5882 = vmatpush1.msra.mxu0 %v5881
      %5883 = vmatprep.subr.mxu0 0.0
      %5884 = vmatpush1.msra.mxu0 0.0
      %5885 = vmatprep.subr.mxu0 0.0
      %5886 = vmatpush1.msra.mxu0 0.0
      %5887 = vmatprep.subr.mxu0 0.0
      %5888 = vmatpush1.msra.mxu0 0.0
      %5889 = vmatprep.subr.mxu0 0.0
      %5890 = vmatpush1.msra.mxu0 0.0
      %5891 = vmatprep.subr.mxu0 0.0
      %5892 = vmatpush1.msra.mxu0 0.0
      %5893 = vmatprep.subr.mxu0 0.0
      %5894 = vmatpush1.msra.mxu0 0.0
      %5895 = vmatprep.subr.mxu0 0.0
      %5896 = vmatpush1.msra.mxu0 0.0
      %5897 = vmatprep.subr.mxu0 0.0
      %5898 = vmatpush1.msra.mxu0 0.0
      %5899 = vmatprep.subr.mxu0 0.0
      %5900 = vmatpush1.msra.mxu0 0.0
      %5901 = vmatprep.subr.mxu0 0.0
      %5902 = vmatpush1.msra.mxu0 0.0
      %5903 = vmatprep.subr.mxu0 0.0
      %5904 = vmatpush1.msra.mxu0 0.0
      %5905 = vmatprep.subr.mxu0 0.0
      %5906 = vmatpush1.msra.mxu0 0.0
      %5907 = vmatprep.subr.mxu0 0.0
      %5908 = vmatpush1.msra.mxu0 0.0
      %5909 = vmatprep.subr.mxu0 0.0
      %5910 = vmatpush1.msra.mxu0 0.0
      %5911 = vmatprep.subr.mxu0 0.0
      %5912 = vmatpush1.msra.mxu0 0.0
      %5913 = vmatprep.subr.mxu0 0.0
      %5914 = vmatpush1.msra.mxu0 0.0
      %5915 = vmatprep.subr.mxu0 0.0
      %5916 = vmatpush1.msra.mxu0 0.0
      %5917 = vmatprep.subr.mxu0 0.0
      %5918 = vmatpush1.msra.mxu0 0.0
      %5919 = vmatprep.subr.mxu0 0.0
      %5920 = vmatpush1.msra.mxu0 0.0
      %5921 = vmatprep.subr.mxu0 0.0
      %5922 = vmatpush1.msra.mxu0 0.0
      %5923 = vmatprep.subr.mxu0 0.0
      %5924 = vmatpush1.msra.mxu0 0.0
      %5925 = vmatprep.subr.mxu0 0.0
      %5926 = vmatpush1.msra.mxu0 0.0
      %5927 = vmatprep.subr.mxu0 0.0
      %5928 = vmatpush1.msra.mxu0 0.0
      %5929 = vmatprep.subr.mxu0 0.0
      %5930 = vmatpush1.msra.mxu0 0.0
      %5931 = vmatprep.subr.mxu0 0.0
      %5932 = vmatpush1.msra.mxu0 0.0
      %5933 = vmatprep.subr.mxu0 0.0
      %5934 = vmatpush1.msra.mxu0 0.0
      %5935 = vmatprep.subr.mxu0 0.0
      %5936 = vmatpush1.msra.mxu0 0.0
      %5937 = vmatprep.subr.mxu0 0.0
      %5938 = vmatpush1.msra.mxu0 0.0
      %5939 = vmatprep.subr.mxu0 0.0
      %5940 = vmatpush1.msra.mxu0 0.0
      %5941 = vmatprep.subr.mxu0 0.0
      %5942 = vmatpush1.msra.mxu0 0.0
      %5943 = vmatprep.subr.mxu0 0.0
      %5944 = vmatpush1.msra.mxu0 0.0
      %5945 = vmatprep.mubr.f32.mxu0 0.0
      %v5946 = vand.u32 %v5560, 4294901760
      %5947 = vmatmul.mubr.f32.gmra.mrb[0].mxu0 %v5946
      %v5948 = vpop.f32.mrb[0].mxu0
      %v5949 = vadd.f32 %v5871, %v5948
      %v5950 = vpop.f32.mrb[0].mxu0
      %v5951 = vadd.f32 %v5873, %v5950
      %5952 = vdwg.mxu0
      %v5953 = vand.u32 %v4617, 4294901760
      %5954 = vmatprep.subr.mxu0 %v5953
      %v5955 = vand.u32 %v4616, 4294901760
      %5956 = vmatpush1.msra.mxu0 %v5955
      %5957 = vmatprep.subr.mxu0 0.0
      %5958 = vmatpush1.msra.mxu0 0.0
      %5959 = vmatprep.subr.mxu0 0.0
      %5960 = vmatpush1.msra.mxu0 0.0
      %5961 = vmatprep.subr.mxu0 0.0
      %5962 = vmatpush1.msra.mxu0 0.0
      %5963 = vmatprep.subr.mxu0 0.0
      %5964 = vmatpush1.msra.mxu0 0.0
      %5965 = vmatprep.subr.mxu0 0.0
      %5966 = vmatpush1.msra.mxu0 0.0
      %5967 = vmatprep.subr.mxu0 0.0
      %5968 = vmatpush1.msra.mxu0 0.0
      %5969 = vmatprep.subr.mxu0 0.0
      %5970 = vmatpush1.msra.mxu0 0.0
      %5971 = vmatprep.subr.mxu0 0.0
      %5972 = vmatpush1.msra.mxu0 0.0
      %5973 = vmatprep.subr.mxu0 0.0
      %5974 = vmatpush1.msra.mxu0 0.0
      %5975 = vmatprep.subr.mxu0 0.0
      %5976 = vmatpush1.msra.mxu0 0.0
      %5977 = vmatprep.subr.mxu0 0.0
      %5978 = vmatpush1.msra.mxu0 0.0
      %5979 = vmatprep.subr.mxu0 0.0
      %5980 = vmatpush1.msra.mxu0 0.0
      %5981 = vmatprep.subr.mxu0 0.0
      %5982 = vmatpush1.msra.mxu0 0.0
      %5983 = vmatprep.subr.mxu0 0.0
      %5984 = vmatpush1.msra.mxu0 0.0
      %5985 = vmatprep.subr.mxu0 0.0
      %5986 = vmatpush1.msra.mxu0 0.0
      %5987 = vmatprep.subr.mxu0 0.0
      %5988 = vmatpush1.msra.mxu0 0.0
      %5989 = vmatprep.subr.mxu0 0.0
      %5990 = vmatpush1.msra.mxu0 0.0
      %5991 = vmatprep.subr.mxu0 0.0
      %5992 = vmatpush1.msra.mxu0 0.0
      %5993 = vmatprep.subr.mxu0 0.0
      %5994 = vmatpush1.msra.mxu0 0.0
      %5995 = vmatprep.subr.mxu0 0.0
      %5996 = vmatpush1.msra.mxu0 0.0
      %5997 = vmatprep.subr.mxu0 0.0
      %5998 = vmatpush1.msra.mxu0 0.0
      %5999 = vmatprep.subr.mxu0 0.0
      %6000 = vmatpush1.msra.mxu0 0.0
      %6001 = vmatprep.subr.mxu0 0.0
      %6002 = vmatpush1.msra.mxu0 0.0
      %6003 = vmatprep.subr.mxu0 0.0
      %6004 = vmatpush1.msra.mxu0 0.0
      %6005 = vmatprep.subr.mxu0 0.0
      %6006 = vmatpush1.msra.mxu0 0.0
      %6007 = vmatprep.subr.mxu0 0.0
      %6008 = vmatpush1.msra.mxu0 0.0
      %6009 = vmatprep.subr.mxu0 0.0
      %6010 = vmatpush1.msra.mxu0 0.0
      %6011 = vmatprep.subr.mxu0 0.0
      %6012 = vmatpush1.msra.mxu0 0.0
      %6013 = vmatprep.subr.mxu0 0.0
      %6014 = vmatpush1.msra.mxu0 0.0
      %6015 = vmatprep.subr.mxu0 0.0
      %6016 = vmatpush1.msra.mxu0 0.0
      %6017 = vmatprep.subr.mxu0 0.0
      %6018 = vmatpush1.msra.mxu0 0.0
      %6019 = vmatprep.mubr.f32.mxu0 0.0
      %v6020 = vand.u32 %v5560, 4294901760
      %6021 = vmatmul.mubr.f32.gmra.mrb[0].mxu0 %v6020
      %v6022 = vpop.f32.mrb[0].mxu0
      %v6023 = vadd.f32 %v5949, %v6022
      %v6024 = vpop.f32.mrb[0].mxu0
      %v6025 = vadd.f32 %v5951, %v6024
      %6026 = vdwg.mxu0
      %v6027 = vadd.f32 %v5553, %v6023
      %v6028 = vadd.f32 %v5555, %v6025
      %6029 = vrot.lane.b32.xlu0 %v4584, 1
      %v6030 = vpop.permute.xlu0 %6029
      %6031 = vrot.lane.b32.xlu0 %v4585, 1
      %v6032 = vpop.permute.xlu0 %6031
      %v6033 = vsel %vm253, %v6030, %v6032
      %v6034 = vsel %vm253, %v6032, %v6030
      %6035 = vrot.lane.b32.xlu0 %v4584, 127
      %v6036 = vpop.permute.xlu0 %6035
      %6037 = vrot.lane.b32.xlu0 %v4585, 127
      %v6038 = vpop.permute.xlu0 %6037
      %v6039 = vsel %vm260, %v6036, %v6038
      %v6040 = vsel %vm260, %v6038, %v6036
      %v6041 = vsel %vm272, %v6039, %v6034
      %v6042 = vsel %vm273, %v6040, %v6033
      %v6043 = vsel %vm285, %v6034, %v6039
      %v6044 = vsel %vm286, %v6033, %v6040
      %s6045 = scalar_lea.vmem %s3, 24
      %v6046 = vld [vmem:[%s6045] sm:$0xff]
      %v6048 = vsel %vm292, %v6046, 0
      %v6050 = vand.u32 %v6042, 4294901760
      %6051 = vmatprep.subr.mxu0 %v6050
      %v6052 = vand.u32 %v6041, 4294901760
      %6053 = vmatpush1.msra.mxu0 %v6052
      %6054 = vmatprep.subr.mxu0 0.0
      %6055 = vmatpush1.msra.mxu0 0.0
      %6056 = vmatprep.subr.mxu0 0.0
      %6057 = vmatpush1.msra.mxu0 0.0
      %6058 = vmatprep.subr.mxu0 0.0
      %6059 = vmatpush1.msra.mxu0 0.0
      %6060 = vmatprep.subr.mxu0 0.0
      %6061 = vmatpush1.msra.mxu0 0.0
      %6062 = vmatprep.subr.mxu0 0.0
      %6063 = vmatpush1.msra.mxu0 0.0
      %6064 = vmatprep.subr.mxu0 0.0
      %6065 = vmatpush1.msra.mxu0 0.0
      %6066 = vmatprep.subr.mxu0 0.0
      %6067 = vmatpush1.msra.mxu0 0.0
      %6068 = vmatprep.subr.mxu0 0.0
      %6069 = vmatpush1.msra.mxu0 0.0
      %6070 = vmatprep.subr.mxu0 0.0
      %6071 = vmatpush1.msra.mxu0 0.0
      %6072 = vmatprep.subr.mxu0 0.0
      %6073 = vmatpush1.msra.mxu0 0.0
      %6074 = vmatprep.subr.mxu0 0.0
      %6075 = vmatpush1.msra.mxu0 0.0
      %6076 = vmatprep.subr.mxu0 0.0
      %6077 = vmatpush1.msra.mxu0 0.0
      %6078 = vmatprep.subr.mxu0 0.0
      %6079 = vmatpush1.msra.mxu0 0.0
      %6080 = vmatprep.subr.mxu0 0.0
      %6081 = vmatpush1.msra.mxu0 0.0
      %6082 = vmatprep.subr.mxu0 0.0
      %6083 = vmatpush1.msra.mxu0 0.0
      %6084 = vmatprep.subr.mxu0 0.0
      %6085 = vmatpush1.msra.mxu0 0.0
      %6086 = vmatprep.subr.mxu0 0.0
      %6087 = vmatpush1.msra.mxu0 0.0
      %6088 = vmatprep.subr.mxu0 0.0
      %6089 = vmatpush1.msra.mxu0 0.0
      %6090 = vmatprep.subr.mxu0 0.0
      %6091 = vmatpush1.msra.mxu0 0.0
      %6092 = vmatprep.subr.mxu0 0.0
      %6093 = vmatpush1.msra.mxu0 0.0
      %6094 = vmatprep.subr.mxu0 0.0
      %6095 = vmatpush1.msra.mxu0 0.0
      %6096 = vmatprep.subr.mxu0 0.0
      %6097 = vmatpush1.msra.mxu0 0.0
      %6098 = vmatprep.subr.mxu0 0.0
      %6099 = vmatpush1.msra.mxu0 0.0
      %6100 = vmatprep.subr.mxu0 0.0
      %6101 = vmatpush1.msra.mxu0 0.0
      %6102 = vmatprep.subr.mxu0 0.0
      %6103 = vmatpush1.msra.mxu0 0.0
      %6104 = vmatprep.subr.mxu0 0.0
      %6105 = vmatpush1.msra.mxu0 0.0
      %6106 = vmatprep.subr.mxu0 0.0
      %6107 = vmatpush1.msra.mxu0 0.0
      %6108 = vmatprep.subr.mxu0 0.0
      %6109 = vmatpush1.msra.mxu0 0.0
      %6110 = vmatprep.subr.mxu0 0.0
      %6111 = vmatpush1.msra.mxu0 0.0
      %6112 = vmatprep.subr.mxu0 0.0
      %6113 = vmatpush1.msra.mxu0 0.0
      %6114 = vmatprep.subr.mxu0 0.0
      %6115 = vmatpush1.msra.mxu0 0.0
      %6116 = vmatprep.mubr.f32.mxu0 0.0
      %v6117 = vand.u32 %v6048, 4294901760
      %v6118 = vsub.f32 %v6048, %v6117
      %v6119 = vand.u32 %v6118, 4294901760
      %v6120 = vsub.f32 %v6118, %v6119
      %v6121 = vand.u32 %v6120, 4294901760
      %6122 = vmatmul.mubr.f32.gmra.mrb[0].mxu0 %v6121
      %v6123 = vpop.f32.mrb[0].mxu0
      %v6124 = vadd.f32 0.0, %v6123
      %v6125 = vpop.f32.mrb[0].mxu0
      %v6126 = vadd.f32 0.0, %v6125
      %6127 = vdwg.mxu0
      %v6128 = vand.u32 %v6042, 4294901760
      %v6129 = vsub.f32 %v6042, %v6128
      %v6130 = vand.u32 %v6129, 4294901760
      %v6131 = vsub.f32 %v6129, %v6130
      %v6132 = vand.u32 %v6131, 4294901760
      %6133 = vmatprep.subr.mxu0 %v6132
      %v6134 = vand.u32 %v6041, 4294901760
      %v6135 = vsub.f32 %v6041, %v6134
      %v6136 = vand.u32 %v6135, 4294901760
      %v6137 = vsub.f32 %v6135, %v6136
      %v6138 = vand.u32 %v6137, 4294901760
      %6139 = vmatpush1.msra.mxu0 %v6138
      %6140 = vmatprep.subr.mxu0 0.0
      %6141 = vmatpush1.msra.mxu0 0.0
      %6142 = vmatprep.subr.mxu0 0.0
      %6143 = vmatpush1.msra.mxu0 0.0
      %6144 = vmatprep.subr.mxu0 0.0
      %6145 = vmatpush1.msra.mxu0 0.0
      %6146 = vmatprep.subr.mxu0 0.0
      %6147 = vmatpush1.msra.mxu0 0.0
      %6148 = vmatprep.subr.mxu0 0.0
      %6149 = vmatpush1.msra.mxu0 0.0
      %6150 = vmatprep.subr.mxu0 0.0
      %6151 = vmatpush1.msra.mxu0 0.0
      %6152 = vmatprep.subr.mxu0 0.0
      %6153 = vmatpush1.msra.mxu0 0.0
      %6154 = vmatprep.subr.mxu0 0.0
      %6155 = vmatpush1.msra.mxu0 0.0
      %6156 = vmatprep.subr.mxu0 0.0
      %6157 = vmatpush1.msra.mxu0 0.0
      %6158 = vmatprep.subr.mxu0 0.0
      %6159 = vmatpush1.msra.mxu0 0.0
      %6160 = vmatprep.subr.mxu0 0.0
      %6161 = vmatpush1.msra.mxu0 0.0
      %6162 = vmatprep.subr.mxu0 0.0
      %6163 = vmatpush1.msra.mxu0 0.0
      %6164 = vmatprep.subr.mxu0 0.0
      %6165 = vmatpush1.msra.mxu0 0.0
      %6166 = vmatprep.subr.mxu0 0.0
      %6167 = vmatpush1.msra.mxu0 0.0
      %6168 = vmatprep.subr.mxu0 0.0
      %6169 = vmatpush1.msra.mxu0 0.0
      %6170 = vmatprep.subr.mxu0 0.0
      %6171 = vmatpush1.msra.mxu0 0.0
      %6172 = vmatprep.subr.mxu0 0.0
      %6173 = vmatpush1.msra.mxu0 0.0
      %6174 = vmatprep.subr.mxu0 0.0
      %6175 = vmatpush1.msra.mxu0 0.0
      %6176 = vmatprep.subr.mxu0 0.0
      %6177 = vmatpush1.msra.mxu0 0.0
      %6178 = vmatprep.subr.mxu0 0.0
      %6179 = vmatpush1.msra.mxu0 0.0
      %6180 = vmatprep.subr.mxu0 0.0
      %6181 = vmatpush1.msra.mxu0 0.0
      %6182 = vmatprep.subr.mxu0 0.0
      %6183 = vmatpush1.msra.mxu0 0.0
      %6184 = vmatprep.subr.mxu0 0.0
      %6185 = vmatpush1.msra.mxu0 0.0
      %6186 = vmatprep.subr.mxu0 0.0
      %6187 = vmatpush1.msra.mxu0 0.0
      %6188 = vmatprep.subr.mxu0 0.0
      %6189 = vmatpush1.msra.mxu0 0.0
      %6190 = vmatprep.subr.mxu0 0.0
      %6191 = vmatpush1.msra.mxu0 0.0
      %6192 = vmatprep.subr.mxu0 0.0
      %6193 = vmatpush1.msra.mxu0 0.0
      %6194 = vmatprep.subr.mxu0 0.0
      %6195 = vmatpush1.msra.mxu0 0.0
      %6196 = vmatprep.subr.mxu0 0.0
      %6197 = vmatpush1.msra.mxu0 0.0
      %6198 = vmatprep.subr.mxu0 0.0
      %6199 = vmatpush1.msra.mxu0 0.0
      %6200 = vmatprep.subr.mxu0 0.0
      %6201 = vmatpush1.msra.mxu0 0.0
      %6202 = vmatprep.mubr.f32.mxu0 0.0
      %v6203 = vand.u32 %v6048, 4294901760
      %6204 = vmatmul.mubr.f32.gmra.mrb[0].mxu0 %v6203
      %v6205 = vpop.f32.mrb[0].mxu0
      %v6206 = vadd.f32 %v6124, %v6205
      %v6207 = vpop.f32.mrb[0].mxu0
      %v6208 = vadd.f32 %v6126, %v6207
      %6209 = vdwg.mxu0
      %v6210 = vand.u32 %v6042, 4294901760
      %v6211 = vsub.f32 %v6042, %v6210
      %6212 = vmatprep.subr.mxu0 %v6211
      %v6213 = vand.u32 %v6041, 4294901760
      %v6214 = vsub.f32 %v6041, %v6213
      %6215 = vmatpush1.msra.mxu0 %v6214
      %6216 = vmatprep.subr.mxu0 0.0
      %6217 = vmatpush1.msra.mxu0 0.0
      %6218 = vmatprep.subr.mxu0 0.0
      %6219 = vmatpush1.msra.mxu0 0.0
      %6220 = vmatprep.subr.mxu0 0.0
      %6221 = vmatpush1.msra.mxu0 0.0
      %6222 = vmatprep.subr.mxu0 0.0
      %6223 = vmatpush1.msra.mxu0 0.0
      %6224 = vmatprep.subr.mxu0 0.0
      %6225 = vmatpush1.msra.mxu0 0.0
      %6226 = vmatprep.subr.mxu0 0.0
      %6227 = vmatpush1.msra.mxu0 0.0
      %6228 = vmatprep.subr.mxu0 0.0
      %6229 = vmatpush1.msra.mxu0 0.0
      %6230 = vmatprep.subr.mxu0 0.0
      %6231 = vmatpush1.msra.mxu0 0.0
      %6232 = vmatprep.subr.mxu0 0.0
      %6233 = vmatpush1.msra.mxu0 0.0
      %6234 = vmatprep.subr.mxu0 0.0
      %6235 = vmatpush1.msra.mxu0 0.0
      %6236 = vmatprep.subr.mxu0 0.0
      %6237 = vmatpush1.msra.mxu0 0.0
      %6238 = vmatprep.subr.mxu0 0.0
      %6239 = vmatpush1.msra.mxu0 0.0
      %6240 = vmatprep.subr.mxu0 0.0
      %6241 = vmatpush1.msra.mxu0 0.0
      %6242 = vmatprep.subr.mxu0 0.0
      %6243 = vmatpush1.msra.mxu0 0.0
      %6244 = vmatprep.subr.mxu0 0.0
      %6245 = vmatpush1.msra.mxu0 0.0
      %6246 = vmatprep.subr.mxu0 0.0
      %6247 = vmatpush1.msra.mxu0 0.0
      %6248 = vmatprep.subr.mxu0 0.0
      %6249 = vmatpush1.msra.mxu0 0.0
      %6250 = vmatprep.subr.mxu0 0.0
      %6251 = vmatpush1.msra.mxu0 0.0
      %6252 = vmatprep.subr.mxu0 0.0
      %6253 = vmatpush1.msra.mxu0 0.0
      %6254 = vmatprep.subr.mxu0 0.0
      %6255 = vmatpush1.msra.mxu0 0.0
      %6256 = vmatprep.subr.mxu0 0.0
      %6257 = vmatpush1.msra.mxu0 0.0
      %6258 = vmatprep.subr.mxu0 0.0
      %6259 = vmatpush1.msra.mxu0 0.0
      %6260 = vmatprep.subr.mxu0 0.0
      %6261 = vmatpush1.msra.mxu0 0.0
      %6262 = vmatprep.subr.mxu0 0.0
      %6263 = vmatpush1.msra.mxu0 0.0
      %6264 = vmatprep.subr.mxu0 0.0
      %6265 = vmatpush1.msra.mxu0 0.0
      %6266 = vmatprep.subr.mxu0 0.0
      %6267 = vmatpush1.msra.mxu0 0.0
      %6268 = vmatprep.subr.mxu0 0.0
      %6269 = vmatpush1.msra.mxu0 0.0
      %6270 = vmatprep.subr.mxu0 0.0
      %6271 = vmatpush1.msra.mxu0 0.0
      %6272 = vmatprep.subr.mxu0 0.0
      %6273 = vmatpush1.msra.mxu0 0.0
      %6274 = vmatprep.subr.mxu0 0.0
      %6275 = vmatpush1.msra.mxu0 0.0
      %6276 = vmatprep.subr.mxu0 0.0
      %6277 = vmatpush1.msra.mxu0 0.0
      %6278 = vmatprep.mubr.f32.mxu0 0.0
      %v6279 = vand.u32 %v6048, 4294901760
      %v6280 = vsub.f32 %v6048, %v6279
      %6281 = vmatmul.mubr.f32.gmra.mrb[0].mxu0 %v6280
      %v6282 = vpop.f32.mrb[0].mxu0
      %v6283 = vadd.f32 %v6206, %v6282
      %v6284 = vpop.f32.mrb[0].mxu0
      %v6285 = vadd.f32 %v6208, %v6284
      %6286 = vdwg.mxu0
      %v6287 = vand.u32 %v6042, 4294901760
      %6288 = vmatprep.subr.mxu0 %v6287
      %v6289 = vand.u32 %v6041, 4294901760
      %6290 = vmatpush1.msra.mxu0 %v6289
      %6291 = vmatprep.subr.mxu0 0.0
      %6292 = vmatpush1.msra.mxu0 0.0
      %6293 = vmatprep.subr.mxu0 0.0
      %6294 = vmatpush1.msra.mxu0 0.0
      %6295 = vmatprep.subr.mxu0 0.0
      %6296 = vmatpush1.msra.mxu0 0.0
      %6297 = vmatprep.subr.mxu0 0.0
      %6298 = vmatpush1.msra.mxu0 0.0
      %6299 = vmatprep.subr.mxu0 0.0
      %6300 = vmatpush1.msra.mxu0 0.0
      %6301 = vmatprep.subr.mxu0 0.0
      %6302 = vmatpush1.msra.mxu0 0.0
      %6303 = vmatprep.subr.mxu0 0.0
      %6304 = vmatpush1.msra.mxu0 0.0
      %6305 = vmatprep.subr.mxu0 0.0
      %6306 = vmatpush1.msra.mxu0 0.0
      %6307 = vmatprep.subr.mxu0 0.0
      %6308 = vmatpush1.msra.mxu0 0.0
      %6309 = vmatprep.subr.mxu0 0.0
      %6310 = vmatpush1.msra.mxu0 0.0
      %6311 = vmatprep.subr.mxu0 0.0
      %6312 = vmatpush1.msra.mxu0 0.0
      %6313 = vmatprep.subr.mxu0 0.0
      %6314 = vmatpush1.msra.mxu0 0.0
      %6315 = vmatprep.subr.mxu0 0.0
      %6316 = vmatpush1.msra.mxu0 0.0
      %6317 = vmatprep.subr.mxu0 0.0
      %6318 = vmatpush1.msra.mxu0 0.0
      %6319 = vmatprep.subr.mxu0 0.0
      %6320 = vmatpush1.msra.mxu0 0.0
      %6321 = vmatprep.subr.mxu0 0.0
      %6322 = vmatpush1.msra.mxu0 0.0
      %6323 = vmatprep.subr.mxu0 0.0
      %6324 = vmatpush1.msra.mxu0 0.0
      %6325 = vmatprep.subr.mxu0 0.0
      %6326 = vmatpush1.msra.mxu0 0.0
      %6327 = vmatprep.subr.mxu0 0.0
      %6328 = vmatpush1.msra.mxu0 0.0
      %6329 = vmatprep.subr.mxu0 0.0
      %6330 = vmatpush1.msra.mxu0 0.0
      %6331 = vmatprep.subr.mxu0 0.0
      %6332 = vmatpush1.msra.mxu0 0.0
      %6333 = vmatprep.subr.mxu0 0.0
      %6334 = vmatpush1.msra.mxu0 0.0
      %6335 = vmatprep.subr.mxu0 0.0
      %6336 = vmatpush1.msra.mxu0 0.0
      %6337 = vmatprep.subr.mxu0 0.0
      %6338 = vmatpush1.msra.mxu0 0.0
      %6339 = vmatprep.subr.mxu0 0.0
      %6340 = vmatpush1.msra.mxu0 0.0
      %6341 = vmatprep.subr.mxu0 0.0
      %6342 = vmatpush1.msra.mxu0 0.0
      %6343 = vmatprep.subr.mxu0 0.0
      %6344 = vmatpush1.msra.mxu0 0.0
      %6345 = vmatprep.subr.mxu0 0.0
      %6346 = vmatpush1.msra.mxu0 0.0
      %6347 = vmatprep.subr.mxu0 0.0
      %6348 = vmatpush1.msra.mxu0 0.0
      %6349 = vmatprep.subr.mxu0 0.0
      %6350 = vmatpush1.msra.mxu0 0.0
      %6351 = vmatprep.subr.mxu0 0.0
      %6352 = vmatpush1.msra.mxu0 0.0
      %6353 = vmatprep.mubr.f32.mxu0 0.0
      %v6354 = vand.u32 %v6048, 4294901760
      %v6355 = vsub.f32 %v6048, %v6354
      %v6356 = vand.u32 %v6355, 4294901760
      %6357 = vmatmul.mubr.f32.gmra.mrb[0].mxu0 %v6356
      %v6358 = vpop.f32.mrb[0].mxu0
      %v6359 = vadd.f32 %v6283, %v6358
      %v6360 = vpop.f32.mrb[0].mxu0
      %v6361 = vadd.f32 %v6285, %v6360
      %6362 = vdwg.mxu0
      %v6363 = vand.u32 %v6042, 4294901760
      %v6364 = vsub.f32 %v6042, %v6363
      %v6365 = vand.u32 %v6364, 4294901760
      %6366 = vmatprep.subr.mxu0 %v6365
      %v6367 = vand.u32 %v6041, 4294901760
      %v6368 = vsub.f32 %v6041, %v6367
      %v6369 = vand.u32 %v6368, 4294901760
      %6370 = vmatpush1.msra.mxu0 %v6369
      %6371 = vmatprep.subr.mxu0 0.0
      %6372 = vmatpush1.msra.mxu0 0.0
      %6373 = vmatprep.subr.mxu0 0.0
      %6374 = vmatpush1.msra.mxu0 0.0
      %6375 = vmatprep.subr.mxu0 0.0
      %6376 = vmatpush1.msra.mxu0 0.0
      %6377 = vmatprep.subr.mxu0 0.0
      %6378 = vmatpush1.msra.mxu0 0.0
      %6379 = vmatprep.subr.mxu0 0.0
      %6380 = vmatpush1.msra.mxu0 0.0
      %6381 = vmatprep.subr.mxu0 0.0
      %6382 = vmatpush1.msra.mxu0 0.0
      %6383 = vmatprep.subr.mxu0 0.0
      %6384 = vmatpush1.msra.mxu0 0.0
      %6385 = vmatprep.subr.mxu0 0.0
      %6386 = vmatpush1.msra.mxu0 0.0
      %6387 = vmatprep.subr.mxu0 0.0
      %6388 = vmatpush1.msra.mxu0 0.0
      %6389 = vmatprep.subr.mxu0 0.0
      %6390 = vmatpush1.msra.mxu0 0.0
      %6391 = vmatprep.subr.mxu0 0.0
      %6392 = vmatpush1.msra.mxu0 0.0
      %6393 = vmatprep.subr.mxu0 0.0
      %6394 = vmatpush1.msra.mxu0 0.0
      %6395 = vmatprep.subr.mxu0 0.0
      %6396 = vmatpush1.msra.mxu0 0.0
      %6397 = vmatprep.subr.mxu0 0.0
      %6398 = vmatpush1.msra.mxu0 0.0
      %6399 = vmatprep.subr.mxu0 0.0
      %6400 = vmatpush1.msra.mxu0 0.0
      %6401 = vmatprep.subr.mxu0 0.0
      %6402 = vmatpush1.msra.mxu0 0.0
      %6403 = vmatprep.subr.mxu0 0.0
      %6404 = vmatpush1.msra.mxu0 0.0
      %6405 = vmatprep.subr.mxu0 0.0
      %6406 = vmatpush1.msra.mxu0 0.0
      %6407 = vmatprep.subr.mxu0 0.0
      %6408 = vmatpush1.msra.mxu0 0.0
      %6409 = vmatprep.subr.mxu0 0.0
      %6410 = vmatpush1.msra.mxu0 0.0
      %6411 = vmatprep.subr.mxu0 0.0
      %6412 = vmatpush1.msra.mxu0 0.0
      %6413 = vmatprep.subr.mxu0 0.0
      %6414 = vmatpush1.msra.mxu0 0.0
      %6415 = vmatprep.subr.mxu0 0.0
      %6416 = vmatpush1.msra.mxu0 0.0
      %6417 = vmatprep.subr.mxu0 0.0
      %6418 = vmatpush1.msra.mxu0 0.0
      %6419 = vmatprep.subr.mxu0 0.0
      %6420 = vmatpush1.msra.mxu0 0.0
      %6421 = vmatprep.subr.mxu0 0.0
      %6422 = vmatpush1.msra.mxu0 0.0
      %6423 = vmatprep.subr.mxu0 0.0
      %6424 = vmatpush1.msra.mxu0 0.0
      %6425 = vmatprep.subr.mxu0 0.0
      %6426 = vmatpush1.msra.mxu0 0.0
      %6427 = vmatprep.subr.mxu0 0.0
      %6428 = vmatpush1.msra.mxu0 0.0
      %6429 = vmatprep.subr.mxu0 0.0
      %6430 = vmatpush1.msra.mxu0 0.0
      %6431 = vmatprep.subr.mxu0 0.0
      %6432 = vmatpush1.msra.mxu0 0.0
      %6433 = vmatprep.mubr.f32.mxu0 0.0
      %v6434 = vand.u32 %v6048, 4294901760
      %6435 = vmatmul.mubr.f32.gmra.mrb[0].mxu0 %v6434
      %v6436 = vpop.f32.mrb[0].mxu0
      %v6437 = vadd.f32 %v6359, %v6436
      %v6438 = vpop.f32.mrb[0].mxu0
      %v6439 = vadd.f32 %v6361, %v6438
      %6440 = vdwg.mxu0
      %v6441 = vand.u32 %v6042, 4294901760
      %6442 = vmatprep.subr.mxu0 %v6441
      %v6443 = vand.u32 %v6041, 4294901760
      %6444 = vmatpush1.msra.mxu0 %v6443
      %6445 = vmatprep.subr.mxu0 0.0
      %6446 = vmatpush1.msra.mxu0 0.0
      %6447 = vmatprep.subr.mxu0 0.0
      %6448 = vmatpush1.msra.mxu0 0.0
      %6449 = vmatprep.subr.mxu0 0.0
      %6450 = vmatpush1.msra.mxu0 0.0
      %6451 = vmatprep.subr.mxu0 0.0
      %6452 = vmatpush1.msra.mxu0 0.0
      %6453 = vmatprep.subr.mxu0 0.0
      %6454 = vmatpush1.msra.mxu0 0.0
      %6455 = vmatprep.subr.mxu0 0.0
      %6456 = vmatpush1.msra.mxu0 0.0
      %6457 = vmatprep.subr.mxu0 0.0
      %6458 = vmatpush1.msra.mxu0 0.0
      %6459 = vmatprep.subr.mxu0 0.0
      %6460 = vmatpush1.msra.mxu0 0.0
      %6461 = vmatprep.subr.mxu0 0.0
      %6462 = vmatpush1.msra.mxu0 0.0
      %6463 = vmatprep.subr.mxu0 0.0
      %6464 = vmatpush1.msra.mxu0 0.0
      %6465 = vmatprep.subr.mxu0 0.0
      %6466 = vmatpush1.msra.mxu0 0.0
      %6467 = vmatprep.subr.mxu0 0.0
      %6468 = vmatpush1.msra.mxu0 0.0
      %6469 = vmatprep.subr.mxu0 0.0
      %6470 = vmatpush1.msra.mxu0 0.0
      %6471 = vmatprep.subr.mxu0 0.0
      %6472 = vmatpush1.msra.mxu0 0.0
      %6473 = vmatprep.subr.mxu0 0.0
      %6474 = vmatpush1.msra.mxu0 0.0
      %6475 = vmatprep.subr.mxu0 0.0
      %6476 = vmatpush1.msra.mxu0 0.0
      %6477 = vmatprep.subr.mxu0 0.0
      %6478 = vmatpush1.msra.mxu0 0.0
      %6479 = vmatprep.subr.mxu0 0.0
      %6480 = vmatpush1.msra.mxu0 0.0
      %6481 = vmatprep.subr.mxu0 0.0
      %6482 = vmatpush1.msra.mxu0 0.0
      %6483 = vmatprep.subr.mxu0 0.0
      %6484 = vmatpush1.msra.mxu0 0.0
      %6485 = vmatprep.subr.mxu0 0.0
      %6486 = vmatpush1.msra.mxu0 0.0
      %6487 = vmatprep.subr.mxu0 0.0
      %6488 = vmatpush1.msra.mxu0 0.0
      %6489 = vmatprep.subr.mxu0 0.0
      %6490 = vmatpush1.msra.mxu0 0.0
      %6491 = vmatprep.subr.mxu0 0.0
      %6492 = vmatpush1.msra.mxu0 0.0
      %6493 = vmatprep.subr.mxu0 0.0
      %6494 = vmatpush1.msra.mxu0 0.0
      %6495 = vmatprep.subr.mxu0 0.0
      %6496 = vmatpush1.msra.mxu0 0.0
      %6497 = vmatprep.subr.mxu0 0.0
      %6498 = vmatpush1.msra.mxu0 0.0
      %6499 = vmatprep.subr.mxu0 0.0
      %6500 = vmatpush1.msra.mxu0 0.0
      %6501 = vmatprep.subr.mxu0 0.0
      %6502 = vmatpush1.msra.mxu0 0.0
      %6503 = vmatprep.subr.mxu0 0.0
      %6504 = vmatpush1.msra.mxu0 0.0
      %6505 = vmatprep.subr.mxu0 0.0
      %6506 = vmatpush1.msra.mxu0 0.0
      %6507 = vmatprep.mubr.f32.mxu0 0.0
      %v6508 = vand.u32 %v6048, 4294901760
      %6509 = vmatmul.mubr.f32.gmra.mrb[0].mxu0 %v6508
      %v6510 = vpop.f32.mrb[0].mxu0
      %v6511 = vadd.f32 %v6437, %v6510
      %v6512 = vpop.f32.mrb[0].mxu0
      %v6513 = vadd.f32 %v6439, %v6512
      %6514 = vdwg.mxu0
      %v6515 = vadd.f32 %v6027, %v6511
      %v6516 = vadd.f32 %v6028, %v6513
      %s6517 = scalar_lea.vmem %s3, 32
      %v6518 = vld [vmem:[%s6517] sm:$0xff]
      %v6520 = vsel %vm292, %v6518, 0
      %v6522 = vand.u32 %v4585, 4294901760
      %6523 = vmatprep.subr.mxu0 %v6522
      %v6524 = vand.u32 %v4584, 4294901760
      %6525 = vmatpush1.msra.mxu0 %v6524
      %6526 = vmatprep.subr.mxu0 0.0
      %6527 = vmatpush1.msra.mxu0 0.0
      %6528 = vmatprep.subr.mxu0 0.0
      %6529 = vmatpush1.msra.mxu0 0.0
      %6530 = vmatprep.subr.mxu0 0.0
      %6531 = vmatpush1.msra.mxu0 0.0
      %6532 = vmatprep.subr.mxu0 0.0
      %6533 = vmatpush1.msra.mxu0 0.0
      %6534 = vmatprep.subr.mxu0 0.0
      %6535 = vmatpush1.msra.mxu0 0.0
      %6536 = vmatprep.subr.mxu0 0.0
      %6537 = vmatpush1.msra.mxu0 0.0
      %6538 = vmatprep.subr.mxu0 0.0
      %6539 = vmatpush1.msra.mxu0 0.0
      %6540 = vmatprep.subr.mxu0 0.0
      %6541 = vmatpush1.msra.mxu0 0.0
      %6542 = vmatprep.subr.mxu0 0.0
      %6543 = vmatpush1.msra.mxu0 0.0
      %6544 = vmatprep.subr.mxu0 0.0
      %6545 = vmatpush1.msra.mxu0 0.0
      %6546 = vmatprep.subr.mxu0 0.0
      %6547 = vmatpush1.msra.mxu0 0.0
      %6548 = vmatprep.subr.mxu0 0.0
      %6549 = vmatpush1.msra.mxu0 0.0
      %6550 = vmatprep.subr.mxu0 0.0
      %6551 = vmatpush1.msra.mxu0 0.0
      %6552 = vmatprep.subr.mxu0 0.0
      %6553 = vmatpush1.msra.mxu0 0.0
      %6554 = vmatprep.subr.mxu0 0.0
      %6555 = vmatpush1.msra.mxu0 0.0
      %6556 = vmatprep.subr.mxu0 0.0
      %6557 = vmatpush1.msra.mxu0 0.0
      %6558 = vmatprep.subr.mxu0 0.0
      %6559 = vmatpush1.msra.mxu0 0.0
      %6560 = vmatprep.subr.mxu0 0.0
      %6561 = vmatpush1.msra.mxu0 0.0
      %6562 = vmatprep.subr.mxu0 0.0
      %6563 = vmatpush1.msra.mxu0 0.0
      %6564 = vmatprep.subr.mxu0 0.0
      %6565 = vmatpush1.msra.mxu0 0.0
      %6566 = vmatprep.subr.mxu0 0.0
      %6567 = vmatpush1.msra.mxu0 0.0
      %6568 = vmatprep.subr.mxu0 0.0
      %6569 = vmatpush1.msra.mxu0 0.0
      %6570 = vmatprep.subr.mxu0 0.0
      %6571 = vmatpush1.msra.mxu0 0.0
      %6572 = vmatprep.subr.mxu0 0.0
      %6573 = vmatpush1.msra.mxu0 0.0
      %6574 = vmatprep.subr.mxu0 0.0
      %6575 = vmatpush1.msra.mxu0 0.0
      %6576 = vmatprep.subr.mxu0 0.0
      %6577 = vmatpush1.msra.mxu0 0.0
      %6578 = vmatprep.subr.mxu0 0.0
      %6579 = vmatpush1.msra.mxu0 0.0
      %6580 = vmatprep.subr.mxu0 0.0
      %6581 = vmatpush1.msra.mxu0 0.0
      %6582 = vmatprep.subr.mxu0 0.0
      %6583 = vmatpush1.msra.mxu0 0.0
      %6584 = vmatprep.subr.mxu0 0.0
      %6585 = vmatpush1.msra.mxu0 0.0
      %6586 = vmatprep.subr.mxu0 0.0
      %6587 = vmatpush1.msra.mxu0 0.0
      %6588 = vmatprep.mubr.f32.mxu0 0.0
      %v6589 = vand.u32 %v6520, 4294901760
      %v6590 = vsub.f32 %v6520, %v6589
      %v6591 = vand.u32 %v6590, 4294901760
      %v6592 = vsub.f32 %v6590, %v6591
      %v6593 = vand.u32 %v6592, 4294901760
      %6594 = vmatmul.mubr.f32.gmra.mrb[0].mxu0 %v6593
      %v6595 = vpop.f32.mrb[0].mxu0
      %v6596 = vadd.f32 0.0, %v6595
      %v6597 = vpop.f32.mrb[0].mxu0
      %v6598 = vadd.f32 0.0, %v6597
      %6599 = vdwg.mxu0
      %v6600 = vand.u32 %v4585, 4294901760
      %v6601 = vsub.f32 %v4585, %v6600
      %v6602 = vand.u32 %v6601, 4294901760
      %v6603 = vsub.f32 %v6601, %v6602
      %v6604 = vand.u32 %v6603, 4294901760
      %6605 = vmatprep.subr.mxu0 %v6604
      %v6606 = vand.u32 %v4584, 4294901760
      %v6607 = vsub.f32 %v4584, %v6606
      %v6608 = vand.u32 %v6607, 4294901760
      %v6609 = vsub.f32 %v6607, %v6608
      %v6610 = vand.u32 %v6609, 4294901760
      %6611 = vmatpush1.msra.mxu0 %v6610
      %6612 = vmatprep.subr.mxu0 0.0
      %6613 = vmatpush1.msra.mxu0 0.0
      %6614 = vmatprep.subr.mxu0 0.0
      %6615 = vmatpush1.msra.mxu0 0.0
      %6616 = vmatprep.subr.mxu0 0.0
      %6617 = vmatpush1.msra.mxu0 0.0
      %6618 = vmatprep.subr.mxu0 0.0
      %6619 = vmatpush1.msra.mxu0 0.0
      %6620 = vmatprep.subr.mxu0 0.0
      %6621 = vmatpush1.msra.mxu0 0.0
      %6622 = vmatprep.subr.mxu0 0.0
      %6623 = vmatpush1.msra.mxu0 0.0
      %6624 = vmatprep.subr.mxu0 0.0
      %6625 = vmatpush1.msra.mxu0 0.0
      %6626 = vmatprep.subr.mxu0 0.0
      %6627 = vmatpush1.msra.mxu0 0.0
      %6628 = vmatprep.subr.mxu0 0.0
      %6629 = vmatpush1.msra.mxu0 0.0
      %6630 = vmatprep.subr.mxu0 0.0
      %6631 = vmatpush1.msra.mxu0 0.0
      %6632 = vmatprep.subr.mxu0 0.0
      %6633 = vmatpush1.msra.mxu0 0.0
      %6634 = vmatprep.subr.mxu0 0.0
      %6635 = vmatpush1.msra.mxu0 0.0
      %6636 = vmatprep.subr.mxu0 0.0
      %6637 = vmatpush1.msra.mxu0 0.0
      %6638 = vmatprep.subr.mxu0 0.0
      %6639 = vmatpush1.msra.mxu0 0.0
      %6640 = vmatprep.subr.mxu0 0.0
      %6641 = vmatpush1.msra.mxu0 0.0
      %6642 = vmatprep.subr.mxu0 0.0
      %6643 = vmatpush1.msra.mxu0 0.0
      %6644 = vmatprep.subr.mxu0 0.0
      %6645 = vmatpush1.msra.mxu0 0.0
      %6646 = vmatprep.subr.mxu0 0.0
      %6647 = vmatpush1.msra.mxu0 0.0
      %6648 = vmatprep.subr.mxu0 0.0
      %6649 = vmatpush1.msra.mxu0 0.0
      %6650 = vmatprep.subr.mxu0 0.0
      %6651 = vmatpush1.msra.mxu0 0.0
      %6652 = vmatprep.subr.mxu0 0.0
      %6653 = vmatpush1.msra.mxu0 0.0
      %6654 = vmatprep.subr.mxu0 0.0
      %6655 = vmatpush1.msra.mxu0 0.0
      %6656 = vmatprep.subr.mxu0 0.0
      %6657 = vmatpush1.msra.mxu0 0.0
      %6658 = vmatprep.subr.mxu0 0.0
      %6659 = vmatpush1.msra.mxu0 0.0
      %6660 = vmatprep.subr.mxu0 0.0
      %6661 = vmatpush1.msra.mxu0 0.0
      %6662 = vmatprep.subr.mxu0 0.0
      %6663 = vmatpush1.msra.mxu0 0.0
      %6664 = vmatprep.subr.mxu0 0.0
      %6665 = vmatpush1.msra.mxu0 0.0
      %6666 = vmatprep.subr.mxu0 0.0
      %6667 = vmatpush1.msra.mxu0 0.0
      %6668 = vmatprep.subr.mxu0 0.0
      %6669 = vmatpush1.msra.mxu0 0.0
      %6670 = vmatprep.subr.mxu0 0.0
      %6671 = vmatpush1.msra.mxu0 0.0
      %6672 = vmatprep.subr.mxu0 0.0
      %6673 = vmatpush1.msra.mxu0 0.0
      %6674 = vmatprep.mubr.f32.mxu0 0.0
      %v6675 = vand.u32 %v6520, 4294901760
      %6676 = vmatmul.mubr.f32.gmra.mrb[0].mxu0 %v6675
      %v6677 = vpop.f32.mrb[0].mxu0
      %v6678 = vadd.f32 %v6596, %v6677
      %v6679 = vpop.f32.mrb[0].mxu0
      %v6680 = vadd.f32 %v6598, %v6679
      %6681 = vdwg.mxu0
      %v6682 = vand.u32 %v4585, 4294901760
      %v6683 = vsub.f32 %v4585, %v6682
      %6684 = vmatprep.subr.mxu0 %v6683
      %v6685 = vand.u32 %v4584, 4294901760
      %v6686 = vsub.f32 %v4584, %v6685
      %6687 = vmatpush1.msra.mxu0 %v6686
      %6688 = vmatprep.subr.mxu0 0.0
      %6689 = vmatpush1.msra.mxu0 0.0
      %6690 = vmatprep.subr.mxu0 0.0
      %6691 = vmatpush1.msra.mxu0 0.0
      %6692 = vmatprep.subr.mxu0 0.0
      %6693 = vmatpush1.msra.mxu0 0.0
      %6694 = vmatprep.subr.mxu0 0.0
      %6695 = vmatpush1.msra.mxu0 0.0
      %6696 = vmatprep.subr.mxu0 0.0
      %6697 = vmatpush1.msra.mxu0 0.0
      %6698 = vmatprep.subr.mxu0 0.0
      %6699 = vmatpush1.msra.mxu0 0.0
      %6700 = vmatprep.subr.mxu0 0.0
      %6701 = vmatpush1.msra.mxu0 0.0
      %6702 = vmatprep.subr.mxu0 0.0
      %6703 = vmatpush1.msra.mxu0 0.0
      %6704 = vmatprep.subr.mxu0 0.0
      %6705 = vmatpush1.msra.mxu0 0.0
      %6706 = vmatprep.subr.mxu0 0.0
      %6707 = vmatpush1.msra.mxu0 0.0
      %6708 = vmatprep.subr.mxu0 0.0
      %6709 = vmatpush1.msra.mxu0 0.0
      %6710 = vmatprep.subr.mxu0 0.0
      %6711 = vmatpush1.msra.mxu0 0.0
      %6712 = vmatprep.subr.mxu0 0.0
      %6713 = vmatpush1.msra.mxu0 0.0
      %6714 = vmatprep.subr.mxu0 0.0
      %6715 = vmatpush1.msra.mxu0 0.0
      %6716 = vmatprep.subr.mxu0 0.0
      %6717 = vmatpush1.msra.mxu0 0.0
      %6718 = vmatprep.subr.mxu0 0.0
      %6719 = vmatpush1.msra.mxu0 0.0
      %6720 = vmatprep.subr.mxu0 0.0
      %6721 = vmatpush1.msra.mxu0 0.0
      %6722 = vmatprep.subr.mxu0 0.0
      %6723 = vmatpush1.msra.mxu0 0.0
      %6724 = vmatprep.subr.mxu0 0.0
      %6725 = vmatpush1.msra.mxu0 0.0
      %6726 = vmatprep.subr.mxu0 0.0
      %6727 = vmatpush1.msra.mxu0 0.0
      %6728 = vmatprep.subr.mxu0 0.0
      %6729 = vmatpush1.msra.mxu0 0.0
      %6730 = vmatprep.subr.mxu0 0.0
      %6731 = vmatpush1.msra.mxu0 0.0
      %6732 = vmatprep.subr.mxu0 0.0
      %6733 = vmatpush1.msra.mxu0 0.0
      %6734 = vmatprep.subr.mxu0 0.0
      %6735 = vmatpush1.msra.mxu0 0.0
      %6736 = vmatprep.subr.mxu0 0.0
      %6737 = vmatpush1.msra.mxu0 0.0
      %6738 = vmatprep.subr.mxu0 0.0
      %6739 = vmatpush1.msra.mxu0 0.0
      %6740 = vmatprep.subr.mxu0 0.0
      %6741 = vmatpush1.msra.mxu0 0.0
      %6742 = vmatprep.subr.mxu0 0.0
      %6743 = vmatpush1.msra.mxu0 0.0
      %6744 = vmatprep.subr.mxu0 0.0
      %6745 = vmatpush1.msra.mxu0 0.0
      %6746 = vmatprep.subr.mxu0 0.0
      %6747 = vmatpush1.msra.mxu0 0.0
      %6748 = vmatprep.subr.mxu0 0.0
      %6749 = vmatpush1.msra.mxu0 0.0
      %6750 = vmatprep.mubr.f32.mxu0 0.0
      %v6751 = vand.u32 %v6520, 4294901760
      %v6752 = vsub.f32 %v6520, %v6751
      %6753 = vmatmul.mubr.f32.gmra.mrb[0].mxu0 %v6752
      %v6754 = vpop.f32.mrb[0].mxu0
      %v6755 = vadd.f32 %v6678, %v6754
      %v6756 = vpop.f32.mrb[0].mxu0
      %v6757 = vadd.f32 %v6680, %v6756
      %6758 = vdwg.mxu0
      %v6759 = vand.u32 %v4585, 4294901760
      %6760 = vmatprep.subr.mxu0 %v6759
      %v6761 = vand.u32 %v4584, 4294901760
      %6762 = vmatpush1.msra.mxu0 %v6761
      %6763 = vmatprep.subr.mxu0 0.0
      %6764 = vmatpush1.msra.mxu0 0.0
      %6765 = vmatprep.subr.mxu0 0.0
      %6766 = vmatpush1.msra.mxu0 0.0
      %6767 = vmatprep.subr.mxu0 0.0
      %6768 = vmatpush1.msra.mxu0 0.0
      %6769 = vmatprep.subr.mxu0 0.0
      %6770 = vmatpush1.msra.mxu0 0.0
      %6771 = vmatprep.subr.mxu0 0.0
      %6772 = vmatpush1.msra.mxu0 0.0
      %6773 = vmatprep.subr.mxu0 0.0
      %6774 = vmatpush1.msra.mxu0 0.0
      %6775 = vmatprep.subr.mxu0 0.0
      %6776 = vmatpush1.msra.mxu0 0.0
      %6777 = vmatprep.subr.mxu0 0.0
      %6778 = vmatpush1.msra.mxu0 0.0
      %6779 = vmatprep.subr.mxu0 0.0
      %6780 = vmatpush1.msra.mxu0 0.0
      %6781 = vmatprep.subr.mxu0 0.0
      %6782 = vmatpush1.msra.mxu0 0.0
      %6783 = vmatprep.subr.mxu0 0.0
      %6784 = vmatpush1.msra.mxu0 0.0
      %6785 = vmatprep.subr.mxu0 0.0
      %6786 = vmatpush1.msra.mxu0 0.0
      %6787 = vmatprep.subr.mxu0 0.0
      %6788 = vmatpush1.msra.mxu0 0.0
      %6789 = vmatprep.subr.mxu0 0.0
      %6790 = vmatpush1.msra.mxu0 0.0
      %6791 = vmatprep.subr.mxu0 0.0
      %6792 = vmatpush1.msra.mxu0 0.0
      %6793 = vmatprep.subr.mxu0 0.0
      %6794 = vmatpush1.msra.mxu0 0.0
      %6795 = vmatprep.subr.mxu0 0.0
      %6796 = vmatpush1.msra.mxu0 0.0
      %6797 = vmatprep.subr.mxu0 0.0
      %6798 = vmatpush1.msra.mxu0 0.0
      %6799 = vmatprep.subr.mxu0 0.0
      %6800 = vmatpush1.msra.mxu0 0.0
      %6801 = vmatprep.subr.mxu0 0.0
      %6802 = vmatpush1.msra.mxu0 0.0
      %6803 = vmatprep.subr.mxu0 0.0
      %6804 = vmatpush1.msra.mxu0 0.0
      %6805 = vmatprep.subr.mxu0 0.0
      %6806 = vmatpush1.msra.mxu0 0.0
      %6807 = vmatprep.subr.mxu0 0.0
      %6808 = vmatpush1.msra.mxu0 0.0
      %6809 = vmatprep.subr.mxu0 0.0
      %6810 = vmatpush1.msra.mxu0 0.0
      %6811 = vmatprep.subr.mxu0 0.0
      %6812 = vmatpush1.msra.mxu0 0.0
      %6813 = vmatprep.subr.mxu0 0.0
      %6814 = vmatpush1.msra.mxu0 0.0
      %6815 = vmatprep.subr.mxu0 0.0
      %6816 = vmatpush1.msra.mxu0 0.0
      %6817 = vmatprep.subr.mxu0 0.0
      %6818 = vmatpush1.msra.mxu0 0.0
      %6819 = vmatprep.subr.mxu0 0.0
      %6820 = vmatpush1.msra.mxu0 0.0
      %6821 = vmatprep.subr.mxu0 0.0
      %6822 = vmatpush1.msra.mxu0 0.0
      %6823 = vmatprep.subr.mxu0 0.0
      %6824 = vmatpush1.msra.mxu0 0.0
      %6825 = vmatprep.mubr.f32.mxu0 0.0
      %v6826 = vand.u32 %v6520, 4294901760
      %v6827 = vsub.f32 %v6520, %v6826
      %v6828 = vand.u32 %v6827, 4294901760
      %6829 = vmatmul.mubr.f32.gmra.mrb[0].mxu0 %v6828
      %v6830 = vpop.f32.mrb[0].mxu0
      %v6831 = vadd.f32 %v6755, %v6830
      %v6832 = vpop.f32.mrb[0].mxu0
      %v6833 = vadd.f32 %v6757, %v6832
      %6834 = vdwg.mxu0
      %v6835 = vand.u32 %v4585, 4294901760
      %v6836 = vsub.f32 %v4585, %v6835
      %v6837 = vand.u32 %v6836, 4294901760
      %6838 = vmatprep.subr.mxu0 %v6837
      %v6839 = vand.u32 %v4584, 4294901760
      %v6840 = vsub.f32 %v4584, %v6839
      %v6841 = vand.u32 %v6840, 4294901760
      %6842 = vmatpush1.msra.mxu0 %v6841
      %6843 = vmatprep.subr.mxu0 0.0
      %6844 = vmatpush1.msra.mxu0 0.0
      %6845 = vmatprep.subr.mxu0 0.0
      %6846 = vmatpush1.msra.mxu0 0.0
      %6847 = vmatprep.subr.mxu0 0.0
      %6848 = vmatpush1.msra.mxu0 0.0
      %6849 = vmatprep.subr.mxu0 0.0
      %6850 = vmatpush1.msra.mxu0 0.0
      %6851 = vmatprep.subr.mxu0 0.0
      %6852 = vmatpush1.msra.mxu0 0.0
      %6853 = vmatprep.subr.mxu0 0.0
      %6854 = vmatpush1.msra.mxu0 0.0
      %6855 = vmatprep.subr.mxu0 0.0
      %6856 = vmatpush1.msra.mxu0 0.0
      %6857 = vmatprep.subr.mxu0 0.0
      %6858 = vmatpush1.msra.mxu0 0.0
      %6859 = vmatprep.subr.mxu0 0.0
      %6860 = vmatpush1.msra.mxu0 0.0
      %6861 = vmatprep.subr.mxu0 0.0
      %6862 = vmatpush1.msra.mxu0 0.0
      %6863 = vmatprep.subr.mxu0 0.0
      %6864 = vmatpush1.msra.mxu0 0.0
      %6865 = vmatprep.subr.mxu0 0.0
      %6866 = vmatpush1.msra.mxu0 0.0
      %6867 = vmatprep.subr.mxu0 0.0
      %6868 = vmatpush1.msra.mxu0 0.0
      %6869 = vmatprep.subr.mxu0 0.0
      %6870 = vmatpush1.msra.mxu0 0.0
      %6871 = vmatprep.subr.mxu0 0.0
      %6872 = vmatpush1.msra.mxu0 0.0
      %6873 = vmatprep.subr.mxu0 0.0
      %6874 = vmatpush1.msra.mxu0 0.0
      %6875 = vmatprep.subr.mxu0 0.0
      %6876 = vmatpush1.msra.mxu0 0.0
      %6877 = vmatprep.subr.mxu0 0.0
      %6878 = vmatpush1.msra.mxu0 0.0
      %6879 = vmatprep.subr.mxu0 0.0
      %6880 = vmatpush1.msra.mxu0 0.0
      %6881 = vmatprep.subr.mxu0 0.0
      %6882 = vmatpush1.msra.mxu0 0.0
      %6883 = vmatprep.subr.mxu0 0.0
      %6884 = vmatpush1.msra.mxu0 0.0
      %6885 = vmatprep.subr.mxu0 0.0
      %6886 = vmatpush1.msra.mxu0 0.0
      %6887 = vmatprep.subr.mxu0 0.0
      %6888 = vmatpush1.msra.mxu0 0.0
      %6889 = vmatprep.subr.mxu0 0.0
      %6890 = vmatpush1.msra.mxu0 0.0
      %6891 = vmatprep.subr.mxu0 0.0
      %6892 = vmatpush1.msra.mxu0 0.0
      %6893 = vmatprep.subr.mxu0 0.0
      %6894 = vmatpush1.msra.mxu0 0.0
      %6895 = vmatprep.subr.mxu0 0.0
      %6896 = vmatpush1.msra.mxu0 0.0
      %6897 = vmatprep.subr.mxu0 0.0
      %6898 = vmatpush1.msra.mxu0 0.0
      %6899 = vmatprep.subr.mxu0 0.0
      %6900 = vmatpush1.msra.mxu0 0.0
      %6901 = vmatprep.subr.mxu0 0.0
      %6902 = vmatpush1.msra.mxu0 0.0
      %6903 = vmatprep.subr.mxu0 0.0
      %6904 = vmatpush1.msra.mxu0 0.0
      %6905 = vmatprep.mubr.f32.mxu0 0.0
      %v6906 = vand.u32 %v6520, 4294901760
      %6907 = vmatmul.mubr.f32.gmra.mrb[0].mxu0 %v6906
      %v6908 = vpop.f32.mrb[0].mxu0
      %v6909 = vadd.f32 %v6831, %v6908
      %v6910 = vpop.f32.mrb[0].mxu0
      %v6911 = vadd.f32 %v6833, %v6910
      %6912 = vdwg.mxu0
      %v6913 = vand.u32 %v4585, 4294901760
      %6914 = vmatprep.subr.mxu0 %v6913
      %v6915 = vand.u32 %v4584, 4294901760
      %6916 = vmatpush1.msra.mxu0 %v6915
      %6917 = vmatprep.subr.mxu0 0.0
      %6918 = vmatpush1.msra.mxu0 0.0
      %6919 = vmatprep.subr.mxu0 0.0
      %6920 = vmatpush1.msra.mxu0 0.0
      %6921 = vmatprep.subr.mxu0 0.0
      %6922 = vmatpush1.msra.mxu0 0.0
      %6923 = vmatprep.subr.mxu0 0.0
      %6924 = vmatpush1.msra.mxu0 0.0
      %6925 = vmatprep.subr.mxu0 0.0
      %6926 = vmatpush1.msra.mxu0 0.0
      %6927 = vmatprep.subr.mxu0 0.0
      %6928 = vmatpush1.msra.mxu0 0.0
      %6929 = vmatprep.subr.mxu0 0.0
      %6930 = vmatpush1.msra.mxu0 0.0
      %6931 = vmatprep.subr.mxu0 0.0
      %6932 = vmatpush1.msra.mxu0 0.0
      %6933 = vmatprep.subr.mxu0 0.0
      %6934 = vmatpush1.msra.mxu0 0.0
      %6935 = vmatprep.subr.mxu0 0.0
      %6936 = vmatpush1.msra.mxu0 0.0
      %6937 = vmatprep.subr.mxu0 0.0
      %6938 = vmatpush1.msra.mxu0 0.0
      %6939 = vmatprep.subr.mxu0 0.0
      %6940 = vmatpush1.msra.mxu0 0.0
      %6941 = vmatprep.subr.mxu0 0.0
      %6942 = vmatpush1.msra.mxu0 0.0
      %6943 = vmatprep.subr.mxu0 0.0
      %6944 = vmatpush1.msra.mxu0 0.0
      %6945 = vmatprep.subr.mxu0 0.0
      %6946 = vmatpush1.msra.mxu0 0.0
      %6947 = vmatprep.subr.mxu0 0.0
      %6948 = vmatpush1.msra.mxu0 0.0
      %6949 = vmatprep.subr.mxu0 0.0
      %6950 = vmatpush1.msra.mxu0 0.0
      %6951 = vmatprep.subr.mxu0 0.0
      %6952 = vmatpush1.msra.mxu0 0.0
      %6953 = vmatprep.subr.mxu0 0.0
      %6954 = vmatpush1.msra.mxu0 0.0
      %6955 = vmatprep.subr.mxu0 0.0
      %6956 = vmatpush1.msra.mxu0 0.0
      %6957 = vmatprep.subr.mxu0 0.0
      %6958 = vmatpush1.msra.mxu0 0.0
      %6959 = vmatprep.subr.mxu0 0.0
      %6960 = vmatpush1.msra.mxu0 0.0
      %6961 = vmatprep.subr.mxu0 0.0
      %6962 = vmatpush1.msra.mxu0 0.0
      %6963 = vmatprep.subr.mxu0 0.0
      %6964 = vmatpush1.msra.mxu0 0.0
      %6965 = vmatprep.subr.mxu0 0.0
      %6966 = vmatpush1.msra.mxu0 0.0
      %6967 = vmatprep.subr.mxu0 0.0
      %6968 = vmatpush1.msra.mxu0 0.0
      %6969 = vmatprep.subr.mxu0 0.0
      %6970 = vmatpush1.msra.mxu0 0.0
      %6971 = vmatprep.subr.mxu0 0.0
      %6972 = vmatpush1.msra.mxu0 0.0
      %6973 = vmatprep.subr.mxu0 0.0
      %6974 = vmatpush1.msra.mxu0 0.0
      %6975 = vmatprep.subr.mxu0 0.0
      %6976 = vmatpush1.msra.mxu0 0.0
      %6977 = vmatprep.subr.mxu0 0.0
      %6978 = vmatpush1.msra.mxu0 0.0
      %6979 = vmatprep.mubr.f32.mxu0 0.0
      %v6980 = vand.u32 %v6520, 4294901760
      %6981 = vmatmul.mubr.f32.gmra.mrb[0].mxu0 %v6980
      %v6982 = vpop.f32.mrb[0].mxu0
      %v6983 = vadd.f32 %v6909, %v6982
      %v6984 = vpop.f32.mrb[0].mxu0
      %v6985 = vadd.f32 %v6911, %v6984
      %6986 = vdwg.mxu0
      %v6987 = vadd.f32 %v6515, %v6983
      %v6988 = vadd.f32 %v6516, %v6985
      %s6989 = scalar_lea.vmem %s3, 40
      %v6990 = vld [vmem:[%s6989] sm:$0xff]
      %v6992 = vsel %vm292, %v6990, 0
      %v6994 = vand.u32 %v6044, 4294901760
      %6995 = vmatprep.subr.mxu0 %v6994
      %v6996 = vand.u32 %v6043, 4294901760
      %6997 = vmatpush1.msra.mxu0 %v6996
      %6998 = vmatprep.subr.mxu0 0.0
      %6999 = vmatpush1.msra.mxu0 0.0
      %7000 = vmatprep.subr.mxu0 0.0
      %7001 = vmatpush1.msra.mxu0 0.0
      %7002 = vmatprep.subr.mxu0 0.0
      %7003 = vmatpush1.msra.mxu0 0.0
      %7004 = vmatprep.subr.mxu0 0.0
      %7005 = vmatpush1.msra.mxu0 0.0
      %7006 = vmatprep.subr.mxu0 0.0
      %7007 = vmatpush1.msra.mxu0 0.0
      %7008 = vmatprep.subr.mxu0 0.0
      %7009 = vmatpush1.msra.mxu0 0.0
      %7010 = vmatprep.subr.mxu0 0.0
      %7011 = vmatpush1.msra.mxu0 0.0
      %7012 = vmatprep.subr.mxu0 0.0
      %7013 = vmatpush1.msra.mxu0 0.0
      %7014 = vmatprep.subr.mxu0 0.0
      %7015 = vmatpush1.msra.mxu0 0.0
      %7016 = vmatprep.subr.mxu0 0.0
      %7017 = vmatpush1.msra.mxu0 0.0
      %7018 = vmatprep.subr.mxu0 0.0
      %7019 = vmatpush1.msra.mxu0 0.0
      %7020 = vmatprep.subr.mxu0 0.0
      %7021 = vmatpush1.msra.mxu0 0.0
      %7022 = vmatprep.subr.mxu0 0.0
      %7023 = vmatpush1.msra.mxu0 0.0
      %7024 = vmatprep.subr.mxu0 0.0
      %7025 = vmatpush1.msra.mxu0 0.0
      %7026 = vmatprep.subr.mxu0 0.0
      %7027 = vmatpush1.msra.mxu0 0.0
      %7028 = vmatprep.subr.mxu0 0.0
      %7029 = vmatpush1.msra.mxu0 0.0
      %7030 = vmatprep.subr.mxu0 0.0
      %7031 = vmatpush1.msra.mxu0 0.0
      %7032 = vmatprep.subr.mxu0 0.0
      %7033 = vmatpush1.msra.mxu0 0.0
      %7034 = vmatprep.subr.mxu0 0.0
      %7035 = vmatpush1.msra.mxu0 0.0
      %7036 = vmatprep.subr.mxu0 0.0
      %7037 = vmatpush1.msra.mxu0 0.0
      %7038 = vmatprep.subr.mxu0 0.0
      %7039 = vmatpush1.msra.mxu0 0.0
      %7040 = vmatprep.subr.mxu0 0.0
      %7041 = vmatpush1.msra.mxu0 0.0
      %7042 = vmatprep.subr.mxu0 0.0
      %7043 = vmatpush1.msra.mxu0 0.0
      %7044 = vmatprep.subr.mxu0 0.0
      %7045 = vmatpush1.msra.mxu0 0.0
      %7046 = vmatprep.subr.mxu0 0.0
      %7047 = vmatpush1.msra.mxu0 0.0
      %7048 = vmatprep.subr.mxu0 0.0
      %7049 = vmatpush1.msra.mxu0 0.0
      %7050 = vmatprep.subr.mxu0 0.0
      %7051 = vmatpush1.msra.mxu0 0.0
      %7052 = vmatprep.subr.mxu0 0.0
      %7053 = vmatpush1.msra.mxu0 0.0
      %7054 = vmatprep.subr.mxu0 0.0
      %7055 = vmatpush1.msra.mxu0 0.0
      %7056 = vmatprep.subr.mxu0 0.0
      %7057 = vmatpush1.msra.mxu0 0.0
      %7058 = vmatprep.subr.mxu0 0.0
      %7059 = vmatpush1.msra.mxu0 0.0
      %7060 = vmatprep.mubr.f32.mxu0 0.0
      %v7061 = vand.u32 %v6992, 4294901760
      %v7062 = vsub.f32 %v6992, %v7061
      %v7063 = vand.u32 %v7062, 4294901760
      %v7064 = vsub.f32 %v7062, %v7063
      %v7065 = vand.u32 %v7064, 4294901760
      %7066 = vmatmul.mubr.f32.gmra.mrb[0].mxu0 %v7065
      %v7067 = vpop.f32.mrb[0].mxu0
      %v7068 = vadd.f32 0.0, %v7067
      %v7069 = vpop.f32.mrb[0].mxu0
      %v7070 = vadd.f32 0.0, %v7069
      %7071 = vdwg.mxu0
      %v7072 = vand.u32 %v6044, 4294901760
      %v7073 = vsub.f32 %v6044, %v7072
      %v7074 = vand.u32 %v7073, 4294901760
      %v7075 = vsub.f32 %v7073, %v7074
      %v7076 = vand.u32 %v7075, 4294901760
      %7077 = vmatprep.subr.mxu0 %v7076
      %v7078 = vand.u32 %v6043, 4294901760
      %v7079 = vsub.f32 %v6043, %v7078
      %v7080 = vand.u32 %v7079, 4294901760
      %v7081 = vsub.f32 %v7079, %v7080
      %v7082 = vand.u32 %v7081, 4294901760
      %7083 = vmatpush1.msra.mxu0 %v7082
      %7084 = vmatprep.subr.mxu0 0.0
      %7085 = vmatpush1.msra.mxu0 0.0
      %7086 = vmatprep.subr.mxu0 0.0
      %7087 = vmatpush1.msra.mxu0 0.0
      %7088 = vmatprep.subr.mxu0 0.0
      %7089 = vmatpush1.msra.mxu0 0.0
      %7090 = vmatprep.subr.mxu0 0.0
      %7091 = vmatpush1.msra.mxu0 0.0
      %7092 = vmatprep.subr.mxu0 0.0
      %7093 = vmatpush1.msra.mxu0 0.0
      %7094 = vmatprep.subr.mxu0 0.0
      %7095 = vmatpush1.msra.mxu0 0.0
      %7096 = vmatprep.subr.mxu0 0.0
      %7097 = vmatpush1.msra.mxu0 0.0
      %7098 = vmatprep.subr.mxu0 0.0
      %7099 = vmatpush1.msra.mxu0 0.0
      %7100 = vmatprep.subr.mxu0 0.0
      %7101 = vmatpush1.msra.mxu0 0.0
      %7102 = vmatprep.subr.mxu0 0.0
      %7103 = vmatpush1.msra.mxu0 0.0
      %7104 = vmatprep.subr.mxu0 0.0
      %7105 = vmatpush1.msra.mxu0 0.0
      %7106 = vmatprep.subr.mxu0 0.0
      %7107 = vmatpush1.msra.mxu0 0.0
      %7108 = vmatprep.subr.mxu0 0.0
      %7109 = vmatpush1.msra.mxu0 0.0
      %7110 = vmatprep.subr.mxu0 0.0
      %7111 = vmatpush1.msra.mxu0 0.0
      %7112 = vmatprep.subr.mxu0 0.0
      %7113 = vmatpush1.msra.mxu0 0.0
      %7114 = vmatprep.subr.mxu0 0.0
      %7115 = vmatpush1.msra.mxu0 0.0
      %7116 = vmatprep.subr.mxu0 0.0
      %7117 = vmatpush1.msra.mxu0 0.0
      %7118 = vmatprep.subr.mxu0 0.0
      %7119 = vmatpush1.msra.mxu0 0.0
      %7120 = vmatprep.subr.mxu0 0.0
      %7121 = vmatpush1.msra.mxu0 0.0
      %7122 = vmatprep.subr.mxu0 0.0
      %7123 = vmatpush1.msra.mxu0 0.0
      %7124 = vmatprep.subr.mxu0 0.0
      %7125 = vmatpush1.msra.mxu0 0.0
      %7126 = vmatprep.subr.mxu0 0.0
      %7127 = vmatpush1.msra.mxu0 0.0
      %7128 = vmatprep.subr.mxu0 0.0
      %7129 = vmatpush1.msra.mxu0 0.0
      %7130 = vmatprep.subr.mxu0 0.0
      %7131 = vmatpush1.msra.mxu0 0.0
      %7132 = vmatprep.subr.mxu0 0.0
      %7133 = vmatpush1.msra.mxu0 0.0
      %7134 = vmatprep.subr.mxu0 0.0
      %7135 = vmatpush1.msra.mxu0 0.0
      %7136 = vmatprep.subr.mxu0 0.0
      %7137 = vmatpush1.msra.mxu0 0.0
      %7138 = vmatprep.subr.mxu0 0.0
      %7139 = vmatpush1.msra.mxu0 0.0
      %7140 = vmatprep.subr.mxu0 0.0
      %7141 = vmatpush1.msra.mxu0 0.0
      %7142 = vmatprep.subr.mxu0 0.0
      %7143 = vmatpush1.msra.mxu0 0.0
      %7144 = vmatprep.subr.mxu0 0.0
      %7145 = vmatpush1.msra.mxu0 0.0
      %7146 = vmatprep.mubr.f32.mxu0 0.0
      %v7147 = vand.u32 %v6992, 4294901760
      %7148 = vmatmul.mubr.f32.gmra.mrb[0].mxu0 %v7147
      %v7149 = vpop.f32.mrb[0].mxu0
      %v7150 = vadd.f32 %v7068, %v7149
      %v7151 = vpop.f32.mrb[0].mxu0
      %v7152 = vadd.f32 %v7070, %v7151
      %7153 = vdwg.mxu0
      %v7154 = vand.u32 %v6044, 4294901760
      %v7155 = vsub.f32 %v6044, %v7154
      %7156 = vmatprep.subr.mxu0 %v7155
      %v7157 = vand.u32 %v6043, 4294901760
      %v7158 = vsub.f32 %v6043, %v7157
      %7159 = vmatpush1.msra.mxu0 %v7158
      %7160 = vmatprep.subr.mxu0 0.0
      %7161 = vmatpush1.msra.mxu0 0.0
      %7162 = vmatprep.subr.mxu0 0.0
      %7163 = vmatpush1.msra.mxu0 0.0
      %7164 = vmatprep.subr.mxu0 0.0
      %7165 = vmatpush1.msra.mxu0 0.0
      %7166 = vmatprep.subr.mxu0 0.0
      %7167 = vmatpush1.msra.mxu0 0.0
      %7168 = vmatprep.subr.mxu0 0.0
      %7169 = vmatpush1.msra.mxu0 0.0
      %7170 = vmatprep.subr.mxu0 0.0
      %7171 = vmatpush1.msra.mxu0 0.0
      %7172 = vmatprep.subr.mxu0 0.0
      %7173 = vmatpush1.msra.mxu0 0.0
      %7174 = vmatprep.subr.mxu0 0.0
      %7175 = vmatpush1.msra.mxu0 0.0
      %7176 = vmatprep.subr.mxu0 0.0
      %7177 = vmatpush1.msra.mxu0 0.0
      %7178 = vmatprep.subr.mxu0 0.0
      %7179 = vmatpush1.msra.mxu0 0.0
      %7180 = vmatprep.subr.mxu0 0.0
      %7181 = vmatpush1.msra.mxu0 0.0
      %7182 = vmatprep.subr.mxu0 0.0
      %7183 = vmatpush1.msra.mxu0 0.0
      %7184 = vmatprep.subr.mxu0 0.0
      %7185 = vmatpush1.msra.mxu0 0.0
      %7186 = vmatprep.subr.mxu0 0.0
      %7187 = vmatpush1.msra.mxu0 0.0
      %7188 = vmatprep.subr.mxu0 0.0
      %7189 = vmatpush1.msra.mxu0 0.0
      %7190 = vmatprep.subr.mxu0 0.0
      %7191 = vmatpush1.msra.mxu0 0.0
      %7192 = vmatprep.subr.mxu0 0.0
      %7193 = vmatpush1.msra.mxu0 0.0
      %7194 = vmatprep.subr.mxu0 0.0
      %7195 = vmatpush1.msra.mxu0 0.0
      %7196 = vmatprep.subr.mxu0 0.0
      %7197 = vmatpush1.msra.mxu0 0.0
      %7198 = vmatprep.subr.mxu0 0.0
      %7199 = vmatpush1.msra.mxu0 0.0
      %7200 = vmatprep.subr.mxu0 0.0
      %7201 = vmatpush1.msra.mxu0 0.0
      %7202 = vmatprep.subr.mxu0 0.0
      %7203 = vmatpush1.msra.mxu0 0.0
      %7204 = vmatprep.subr.mxu0 0.0
      %7205 = vmatpush1.msra.mxu0 0.0
      %7206 = vmatprep.subr.mxu0 0.0
      %7207 = vmatpush1.msra.mxu0 0.0
      %7208 = vmatprep.subr.mxu0 0.0
      %7209 = vmatpush1.msra.mxu0 0.0
      %7210 = vmatprep.subr.mxu0 0.0
      %7211 = vmatpush1.msra.mxu0 0.0
      %7212 = vmatprep.subr.mxu0 0.0
      %7213 = vmatpush1.msra.mxu0 0.0
      %7214 = vmatprep.subr.mxu0 0.0
      %7215 = vmatpush1.msra.mxu0 0.0
      %7216 = vmatprep.subr.mxu0 0.0
      %7217 = vmatpush1.msra.mxu0 0.0
      %7218 = vmatprep.subr.mxu0 0.0
      %7219 = vmatpush1.msra.mxu0 0.0
      %7220 = vmatprep.subr.mxu0 0.0
      %7221 = vmatpush1.msra.mxu0 0.0
      %7222 = vmatprep.mubr.f32.mxu0 0.0
      %v7223 = vand.u32 %v6992, 4294901760
      %v7224 = vsub.f32 %v6992, %v7223
      %7225 = vmatmul.mubr.f32.gmra.mrb[0].mxu0 %v7224
      %v7226 = vpop.f32.mrb[0].mxu0
      %v7227 = vadd.f32 %v7150, %v7226
      %v7228 = vpop.f32.mrb[0].mxu0
      %v7229 = vadd.f32 %v7152, %v7228
      %7230 = vdwg.mxu0
      %v7231 = vand.u32 %v6044, 4294901760
      %7232 = vmatprep.subr.mxu0 %v7231
      %v7233 = vand.u32 %v6043, 4294901760
      %7234 = vmatpush1.msra.mxu0 %v7233
      %7235 = vmatprep.subr.mxu0 0.0
      %7236 = vmatpush1.msra.mxu0 0.0
      %7237 = vmatprep.subr.mxu0 0.0
      %7238 = vmatpush1.msra.mxu0 0.0
      %7239 = vmatprep.subr.mxu0 0.0
      %7240 = vmatpush1.msra.mxu0 0.0
      %7241 = vmatprep.subr.mxu0 0.0
      %7242 = vmatpush1.msra.mxu0 0.0
      %7243 = vmatprep.subr.mxu0 0.0
      %7244 = vmatpush1.msra.mxu0 0.0
      %7245 = vmatprep.subr.mxu0 0.0
      %7246 = vmatpush1.msra.mxu0 0.0
      %7247 = vmatprep.subr.mxu0 0.0
      %7248 = vmatpush1.msra.mxu0 0.0
      %7249 = vmatprep.subr.mxu0 0.0
      %7250 = vmatpush1.msra.mxu0 0.0
      %7251 = vmatprep.subr.mxu0 0.0
      %7252 = vmatpush1.msra.mxu0 0.0
      %7253 = vmatprep.subr.mxu0 0.0
      %7254 = vmatpush1.msra.mxu0 0.0
      %7255 = vmatprep.subr.mxu0 0.0
      %7256 = vmatpush1.msra.mxu0 0.0
      %7257 = vmatprep.subr.mxu0 0.0
      %7258 = vmatpush1.msra.mxu0 0.0
      %7259 = vmatprep.subr.mxu0 0.0
      %7260 = vmatpush1.msra.mxu0 0.0
      %7261 = vmatprep.subr.mxu0 0.0
      %7262 = vmatpush1.msra.mxu0 0.0
      %7263 = vmatprep.subr.mxu0 0.0
      %7264 = vmatpush1.msra.mxu0 0.0
      %7265 = vmatprep.subr.mxu0 0.0
      %7266 = vmatpush1.msra.mxu0 0.0
      %7267 = vmatprep.subr.mxu0 0.0
      %7268 = vmatpush1.msra.mxu0 0.0
      %7269 = vmatprep.subr.mxu0 0.0
      %7270 = vmatpush1.msra.mxu0 0.0
      %7271 = vmatprep.subr.mxu0 0.0
      %7272 = vmatpush1.msra.mxu0 0.0
      %7273 = vmatprep.subr.mxu0 0.0
      %7274 = vmatpush1.msra.mxu0 0.0
      %7275 = vmatprep.subr.mxu0 0.0
      %7276 = vmatpush1.msra.mxu0 0.0
      %7277 = vmatprep.subr.mxu0 0.0
      %7278 = vmatpush1.msra.mxu0 0.0
      %7279 = vmatprep.subr.mxu0 0.0
      %7280 = vmatpush1.msra.mxu0 0.0
      %7281 = vmatprep.subr.mxu0 0.0
      %7282 = vmatpush1.msra.mxu0 0.0
      %7283 = vmatprep.subr.mxu0 0.0
      %7284 = vmatpush1.msra.mxu0 0.0
      %7285 = vmatprep.subr.mxu0 0.0
      %7286 = vmatpush1.msra.mxu0 0.0
      %7287 = vmatprep.subr.mxu0 0.0
      %7288 = vmatpush1.msra.mxu0 0.0
      %7289 = vmatprep.subr.mxu0 0.0
      %7290 = vmatpush1.msra.mxu0 0.0
      %7291 = vmatprep.subr.mxu0 0.0
      %7292 = vmatpush1.msra.mxu0 0.0
      %7293 = vmatprep.subr.mxu0 0.0
      %7294 = vmatpush1.msra.mxu0 0.0
      %7295 = vmatprep.subr.mxu0 0.0
      %7296 = vmatpush1.msra.mxu0 0.0
      %7297 = vmatprep.mubr.f32.mxu0 0.0
      %v7298 = vand.u32 %v6992, 4294901760
      %v7299 = vsub.f32 %v6992, %v7298
      %v7300 = vand.u32 %v7299, 4294901760
      %7301 = vmatmul.mubr.f32.gmra.mrb[0].mxu0 %v7300
      %v7302 = vpop.f32.mrb[0].mxu0
      %v7303 = vadd.f32 %v7227, %v7302
      %v7304 = vpop.f32.mrb[0].mxu0
      %v7305 = vadd.f32 %v7229, %v7304
      %7306 = vdwg.mxu0
      %v7307 = vand.u32 %v6044, 4294901760
      %v7308 = vsub.f32 %v6044, %v7307
      %v7309 = vand.u32 %v7308, 4294901760
      %7310 = vmatprep.subr.mxu0 %v7309
      %v7311 = vand.u32 %v6043, 4294901760
      %v7312 = vsub.f32 %v6043, %v7311
      %v7313 = vand.u32 %v7312, 4294901760
      %7314 = vmatpush1.msra.mxu0 %v7313
      %7315 = vmatprep.subr.mxu0 0.0
      %7316 = vmatpush1.msra.mxu0 0.0
      %7317 = vmatprep.subr.mxu0 0.0
      %7318 = vmatpush1.msra.mxu0 0.0
      %7319 = vmatprep.subr.mxu0 0.0
      %7320 = vmatpush1.msra.mxu0 0.0
      %7321 = vmatprep.subr.mxu0 0.0
      %7322 = vmatpush1.msra.mxu0 0.0
      %7323 = vmatprep.subr.mxu0 0.0
      %7324 = vmatpush1.msra.mxu0 0.0
      %7325 = vmatprep.subr.mxu0 0.0
      %7326 = vmatpush1.msra.mxu0 0.0
      %7327 = vmatprep.subr.mxu0 0.0
      %7328 = vmatpush1.msra.mxu0 0.0
      %7329 = vmatprep.subr.mxu0 0.0
      %7330 = vmatpush1.msra.mxu0 0.0
      %7331 = vmatprep.subr.mxu0 0.0
      %7332 = vmatpush1.msra.mxu0 0.0
      %7333 = vmatprep.subr.mxu0 0.0
      %7334 = vmatpush1.msra.mxu0 0.0
      %7335 = vmatprep.subr.mxu0 0.0
      %7336 = vmatpush1.msra.mxu0 0.0
      %7337 = vmatprep.subr.mxu0 0.0
      %7338 = vmatpush1.msra.mxu0 0.0
      %7339 = vmatprep.subr.mxu0 0.0
      %7340 = vmatpush1.msra.mxu0 0.0
      %7341 = vmatprep.subr.mxu0 0.0
      %7342 = vmatpush1.msra.mxu0 0.0
      %7343 = vmatprep.subr.mxu0 0.0
      %7344 = vmatpush1.msra.mxu0 0.0
      %7345 = vmatprep.subr.mxu0 0.0
      %7346 = vmatpush1.msra.mxu0 0.0
      %7347 = vmatprep.subr.mxu0 0.0
      %7348 = vmatpush1.msra.mxu0 0.0
      %7349 = vmatprep.subr.mxu0 0.0
      %7350 = vmatpush1.msra.mxu0 0.0
      %7351 = vmatprep.subr.mxu0 0.0
      %7352 = vmatpush1.msra.mxu0 0.0
      %7353 = vmatprep.subr.mxu0 0.0
      %7354 = vmatpush1.msra.mxu0 0.0
      %7355 = vmatprep.subr.mxu0 0.0
      %7356 = vmatpush1.msra.mxu0 0.0
      %7357 = vmatprep.subr.mxu0 0.0
      %7358 = vmatpush1.msra.mxu0 0.0
      %7359 = vmatprep.subr.mxu0 0.0
      %7360 = vmatpush1.msra.mxu0 0.0
      %7361 = vmatprep.subr.mxu0 0.0
      %7362 = vmatpush1.msra.mxu0 0.0
      %7363 = vmatprep.subr.mxu0 0.0
      %7364 = vmatpush1.msra.mxu0 0.0
      %7365 = vmatprep.subr.mxu0 0.0
      %7366 = vmatpush1.msra.mxu0 0.0
      %7367 = vmatprep.subr.mxu0 0.0
      %7368 = vmatpush1.msra.mxu0 0.0
      %7369 = vmatprep.subr.mxu0 0.0
      %7370 = vmatpush1.msra.mxu0 0.0
      %7371 = vmatprep.subr.mxu0 0.0
      %7372 = vmatpush1.msra.mxu0 0.0
      %7373 = vmatprep.subr.mxu0 0.0
      %7374 = vmatpush1.msra.mxu0 0.0
      %7375 = vmatprep.subr.mxu0 0.0
      %7376 = vmatpush1.msra.mxu0 0.0
      %7377 = vmatprep.mubr.f32.mxu0 0.0
      %v7378 = vand.u32 %v6992, 4294901760
      %7379 = vmatmul.mubr.f32.gmra.mrb[0].mxu0 %v7378
      %v7380 = vpop.f32.mrb[0].mxu0
      %v7381 = vadd.f32 %v7303, %v7380
      %v7382 = vpop.f32.mrb[0].mxu0
      %v7383 = vadd.f32 %v7305, %v7382
      %7384 = vdwg.mxu0
      %v7385 = vand.u32 %v6044, 4294901760
      %7386 = vmatprep.subr.mxu0 %v7385
      %v7387 = vand.u32 %v6043, 4294901760
      %7388 = vmatpush1.msra.mxu0 %v7387
      %7389 = vmatprep.subr.mxu0 0.0
      %7390 = vmatpush1.msra.mxu0 0.0
      %7391 = vmatprep.subr.mxu0 0.0
      %7392 = vmatpush1.msra.mxu0 0.0
      %7393 = vmatprep.subr.mxu0 0.0
      %7394 = vmatpush1.msra.mxu0 0.0
      %7395 = vmatprep.subr.mxu0 0.0
      %7396 = vmatpush1.msra.mxu0 0.0
      %7397 = vmatprep.subr.mxu0 0.0
      %7398 = vmatpush1.msra.mxu0 0.0
      %7399 = vmatprep.subr.mxu0 0.0
      %7400 = vmatpush1.msra.mxu0 0.0
      %7401 = vmatprep.subr.mxu0 0.0
      %7402 = vmatpush1.msra.mxu0 0.0
      %7403 = vmatprep.subr.mxu0 0.0
      %7404 = vmatpush1.msra.mxu0 0.0
      %7405 = vmatprep.subr.mxu0 0.0
      %7406 = vmatpush1.msra.mxu0 0.0
      %7407 = vmatprep.subr.mxu0 0.0
      %7408 = vmatpush1.msra.mxu0 0.0
      %7409 = vmatprep.subr.mxu0 0.0
      %7410 = vmatpush1.msra.mxu0 0.0
      %7411 = vmatprep.subr.mxu0 0.0
      %7412 = vmatpush1.msra.mxu0 0.0
      %7413 = vmatprep.subr.mxu0 0.0
      %7414 = vmatpush1.msra.mxu0 0.0
      %7415 = vmatprep.subr.mxu0 0.0
      %7416 = vmatpush1.msra.mxu0 0.0
      %7417 = vmatprep.subr.mxu0 0.0
      %7418 = vmatpush1.msra.mxu0 0.0
      %7419 = vmatprep.subr.mxu0 0.0
      %7420 = vmatpush1.msra.mxu0 0.0
      %7421 = vmatprep.subr.mxu0 0.0
      %7422 = vmatpush1.msra.mxu0 0.0
      %7423 = vmatprep.subr.mxu0 0.0
      %7424 = vmatpush1.msra.mxu0 0.0
      %7425 = vmatprep.subr.mxu0 0.0
      %7426 = vmatpush1.msra.mxu0 0.0
      %7427 = vmatprep.subr.mxu0 0.0
      %7428 = vmatpush1.msra.mxu0 0.0
      %7429 = vmatprep.subr.mxu0 0.0
      %7430 = vmatpush1.msra.mxu0 0.0
      %7431 = vmatprep.subr.mxu0 0.0
      %7432 = vmatpush1.msra.mxu0 0.0
      %7433 = vmatprep.subr.mxu0 0.0
      %7434 = vmatpush1.msra.mxu0 0.0
      %7435 = vmatprep.subr.mxu0 0.0
      %7436 = vmatpush1.msra.mxu0 0.0
      %7437 = vmatprep.subr.mxu0 0.0
      %7438 = vmatpush1.msra.mxu0 0.0
      %7439 = vmatprep.subr.mxu0 0.0
      %7440 = vmatpush1.msra.mxu0 0.0
      %7441 = vmatprep.subr.mxu0 0.0
      %7442 = vmatpush1.msra.mxu0 0.0
      %7443 = vmatprep.subr.mxu0 0.0
      %7444 = vmatpush1.msra.mxu0 0.0
      %7445 = vmatprep.subr.mxu0 0.0
      %7446 = vmatpush1.msra.mxu0 0.0
      %7447 = vmatprep.subr.mxu0 0.0
      %7448 = vmatpush1.msra.mxu0 0.0
      %7449 = vmatprep.subr.mxu0 0.0
      %7450 = vmatpush1.msra.mxu0 0.0
      %7451 = vmatprep.mubr.f32.mxu0 0.0
      %v7452 = vand.u32 %v6992, 4294901760
      %7453 = vmatmul.mubr.f32.gmra.mrb[0].mxu0 %v7452
      %v7454 = vpop.f32.mrb[0].mxu0
      %v7455 = vadd.f32 %v7381, %v7454
      %v7456 = vpop.f32.mrb[0].mxu0
      %v7457 = vadd.f32 %v7383, %v7456
      %7458 = vdwg.mxu0
      %v7459 = vadd.f32 %v6987, %v7455
      %v7460 = vadd.f32 %v6988, %v7457
      %7461 = vrot.lane.b32.xlu0 %v4600, 1
      %v7462 = vpop.permute.xlu0 %7461
      %7463 = vrot.lane.b32.xlu0 %v4601, 1
      %v7464 = vpop.permute.xlu0 %7463
      %v7465 = vsel %vm253, %v7462, %v7464
      %v7466 = vsel %vm253, %v7464, %v7462
      %7467 = vrot.lane.b32.xlu0 %v4600, 127
      %v7468 = vpop.permute.xlu0 %7467
      %7469 = vrot.lane.b32.xlu0 %v4601, 127
      %v7470 = vpop.permute.xlu0 %7469
      %v7471 = vsel %vm260, %v7468, %v7470
      %v7472 = vsel %vm260, %v7470, %v7468
      %v7473 = vsel %vm272, %v7471, %v7466
      %v7474 = vsel %vm273, %v7472, %v7465
      %v7475 = vsel %vm285, %v7466, %v7471
      %v7476 = vsel %vm286, %v7465, %v7472
      %s7477 = scalar_lea.vmem %s3, 48
      %v7478 = vld [vmem:[%s7477] sm:$0xff]
      %v7480 = vsel %vm292, %v7478, 0
      %v7482 = vand.u32 %v7474, 4294901760
      %7483 = vmatprep.subr.mxu0 %v7482
      %v7484 = vand.u32 %v7473, 4294901760
      %7485 = vmatpush1.msra.mxu0 %v7484
      %7486 = vmatprep.subr.mxu0 0.0
      %7487 = vmatpush1.msra.mxu0 0.0
      %7488 = vmatprep.subr.mxu0 0.0
      %7489 = vmatpush1.msra.mxu0 0.0
      %7490 = vmatprep.subr.mxu0 0.0
      %7491 = vmatpush1.msra.mxu0 0.0
      %7492 = vmatprep.subr.mxu0 0.0
      %7493 = vmatpush1.msra.mxu0 0.0
      %7494 = vmatprep.subr.mxu0 0.0
      %7495 = vmatpush1.msra.mxu0 0.0
      %7496 = vmatprep.subr.mxu0 0.0
      %7497 = vmatpush1.msra.mxu0 0.0
      %7498 = vmatprep.subr.mxu0 0.0
      %7499 = vmatpush1.msra.mxu0 0.0
      %7500 = vmatprep.subr.mxu0 0.0
      %7501 = vmatpush1.msra.mxu0 0.0
      %7502 = vmatprep.subr.mxu0 0.0
      %7503 = vmatpush1.msra.mxu0 0.0
      %7504 = vmatprep.subr.mxu0 0.0
      %7505 = vmatpush1.msra.mxu0 0.0
      %7506 = vmatprep.subr.mxu0 0.0
      %7507 = vmatpush1.msra.mxu0 0.0
      %7508 = vmatprep.subr.mxu0 0.0
      %7509 = vmatpush1.msra.mxu0 0.0
      %7510 = vmatprep.subr.mxu0 0.0
      %7511 = vmatpush1.msra.mxu0 0.0
      %7512 = vmatprep.subr.mxu0 0.0
      %7513 = vmatpush1.msra.mxu0 0.0
      %7514 = vmatprep.subr.mxu0 0.0
      %7515 = vmatpush1.msra.mxu0 0.0
      %7516 = vmatprep.subr.mxu0 0.0
      %7517 = vmatpush1.msra.mxu0 0.0
      %7518 = vmatprep.subr.mxu0 0.0
      %7519 = vmatpush1.msra.mxu0 0.0
      %7520 = vmatprep.subr.mxu0 0.0
      %7521 = vmatpush1.msra.mxu0 0.0
      %7522 = vmatprep.subr.mxu0 0.0
      %7523 = vmatpush1.msra.mxu0 0.0
      %7524 = vmatprep.subr.mxu0 0.0
      %7525 = vmatpush1.msra.mxu0 0.0
      %7526 = vmatprep.subr.mxu0 0.0
      %7527 = vmatpush1.msra.mxu0 0.0
      %7528 = vmatprep.subr.mxu0 0.0
      %7529 = vmatpush1.msra.mxu0 0.0
      %7530 = vmatprep.subr.mxu0 0.0
      %7531 = vmatpush1.msra.mxu0 0.0
      %7532 = vmatprep.subr.mxu0 0.0
      %7533 = vmatpush1.msra.mxu0 0.0
      %7534 = vmatprep.subr.mxu0 0.0
      %7535 = vmatpush1.msra.mxu0 0.0
      %7536 = vmatprep.subr.mxu0 0.0
      %7537 = vmatpush1.msra.mxu0 0.0
      %7538 = vmatprep.subr.mxu0 0.0
      %7539 = vmatpush1.msra.mxu0 0.0
      %7540 = vmatprep.subr.mxu0 0.0
      %7541 = vmatpush1.msra.mxu0 0.0
      %7542 = vmatprep.subr.mxu0 0.0
      %7543 = vmatpush1.msra.mxu0 0.0
      %7544 = vmatprep.subr.mxu0 0.0
      %7545 = vmatpush1.msra.mxu0 0.0
      %7546 = vmatprep.subr.mxu0 0.0
      %7547 = vmatpush1.msra.mxu0 0.0
      %7548 = vmatprep.mubr.f32.mxu0 0.0
      %v7549 = vand.u32 %v7480, 4294901760
      %v7550 = vsub.f32 %v7480, %v7549
      %v7551 = vand.u32 %v7550, 4294901760
      %v7552 = vsub.f32 %v7550, %v7551
      %v7553 = vand.u32 %v7552, 4294901760
      %7554 = vmatmul.mubr.f32.gmra.mrb[0].mxu0 %v7553
      %v7555 = vpop.f32.mrb[0].mxu0
      %v7556 = vadd.f32 0.0, %v7555
      %v7557 = vpop.f32.mrb[0].mxu0
      %v7558 = vadd.f32 0.0, %v7557
      %7559 = vdwg.mxu0
      %v7560 = vand.u32 %v7474, 4294901760
      %v7561 = vsub.f32 %v7474, %v7560
      %v7562 = vand.u32 %v7561, 4294901760
      %v7563 = vsub.f32 %v7561, %v7562
      %v7564 = vand.u32 %v7563, 4294901760
      %7565 = vmatprep.subr.mxu0 %v7564
      %v7566 = vand.u32 %v7473, 4294901760
      %v7567 = vsub.f32 %v7473, %v7566
      %v7568 = vand.u32 %v7567, 4294901760
      %v7569 = vsub.f32 %v7567, %v7568
      %v7570 = vand.u32 %v7569, 4294901760
      %7571 = vmatpush1.msra.mxu0 %v7570
      %7572 = vmatprep.subr.mxu0 0.0
      %7573 = vmatpush1.msra.mxu0 0.0
      %7574 = vmatprep.subr.mxu0 0.0
      %7575 = vmatpush1.msra.mxu0 0.0
      %7576 = vmatprep.subr.mxu0 0.0
      %7577 = vmatpush1.msra.mxu0 0.0
      %7578 = vmatprep.subr.mxu0 0.0
      %7579 = vmatpush1.msra.mxu0 0.0
      %7580 = vmatprep.subr.mxu0 0.0
      %7581 = vmatpush1.msra.mxu0 0.0
      %7582 = vmatprep.subr.mxu0 0.0
      %7583 = vmatpush1.msra.mxu0 0.0
      %7584 = vmatprep.subr.mxu0 0.0
      %7585 = vmatpush1.msra.mxu0 0.0
      %7586 = vmatprep.subr.mxu0 0.0
      %7587 = vmatpush1.msra.mxu0 0.0
      %7588 = vmatprep.subr.mxu0 0.0
      %7589 = vmatpush1.msra.mxu0 0.0
      %7590 = vmatprep.subr.mxu0 0.0
      %7591 = vmatpush1.msra.mxu0 0.0
      %7592 = vmatprep.subr.mxu0 0.0
      %7593 = vmatpush1.msra.mxu0 0.0
      %7594 = vmatprep.subr.mxu0 0.0
      %7595 = vmatpush1.msra.mxu0 0.0
      %7596 = vmatprep.subr.mxu0 0.0
      %7597 = vmatpush1.msra.mxu0 0.0
      %7598 = vmatprep.subr.mxu0 0.0
      %7599 = vmatpush1.msra.mxu0 0.0
      %7600 = vmatprep.subr.mxu0 0.0
      %7601 = vmatpush1.msra.mxu0 0.0
      %7602 = vmatprep.subr.mxu0 0.0
      %7603 = vmatpush1.msra.mxu0 0.0
      %7604 = vmatprep.subr.mxu0 0.0
      %7605 = vmatpush1.msra.mxu0 0.0
      %7606 = vmatprep.subr.mxu0 0.0
      %7607 = vmatpush1.msra.mxu0 0.0
      %7608 = vmatprep.subr.mxu0 0.0
      %7609 = vmatpush1.msra.mxu0 0.0
      %7610 = vmatprep.subr.mxu0 0.0
      %7611 = vmatpush1.msra.mxu0 0.0
      %7612 = vmatprep.subr.mxu0 0.0
      %7613 = vmatpush1.msra.mxu0 0.0
      %7614 = vmatprep.subr.mxu0 0.0
      %7615 = vmatpush1.msra.mxu0 0.0
      %7616 = vmatprep.subr.mxu0 0.0
      %7617 = vmatpush1.msra.mxu0 0.0
      %7618 = vmatprep.subr.mxu0 0.0
      %7619 = vmatpush1.msra.mxu0 0.0
      %7620 = vmatprep.subr.mxu0 0.0
      %7621 = vmatpush1.msra.mxu0 0.0
      %7622 = vmatprep.subr.mxu0 0.0
      %7623 = vmatpush1.msra.mxu0 0.0
      %7624 = vmatprep.subr.mxu0 0.0
      %7625 = vmatpush1.msra.mxu0 0.0
      %7626 = vmatprep.subr.mxu0 0.0
      %7627 = vmatpush1.msra.mxu0 0.0
      %7628 = vmatprep.subr.mxu0 0.0
      %7629 = vmatpush1.msra.mxu0 0.0
      %7630 = vmatprep.subr.mxu0 0.0
      %7631 = vmatpush1.msra.mxu0 0.0
      %7632 = vmatprep.subr.mxu0 0.0
      %7633 = vmatpush1.msra.mxu0 0.0
      %7634 = vmatprep.mubr.f32.mxu0 0.0
      %v7635 = vand.u32 %v7480, 4294901760
      %7636 = vmatmul.mubr.f32.gmra.mrb[0].mxu0 %v7635
      %v7637 = vpop.f32.mrb[0].mxu0
      %v7638 = vadd.f32 %v7556, %v7637
      %v7639 = vpop.f32.mrb[0].mxu0
      %v7640 = vadd.f32 %v7558, %v7639
      %7641 = vdwg.mxu0
      %v7642 = vand.u32 %v7474, 4294901760
      %v7643 = vsub.f32 %v7474, %v7642
      %7644 = vmatprep.subr.mxu0 %v7643
      %v7645 = vand.u32 %v7473, 4294901760
      %v7646 = vsub.f32 %v7473, %v7645
      %7647 = vmatpush1.msra.mxu0 %v7646
      %7648 = vmatprep.subr.mxu0 0.0
      %7649 = vmatpush1.msra.mxu0 0.0
      %7650 = vmatprep.subr.mxu0 0.0
      %7651 = vmatpush1.msra.mxu0 0.0
      %7652 = vmatprep.subr.mxu0 0.0
      %7653 = vmatpush1.msra.mxu0 0.0
      %7654 = vmatprep.subr.mxu0 0.0
      %7655 = vmatpush1.msra.mxu0 0.0
      %7656 = vmatprep.subr.mxu0 0.0
      %7657 = vmatpush1.msra.mxu0 0.0
      %7658 = vmatprep.subr.mxu0 0.0
      %7659 = vmatpush1.msra.mxu0 0.0
      %7660 = vmatprep.subr.mxu0 0.0
      %7661 = vmatpush1.msra.mxu0 0.0
      %7662 = vmatprep.subr.mxu0 0.0
      %7663 = vmatpush1.msra.mxu0 0.0
      %7664 = vmatprep.subr.mxu0 0.0
      %7665 = vmatpush1.msra.mxu0 0.0
      %7666 = vmatprep.subr.mxu0 0.0
      %7667 = vmatpush1.msra.mxu0 0.0
      %7668 = vmatprep.subr.mxu0 0.0
      %7669 = vmatpush1.msra.mxu0 0.0
      %7670 = vmatprep.subr.mxu0 0.0
      %7671 = vmatpush1.msra.mxu0 0.0
      %7672 = vmatprep.subr.mxu0 0.0
      %7673 = vmatpush1.msra.mxu0 0.0
      %7674 = vmatprep.subr.mxu0 0.0
      %7675 = vmatpush1.msra.mxu0 0.0
      %7676 = vmatprep.subr.mxu0 0.0
      %7677 = vmatpush1.msra.mxu0 0.0
      %7678 = vmatprep.subr.mxu0 0.0
      %7679 = vmatpush1.msra.mxu0 0.0
      %7680 = vmatprep.subr.mxu0 0.0
      %7681 = vmatpush1.msra.mxu0 0.0
      %7682 = vmatprep.subr.mxu0 0.0
      %7683 = vmatpush1.msra.mxu0 0.0
      %7684 = vmatprep.subr.mxu0 0.0
      %7685 = vmatpush1.msra.mxu0 0.0
      %7686 = vmatprep.subr.mxu0 0.0
      %7687 = vmatpush1.msra.mxu0 0.0
      %7688 = vmatprep.subr.mxu0 0.0
      %7689 = vmatpush1.msra.mxu0 0.0
      %7690 = vmatprep.subr.mxu0 0.0
      %7691 = vmatpush1.msra.mxu0 0.0
      %7692 = vmatprep.subr.mxu0 0.0
      %7693 = vmatpush1.msra.mxu0 0.0
      %7694 = vmatprep.subr.mxu0 0.0
      %7695 = vmatpush1.msra.mxu0 0.0
      %7696 = vmatprep.subr.mxu0 0.0
      %7697 = vmatpush1.msra.mxu0 0.0
      %7698 = vmatprep.subr.mxu0 0.0
      %7699 = vmatpush1.msra.mxu0 0.0
      %7700 = vmatprep.subr.mxu0 0.0
      %7701 = vmatpush1.msra.mxu0 0.0
      %7702 = vmatprep.subr.mxu0 0.0
      %7703 = vmatpush1.msra.mxu0 0.0
      %7704 = vmatprep.subr.mxu0 0.0
      %7705 = vmatpush1.msra.mxu0 0.0
      %7706 = vmatprep.subr.mxu0 0.0
      %7707 = vmatpush1.msra.mxu0 0.0
      %7708 = vmatprep.subr.mxu0 0.0
      %7709 = vmatpush1.msra.mxu0 0.0
      %7710 = vmatprep.mubr.f32.mxu0 0.0
      %v7711 = vand.u32 %v7480, 4294901760
      %v7712 = vsub.f32 %v7480, %v7711
      %7713 = vmatmul.mubr.f32.gmra.mrb[0].mxu0 %v7712
      %v7714 = vpop.f32.mrb[0].mxu0
      %v7715 = vadd.f32 %v7638, %v7714
      %v7716 = vpop.f32.mrb[0].mxu0
      %v7717 = vadd.f32 %v7640, %v7716
      %7718 = vdwg.mxu0
      %v7719 = vand.u32 %v7474, 4294901760
      %7720 = vmatprep.subr.mxu0 %v7719
      %v7721 = vand.u32 %v7473, 4294901760
      %7722 = vmatpush1.msra.mxu0 %v7721
      %7723 = vmatprep.subr.mxu0 0.0
      %7724 = vmatpush1.msra.mxu0 0.0
      %7725 = vmatprep.subr.mxu0 0.0
      %7726 = vmatpush1.msra.mxu0 0.0
      %7727 = vmatprep.subr.mxu0 0.0
      %7728 = vmatpush1.msra.mxu0 0.0
      %7729 = vmatprep.subr.mxu0 0.0
      %7730 = vmatpush1.msra.mxu0 0.0
      %7731 = vmatprep.subr.mxu0 0.0
      %7732 = vmatpush1.msra.mxu0 0.0
      %7733 = vmatprep.subr.mxu0 0.0
      %7734 = vmatpush1.msra.mxu0 0.0
      %7735 = vmatprep.subr.mxu0 0.0
      %7736 = vmatpush1.msra.mxu0 0.0
      %7737 = vmatprep.subr.mxu0 0.0
      %7738 = vmatpush1.msra.mxu0 0.0
      %7739 = vmatprep.subr.mxu0 0.0
      %7740 = vmatpush1.msra.mxu0 0.0
      %7741 = vmatprep.subr.mxu0 0.0
      %7742 = vmatpush1.msra.mxu0 0.0
      %7743 = vmatprep.subr.mxu0 0.0
      %7744 = vmatpush1.msra.mxu0 0.0
      %7745 = vmatprep.subr.mxu0 0.0
      %7746 = vmatpush1.msra.mxu0 0.0
      %7747 = vmatprep.subr.mxu0 0.0
      %7748 = vmatpush1.msra.mxu0 0.0
      %7749 = vmatprep.subr.mxu0 0.0
      %7750 = vmatpush1.msra.mxu0 0.0
      %7751 = vmatprep.subr.mxu0 0.0
      %7752 = vmatpush1.msra.mxu0 0.0
      %7753 = vmatprep.subr.mxu0 0.0
      %7754 = vmatpush1.msra.mxu0 0.0
      %7755 = vmatprep.subr.mxu0 0.0
      %7756 = vmatpush1.msra.mxu0 0.0
      %7757 = vmatprep.subr.mxu0 0.0
      %7758 = vmatpush1.msra.mxu0 0.0
      %7759 = vmatprep.subr.mxu0 0.0
      %7760 = vmatpush1.msra.mxu0 0.0
      %7761 = vmatprep.subr.mxu0 0.0
      %7762 = vmatpush1.msra.mxu0 0.0
      %7763 = vmatprep.subr.mxu0 0.0
      %7764 = vmatpush1.msra.mxu0 0.0
      %7765 = vmatprep.subr.mxu0 0.0
      %7766 = vmatpush1.msra.mxu0 0.0
      %7767 = vmatprep.subr.mxu0 0.0
      %7768 = vmatpush1.msra.mxu0 0.0
      %7769 = vmatprep.subr.mxu0 0.0
      %7770 = vmatpush1.msra.mxu0 0.0
      %7771 = vmatprep.subr.mxu0 0.0
      %7772 = vmatpush1.msra.mxu0 0.0
      %7773 = vmatprep.subr.mxu0 0.0
      %7774 = vmatpush1.msra.mxu0 0.0
      %7775 = vmatprep.subr.mxu0 0.0
      %7776 = vmatpush1.msra.mxu0 0.0
      %7777 = vmatprep.subr.mxu0 0.0
      %7778 = vmatpush1.msra.mxu0 0.0
      %7779 = vmatprep.subr.mxu0 0.0
      %7780 = vmatpush1.msra.mxu0 0.0
      %7781 = vmatprep.subr.mxu0 0.0
      %7782 = vmatpush1.msra.mxu0 0.0
      %7783 = vmatprep.subr.mxu0 0.0
      %7784 = vmatpush1.msra.mxu0 0.0
      %7785 = vmatprep.mubr.f32.mxu0 0.0
      %v7786 = vand.u32 %v7480, 4294901760
      %v7787 = vsub.f32 %v7480, %v7786
      %v7788 = vand.u32 %v7787, 4294901760
      %7789 = vmatmul.mubr.f32.gmra.mrb[0].mxu0 %v7788
      %v7790 = vpop.f32.mrb[0].mxu0
      %v7791 = vadd.f32 %v7715, %v7790
      %v7792 = vpop.f32.mrb[0].mxu0
      %v7793 = vadd.f32 %v7717, %v7792
      %7794 = vdwg.mxu0
      %v7795 = vand.u32 %v7474, 4294901760
      %v7796 = vsub.f32 %v7474, %v7795
      %v7797 = vand.u32 %v7796, 4294901760
      %7798 = vmatprep.subr.mxu0 %v7797
      %v7799 = vand.u32 %v7473, 4294901760
      %v7800 = vsub.f32 %v7473, %v7799
      %v7801 = vand.u32 %v7800, 4294901760
      %7802 = vmatpush1.msra.mxu0 %v7801
      %7803 = vmatprep.subr.mxu0 0.0
      %7804 = vmatpush1.msra.mxu0 0.0
      %7805 = vmatprep.subr.mxu0 0.0
      %7806 = vmatpush1.msra.mxu0 0.0
      %7807 = vmatprep.subr.mxu0 0.0
      %7808 = vmatpush1.msra.mxu0 0.0
      %7809 = vmatprep.subr.mxu0 0.0
      %7810 = vmatpush1.msra.mxu0 0.0
      %7811 = vmatprep.subr.mxu0 0.0
      %7812 = vmatpush1.msra.mxu0 0.0
      %7813 = vmatprep.subr.mxu0 0.0
      %7814 = vmatpush1.msra.mxu0 0.0
      %7815 = vmatprep.subr.mxu0 0.0
      %7816 = vmatpush1.msra.mxu0 0.0
      %7817 = vmatprep.subr.mxu0 0.0
      %7818 = vmatpush1.msra.mxu0 0.0
      %7819 = vmatprep.subr.mxu0 0.0
      %7820 = vmatpush1.msra.mxu0 0.0
      %7821 = vmatprep.subr.mxu0 0.0
      %7822 = vmatpush1.msra.mxu0 0.0
      %7823 = vmatprep.subr.mxu0 0.0
      %7824 = vmatpush1.msra.mxu0 0.0
      %7825 = vmatprep.subr.mxu0 0.0
      %7826 = vmatpush1.msra.mxu0 0.0
      %7827 = vmatprep.subr.mxu0 0.0
      %7828 = vmatpush1.msra.mxu0 0.0
      %7829 = vmatprep.subr.mxu0 0.0
      %7830 = vmatpush1.msra.mxu0 0.0
      %7831 = vmatprep.subr.mxu0 0.0
      %7832 = vmatpush1.msra.mxu0 0.0
      %7833 = vmatprep.subr.mxu0 0.0
      %7834 = vmatpush1.msra.mxu0 0.0
      %7835 = vmatprep.subr.mxu0 0.0
      %7836 = vmatpush1.msra.mxu0 0.0
      %7837 = vmatprep.subr.mxu0 0.0
      %7838 = vmatpush1.msra.mxu0 0.0
      %7839 = vmatprep.subr.mxu0 0.0
      %7840 = vmatpush1.msra.mxu0 0.0
      %7841 = vmatprep.subr.mxu0 0.0
      %7842 = vmatpush1.msra.mxu0 0.0
      %7843 = vmatprep.subr.mxu0 0.0
      %7844 = vmatpush1.msra.mxu0 0.0
      %7845 = vmatprep.subr.mxu0 0.0
      %7846 = vmatpush1.msra.mxu0 0.0
      %7847 = vmatprep.subr.mxu0 0.0
      %7848 = vmatpush1.msra.mxu0 0.0
      %7849 = vmatprep.subr.mxu0 0.0
      %7850 = vmatpush1.msra.mxu0 0.0
      %7851 = vmatprep.subr.mxu0 0.0
      %7852 = vmatpush1.msra.mxu0 0.0
      %7853 = vmatprep.subr.mxu0 0.0
      %7854 = vmatpush1.msra.mxu0 0.0
      %7855 = vmatprep.subr.mxu0 0.0
      %7856 = vmatpush1.msra.mxu0 0.0
      %7857 = vmatprep.subr.mxu0 0.0
      %7858 = vmatpush1.msra.mxu0 0.0
      %7859 = vmatprep.subr.mxu0 0.0
      %7860 = vmatpush1.msra.mxu0 0.0
      %7861 = vmatprep.subr.mxu0 0.0
      %7862 = vmatpush1.msra.mxu0 0.0
      %7863 = vmatprep.subr.mxu0 0.0
      %7864 = vmatpush1.msra.mxu0 0.0
      %7865 = vmatprep.mubr.f32.mxu0 0.0
      %v7866 = vand.u32 %v7480, 4294901760
      %7867 = vmatmul.mubr.f32.gmra.mrb[0].mxu0 %v7866
      %v7868 = vpop.f32.mrb[0].mxu0
      %v7869 = vadd.f32 %v7791, %v7868
      %v7870 = vpop.f32.mrb[0].mxu0
      %v7871 = vadd.f32 %v7793, %v7870
      %7872 = vdwg.mxu0
      %v7873 = vand.u32 %v7474, 4294901760
      %7874 = vmatprep.subr.mxu0 %v7873
      %v7875 = vand.u32 %v7473, 4294901760
      %7876 = vmatpush1.msra.mxu0 %v7875
      %7877 = vmatprep.subr.mxu0 0.0
      %7878 = vmatpush1.msra.mxu0 0.0
      %7879 = vmatprep.subr.mxu0 0.0
      %7880 = vmatpush1.msra.mxu0 0.0
      %7881 = vmatprep.subr.mxu0 0.0
      %7882 = vmatpush1.msra.mxu0 0.0
      %7883 = vmatprep.subr.mxu0 0.0
      %7884 = vmatpush1.msra.mxu0 0.0
      %7885 = vmatprep.subr.mxu0 0.0
      %7886 = vmatpush1.msra.mxu0 0.0
      %7887 = vmatprep.subr.mxu0 0.0
      %7888 = vmatpush1.msra.mxu0 0.0
      %7889 = vmatprep.subr.mxu0 0.0
      %7890 = vmatpush1.msra.mxu0 0.0
      %7891 = vmatprep.subr.mxu0 0.0
      %7892 = vmatpush1.msra.mxu0 0.0
      %7893 = vmatprep.subr.mxu0 0.0
      %7894 = vmatpush1.msra.mxu0 0.0
      %7895 = vmatprep.subr.mxu0 0.0
      %7896 = vmatpush1.msra.mxu0 0.0
      %7897 = vmatprep.subr.mxu0 0.0
      %7898 = vmatpush1.msra.mxu0 0.0
      %7899 = vmatprep.subr.mxu0 0.0
      %7900 = vmatpush1.msra.mxu0 0.0
      %7901 = vmatprep.subr.mxu0 0.0
      %7902 = vmatpush1.msra.mxu0 0.0
      %7903 = vmatprep.subr.mxu0 0.0
      %7904 = vmatpush1.msra.mxu0 0.0
      %7905 = vmatprep.subr.mxu0 0.0
      %7906 = vmatpush1.msra.mxu0 0.0
      %7907 = vmatprep.subr.mxu0 0.0
      %7908 = vmatpush1.msra.mxu0 0.0
      %7909 = vmatprep.subr.mxu0 0.0
      %7910 = vmatpush1.msra.mxu0 0.0
      %7911 = vmatprep.subr.mxu0 0.0
      %7912 = vmatpush1.msra.mxu0 0.0
      %7913 = vmatprep.subr.mxu0 0.0
      %7914 = vmatpush1.msra.mxu0 0.0
      %7915 = vmatprep.subr.mxu0 0.0
      %7916 = vmatpush1.msra.mxu0 0.0
      %7917 = vmatprep.subr.mxu0 0.0
      %7918 = vmatpush1.msra.mxu0 0.0
      %7919 = vmatprep.subr.mxu0 0.0
      %7920 = vmatpush1.msra.mxu0 0.0
      %7921 = vmatprep.subr.mxu0 0.0
      %7922 = vmatpush1.msra.mxu0 0.0
      %7923 = vmatprep.subr.mxu0 0.0
      %7924 = vmatpush1.msra.mxu0 0.0
      %7925 = vmatprep.subr.mxu0 0.0
      %7926 = vmatpush1.msra.mxu0 0.0
      %7927 = vmatprep.subr.mxu0 0.0
      %7928 = vmatpush1.msra.mxu0 0.0
      %7929 = vmatprep.subr.mxu0 0.0
      %7930 = vmatpush1.msra.mxu0 0.0
      %7931 = vmatprep.subr.mxu0 0.0
      %7932 = vmatpush1.msra.mxu0 0.0
      %7933 = vmatprep.subr.mxu0 0.0
      %7934 = vmatpush1.msra.mxu0 0.0
      %7935 = vmatprep.subr.mxu0 0.0
      %7936 = vmatpush1.msra.mxu0 0.0
      %7937 = vmatprep.subr.mxu0 0.0
      %7938 = vmatpush1.msra.mxu0 0.0
      %7939 = vmatprep.mubr.f32.mxu0 0.0
      %v7940 = vand.u32 %v7480, 4294901760
      %7941 = vmatmul.mubr.f32.gmra.mrb[0].mxu0 %v7940
      %v7942 = vpop.f32.mrb[0].mxu0
      %v7943 = vadd.f32 %v7869, %v7942
      %v7944 = vpop.f32.mrb[0].mxu0
      %v7945 = vadd.f32 %v7871, %v7944
      %7946 = vdwg.mxu0
      %v7947 = vadd.f32 %v7459, %v7943
      %v7948 = vadd.f32 %v7460, %v7945
      %s7949 = scalar_lea.vmem %s3, 56
      %v7950 = vld [vmem:[%s7949] sm:$0xff]
      %v7952 = vsel %vm292, %v7950, 0
      %v7954 = vand.u32 %v4601, 4294901760
      %7955 = vmatprep.subr.mxu0 %v7954
      %v7956 = vand.u32 %v4600, 4294901760
      %7957 = vmatpush1.msra.mxu0 %v7956
      %7958 = vmatprep.subr.mxu0 0.0
      %7959 = vmatpush1.msra.mxu0 0.0
      %7960 = vmatprep.subr.mxu0 0.0
      %7961 = vmatpush1.msra.mxu0 0.0
      %7962 = vmatprep.subr.mxu0 0.0
      %7963 = vmatpush1.msra.mxu0 0.0
      %7964 = vmatprep.subr.mxu0 0.0
      %7965 = vmatpush1.msra.mxu0 0.0
      %7966 = vmatprep.subr.mxu0 0.0
      %7967 = vmatpush1.msra.mxu0 0.0
      %7968 = vmatprep.subr.mxu0 0.0
      %7969 = vmatpush1.msra.mxu0 0.0
      %7970 = vmatprep.subr.mxu0 0.0
      %7971 = vmatpush1.msra.mxu0 0.0
      %7972 = vmatprep.subr.mxu0 0.0
      %7973 = vmatpush1.msra.mxu0 0.0
      %7974 = vmatprep.subr.mxu0 0.0
      %7975 = vmatpush1.msra.mxu0 0.0
      %7976 = vmatprep.subr.mxu0 0.0
      %7977 = vmatpush1.msra.mxu0 0.0
      %7978 = vmatprep.subr.mxu0 0.0
      %7979 = vmatpush1.msra.mxu0 0.0
      %7980 = vmatprep.subr.mxu0 0.0
      %7981 = vmatpush1.msra.mxu0 0.0
      %7982 = vmatprep.subr.mxu0 0.0
      %7983 = vmatpush1.msra.mxu0 0.0
      %7984 = vmatprep.subr.mxu0 0.0
      %7985 = vmatpush1.msra.mxu0 0.0
      %7986 = vmatprep.subr.mxu0 0.0
      %7987 = vmatpush1.msra.mxu0 0.0
      %7988 = vmatprep.subr.mxu0 0.0
      %7989 = vmatpush1.msra.mxu0 0.0
      %7990 = vmatprep.subr.mxu0 0.0
      %7991 = vmatpush1.msra.mxu0 0.0
      %7992 = vmatprep.subr.mxu0 0.0
      %7993 = vmatpush1.msra.mxu0 0.0
      %7994 = vmatprep.subr.mxu0 0.0
      %7995 = vmatpush1.msra.mxu0 0.0
      %7996 = vmatprep.subr.mxu0 0.0
      %7997 = vmatpush1.msra.mxu0 0.0
      %7998 = vmatprep.subr.mxu0 0.0
      %7999 = vmatpush1.msra.mxu0 0.0
      %8000 = vmatprep.subr.mxu0 0.0
      %8001 = vmatpush1.msra.mxu0 0.0
      %8002 = vmatprep.subr.mxu0 0.0
      %8003 = vmatpush1.msra.mxu0 0.0
      %8004 = vmatprep.subr.mxu0 0.0
      %8005 = vmatpush1.msra.mxu0 0.0
      %8006 = vmatprep.subr.mxu0 0.0
      %8007 = vmatpush1.msra.mxu0 0.0
      %8008 = vmatprep.subr.mxu0 0.0
      %8009 = vmatpush1.msra.mxu0 0.0
      %8010 = vmatprep.subr.mxu0 0.0
      %8011 = vmatpush1.msra.mxu0 0.0
      %8012 = vmatprep.subr.mxu0 0.0
      %8013 = vmatpush1.msra.mxu0 0.0
      %8014 = vmatprep.subr.mxu0 0.0
      %8015 = vmatpush1.msra.mxu0 0.0
      %8016 = vmatprep.subr.mxu0 0.0
      %8017 = vmatpush1.msra.mxu0 0.0
      %8018 = vmatprep.subr.mxu0 0.0
      %8019 = vmatpush1.msra.mxu0 0.0
      %8020 = vmatprep.mubr.f32.mxu0 0.0
      %v8021 = vand.u32 %v7952, 4294901760
      %v8022 = vsub.f32 %v7952, %v8021
      %v8023 = vand.u32 %v8022, 4294901760
      %v8024 = vsub.f32 %v8022, %v8023
      %v8025 = vand.u32 %v8024, 4294901760
      %8026 = vmatmul.mubr.f32.gmra.mrb[0].mxu0 %v8025
      %v8027 = vpop.f32.mrb[0].mxu0
      %v8028 = vadd.f32 0.0, %v8027
      %v8029 = vpop.f32.mrb[0].mxu0
      %v8030 = vadd.f32 0.0, %v8029
      %8031 = vdwg.mxu0
      %v8032 = vand.u32 %v4601, 4294901760
      %v8033 = vsub.f32 %v4601, %v8032
      %v8034 = vand.u32 %v8033, 4294901760
      %v8035 = vsub.f32 %v8033, %v8034
      %v8036 = vand.u32 %v8035, 4294901760
      %8037 = vmatprep.subr.mxu0 %v8036
      %v8038 = vand.u32 %v4600, 4294901760
      %v8039 = vsub.f32 %v4600, %v8038
      %v8040 = vand.u32 %v8039, 4294901760
      %v8041 = vsub.f32 %v8039, %v8040
      %v8042 = vand.u32 %v8041, 4294901760
      %8043 = vmatpush1.msra.mxu0 %v8042
      %8044 = vmatprep.subr.mxu0 0.0
      %8045 = vmatpush1.msra.mxu0 0.0
      %8046 = vmatprep.subr.mxu0 0.0
      %8047 = vmatpush1.msra.mxu0 0.0
      %8048 = vmatprep.subr.mxu0 0.0
      %8049 = vmatpush1.msra.mxu0 0.0
      %8050 = vmatprep.subr.mxu0 0.0
      %8051 = vmatpush1.msra.mxu0 0.0
      %8052 = vmatprep.subr.mxu0 0.0
      %8053 = vmatpush1.msra.mxu0 0.0
      %8054 = vmatprep.subr.mxu0 0.0
      %8055 = vmatpush1.msra.mxu0 0.0
      %8056 = vmatprep.subr.mxu0 0.0
      %8057 = vmatpush1.msra.mxu0 0.0
      %8058 = vmatprep.subr.mxu0 0.0
      %8059 = vmatpush1.msra.mxu0 0.0
      %8060 = vmatprep.subr.mxu0 0.0
      %8061 = vmatpush1.msra.mxu0 0.0
      %8062 = vmatprep.subr.mxu0 0.0
      %8063 = vmatpush1.msra.mxu0 0.0
      %8064 = vmatprep.subr.mxu0 0.0
      %8065 = vmatpush1.msra.mxu0 0.0
      %8066 = vmatprep.subr.mxu0 0.0
      %8067 = vmatpush1.msra.mxu0 0.0
      %8068 = vmatprep.subr.mxu0 0.0
      %8069 = vmatpush1.msra.mxu0 0.0
      %8070 = vmatprep.subr.mxu0 0.0
      %8071 = vmatpush1.msra.mxu0 0.0
      %8072 = vmatprep.subr.mxu0 0.0
      %8073 = vmatpush1.msra.mxu0 0.0
      %8074 = vmatprep.subr.mxu0 0.0
      %8075 = vmatpush1.msra.mxu0 0.0
      %8076 = vmatprep.subr.mxu0 0.0
      %8077 = vmatpush1.msra.mxu0 0.0
      %8078 = vmatprep.subr.mxu0 0.0
      %8079 = vmatpush1.msra.mxu0 0.0
      %8080 = vmatprep.subr.mxu0 0.0
      %8081 = vmatpush1.msra.mxu0 0.0
      %8082 = vmatprep.subr.mxu0 0.0
      %8083 = vmatpush1.msra.mxu0 0.0
      %8084 = vmatprep.subr.mxu0 0.0
      %8085 = vmatpush1.msra.mxu0 0.0
      %8086 = vmatprep.subr.mxu0 0.0
      %8087 = vmatpush1.msra.mxu0 0.0
      %8088 = vmatprep.subr.mxu0 0.0
      %8089 = vmatpush1.msra.mxu0 0.0
      %8090 = vmatprep.subr.mxu0 0.0
      %8091 = vmatpush1.msra.mxu0 0.0
      %8092 = vmatprep.subr.mxu0 0.0
      %8093 = vmatpush1.msra.mxu0 0.0
      %8094 = vmatprep.subr.mxu0 0.0
      %8095 = vmatpush1.msra.mxu0 0.0
      %8096 = vmatprep.subr.mxu0 0.0
      %8097 = vmatpush1.msra.mxu0 0.0
      %8098 = vmatprep.subr.mxu0 0.0
      %8099 = vmatpush1.msra.mxu0 0.0
      %8100 = vmatprep.subr.mxu0 0.0
      %8101 = vmatpush1.msra.mxu0 0.0
      %8102 = vmatprep.subr.mxu0 0.0
      %8103 = vmatpush1.msra.mxu0 0.0
      %8104 = vmatprep.subr.mxu0 0.0
      %8105 = vmatpush1.msra.mxu0 0.0
      %8106 = vmatprep.mubr.f32.mxu0 0.0
      %v8107 = vand.u32 %v7952, 4294901760
      %8108 = vmatmul.mubr.f32.gmra.mrb[0].mxu0 %v8107
      %v8109 = vpop.f32.mrb[0].mxu0
      %v8110 = vadd.f32 %v8028, %v8109
      %v8111 = vpop.f32.mrb[0].mxu0
      %v8112 = vadd.f32 %v8030, %v8111
      %8113 = vdwg.mxu0
      %v8114 = vand.u32 %v4601, 4294901760
      %v8115 = vsub.f32 %v4601, %v8114
      %8116 = vmatprep.subr.mxu0 %v8115
      %v8117 = vand.u32 %v4600, 4294901760
      %v8118 = vsub.f32 %v4600, %v8117
      %8119 = vmatpush1.msra.mxu0 %v8118
      %8120 = vmatprep.subr.mxu0 0.0
      %8121 = vmatpush1.msra.mxu0 0.0
      %8122 = vmatprep.subr.mxu0 0.0
      %8123 = vmatpush1.msra.mxu0 0.0
      %8124 = vmatprep.subr.mxu0 0.0
      %8125 = vmatpush1.msra.mxu0 0.0
      %8126 = vmatprep.subr.mxu0 0.0
      %8127 = vmatpush1.msra.mxu0 0.0
      %8128 = vmatprep.subr.mxu0 0.0
      %8129 = vmatpush1.msra.mxu0 0.0
      %8130 = vmatprep.subr.mxu0 0.0
      %8131 = vmatpush1.msra.mxu0 0.0
      %8132 = vmatprep.subr.mxu0 0.0
      %8133 = vmatpush1.msra.mxu0 0.0
      %8134 = vmatprep.subr.mxu0 0.0
      %8135 = vmatpush1.msra.mxu0 0.0
      %8136 = vmatprep.subr.mxu0 0.0
      %8137 = vmatpush1.msra.mxu0 0.0
      %8138 = vmatprep.subr.mxu0 0.0
      %8139 = vmatpush1.msra.mxu0 0.0
      %8140 = vmatprep.subr.mxu0 0.0
      %8141 = vmatpush1.msra.mxu0 0.0
      %8142 = vmatprep.subr.mxu0 0.0
      %8143 = vmatpush1.msra.mxu0 0.0
      %8144 = vmatprep.subr.mxu0 0.0
      %8145 = vmatpush1.msra.mxu0 0.0
      %8146 = vmatprep.subr.mxu0 0.0
      %8147 = vmatpush1.msra.mxu0 0.0
      %8148 = vmatprep.subr.mxu0 0.0
      %8149 = vmatpush1.msra.mxu0 0.0
      %8150 = vmatprep.subr.mxu0 0.0
      %8151 = vmatpush1.msra.mxu0 0.0
      %8152 = vmatprep.subr.mxu0 0.0
      %8153 = vmatpush1.msra.mxu0 0.0
      %8154 = vmatprep.subr.mxu0 0.0
      %8155 = vmatpush1.msra.mxu0 0.0
      %8156 = vmatprep.subr.mxu0 0.0
      %8157 = vmatpush1.msra.mxu0 0.0
      %8158 = vmatprep.subr.mxu0 0.0
      %8159 = vmatpush1.msra.mxu0 0.0
      %8160 = vmatprep.subr.mxu0 0.0
      %8161 = vmatpush1.msra.mxu0 0.0
      %8162 = vmatprep.subr.mxu0 0.0
      %8163 = vmatpush1.msra.mxu0 0.0
      %8164 = vmatprep.subr.mxu0 0.0
      %8165 = vmatpush1.msra.mxu0 0.0
      %8166 = vmatprep.subr.mxu0 0.0
      %8167 = vmatpush1.msra.mxu0 0.0
      %8168 = vmatprep.subr.mxu0 0.0
      %8169 = vmatpush1.msra.mxu0 0.0
      %8170 = vmatprep.subr.mxu0 0.0
      %8171 = vmatpush1.msra.mxu0 0.0
      %8172 = vmatprep.subr.mxu0 0.0
      %8173 = vmatpush1.msra.mxu0 0.0
      %8174 = vmatprep.subr.mxu0 0.0
      %8175 = vmatpush1.msra.mxu0 0.0
      %8176 = vmatprep.subr.mxu0 0.0
      %8177 = vmatpush1.msra.mxu0 0.0
      %8178 = vmatprep.subr.mxu0 0.0
      %8179 = vmatpush1.msra.mxu0 0.0
      %8180 = vmatprep.subr.mxu0 0.0
      %8181 = vmatpush1.msra.mxu0 0.0
      %8182 = vmatprep.mubr.f32.mxu0 0.0
      %v8183 = vand.u32 %v7952, 4294901760
      %v8184 = vsub.f32 %v7952, %v8183
      %8185 = vmatmul.mubr.f32.gmra.mrb[0].mxu0 %v8184
      %v8186 = vpop.f32.mrb[0].mxu0
      %v8187 = vadd.f32 %v8110, %v8186
      %v8188 = vpop.f32.mrb[0].mxu0
      %v8189 = vadd.f32 %v8112, %v8188
      %8190 = vdwg.mxu0
      %v8191 = vand.u32 %v4601, 4294901760
      %8192 = vmatprep.subr.mxu0 %v8191
      %v8193 = vand.u32 %v4600, 4294901760
      %8194 = vmatpush1.msra.mxu0 %v8193
      %8195 = vmatprep.subr.mxu0 0.0
      %8196 = vmatpush1.msra.mxu0 0.0
      %8197 = vmatprep.subr.mxu0 0.0
      %8198 = vmatpush1.msra.mxu0 0.0
      %8199 = vmatprep.subr.mxu0 0.0
      %8200 = vmatpush1.msra.mxu0 0.0
      %8201 = vmatprep.subr.mxu0 0.0
      %8202 = vmatpush1.msra.mxu0 0.0
      %8203 = vmatprep.subr.mxu0 0.0
      %8204 = vmatpush1.msra.mxu0 0.0
      %8205 = vmatprep.subr.mxu0 0.0
      %8206 = vmatpush1.msra.mxu0 0.0
      %8207 = vmatprep.subr.mxu0 0.0
      %8208 = vmatpush1.msra.mxu0 0.0
      %8209 = vmatprep.subr.mxu0 0.0
      %8210 = vmatpush1.msra.mxu0 0.0
      %8211 = vmatprep.subr.mxu0 0.0
      %8212 = vmatpush1.msra.mxu0 0.0
      %8213 = vmatprep.subr.mxu0 0.0
      %8214 = vmatpush1.msra.mxu0 0.0
      %8215 = vmatprep.subr.mxu0 0.0
      %8216 = vmatpush1.msra.mxu0 0.0
      %8217 = vmatprep.subr.mxu0 0.0
      %8218 = vmatpush1.msra.mxu0 0.0
      %8219 = vmatprep.subr.mxu0 0.0
      %8220 = vmatpush1.msra.mxu0 0.0
      %8221 = vmatprep.subr.mxu0 0.0
      %8222 = vmatpush1.msra.mxu0 0.0
      %8223 = vmatprep.subr.mxu0 0.0
      %8224 = vmatpush1.msra.mxu0 0.0
      %8225 = vmatprep.subr.mxu0 0.0
      %8226 = vmatpush1.msra.mxu0 0.0
      %8227 = vmatprep.subr.mxu0 0.0
      %8228 = vmatpush1.msra.mxu0 0.0
      %8229 = vmatprep.subr.mxu0 0.0
      %8230 = vmatpush1.msra.mxu0 0.0
      %8231 = vmatprep.subr.mxu0 0.0
      %8232 = vmatpush1.msra.mxu0 0.0
      %8233 = vmatprep.subr.mxu0 0.0
      %8234 = vmatpush1.msra.mxu0 0.0
      %8235 = vmatprep.subr.mxu0 0.0
      %8236 = vmatpush1.msra.mxu0 0.0
      %8237 = vmatprep.subr.mxu0 0.0
      %8238 = vmatpush1.msra.mxu0 0.0
      %8239 = vmatprep.subr.mxu0 0.0
      %8240 = vmatpush1.msra.mxu0 0.0
      %8241 = vmatprep.subr.mxu0 0.0
      %8242 = vmatpush1.msra.mxu0 0.0
      %8243 = vmatprep.subr.mxu0 0.0
      %8244 = vmatpush1.msra.mxu0 0.0
      %8245 = vmatprep.subr.mxu0 0.0
      %8246 = vmatpush1.msra.mxu0 0.0
      %8247 = vmatprep.subr.mxu0 0.0
      %8248 = vmatpush1.msra.mxu0 0.0
      %8249 = vmatprep.subr.mxu0 0.0
      %8250 = vmatpush1.msra.mxu0 0.0
      %8251 = vmatprep.subr.mxu0 0.0
      %8252 = vmatpush1.msra.mxu0 0.0
      %8253 = vmatprep.subr.mxu0 0.0
      %8254 = vmatpush1.msra.mxu0 0.0
      %8255 = vmatprep.subr.mxu0 0.0
      %8256 = vmatpush1.msra.mxu0 0.0
      %8257 = vmatprep.mubr.f32.mxu0 0.0
      %v8258 = vand.u32 %v7952, 4294901760
      %v8259 = vsub.f32 %v7952, %v8258
      %v8260 = vand.u32 %v8259, 4294901760
      %8261 = vmatmul.mubr.f32.gmra.mrb[0].mxu0 %v8260
      %v8262 = vpop.f32.mrb[0].mxu0
      %v8263 = vadd.f32 %v8187, %v8262
      %v8264 = vpop.f32.mrb[0].mxu0
      %v8265 = vadd.f32 %v8189, %v8264
      %8266 = vdwg.mxu0
      %v8267 = vand.u32 %v4601, 4294901760
      %v8268 = vsub.f32 %v4601, %v8267
      %v8269 = vand.u32 %v8268, 4294901760
      %8270 = vmatprep.subr.mxu0 %v8269
      %v8271 = vand.u32 %v4600, 4294901760
      %v8272 = vsub.f32 %v4600, %v8271
      %v8273 = vand.u32 %v8272, 4294901760
      %8274 = vmatpush1.msra.mxu0 %v8273
      %8275 = vmatprep.subr.mxu0 0.0
      %8276 = vmatpush1.msra.mxu0 0.0
      %8277 = vmatprep.subr.mxu0 0.0
      %8278 = vmatpush1.msra.mxu0 0.0
      %8279 = vmatprep.subr.mxu0 0.0
      %8280 = vmatpush1.msra.mxu0 0.0
      %8281 = vmatprep.subr.mxu0 0.0
      %8282 = vmatpush1.msra.mxu0 0.0
      %8283 = vmatprep.subr.mxu0 0.0
      %8284 = vmatpush1.msra.mxu0 0.0
      %8285 = vmatprep.subr.mxu0 0.0
      %8286 = vmatpush1.msra.mxu0 0.0
      %8287 = vmatprep.subr.mxu0 0.0
      %8288 = vmatpush1.msra.mxu0 0.0
      %8289 = vmatprep.subr.mxu0 0.0
      %8290 = vmatpush1.msra.mxu0 0.0
      %8291 = vmatprep.subr.mxu0 0.0
      %8292 = vmatpush1.msra.mxu0 0.0
      %8293 = vmatprep.subr.mxu0 0.0
      %8294 = vmatpush1.msra.mxu0 0.0
      %8295 = vmatprep.subr.mxu0 0.0
      %8296 = vmatpush1.msra.mxu0 0.0
      %8297 = vmatprep.subr.mxu0 0.0
      %8298 = vmatpush1.msra.mxu0 0.0
      %8299 = vmatprep.subr.mxu0 0.0
      %8300 = vmatpush1.msra.mxu0 0.0
      %8301 = vmatprep.subr.mxu0 0.0
      %8302 = vmatpush1.msra.mxu0 0.0
      %8303 = vmatprep.subr.mxu0 0.0
      %8304 = vmatpush1.msra.mxu0 0.0
      %8305 = vmatprep.subr.mxu0 0.0
      %8306 = vmatpush1.msra.mxu0 0.0
      %8307 = vmatprep.subr.mxu0 0.0
      %8308 = vmatpush1.msra.mxu0 0.0
      %8309 = vmatprep.subr.mxu0 0.0
      %8310 = vmatpush1.msra.mxu0 0.0
      %8311 = vmatprep.subr.mxu0 0.0
      %8312 = vmatpush1.msra.mxu0 0.0
      %8313 = vmatprep.subr.mxu0 0.0
      %8314 = vmatpush1.msra.mxu0 0.0
      %8315 = vmatprep.subr.mxu0 0.0
      %8316 = vmatpush1.msra.mxu0 0.0
      %8317 = vmatprep.subr.mxu0 0.0
      %8318 = vmatpush1.msra.mxu0 0.0
      %8319 = vmatprep.subr.mxu0 0.0
      %8320 = vmatpush1.msra.mxu0 0.0
      %8321 = vmatprep.subr.mxu0 0.0
      %8322 = vmatpush1.msra.mxu0 0.0
      %8323 = vmatprep.subr.mxu0 0.0
      %8324 = vmatpush1.msra.mxu0 0.0
      %8325 = vmatprep.subr.mxu0 0.0
      %8326 = vmatpush1.msra.mxu0 0.0
      %8327 = vmatprep.subr.mxu0 0.0
      %8328 = vmatpush1.msra.mxu0 0.0
      %8329 = vmatprep.subr.mxu0 0.0
      %8330 = vmatpush1.msra.mxu0 0.0
      %8331 = vmatprep.subr.mxu0 0.0
      %8332 = vmatpush1.msra.mxu0 0.0
      %8333 = vmatprep.subr.mxu0 0.0
      %8334 = vmatpush1.msra.mxu0 0.0
      %8335 = vmatprep.subr.mxu0 0.0
      %8336 = vmatpush1.msra.mxu0 0.0
      %8337 = vmatprep.mubr.f32.mxu0 0.0
      %v8338 = vand.u32 %v7952, 4294901760
      %8339 = vmatmul.mubr.f32.gmra.mrb[0].mxu0 %v8338
      %v8340 = vpop.f32.mrb[0].mxu0
      %v8341 = vadd.f32 %v8263, %v8340
      %v8342 = vpop.f32.mrb[0].mxu0
      %v8343 = vadd.f32 %v8265, %v8342
      %8344 = vdwg.mxu0
      %v8345 = vand.u32 %v4601, 4294901760
      %8346 = vmatprep.subr.mxu0 %v8345
      %v8347 = vand.u32 %v4600, 4294901760
      %8348 = vmatpush1.msra.mxu0 %v8347
      %8349 = vmatprep.subr.mxu0 0.0
      %8350 = vmatpush1.msra.mxu0 0.0
      %8351 = vmatprep.subr.mxu0 0.0
      %8352 = vmatpush1.msra.mxu0 0.0
      %8353 = vmatprep.subr.mxu0 0.0
      %8354 = vmatpush1.msra.mxu0 0.0
      %8355 = vmatprep.subr.mxu0 0.0
      %8356 = vmatpush1.msra.mxu0 0.0
      %8357 = vmatprep.subr.mxu0 0.0
      %8358 = vmatpush1.msra.mxu0 0.0
      %8359 = vmatprep.subr.mxu0 0.0
      %8360 = vmatpush1.msra.mxu0 0.0
      %8361 = vmatprep.subr.mxu0 0.0
      %8362 = vmatpush1.msra.mxu0 0.0
      %8363 = vmatprep.subr.mxu0 0.0
      %8364 = vmatpush1.msra.mxu0 0.0
      %8365 = vmatprep.subr.mxu0 0.0
      %8366 = vmatpush1.msra.mxu0 0.0
      %8367 = vmatprep.subr.mxu0 0.0
      %8368 = vmatpush1.msra.mxu0 0.0
      %8369 = vmatprep.subr.mxu0 0.0
      %8370 = vmatpush1.msra.mxu0 0.0
      %8371 = vmatprep.subr.mxu0 0.0
      %8372 = vmatpush1.msra.mxu0 0.0
      %8373 = vmatprep.subr.mxu0 0.0
      %8374 = vmatpush1.msra.mxu0 0.0
      %8375 = vmatprep.subr.mxu0 0.0
      %8376 = vmatpush1.msra.mxu0 0.0
      %8377 = vmatprep.subr.mxu0 0.0
      %8378 = vmatpush1.msra.mxu0 0.0
      %8379 = vmatprep.subr.mxu0 0.0
      %8380 = vmatpush1.msra.mxu0 0.0
      %8381 = vmatprep.subr.mxu0 0.0
      %8382 = vmatpush1.msra.mxu0 0.0
      %8383 = vmatprep.subr.mxu0 0.0
      %8384 = vmatpush1.msra.mxu0 0.0
      %8385 = vmatprep.subr.mxu0 0.0
      %8386 = vmatpush1.msra.mxu0 0.0
      %8387 = vmatprep.subr.mxu0 0.0
      %8388 = vmatpush1.msra.mxu0 0.0
      %8389 = vmatprep.subr.mxu0 0.0
      %8390 = vmatpush1.msra.mxu0 0.0
      %8391 = vmatprep.subr.mxu0 0.0
      %8392 = vmatpush1.msra.mxu0 0.0
      %8393 = vmatprep.subr.mxu0 0.0
      %8394 = vmatpush1.msra.mxu0 0.0
      %8395 = vmatprep.subr.mxu0 0.0
      %8396 = vmatpush1.msra.mxu0 0.0
      %8397 = vmatprep.subr.mxu0 0.0
      %8398 = vmatpush1.msra.mxu0 0.0
      %8399 = vmatprep.subr.mxu0 0.0
      %8400 = vmatpush1.msra.mxu0 0.0
      %8401 = vmatprep.subr.mxu0 0.0
      %8402 = vmatpush1.msra.mxu0 0.0
      %8403 = vmatprep.subr.mxu0 0.0
      %8404 = vmatpush1.msra.mxu0 0.0
      %8405 = vmatprep.subr.mxu0 0.0
      %8406 = vmatpush1.msra.mxu0 0.0
      %8407 = vmatprep.subr.mxu0 0.0
      %8408 = vmatpush1.msra.mxu0 0.0
      %8409 = vmatprep.subr.mxu0 0.0
      %8410 = vmatpush1.msra.mxu0 0.0
      %8411 = vmatprep.mubr.f32.mxu0 0.0
      %v8412 = vand.u32 %v7952, 4294901760
      %8413 = vmatmul.mubr.f32.gmra.mrb[0].mxu0 %v8412
      %v8414 = vpop.f32.mrb[0].mxu0
      %v8415 = vadd.f32 %v8341, %v8414
      %v8416 = vpop.f32.mrb[0].mxu0
      %v8417 = vadd.f32 %v8343, %v8416
      %8418 = vdwg.mxu0
      %v8419 = vadd.f32 %v7947, %v8415
      %v8420 = vadd.f32 %v7948, %v8417
      %s8421 = scalar_lea.vmem %s3, 64
      %v8422 = vld [vmem:[%s8421] sm:$0xff]
      %v8424 = vsel %vm292, %v8422, 0
      %v8426 = vand.u32 %v7476, 4294901760
      %8427 = vmatprep.subr.mxu0 %v8426
      %v8428 = vand.u32 %v7475, 4294901760
      %8429 = vmatpush1.msra.mxu0 %v8428
      %8430 = vmatprep.subr.mxu0 0.0
      %8431 = vmatpush1.msra.mxu0 0.0
      %8432 = vmatprep.subr.mxu0 0.0
      %8433 = vmatpush1.msra.mxu0 0.0
      %8434 = vmatprep.subr.mxu0 0.0
      %8435 = vmatpush1.msra.mxu0 0.0
      %8436 = vmatprep.subr.mxu0 0.0
      %8437 = vmatpush1.msra.mxu0 0.0
      %8438 = vmatprep.subr.mxu0 0.0
      %8439 = vmatpush1.msra.mxu0 0.0
      %8440 = vmatprep.subr.mxu0 0.0
      %8441 = vmatpush1.msra.mxu0 0.0
      %8442 = vmatprep.subr.mxu0 0.0
      %8443 = vmatpush1.msra.mxu0 0.0
      %8444 = vmatprep.subr.mxu0 0.0
      %8445 = vmatpush1.msra.mxu0 0.0
      %8446 = vmatprep.subr.mxu0 0.0
      %8447 = vmatpush1.msra.mxu0 0.0
      %8448 = vmatprep.subr.mxu0 0.0
      %8449 = vmatpush1.msra.mxu0 0.0
      %8450 = vmatprep.subr.mxu0 0.0
      %8451 = vmatpush1.msra.mxu0 0.0
      %8452 = vmatprep.subr.mxu0 0.0
      %8453 = vmatpush1.msra.mxu0 0.0
      %8454 = vmatprep.subr.mxu0 0.0
      %8455 = vmatpush1.msra.mxu0 0.0
      %8456 = vmatprep.subr.mxu0 0.0
      %8457 = vmatpush1.msra.mxu0 0.0
      %8458 = vmatprep.subr.mxu0 0.0
      %8459 = vmatpush1.msra.mxu0 0.0
      %8460 = vmatprep.subr.mxu0 0.0
      %8461 = vmatpush1.msra.mxu0 0.0
      %8462 = vmatprep.subr.mxu0 0.0
      %8463 = vmatpush1.msra.mxu0 0.0
      %8464 = vmatprep.subr.mxu0 0.0
      %8465 = vmatpush1.msra.mxu0 0.0
      %8466 = vmatprep.subr.mxu0 0.0
      %8467 = vmatpush1.msra.mxu0 0.0
      %8468 = vmatprep.subr.mxu0 0.0
      %8469 = vmatpush1.msra.mxu0 0.0
      %8470 = vmatprep.subr.mxu0 0.0
      %8471 = vmatpush1.msra.mxu0 0.0
      %8472 = vmatprep.subr.mxu0 0.0
      %8473 = vmatpush1.msra.mxu0 0.0
      %8474 = vmatprep.subr.mxu0 0.0
      %8475 = vmatpush1.msra.mxu0 0.0
      %8476 = vmatprep.subr.mxu0 0.0
      %8477 = vmatpush1.msra.mxu0 0.0
      %8478 = vmatprep.subr.mxu0 0.0
      %8479 = vmatpush1.msra.mxu0 0.0
      %8480 = vmatprep.subr.mxu0 0.0
      %8481 = vmatpush1.msra.mxu0 0.0
      %8482 = vmatprep.subr.mxu0 0.0
      %8483 = vmatpush1.msra.mxu0 0.0
      %8484 = vmatprep.subr.mxu0 0.0
      %8485 = vmatpush1.msra.mxu0 0.0
      %8486 = vmatprep.subr.mxu0 0.0
      %8487 = vmatpush1.msra.mxu0 0.0
      %8488 = vmatprep.subr.mxu0 0.0
      %8489 = vmatpush1.msra.mxu0 0.0
      %8490 = vmatprep.subr.mxu0 0.0
      %8491 = vmatpush1.msra.mxu0 0.0
      %8492 = vmatprep.mubr.f32.mxu0 0.0
      %v8493 = vand.u32 %v8424, 4294901760
      %v8494 = vsub.f32 %v8424, %v8493
      %v8495 = vand.u32 %v8494, 4294901760
      %v8496 = vsub.f32 %v8494, %v8495
      %v8497 = vand.u32 %v8496, 4294901760
      %8498 = vmatmul.mubr.f32.gmra.mrb[0].mxu0 %v8497
      %v8499 = vpop.f32.mrb[0].mxu0
      %v8500 = vadd.f32 0.0, %v8499
      %v8501 = vpop.f32.mrb[0].mxu0
      %v8502 = vadd.f32 0.0, %v8501
      %8503 = vdwg.mxu0
      %v8504 = vand.u32 %v7476, 4294901760
      %v8505 = vsub.f32 %v7476, %v8504
      %v8506 = vand.u32 %v8505, 4294901760
      %v8507 = vsub.f32 %v8505, %v8506
      %v8508 = vand.u32 %v8507, 4294901760
      %8509 = vmatprep.subr.mxu0 %v8508
      %v8510 = vand.u32 %v7475, 4294901760
      %v8511 = vsub.f32 %v7475, %v8510
      %v8512 = vand.u32 %v8511, 4294901760
      %v8513 = vsub.f32 %v8511, %v8512
      %v8514 = vand.u32 %v8513, 4294901760
      %8515 = vmatpush1.msra.mxu0 %v8514
      %8516 = vmatprep.subr.mxu0 0.0
      %8517 = vmatpush1.msra.mxu0 0.0
      %8518 = vmatprep.subr.mxu0 0.0
      %8519 = vmatpush1.msra.mxu0 0.0
      %8520 = vmatprep.subr.mxu0 0.0
      %8521 = vmatpush1.msra.mxu0 0.0
      %8522 = vmatprep.subr.mxu0 0.0
      %8523 = vmatpush1.msra.mxu0 0.0
      %8524 = vmatprep.subr.mxu0 0.0
      %8525 = vmatpush1.msra.mxu0 0.0
      %8526 = vmatprep.subr.mxu0 0.0
      %8527 = vmatpush1.msra.mxu0 0.0
      %8528 = vmatprep.subr.mxu0 0.0
      %8529 = vmatpush1.msra.mxu0 0.0
      %8530 = vmatprep.subr.mxu0 0.0
      %8531 = vmatpush1.msra.mxu0 0.0
      %8532 = vmatprep.subr.mxu0 0.0
      %8533 = vmatpush1.msra.mxu0 0.0
      %8534 = vmatprep.subr.mxu0 0.0
      %8535 = vmatpush1.msra.mxu0 0.0
      %8536 = vmatprep.subr.mxu0 0.0
      %8537 = vmatpush1.msra.mxu0 0.0
      %8538 = vmatprep.subr.mxu0 0.0
      %8539 = vmatpush1.msra.mxu0 0.0
      %8540 = vmatprep.subr.mxu0 0.0
      %8541 = vmatpush1.msra.mxu0 0.0
      %8542 = vmatprep.subr.mxu0 0.0
      %8543 = vmatpush1.msra.mxu0 0.0
      %8544 = vmatprep.subr.mxu0 0.0
      %8545 = vmatpush1.msra.mxu0 0.0
      %8546 = vmatprep.subr.mxu0 0.0
      %8547 = vmatpush1.msra.mxu0 0.0
      %8548 = vmatprep.subr.mxu0 0.0
      %8549 = vmatpush1.msra.mxu0 0.0
      %8550 = vmatprep.subr.mxu0 0.0
      %8551 = vmatpush1.msra.mxu0 0.0
      %8552 = vmatprep.subr.mxu0 0.0
      %8553 = vmatpush1.msra.mxu0 0.0
      %8554 = vmatprep.subr.mxu0 0.0
      %8555 = vmatpush1.msra.mxu0 0.0
      %8556 = vmatprep.subr.mxu0 0.0
      %8557 = vmatpush1.msra.mxu0 0.0
      %8558 = vmatprep.subr.mxu0 0.0
      %8559 = vmatpush1.msra.mxu0 0.0
      %8560 = vmatprep.subr.mxu0 0.0
      %8561 = vmatpush1.msra.mxu0 0.0
      %8562 = vmatprep.subr.mxu0 0.0
      %8563 = vmatpush1.msra.mxu0 0.0
      %8564 = vmatprep.subr.mxu0 0.0
      %8565 = vmatpush1.msra.mxu0 0.0
      %8566 = vmatprep.subr.mxu0 0.0
      %8567 = vmatpush1.msra.mxu0 0.0
      %8568 = vmatprep.subr.mxu0 0.0
      %8569 = vmatpush1.msra.mxu0 0.0
      %8570 = vmatprep.subr.mxu0 0.0
      %8571 = vmatpush1.msra.mxu0 0.0
      %8572 = vmatprep.subr.mxu0 0.0
      %8573 = vmatpush1.msra.mxu0 0.0
      %8574 = vmatprep.subr.mxu0 0.0
      %8575 = vmatpush1.msra.mxu0 0.0
      %8576 = vmatprep.subr.mxu0 0.0
      %8577 = vmatpush1.msra.mxu0 0.0
      %8578 = vmatprep.mubr.f32.mxu0 0.0
      %v8579 = vand.u32 %v8424, 4294901760
      %8580 = vmatmul.mubr.f32.gmra.mrb[0].mxu0 %v8579
      %v8581 = vpop.f32.mrb[0].mxu0
      %v8582 = vadd.f32 %v8500, %v8581
      %v8583 = vpop.f32.mrb[0].mxu0
      %v8584 = vadd.f32 %v8502, %v8583
      %8585 = vdwg.mxu0
      %v8586 = vand.u32 %v7476, 4294901760
      %v8587 = vsub.f32 %v7476, %v8586
      %8588 = vmatprep.subr.mxu0 %v8587
      %v8589 = vand.u32 %v7475, 4294901760
      %v8590 = vsub.f32 %v7475, %v8589
      %8591 = vmatpush1.msra.mxu0 %v8590
      %8592 = vmatprep.subr.mxu0 0.0
      %8593 = vmatpush1.msra.mxu0 0.0
      %8594 = vmatprep.subr.mxu0 0.0
      %8595 = vmatpush1.msra.mxu0 0.0
      %8596 = vmatprep.subr.mxu0 0.0
      %8597 = vmatpush1.msra.mxu0 0.0
      %8598 = vmatprep.subr.mxu0 0.0
      %8599 = vmatpush1.msra.mxu0 0.0
      %8600 = vmatprep.subr.mxu0 0.0
      %8601 = vmatpush1.msra.mxu0 0.0
      %8602 = vmatprep.subr.mxu0 0.0
      %8603 = vmatpush1.msra.mxu0 0.0
      %8604 = vmatprep.subr.mxu0 0.0
      %8605 = vmatpush1.msra.mxu0 0.0
      %8606 = vmatprep.subr.mxu0 0.0
      %8607 = vmatpush1.msra.mxu0 0.0
      %8608 = vmatprep.subr.mxu0 0.0
      %8609 = vmatpush1.msra.mxu0 0.0
      %8610 = vmatprep.subr.mxu0 0.0
      %8611 = vmatpush1.msra.mxu0 0.0
      %8612 = vmatprep.subr.mxu0 0.0
      %8613 = vmatpush1.msra.mxu0 0.0
      %8614 = vmatprep.subr.mxu0 0.0
      %8615 = vmatpush1.msra.mxu0 0.0
      %8616 = vmatprep.subr.mxu0 0.0
      %8617 = vmatpush1.msra.mxu0 0.0
      %8618 = vmatprep.subr.mxu0 0.0
      %8619 = vmatpush1.msra.mxu0 0.0
      %8620 = vmatprep.subr.mxu0 0.0
      %8621 = vmatpush1.msra.mxu0 0.0
      %8622 = vmatprep.subr.mxu0 0.0
      %8623 = vmatpush1.msra.mxu0 0.0
      %8624 = vmatprep.subr.mxu0 0.0
      %8625 = vmatpush1.msra.mxu0 0.0
      %8626 = vmatprep.subr.mxu0 0.0
      %8627 = vmatpush1.msra.mxu0 0.0
      %8628 = vmatprep.subr.mxu0 0.0
      %8629 = vmatpush1.msra.mxu0 0.0
      %8630 = vmatprep.subr.mxu0 0.0
      %8631 = vmatpush1.msra.mxu0 0.0
      %8632 = vmatprep.subr.mxu0 0.0
      %8633 = vmatpush1.msra.mxu0 0.0
      %8634 = vmatprep.subr.mxu0 0.0
      %8635 = vmatpush1.msra.mxu0 0.0
      %8636 = vmatprep.subr.mxu0 0.0
      %8637 = vmatpush1.msra.mxu0 0.0
      %8638 = vmatprep.subr.mxu0 0.0
      %8639 = vmatpush1.msra.mxu0 0.0
      %8640 = vmatprep.subr.mxu0 0.0
      %8641 = vmatpush1.msra.mxu0 0.0
      %8642 = vmatprep.subr.mxu0 0.0
      %8643 = vmatpush1.msra.mxu0 0.0
      %8644 = vmatprep.subr.mxu0 0.0
      %8645 = vmatpush1.msra.mxu0 0.0
      %8646 = vmatprep.subr.mxu0 0.0
      %8647 = vmatpush1.msra.mxu0 0.0
      %8648 = vmatprep.subr.mxu0 0.0
      %8649 = vmatpush1.msra.mxu0 0.0
      %8650 = vmatprep.subr.mxu0 0.0
      %8651 = vmatpush1.msra.mxu0 0.0
      %8652 = vmatprep.subr.mxu0 0.0
      %8653 = vmatpush1.msra.mxu0 0.0
      %8654 = vmatprep.mubr.f32.mxu0 0.0
      %v8655 = vand.u32 %v8424, 4294901760
      %v8656 = vsub.f32 %v8424, %v8655
      %8657 = vmatmul.mubr.f32.gmra.mrb[0].mxu0 %v8656
      %v8658 = vpop.f32.mrb[0].mxu0
      %v8659 = vadd.f32 %v8582, %v8658
      %v8660 = vpop.f32.mrb[0].mxu0
      %v8661 = vadd.f32 %v8584, %v8660
      %8662 = vdwg.mxu0
      %v8663 = vand.u32 %v7476, 4294901760
      %8664 = vmatprep.subr.mxu0 %v8663
      %v8665 = vand.u32 %v7475, 4294901760
      %8666 = vmatpush1.msra.mxu0 %v8665
      %8667 = vmatprep.subr.mxu0 0.0
      %8668 = vmatpush1.msra.mxu0 0.0
      %8669 = vmatprep.subr.mxu0 0.0
      %8670 = vmatpush1.msra.mxu0 0.0
      %8671 = vmatprep.subr.mxu0 0.0
      %8672 = vmatpush1.msra.mxu0 0.0
      %8673 = vmatprep.subr.mxu0 0.0
      %8674 = vmatpush1.msra.mxu0 0.0
      %8675 = vmatprep.subr.mxu0 0.0
      %8676 = vmatpush1.msra.mxu0 0.0
      %8677 = vmatprep.subr.mxu0 0.0
      %8678 = vmatpush1.msra.mxu0 0.0
      %8679 = vmatprep.subr.mxu0 0.0
      %8680 = vmatpush1.msra.mxu0 0.0
      %8681 = vmatprep.subr.mxu0 0.0
      %8682 = vmatpush1.msra.mxu0 0.0
      %8683 = vmatprep.subr.mxu0 0.0
      %8684 = vmatpush1.msra.mxu0 0.0
      %8685 = vmatprep.subr.mxu0 0.0
      %8686 = vmatpush1.msra.mxu0 0.0
      %8687 = vmatprep.subr.mxu0 0.0
      %8688 = vmatpush1.msra.mxu0 0.0
      %8689 = vmatprep.subr.mxu0 0.0
      %8690 = vmatpush1.msra.mxu0 0.0
      %8691 = vmatprep.subr.mxu0 0.0
      %8692 = vmatpush1.msra.mxu0 0.0
      %8693 = vmatprep.subr.mxu0 0.0
      %8694 = vmatpush1.msra.mxu0 0.0
      %8695 = vmatprep.subr.mxu0 0.0
      %8696 = vmatpush1.msra.mxu0 0.0
      %8697 = vmatprep.subr.mxu0 0.0
      %8698 = vmatpush1.msra.mxu0 0.0
      %8699 = vmatprep.subr.mxu0 0.0
      %8700 = vmatpush1.msra.mxu0 0.0
      %8701 = vmatprep.subr.mxu0 0.0
      %8702 = vmatpush1.msra.mxu0 0.0
      %8703 = vmatprep.subr.mxu0 0.0
      %8704 = vmatpush1.msra.mxu0 0.0
      %8705 = vmatprep.subr.mxu0 0.0
      %8706 = vmatpush1.msra.mxu0 0.0
      %8707 = vmatprep.subr.mxu0 0.0
      %8708 = vmatpush1.msra.mxu0 0.0
      %8709 = vmatprep.subr.mxu0 0.0
      %8710 = vmatpush1.msra.mxu0 0.0
      %8711 = vmatprep.subr.mxu0 0.0
      %8712 = vmatpush1.msra.mxu0 0.0
      %8713 = vmatprep.subr.mxu0 0.0
      %8714 = vmatpush1.msra.mxu0 0.0
      %8715 = vmatprep.subr.mxu0 0.0
      %8716 = vmatpush1.msra.mxu0 0.0
      %8717 = vmatprep.subr.mxu0 0.0
      %8718 = vmatpush1.msra.mxu0 0.0
      %8719 = vmatprep.subr.mxu0 0.0
      %8720 = vmatpush1.msra.mxu0 0.0
      %8721 = vmatprep.subr.mxu0 0.0
      %8722 = vmatpush1.msra.mxu0 0.0
      %8723 = vmatprep.subr.mxu0 0.0
      %8724 = vmatpush1.msra.mxu0 0.0
      %8725 = vmatprep.subr.mxu0 0.0
      %8726 = vmatpush1.msra.mxu0 0.0
      %8727 = vmatprep.subr.mxu0 0.0
      %8728 = vmatpush1.msra.mxu0 0.0
      %8729 = vmatprep.mubr.f32.mxu0 0.0
      %v8730 = vand.u32 %v8424, 4294901760
      %v8731 = vsub.f32 %v8424, %v8730
      %v8732 = vand.u32 %v8731, 4294901760
      %8733 = vmatmul.mubr.f32.gmra.mrb[0].mxu0 %v8732
      %v8734 = vpop.f32.mrb[0].mxu0
      %v8735 = vadd.f32 %v8659, %v8734
      %v8736 = vpop.f32.mrb[0].mxu0
      %v8737 = vadd.f32 %v8661, %v8736
      %8738 = vdwg.mxu0
      %v8739 = vand.u32 %v7476, 4294901760
      %v8740 = vsub.f32 %v7476, %v8739
      %v8741 = vand.u32 %v8740, 4294901760
      %8742 = vmatprep.subr.mxu0 %v8741
      %v8743 = vand.u32 %v7475, 4294901760
      %v8744 = vsub.f32 %v7475, %v8743
      %v8745 = vand.u32 %v8744, 4294901760
      %8746 = vmatpush1.msra.mxu0 %v8745
      %8747 = vmatprep.subr.mxu0 0.0
      %8748 = vmatpush1.msra.mxu0 0.0
      %8749 = vmatprep.subr.mxu0 0.0
      %8750 = vmatpush1.msra.mxu0 0.0
      %8751 = vmatprep.subr.mxu0 0.0
      %8752 = vmatpush1.msra.mxu0 0.0
      %8753 = vmatprep.subr.mxu0 0.0
      %8754 = vmatpush1.msra.mxu0 0.0
      %8755 = vmatprep.subr.mxu0 0.0
      %8756 = vmatpush1.msra.mxu0 0.0
      %8757 = vmatprep.subr.mxu0 0.0
      %8758 = vmatpush1.msra.mxu0 0.0
      %8759 = vmatprep.subr.mxu0 0.0
      %8760 = vmatpush1.msra.mxu0 0.0
      %8761 = vmatprep.subr.mxu0 0.0
      %8762 = vmatpush1.msra.mxu0 0.0
      %8763 = vmatprep.subr.mxu0 0.0
      %8764 = vmatpush1.msra.mxu0 0.0
      %8765 = vmatprep.subr.mxu0 0.0
      %8766 = vmatpush1.msra.mxu0 0.0
      %8767 = vmatprep.subr.mxu0 0.0
      %8768 = vmatpush1.msra.mxu0 0.0
      %8769 = vmatprep.subr.mxu0 0.0
      %8770 = vmatpush1.msra.mxu0 0.0
      %8771 = vmatprep.subr.mxu0 0.0
      %8772 = vmatpush1.msra.mxu0 0.0
      %8773 = vmatprep.subr.mxu0 0.0
      %8774 = vmatpush1.msra.mxu0 0.0
      %8775 = vmatprep.subr.mxu0 0.0
      %8776 = vmatpush1.msra.mxu0 0.0
      %8777 = vmatprep.subr.mxu0 0.0
      %8778 = vmatpush1.msra.mxu0 0.0
      %8779 = vmatprep.subr.mxu0 0.0
      %8780 = vmatpush1.msra.mxu0 0.0
      %8781 = vmatprep.subr.mxu0 0.0
      %8782 = vmatpush1.msra.mxu0 0.0
      %8783 = vmatprep.subr.mxu0 0.0
      %8784 = vmatpush1.msra.mxu0 0.0
      %8785 = vmatprep.subr.mxu0 0.0
      %8786 = vmatpush1.msra.mxu0 0.0
      %8787 = vmatprep.subr.mxu0 0.0
      %8788 = vmatpush1.msra.mxu0 0.0
      %8789 = vmatprep.subr.mxu0 0.0
      %8790 = vmatpush1.msra.mxu0 0.0
      %8791 = vmatprep.subr.mxu0 0.0
      %8792 = vmatpush1.msra.mxu0 0.0
      %8793 = vmatprep.subr.mxu0 0.0
      %8794 = vmatpush1.msra.mxu0 0.0
      %8795 = vmatprep.subr.mxu0 0.0
      %8796 = vmatpush1.msra.mxu0 0.0
      %8797 = vmatprep.subr.mxu0 0.0
      %8798 = vmatpush1.msra.mxu0 0.0
      %8799 = vmatprep.subr.mxu0 0.0
      %8800 = vmatpush1.msra.mxu0 0.0
      %8801 = vmatprep.subr.mxu0 0.0
      %8802 = vmatpush1.msra.mxu0 0.0
      %8803 = vmatprep.subr.mxu0 0.0
      %8804 = vmatpush1.msra.mxu0 0.0
      %8805 = vmatprep.subr.mxu0 0.0
      %8806 = vmatpush1.msra.mxu0 0.0
      %8807 = vmatprep.subr.mxu0 0.0
      %8808 = vmatpush1.msra.mxu0 0.0
      %8809 = vmatprep.mubr.f32.mxu0 0.0
      %v8810 = vand.u32 %v8424, 4294901760
      %8811 = vmatmul.mubr.f32.gmra.mrb[0].mxu0 %v8810
      %v8812 = vpop.f32.mrb[0].mxu0
      %v8813 = vadd.f32 %v8735, %v8812
      %v8814 = vpop.f32.mrb[0].mxu0
      %v8815 = vadd.f32 %v8737, %v8814
      %8816 = vdwg.mxu0
      %v8817 = vand.u32 %v7476, 4294901760
      %8818 = vmatprep.subr.mxu0 %v8817
      %v8819 = vand.u32 %v7475, 4294901760
      %8820 = vmatpush1.msra.mxu0 %v8819
      %8821 = vmatprep.subr.mxu0 0.0
      %8822 = vmatpush1.msra.mxu0 0.0
      %8823 = vmatprep.subr.mxu0 0.0
      %8824 = vmatpush1.msra.mxu0 0.0
      %8825 = vmatprep.subr.mxu0 0.0
      %8826 = vmatpush1.msra.mxu0 0.0
      %8827 = vmatprep.subr.mxu0 0.0
      %8828 = vmatpush1.msra.mxu0 0.0
      %8829 = vmatprep.subr.mxu0 0.0
      %8830 = vmatpush1.msra.mxu0 0.0
      %8831 = vmatprep.subr.mxu0 0.0
      %8832 = vmatpush1.msra.mxu0 0.0
      %8833 = vmatprep.subr.mxu0 0.0
      %8834 = vmatpush1.msra.mxu0 0.0
      %8835 = vmatprep.subr.mxu0 0.0
      %8836 = vmatpush1.msra.mxu0 0.0
      %8837 = vmatprep.subr.mxu0 0.0
      %8838 = vmatpush1.msra.mxu0 0.0
      %8839 = vmatprep.subr.mxu0 0.0
      %8840 = vmatpush1.msra.mxu0 0.0
      %8841 = vmatprep.subr.mxu0 0.0
      %8842 = vmatpush1.msra.mxu0 0.0
      %8843 = vmatprep.subr.mxu0 0.0
      %8844 = vmatpush1.msra.mxu0 0.0
      %8845 = vmatprep.subr.mxu0 0.0
      %8846 = vmatpush1.msra.mxu0 0.0
      %8847 = vmatprep.subr.mxu0 0.0
      %8848 = vmatpush1.msra.mxu0 0.0
      %8849 = vmatprep.subr.mxu0 0.0
      %8850 = vmatpush1.msra.mxu0 0.0
      %8851 = vmatprep.subr.mxu0 0.0
      %8852 = vmatpush1.msra.mxu0 0.0
      %8853 = vmatprep.subr.mxu0 0.0
      %8854 = vmatpush1.msra.mxu0 0.0
      %8855 = vmatprep.subr.mxu0 0.0
      %8856 = vmatpush1.msra.mxu0 0.0
      %8857 = vmatprep.subr.mxu0 0.0
      %8858 = vmatpush1.msra.mxu0 0.0
      %8859 = vmatprep.subr.mxu0 0.0
      %8860 = vmatpush1.msra.mxu0 0.0
      %8861 = vmatprep.subr.mxu0 0.0
      %8862 = vmatpush1.msra.mxu0 0.0
      %8863 = vmatprep.subr.mxu0 0.0
      %8864 = vmatpush1.msra.mxu0 0.0
      %8865 = vmatprep.subr.mxu0 0.0
      %8866 = vmatpush1.msra.mxu0 0.0
      %8867 = vmatprep.subr.mxu0 0.0
      %8868 = vmatpush1.msra.mxu0 0.0
      %8869 = vmatprep.subr.mxu0 0.0
      %8870 = vmatpush1.msra.mxu0 0.0
      %8871 = vmatprep.subr.mxu0 0.0
      %8872 = vmatpush1.msra.mxu0 0.0
      %8873 = vmatprep.subr.mxu0 0.0
      %8874 = vmatpush1.msra.mxu0 0.0
      %8875 = vmatprep.subr.mxu0 0.0
      %8876 = vmatpush1.msra.mxu0 0.0
      %8877 = vmatprep.subr.mxu0 0.0
      %8878 = vmatpush1.msra.mxu0 0.0
      %8879 = vmatprep.subr.mxu0 0.0
      %8880 = vmatpush1.msra.mxu0 0.0
      %8881 = vmatprep.subr.mxu0 0.0
      %8882 = vmatpush1.msra.mxu0 0.0
      %8883 = vmatprep.mubr.f32.mxu0 0.0
      %v8884 = vand.u32 %v8424, 4294901760
      %8885 = vmatmul.mubr.f32.gmra.mrb[0].mxu0 %v8884
      %v8886 = vpop.f32.mrb[0].mxu0
      %v8887 = vadd.f32 %v8813, %v8886
      %v8888 = vpop.f32.mrb[0].mxu0
      %v8889 = vadd.f32 %v8815, %v8888
      %8890 = vdwg.mxu0
      %v8891 = vadd.f32 %v8419, %v8887
      %v8892 = vadd.f32 %v8420, %v8889
      %v8893 = vadd.f32 %v8891, %v8892
      %8894 = vadd.xlane.f32.xlu0 %v8893
      %v8895 = vpop.xlane.xlu0 %8894
      %v8896 = vmul.f32 %v8891, %v8891
      %v8897 = vmul.f32 %v8892, %v8892
      %v8898 = vadd.f32 %v8896, %v8897
      %8899 = vadd.xlane.f32.xlu0 %v8898
      %v8900 = vpop.xlane.xlu0 %8899
      %v8901 = vmul.f32 %v8895, 0.00390625
      %v8902 = vmul.f32 %v8900, 0.00390625
      %v8903 = vmul.f32 %v8901, %v8901
      %v8904 = vsub.f32 %v8902, %v8903
      %v8905 = vmax.f32 %v8904, 0.0
      %v8906 = vsub.f32 %v8891, %v8901
      %v8907 = vsub.f32 %v8892, %v8901
      %v8908 = vadd.f32 %v8905, 1e-05
      %v8909 = vrsqrt.pop %v8908
      %v8910 = vmul.f32 %v8906, %v8909
      %v8911 = vmul.f32 %v8907, %v8909
      %v8912 = vadd.f32 %v205, %v8910
      %v8913 = vadd.f32 %v206, %v8911
      %8914 = vst [vmem:[%s197] sm:$0xff] %v8912
      %8915 = vst [vmem:[%s197 + $0x8] sm:$0xff] %v8913
      %p8916 = scmp.lt.s32.totalorder %s15, 1
      %s8917 = scalar_select %p8916, %s15, 1
      %s8918 = smul.addr %s8917, 2
      %s8919 = smul.addr %s8918, 8
      %s8920 = scalar_lea.vmem %s4, %s8919
      // Predicated region
      $region37: #{residual_block_forward.1} parent=35 // pred_check
        %p8921 = pneg %p122
      $region38: #{residual_block_forward.1} parent=35 // pred_check_branch
        %8923 = sbr.rel (%p8921) target = $region40
      $region39: #{residual_block_forward.1} parent=35 // pred_region
        _
      $region40: #{residual_block_forward.1} parent=35 // pred_fallthru
        _
    $region36: #{residual_block_forward.1} parent=5 // pred_fallthru
      _
    %p8924 = scmp.le.s32.totalorder 2, %s10
    // Predicated region
    $region41: #{residual_block_forward.1} parent=5 // pred_check
      %p8925 = pneg %p8924
    $region42: #{residual_block_forward.1} parent=5 // pred_check_branch
      %8927 = sbr.rel (%p8925) target = $region44
    $region43: #{residual_block_forward.1} parent=5 // pred_region
      %s8928 = ssub.s32 %s10, 2
      // Predicated region
      $region45: #{residual_block_forward.1} parent=43 // pred_check
        %p8929 = pneg %p128
      $region46: #{residual_block_forward.1} parent=43 // pred_check_branch
        %8931 = sbr.rel (%p8929) target = $region48
      $region47: #{residual_block_forward.1} parent=43 // pred_region
        %p8932 = scmp.lt.s32.totalorder %s16, 1
        %s8933 = scalar_select %p8932, %s16, 1
        %s8934 = smul.addr %s8933, 2
        %s8935 = smul.addr %s8934, 8
        %s8936 = scalar_lea.vmem %s4, %s8935
      $region48: #{residual_block_forward.1} parent=43 // pred_fallthru
        _
    $region44: #{residual_block_forward.1} parent=5 // pred_fallthru
      _
  $region6: #{residual_block_forward.1} parent=0 // loop_footer
    %s14 = sadd.s32 1, %s10
  $region7: #{residual_block_forward.1} parent=0 // loop_footer_branch
    %9 = sbr.rel target = $region3
  $region8: #{residual_block_forward.1} parent=0 // loop_exit
    _

</llo_original>
